<compile_context>
chip_gen: v7x
topology: tpu7x:2x2x1
jax: 0.10.0
libtpu: 0.0.40
codegen_flags: <defaults>
</compile_context>

<pallas_src>
import functools
import math

import jax
import jax.numpy as jnp
import numpy as np
from jax import lax
from jax.experimental import pallas as pl
from jax.experimental.pallas import tpu as pltpu


def _layer_norm(x, gamma, beta, eps):
    mu = jnp.mean(x, axis=-1, keepdims=True)
    c = x - mu
    var = jnp.mean(c * c, axis=-1, keepdims=True)
    return c * lax.rsqrt(var + eps) * gamma + beta


def _transformer_block_kernel(
        x_ref,
        ln1_g_ref, ln1_b_ref,
        wqkv_ref, bqkv_ref,
        wo_ref, bo_ref,
        ln2_g_ref, ln2_b_ref,
        w_in_ref, b_in_ref, w_out_ref, b_out_ref,
        o_ref,
        *, num_heads, ln_eps):
    _, S, H = x_ref.shape
    head_dim = H // num_heads
    scale = 1.0 / math.sqrt(head_dim)

    x = x_ref[0].astype(jnp.float32)                              # (S, H)

    # ---- pre-attention LayerNorm + fused QKV projection (single MXU dot) ----
    h = _layer_norm(x, ln1_g_ref[...], ln1_b_ref[...], ln_eps)
    qkv = jnp.dot(h, wqkv_ref[...],
                  preferred_element_type=jnp.float32) + bqkv_ref[...]   # (S, 3H)
    q = qkv[:, 0:H] * scale          # fold 1/sqrt(d) into q once
    k = qkv[:, H:2 * H]
    v = qkv[:, 2 * H:3 * H]

    # Additive causal bias, built once per grid step (cheap next to matmuls).
    row = lax.broadcasted_iota(jnp.int32, (S, S), 0)
    col = lax.broadcasted_iota(jnp.int32, (S, S), 1)
    causal_bias = jnp.where(col <= row, jnp.float32(0.0), jnp.float32(-1e30))

    # ---- per-head causal self-attention (static unroll over heads) ----
    ctx_heads = []
    for hd in range(num_heads):
        lo = hd * head_dim
        qh = q[:, lo:lo + head_dim]                               # (S, d)
        kh = k[:, lo:lo + head_dim]
        vh = v[:, lo:lo + head_dim]
        # q @ k^T without materializing a transpose (contract the d axis).
        s = lax.dot_general(qh, kh, (((1,), (1,)), ((), ())),
                            preferred_element_type=jnp.float32) + causal_bias
        m = jnp.max(s, axis=-1, keepdims=True)
        p = jnp.exp(s - m)
        p = p * (1.0 / jnp.sum(p, axis=-1, keepdims=True))
        ctx_heads.append(jnp.dot(p, vh, preferred_element_type=jnp.float32))
    ctx = jnp.concatenate(ctx_heads, axis=-1)                     # (S, H)

    attn_out = jnp.dot(ctx, wo_ref[...],
                       preferred_element_type=jnp.float32) + bo_ref[...]
    x = x + attn_out                                              # residual 1

    # ---- pre-MLP LayerNorm + MLP ----
    h2 = _layer_norm(x, ln2_g_ref[...], ln2_b_ref[...], ln_eps)
    inner = jnp.dot(h2, w_in_ref[...],
                    preferred_element_type=jnp.float32) + b_in_ref[...]
    inner = jax.nn.gelu(inner, approximate=True)
    mlp_out = jnp.dot(inner, w_out_ref[...],
                      preferred_element_type=jnp.float32) + b_out_ref[...]

    o_ref[0] = (x + mlp_out).astype(o_ref.dtype)                  # residual 2


def transformer_block_forward(x, params, *, num_heads, ln_eps=1e-5):
    """x: (B, S, H) float32.  All weight matrices use (in, out) layout."""
    B, S, H = x.shape
    inner_dim = params["w_in"].shape[1]

    def _2d(v):
        return v.reshape(1, -1).astype(jnp.float32)

    # Trace-time fusion of the three QKV projections into one matmul.
    wqkv = jnp.concatenate(
        [params["wq"], params["wk"], params["wv"]], axis=1).astype(jnp.float32)
    bqkv = jnp.concatenate(
        [params["bq"], params["bk"], params["bv"]], axis=0).reshape(1, -1)
    bqkv = bqkv.astype(jnp.float32)

    kernel = functools.partial(_transformer_block_kernel,
                               num_heads=num_heads, ln_eps=ln_eps)

    def row_spec(n):
        return pl.BlockSpec((1, n), lambda b: (0, 0))

    def mat_spec(r, c):
        return pl.BlockSpec((r, c), lambda b: (0, 0))

    return pl.pallas_call(
        kernel,
        out_shape=jax.ShapeDtypeStruct((B, S, H), jnp.float32),
        grid_spec=pltpu.PrefetchScalarGridSpec(
            num_scalar_prefetch=0,
            grid=(B,),
            in_specs=[
                pl.BlockSpec((1, S, H), lambda b: (b, 0, 0)),      # x
                row_spec(H), row_spec(H),                          # LN1 gamma/beta
                mat_spec(H, 3 * H), row_spec(3 * H),               # Wqkv, bqkv
                mat_spec(H, H), row_spec(H),                       # Wo, bo
                row_spec(H), row_spec(H),                          # LN2 gamma/beta
                mat_spec(H, inner_dim), row_spec(inner_dim),       # W_in, b_in
                mat_spec(inner_dim, H), row_spec(H),               # W_out, b_out
            ],
            out_specs=pl.BlockSpec((1, S, H), lambda b: (b, 0, 0)),
        ),
        compiler_params=pltpu.CompilerParams(
            dimension_semantics=("parallel",)),
    )(
        x.astype(jnp.float32),
        _2d(params["ln1_g"]), _2d(params["ln1_b"]),
        wqkv, bqkv,
        params["wo"].astype(jnp.float32), _2d(params["bo"]),
        _2d(params["ln2_g"]), _2d(params["ln2_b"]),
        params["w_in"].astype(jnp.float32), _2d(params["b_in"]),
        params["w_out"].astype(jnp.float32), _2d(params["b_out"]),
    )


def _reference(x, params, *, num_heads, ln_eps=1e-5):
    """Plain-JAX reimplementation of the PyTorch forward (for validation)."""
    B, S, H = x.shape
    d = H // num_heads

    def ln(v, g, b):
        mu = jnp.mean(v, axis=-1, keepdims=True)
        c = v - mu
        var = jnp.mean(c * c, axis=-1, keepdims=True)
        return c * lax.rsqrt(var + ln_eps) * g + b

    h = ln(x, params["ln1_g"], params["ln1_b"])
    q = h @ params["wq"] + params["bq"]
    k = h @ params["wk"] + params["bk"]
    v = h @ params["wv"] + params["bv"]

    def split(t):
        return t.reshape(B, S, num_heads, d).transpose(0, 2, 1, 3)

    q, k, v = split(q), split(k), split(v)
    scores = jnp.einsum("bhqd,bhkd->bhqk", q, k) / math.sqrt(d)
    causal = jnp.tril(jnp.ones((S, S), bool))
    scores = jnp.where(causal[None, None], scores, jnp.float32(-1e30))
    attn = jax.nn.softmax(scores, axis=-1)
    ctx = jnp.einsum("bhqk,bhkd->bhqd", attn, v)
    ctx = ctx.transpose(0, 2, 1, 3).reshape(B, S, H)
    x = x + ctx @ params["wo"] + params["bo"]

    h2 = ln(x, params["ln2_g"], params["ln2_b"])
    inner = jax.nn.gelu(h2 @ params["w_in"] + params["b_in"], approximate=True)
    return x + inner @ params["w_out"] + params["b_out"]


if __name__ == "__main__":
    # Keep the plain-JAX reference matmuls in true f32 so the tolerance check
    # is meaningful (XLA's default f32 matmul on TPU may use bf16 passes).
    jax.config.update("jax_default_matmul_precision", "highest")

    B, S, H = 2, 8, 32          # batch, seq_len, hidden_size
    num_heads = 4               # head_dim = 8
    inner_dim = 4 * H           # MLP intermediate size

    keys = jax.random.split(jax.random.PRNGKey(0), 17)

    def w(k, shape, scale):
        return scale * jax.random.normal(k, shape, jnp.float32)

    params = dict(
        ln1_g=1.0 + 0.1 * jax.random.normal(keys[0], (H,), jnp.float32),
        ln1_b=0.1 * jax.random.normal(keys[1], (H,), jnp.float32),
        wq=w(keys[2], (H, H), 0.1), bq=w(keys[3], (H,), 0.02),
        wk=w(keys[4], (H, H), 0.1), bk=w(keys[5], (H,), 0.02),
        wv=w(keys[6], (H, H), 0.1), bv=w(keys[7], (H,), 0.02),
        wo=w(keys[8], (H, H), 0.1), bo=w(keys[9], (H,), 0.02),
        ln2_g=1.0 + 0.1 * jax.random.normal(keys[10], (H,), jnp.float32),
        ln2_b=0.1 * jax.random.normal(keys[11], (H,), jnp.float32),
        w_in=w(keys[12], (H, inner_dim), 0.1), b_in=w(keys[13], (inner_dim,), 0.02),
        w_out=w(keys[14], (inner_dim, H), 0.1), b_out=w(keys[15], (H,), 0.02),
    )
    x = jax.random.normal(keys[16], (B, S, H), jnp.float32)

    out = transformer_block_forward(x, params, num_heads=num_heads)
    out = jax.block_until_ready(out)

    ref = _reference(x, params, num_heads=num_heads)
    np.testing.assert_allclose(np.asarray(out), np.asarray(ref),
                               rtol=2e-3, atol=2e-3)

    print("KERNEL_OK")
</pallas_src>

<mosaic_0001>
module attributes {stable_mosaic.version = 11 : i64} {
  func.func @_transformer_block_kernel(%arg0: i32, %arg1: memref<1x8x32xf32, #tpu.memory_space<vmem>>, %arg2: memref<1x32xf32, #tpu.memory_space<vmem>>, %arg3: memref<1x32xf32, #tpu.memory_space<vmem>>, %arg4: memref<32x96xf32, #tpu.memory_space<vmem>>, %arg5: memref<1x96xf32, #tpu.memory_space<vmem>>, %arg6: memref<32x32xf32, #tpu.memory_space<vmem>>, %arg7: memref<1x32xf32, #tpu.memory_space<vmem>>, %arg8: memref<1x32xf32, #tpu.memory_space<vmem>>, %arg9: memref<1x32xf32, #tpu.memory_space<vmem>>, %arg10: memref<32x128xf32, #tpu.memory_space<vmem>>, %arg11: memref<1x128xf32, #tpu.memory_space<vmem>>, %arg12: memref<128x32xf32, #tpu.memory_space<vmem>>, %arg13: memref<1x32xf32, #tpu.memory_space<vmem>>, %arg14: memref<1x8x32xf32, #tpu.memory_space<vmem>>) attributes {dimension_semantics = [#tpu.dimension_semantics<parallel>], iteration_bounds = array<i64: 2>, scalar_prefetch = 0 : i64, scratch_operands = 0 : i64, tpu.core_type = #tpu.core_type<tc>, window_params = [{transform_indices = @transform_0, window_bounds = array<i64: 1, 8, 32>}, {pipeline_mode = #tpu.pipeline_mode<synchronous>, transform_indices = @transform_1, window_bounds = array<i64: 1, 32>}, {pipeline_mode = #tpu.pipeline_mode<synchronous>, transform_indices = @transform_2, window_bounds = array<i64: 1, 32>}, {pipeline_mode = #tpu.pipeline_mode<synchronous>, transform_indices = @transform_3, window_bounds = array<i64: 32, 96>}, {pipeline_mode = #tpu.pipeline_mode<synchronous>, transform_indices = @transform_4, window_bounds = array<i64: 1, 96>}, {pipeline_mode = #tpu.pipeline_mode<synchronous>, transform_indices = @transform_5, window_bounds = array<i64: 32, 32>}, {pipeline_mode = #tpu.pipeline_mode<synchronous>, transform_indices = @transform_6, window_bounds = array<i64: 1, 32>}, {pipeline_mode = #tpu.pipeline_mode<synchronous>, transform_indices = @transform_7, window_bounds = array<i64: 1, 32>}, {pipeline_mode = #tpu.pipeline_mode<synchronous>, transform_indices = @transform_8, window_bounds = array<i64: 1, 32>}, {pipeline_mode = #tpu.pipeline_mode<synchronous>, transform_indices = @transform_9, window_bounds = array<i64: 32, 128>}, {pipeline_mode = #tpu.pipeline_mode<synchronous>, transform_indices = @transform_10, window_bounds = array<i64: 1, 128>}, {pipeline_mode = #tpu.pipeline_mode<synchronous>, transform_indices = @transform_11, window_bounds = array<i64: 128, 32>}, {pipeline_mode = #tpu.pipeline_mode<synchronous>, transform_indices = @transform_12, window_bounds = array<i64: 1, 32>}, {transform_indices = @transform_13, window_bounds = array<i64: 1, 8, 32>}]} {
    %c0 = arith.constant 0 : index
    %c0_0 = arith.constant 0 : index
    %c0_1 = arith.constant 0 : index
    %0 = vector.load %arg1[%c0, %c0_0, %c0_1] : memref<1x8x32xf32, #tpu.memory_space<vmem>>, vector<1x8x32xf32>
    %1 = vector.shape_cast %0 : vector<1x8x32xf32> to vector<8x32xf32>
    %c0_2 = arith.constant 0 : index
    %c0_3 = arith.constant 0 : index
    %2 = vector.load %arg2[%c0_2, %c0_3] : memref<1x32xf32, #tpu.memory_space<vmem>>, vector<1x32xf32>
    %c0_4 = arith.constant 0 : index
    %c0_5 = arith.constant 0 : index
    %3 = vector.load %arg3[%c0_4, %c0_5] : memref<1x32xf32, #tpu.memory_space<vmem>>, vector<1x32xf32>
    %cst = arith.constant dense<0.000000e+00> : vector<8xf32>
    %4 = vector.multi_reduction <add>, %1, %cst [1] : vector<8x32xf32> to vector<8xf32>
    %5 = vector.shape_cast %4 : vector<8xf32> to vector<8x1xf32>
    %cst_6 = arith.constant 3.200000e+01 : f32
    %6 = vector.broadcast %cst_6 : f32 to vector<8x1xf32>
    %7 = arith.divf %5, %6 : vector<8x1xf32>
    %8 = vector.broadcast %7 : vector<8x1xf32> to vector<8x32xf32>
    %9 = arith.subf %1, %8 : vector<8x32xf32>
    %10 = arith.mulf %9, %9 : vector<8x32xf32>
    %cst_7 = arith.constant dense<0.000000e+00> : vector<8xf32>
    %11 = vector.multi_reduction <add>, %10, %cst_7 [1] : vector<8x32xf32> to vector<8xf32>
    %12 = vector.shape_cast %11 : vector<8xf32> to vector<8x1xf32>
    %cst_8 = arith.constant 3.200000e+01 : f32
    %13 = vector.broadcast %cst_8 : f32 to vector<8x1xf32>
    %14 = arith.divf %12, %13 : vector<8x1xf32>
    %cst_9 = arith.constant 9.99999974E-6 : f32
    %15 = vector.broadcast %cst_9 : f32 to vector<8x1xf32>
    %16 = arith.addf %14, %15 : vector<8x1xf32>
    %17 = math.rsqrt %16 : vector<8x1xf32>
    %18 = vector.broadcast %17 : vector<8x1xf32> to vector<8x32xf32>
    %19 = arith.mulf %9, %18 : vector<8x32xf32>
    %20 = vector.broadcast %2 : vector<1x32xf32> to vector<8x32xf32>
    %21 = arith.mulf %19, %20 : vector<8x32xf32>
    %22 = vector.broadcast %3 : vector<1x32xf32> to vector<8x32xf32>
    %23 = arith.addf %21, %22 : vector<8x32xf32>
    %c0_10 = arith.constant 0 : index
    %c0_11 = arith.constant 0 : index
    %24 = vector.load %arg4[%c0_10, %c0_11] : memref<32x96xf32, #tpu.memory_space<vmem>>, vector<32x96xf32>
    %cst_12 = arith.constant dense<0.000000e+00> : vector<8x96xf32>
    %25 = tpu.matmul %23, %24, %cst_12 {dimension_numbers = #tpu.dot_dimension_numbers<[1], [0], [0], [1], [0, 0, 1, 1], [], []>, precision = #tpu.contract_precision<fp32>} : vector<8x32xf32>, vector<32x96xf32>, vector<8x96xf32> -> vector<8x96xf32>
    %c0_13 = arith.constant 0 : index
    %c0_14 = arith.constant 0 : index
    %26 = vector.load %arg5[%c0_13, %c0_14] : memref<1x96xf32, #tpu.memory_space<vmem>>, vector<1x96xf32>
    %27 = vector.broadcast %26 : vector<1x96xf32> to vector<8x96xf32>
    %28 = arith.addf %25, %27 : vector<8x96xf32>
    %29 = vector.extract_strided_slice %28 {offsets = [0, 0], sizes = [8, 32], strides = [1, 1]} : vector<8x96xf32> to vector<8x32xf32>
    %cst_15 = arith.constant 0.353553385 : f32
    %30 = vector.broadcast %cst_15 : f32 to vector<8x32xf32>
    %31 = arith.mulf %29, %30 : vector<8x32xf32>
    %32 = vector.extract_strided_slice %28 {offsets = [0, 32], sizes = [8, 32], strides = [1, 1]} : vector<8x96xf32> to vector<8x32xf32>
    %33 = vector.extract_strided_slice %28 {offsets = [0, 64], sizes = [8, 32], strides = [1, 1]} : vector<8x96xf32> to vector<8x32xf32>
    %34 = tpu.iota {dimensions = array<i32: 0>} : vector<8x8xi32>
    %35 = tpu.iota {dimensions = array<i32: 1>} : vector<8x8xi32>
    %36 = arith.cmpi sle, %35, %34 : vector<8x8xi32>
    %cst_16 = arith.constant 0.000000e+00 : f32
    %cst_17 = arith.constant -1.000000e+30 : f32
    %37 = vector.broadcast %cst_16 : f32 to vector<8x8xf32>
    %38 = vector.broadcast %cst_17 : f32 to vector<8x8xf32>
    %39 = arith.select %36, %37, %38 : vector<8x8xi1>, vector<8x8xf32>
    %40 = vector.extract_strided_slice %31 {offsets = [0, 0], sizes = [8, 8], strides = [1, 1]} : vector<8x32xf32> to vector<8x8xf32>
    %41 = vector.extract_strided_slice %32 {offsets = [0, 0], sizes = [8, 8], strides = [1, 1]} : vector<8x32xf32> to vector<8x8xf32>
    %42 = vector.extract_strided_slice %33 {offsets = [0, 0], sizes = [8, 8], strides = [1, 1]} : vector<8x32xf32> to vector<8x8xf32>
    %cst_18 = arith.constant dense<0.000000e+00> : vector<8x8xf32>
    %43 = tpu.matmul %40, %41, %cst_18 {dimension_numbers = #tpu.dot_dimension_numbers<[1], [1], [0], [0], [0, 0, 1, 0], [], []>, precision = #tpu.contract_precision<fp32>} : vector<8x8xf32>, vector<8x8xf32>, vector<8x8xf32> -> vector<8x8xf32>
    %44 = arith.addf %43, %39 : vector<8x8xf32>
    %cst_19 = arith.constant dense<0xFF800000> : vector<8xf32>
    %45 = vector.multi_reduction <maximumf>, %44, %cst_19 [1] : vector<8x8xf32> to vector<8xf32>
    %46 = vector.shape_cast %45 : vector<8xf32> to vector<8x1xf32>
    %47 = vector.broadcast %46 : vector<8x1xf32> to vector<8x8xf32>
    %48 = arith.subf %44, %47 : vector<8x8xf32>
    %49 = math.exp %48 : vector<8x8xf32>
    %cst_20 = arith.constant dense<0.000000e+00> : vector<8xf32>
    %50 = vector.multi_reduction <add>, %49, %cst_20 [1] : vector<8x8xf32> to vector<8xf32>
    %51 = vector.shape_cast %50 : vector<8xf32> to vector<8x1xf32>
    %cst_21 = arith.constant 1.000000e+00 : f32
    %52 = vector.broadcast %cst_21 : f32 to vector<8x1xf32>
    %53 = arith.divf %52, %51 : vector<8x1xf32>
    %54 = vector.broadcast %53 : vector<8x1xf32> to vector<8x8xf32>
    %55 = arith.mulf %49, %54 : vector<8x8xf32>
    %cst_22 = arith.constant dense<0.000000e+00> : vector<8x8xf32>
    %56 = tpu.matmul %55, %42, %cst_22 {dimension_numbers = #tpu.dot_dimension_numbers<[1], [0], [0], [1], [0, 0, 1, 1], [], []>, precision = #tpu.contract_precision<fp32>} : vector<8x8xf32>, vector<8x8xf32>, vector<8x8xf32> -> vector<8x8xf32>
    %57 = vector.extract_strided_slice %31 {offsets = [0, 8], sizes = [8, 8], strides = [1, 1]} : vector<8x32xf32> to vector<8x8xf32>
    %58 = vector.extract_strided_slice %32 {offsets = [0, 8], sizes = [8, 8], strides = [1, 1]} : vector<8x32xf32> to vector<8x8xf32>
    %59 = vector.extract_strided_slice %33 {offsets = [0, 8], sizes = [8, 8], strides = [1, 1]} : vector<8x32xf32> to vector<8x8xf32>
    %cst_23 = arith.constant dense<0.000000e+00> : vector<8x8xf32>
    %60 = tpu.matmul %57, %58, %cst_23 {dimension_numbers = #tpu.dot_dimension_numbers<[1], [1], [0], [0], [0, 0, 1, 0], [], []>, precision = #tpu.contract_precision<fp32>} : vector<8x8xf32>, vector<8x8xf32>, vector<8x8xf32> -> vector<8x8xf32>
    %61 = arith.addf %60, %39 : vector<8x8xf32>
    %cst_24 = arith.constant dense<0xFF800000> : vector<8xf32>
    %62 = vector.multi_reduction <maximumf>, %61, %cst_24 [1] : vector<8x8xf32> to vector<8xf32>
    %63 = vector.shape_cast %62 : vector<8xf32> to vector<8x1xf32>
    %64 = vector.broadcast %63 : vector<8x1xf32> to vector<8x8xf32>
    %65 = arith.subf %61, %64 : vector<8x8xf32>
    %66 = math.exp %65 : vector<8x8xf32>
    %cst_25 = arith.constant dense<0.000000e+00> : vector<8xf32>
    %67 = vector.multi_reduction <add>, %66, %cst_25 [1] : vector<8x8xf32> to vector<8xf32>
    %68 = vector.shape_cast %67 : vector<8xf32> to vector<8x1xf32>
    %cst_26 = arith.constant 1.000000e+00 : f32
    %69 = vector.broadcast %cst_26 : f32 to vector<8x1xf32>
    %70 = arith.divf %69, %68 : vector<8x1xf32>
    %71 = vector.broadcast %70 : vector<8x1xf32> to vector<8x8xf32>
    %72 = arith.mulf %66, %71 : vector<8x8xf32>
    %cst_27 = arith.constant dense<0.000000e+00> : vector<8x8xf32>
    %73 = tpu.matmul %72, %59, %cst_27 {dimension_numbers = #tpu.dot_dimension_numbers<[1], [0], [0], [1], [0, 0, 1, 1], [], []>, precision = #tpu.contract_precision<fp32>} : vector<8x8xf32>, vector<8x8xf32>, vector<8x8xf32> -> vector<8x8xf32>
    %74 = vector.extract_strided_slice %31 {offsets = [0, 16], sizes = [8, 8], strides = [1, 1]} : vector<8x32xf32> to vector<8x8xf32>
    %75 = vector.extract_strided_slice %32 {offsets = [0, 16], sizes = [8, 8], strides = [1, 1]} : vector<8x32xf32> to vector<8x8xf32>
    %76 = vector.extract_strided_slice %33 {offsets = [0, 16], sizes = [8, 8], strides = [1, 1]} : vector<8x32xf32> to vector<8x8xf32>
    %cst_28 = arith.constant dense<0.000000e+00> : vector<8x8xf32>
    %77 = tpu.matmul %74, %75, %cst_28 {dimension_numbers = #tpu.dot_dimension_numbers<[1], [1], [0], [0], [0, 0, 1, 0], [], []>, precision = #tpu.contract_precision<fp32>} : vector<8x8xf32>, vector<8x8xf32>, vector<8x8xf32> -> vector<8x8xf32>
    %78 = arith.addf %77, %39 : vector<8x8xf32>
    %cst_29 = arith.constant dense<0xFF800000> : vector<8xf32>
    %79 = vector.multi_reduction <maximumf>, %78, %cst_29 [1] : vector<8x8xf32> to vector<8xf32>
    %80 = vector.shape_cast %79 : vector<8xf32> to vector<8x1xf32>
    %81 = vector.broadcast %80 : vector<8x1xf32> to vector<8x8xf32>
    %82 = arith.subf %78, %81 : vector<8x8xf32>
    %83 = math.exp %82 : vector<8x8xf32>
    %cst_30 = arith.constant dense<0.000000e+00> : vector<8xf32>
    %84 = vector.multi_reduction <add>, %83, %cst_30 [1] : vector<8x8xf32> to vector<8xf32>
    %85 = vector.shape_cast %84 : vector<8xf32> to vector<8x1xf32>
    %cst_31 = arith.constant 1.000000e+00 : f32
    %86 = vector.broadcast %cst_31 : f32 to vector<8x1xf32>
    %87 = arith.divf %86, %85 : vector<8x1xf32>
    %88 = vector.broadcast %87 : vector<8x1xf32> to vector<8x8xf32>
    %89 = arith.mulf %83, %88 : vector<8x8xf32>
    %cst_32 = arith.constant dense<0.000000e+00> : vector<8x8xf32>
    %90 = tpu.matmul %89, %76, %cst_32 {dimension_numbers = #tpu.dot_dimension_numbers<[1], [0], [0], [1], [0, 0, 1, 1], [], []>, precision = #tpu.contract_precision<fp32>} : vector<8x8xf32>, vector<8x8xf32>, vector<8x8xf32> -> vector<8x8xf32>
    %91 = vector.extract_strided_slice %31 {offsets = [0, 24], sizes = [8, 8], strides = [1, 1]} : vector<8x32xf32> to vector<8x8xf32>
    %92 = vector.extract_strided_slice %32 {offsets = [0, 24], sizes = [8, 8], strides = [1, 1]} : vector<8x32xf32> to vector<8x8xf32>
    %93 = vector.extract_strided_slice %33 {offsets = [0, 24], sizes = [8, 8], strides = [1, 1]} : vector<8x32xf32> to vector<8x8xf32>
    %cst_33 = arith.constant dense<0.000000e+00> : vector<8x8xf32>
    %94 = tpu.matmul %91, %92, %cst_33 {dimension_numbers = #tpu.dot_dimension_numbers<[1], [1], [0], [0], [0, 0, 1, 0], [], []>, precision = #tpu.contract_precision<fp32>} : vector<8x8xf32>, vector<8x8xf32>, vector<8x8xf32> -> vector<8x8xf32>
    %95 = arith.addf %94, %39 : vector<8x8xf32>
    %cst_34 = arith.constant dense<0xFF800000> : vector<8xf32>
    %96 = vector.multi_reduction <maximumf>, %95, %cst_34 [1] : vector<8x8xf32> to vector<8xf32>
    %97 = vector.shape_cast %96 : vector<8xf32> to vector<8x1xf32>
    %98 = vector.broadcast %97 : vector<8x1xf32> to vector<8x8xf32>
    %99 = arith.subf %95, %98 : vector<8x8xf32>
    %100 = math.exp %99 : vector<8x8xf32>
    %cst_35 = arith.constant dense<0.000000e+00> : vector<8xf32>
    %101 = vector.multi_reduction <add>, %100, %cst_35 [1] : vector<8x8xf32> to vector<8xf32>
    %102 = vector.shape_cast %101 : vector<8xf32> to vector<8x1xf32>
    %cst_36 = arith.constant 1.000000e+00 : f32
    %103 = vector.broadcast %cst_36 : f32 to vector<8x1xf32>
    %104 = arith.divf %103, %102 : vector<8x1xf32>
    %105 = vector.broadcast %104 : vector<8x1xf32> to vector<8x8xf32>
    %106 = arith.mulf %100, %105 : vector<8x8xf32>
    %cst_37 = arith.constant dense<0.000000e+00> : vector<8x8xf32>
    %107 = tpu.matmul %106, %93, %cst_37 {dimension_numbers = #tpu.dot_dimension_numbers<[1], [0], [0], [1], [0, 0, 1, 1], [], []>, precision = #tpu.contract_precision<fp32>} : vector<8x8xf32>, vector<8x8xf32>, vector<8x8xf32> -> vector<8x8xf32>
    %108 = tpu.concatenate %56, %73, %90, %107 in 1 : vector<8x8xf32>, vector<8x8xf32>, vector<8x8xf32>, vector<8x8xf32> -> vector<8x32xf32>
    %c0_38 = arith.constant 0 : index
    %c0_39 = arith.constant 0 : index
    %109 = vector.load %arg6[%c0_38, %c0_39] : memref<32x32xf32, #tpu.memory_space<vmem>>, vector<32x32xf32>
    %cst_40 = arith.constant dense<0.000000e+00> : vector<8x32xf32>
    %110 = tpu.matmul %108, %109, %cst_40 {dimension_numbers = #tpu.dot_dimension_numbers<[1], [0], [0], [1], [0, 0, 1, 1], [], []>, precision = #tpu.contract_precision<fp32>} : vector<8x32xf32>, vector<32x32xf32>, vector<8x32xf32> -> vector<8x32xf32>
    %c0_41 = arith.constant 0 : index
    %c0_42 = arith.constant 0 : index
    %111 = vector.load %arg7[%c0_41, %c0_42] : memref<1x32xf32, #tpu.memory_space<vmem>>, vector<1x32xf32>
    %112 = vector.broadcast %111 : vector<1x32xf32> to vector<8x32xf32>
    %113 = arith.addf %110, %112 : vector<8x32xf32>
    %114 = arith.addf %1, %113 : vector<8x32xf32>
    %c0_43 = arith.constant 0 : index
    %c0_44 = arith.constant 0 : index
    %115 = vector.load %arg8[%c0_43, %c0_44] : memref<1x32xf32, #tpu.memory_space<vmem>>, vector<1x32xf32>
    %c0_45 = arith.constant 0 : index
    %c0_46 = arith.constant 0 : index
    %116 = vector.load %arg9[%c0_45, %c0_46] : memref<1x32xf32, #tpu.memory_space<vmem>>, vector<1x32xf32>
    %cst_47 = arith.constant dense<0.000000e+00> : vector<8xf32>
    %117 = vector.multi_reduction <add>, %114, %cst_47 [1] : vector<8x32xf32> to vector<8xf32>
    %118 = vector.shape_cast %117 : vector<8xf32> to vector<8x1xf32>
    %cst_48 = arith.constant 3.200000e+01 : f32
    %119 = vector.broadcast %cst_48 : f32 to vector<8x1xf32>
    %120 = arith.divf %118, %119 : vector<8x1xf32>
    %121 = vector.broadcast %120 : vector<8x1xf32> to vector<8x32xf32>
    %122 = arith.subf %114, %121 : vector<8x32xf32>
    %123 = arith.mulf %122, %122 : vector<8x32xf32>
    %cst_49 = arith.constant dense<0.000000e+00> : vector<8xf32>
    %124 = vector.multi_reduction <add>, %123, %cst_49 [1] : vector<8x32xf32> to vector<8xf32>
    %125 = vector.shape_cast %124 : vector<8xf32> to vector<8x1xf32>
    %cst_50 = arith.constant 3.200000e+01 : f32
    %126 = vector.broadcast %cst_50 : f32 to vector<8x1xf32>
    %127 = arith.divf %125, %126 : vector<8x1xf32>
    %cst_51 = arith.constant 9.99999974E-6 : f32
    %128 = vector.broadcast %cst_51 : f32 to vector<8x1xf32>
    %129 = arith.addf %127, %128 : vector<8x1xf32>
    %130 = math.rsqrt %129 : vector<8x1xf32>
    %131 = vector.broadcast %130 : vector<8x1xf32> to vector<8x32xf32>
    %132 = arith.mulf %122, %131 : vector<8x32xf32>
    %133 = vector.broadcast %115 : vector<1x32xf32> to vector<8x32xf32>
    %134 = arith.mulf %132, %133 : vector<8x32xf32>
    %135 = vector.broadcast %116 : vector<1x32xf32> to vector<8x32xf32>
    %136 = arith.addf %134, %135 : vector<8x32xf32>
    %c0_52 = arith.constant 0 : index
    %c0_53 = arith.constant 0 : index
    %137 = vector.load %arg10[%c0_52, %c0_53] : memref<32x128xf32, #tpu.memory_space<vmem>>, vector<32x128xf32>
    %cst_54 = arith.constant dense<0.000000e+00> : vector<8x128xf32>
    %138 = tpu.matmul %136, %137, %cst_54 {dimension_numbers = #tpu.dot_dimension_numbers<[1], [0], [0], [1], [0, 0, 1, 1], [], []>, precision = #tpu.contract_precision<fp32>} : vector<8x32xf32>, vector<32x128xf32>, vector<8x128xf32> -> vector<8x128xf32>
    %c0_55 = arith.constant 0 : index
    %c0_56 = arith.constant 0 : index
    %139 = vector.load %arg11[%c0_55, %c0_56] : memref<1x128xf32, #tpu.memory_space<vmem>>, vector<1x128xf32>
    %140 = vector.broadcast %139 : vector<1x128xf32> to vector<8x128xf32>
    %141 = arith.addf %138, %140 : vector<8x128xf32>
    %142 = arith.mulf %141, %141 : vector<8x128xf32>
    %143 = arith.mulf %141, %142 : vector<8x128xf32>
    %cst_57 = arith.constant 4.471500e-02 : f32
    %144 = vector.broadcast %cst_57 : f32 to vector<8x128xf32>
    %145 = arith.mulf %144, %143 : vector<8x128xf32>
    %146 = arith.addf %141, %145 : vector<8x128xf32>
    %cst_58 = arith.constant 0.797884583 : f32
    %147 = vector.broadcast %cst_58 : f32 to vector<8x128xf32>
    %148 = arith.mulf %147, %146 : vector<8x128xf32>
    %149 = math.tanh %148 : vector<8x128xf32>
    %cst_59 = arith.constant 1.000000e+00 : f32
    %150 = vector.broadcast %cst_59 : f32 to vector<8x128xf32>
    %151 = arith.addf %150, %149 : vector<8x128xf32>
    %cst_60 = arith.constant 5.000000e-01 : f32
    %152 = vector.broadcast %cst_60 : f32 to vector<8x128xf32>
    %153 = arith.mulf %152, %151 : vector<8x128xf32>
    %154 = arith.mulf %141, %153 : vector<8x128xf32>
    %c0_61 = arith.constant 0 : index
    %c0_62 = arith.constant 0 : index
    %155 = vector.load %arg12[%c0_61, %c0_62] : memref<128x32xf32, #tpu.memory_space<vmem>>, vector<128x32xf32>
    %cst_63 = arith.constant dense<0.000000e+00> : vector<8x32xf32>
    %156 = tpu.matmul %154, %155, %cst_63 {dimension_numbers = #tpu.dot_dimension_numbers<[1], [0], [0], [1], [0, 0, 1, 1], [], []>, precision = #tpu.contract_precision<fp32>} : vector<8x128xf32>, vector<128x32xf32>, vector<8x32xf32> -> vector<8x32xf32>
    %c0_64 = arith.constant 0 : index
    %c0_65 = arith.constant 0 : index
    %157 = vector.load %arg13[%c0_64, %c0_65] : memref<1x32xf32, #tpu.memory_space<vmem>>, vector<1x32xf32>
    %158 = vector.broadcast %157 : vector<1x32xf32> to vector<8x32xf32>
    %159 = arith.addf %156, %158 : vector<8x32xf32>
    %160 = arith.addf %114, %159 : vector<8x32xf32>
    %c0_66 = arith.constant 0 : index
    %c0_67 = arith.constant 0 : index
    %c0_68 = arith.constant 0 : index
    %161 = vector.load %arg14[%c0_66, %c0_67, %c0_68] : memref<1x8x32xf32, #tpu.memory_space<vmem>>, vector<1x8x32xf32>
    %162 = vector.shape_cast %161 : vector<1x8x32xf32> to vector<8x32xf32>
    %163 = vector.shape_cast %160 : vector<8x32xf32> to vector<1x8x32xf32>
    tpu.vector_store %arg14[%c0_66, %c0_67, %c0_68], %163 {strides = array<i32>} : memref<1x8x32xf32, #tpu.memory_space<vmem>>, vector<1x8x32xf32>,
    return
  }
  func.func @transform_0(%arg0: i32) -> (i32, i32, i32) {
    %c0_i32 = arith.constant 0 : i32
    %c0_i32_0 = arith.constant 0 : i32
    %c0_i32_1 = arith.constant 0 : i32
    return %arg0, %c0_i32, %c0_i32_0 : i32, i32, i32
  }
  func.func @transform_1(%arg0: i32) -> (i32, i32) {
    %c0_i32 = arith.constant 0 : i32
    %c0_i32_0 = arith.constant 0 : i32
    %c0_i32_1 = arith.constant 0 : i32
    return %c0_i32, %c0_i32_0 : i32, i32
  }
  func.func @transform_2(%arg0: i32) -> (i32, i32) {
    %c0_i32 = arith.constant 0 : i32
    %c0_i32_0 = arith.constant 0 : i32
    %c0_i32_1 = arith.constant 0 : i32
    return %c0_i32, %c0_i32_0 : i32, i32
  }
  func.func @transform_3(%arg0: i32) -> (i32, i32) {
    %c0_i32 = arith.constant 0 : i32
    %c0_i32_0 = arith.constant 0 : i32
    %c0_i32_1 = arith.constant 0 : i32
    return %c0_i32, %c0_i32_0 : i32, i32
  }
  func.func @transform_4(%arg0: i32) -> (i32, i32) {
    %c0_i32 = arith.constant 0 : i32
    %c0_i32_0 = arith.constant 0 : i32
    %c0_i32_1 = arith.constant 0 : i32
    return %c0_i32, %c0_i32_0 : i32, i32
  }
  func.func @transform_5(%arg0: i32) -> (i32, i32) {
    %c0_i32 = arith.constant 0 : i32
    %c0_i32_0 = arith.constant 0 : i32
    %c0_i32_1 = arith.constant 0 : i32
    return %c0_i32, %c0_i32_0 : i32, i32
  }
  func.func @transform_6(%arg0: i32) -> (i32, i32) {
    %c0_i32 = arith.constant 0 : i32
    %c0_i32_0 = arith.constant 0 : i32
    %c0_i32_1 = arith.constant 0 : i32
    return %c0_i32, %c0_i32_0 : i32, i32
  }
  func.func @transform_7(%arg0: i32) -> (i32, i32) {
    %c0_i32 = arith.constant 0 : i32
    %c0_i32_0 = arith.constant 0 : i32
    %c0_i32_1 = arith.constant 0 : i32
    return %c0_i32, %c0_i32_0 : i32, i32
  }
  func.func @transform_8(%arg0: i32) -> (i32, i32) {
    %c0_i32 = arith.constant 0 : i32
    %c0_i32_0 = arith.constant 0 : i32
    %c0_i32_1 = arith.constant 0 : i32
    return %c0_i32, %c0_i32_0 : i32, i32
  }
  func.func @transform_9(%arg0: i32) -> (i32, i32) {
    %c0_i32 = arith.constant 0 : i32
    %c0_i32_0 = arith.constant 0 : i32
    %c0_i32_1 = arith.constant 0 : i32
    return %c0_i32, %c0_i32_0 : i32, i32
  }
  func.func @transform_10(%arg0: i32) -> (i32, i32) {
    %c0_i32 = arith.constant 0 : i32
    %c0_i32_0 = arith.constant 0 : i32
    %c0_i32_1 = arith.constant 0 : i32
    return %c0_i32, %c0_i32_0 : i32, i32
  }
  func.func @transform_11(%arg0: i32) -> (i32, i32) {
    %c0_i32 = arith.constant 0 : i32
    %c0_i32_0 = arith.constant 0 : i32
    %c0_i32_1 = arith.constant 0 : i32
    return %c0_i32, %c0_i32_0 : i32, i32
  }
  func.func @transform_12(%arg0: i32) -> (i32, i32) {
    %c0_i32 = arith.constant 0 : i32
    %c0_i32_0 = arith.constant 0 : i32
    %c0_i32_1 = arith.constant 0 : i32
    return %c0_i32, %c0_i32_0 : i32, i32
  }
  func.func @transform_13(%arg0: i32) -> (i32, i32, i32) {
    %c0_i32 = arith.constant 0 : i32
    %c0_i32_0 = arith.constant 0 : i32
    %c0_i32_1 = arith.constant 0 : i32
    return %arg0, %c0_i32, %c0_i32_0 : i32, i32, i32
  }
}

</mosaic_0001>

<llo_original>
// kernel: tpu_custom_call.1
$region0: #{tpu_custom_call.1}
  #allocation0 [shape = 'u32[]', space=smem, size = 0x4, offset = 0x4, fixed_abs, tag = 'smem constant byte address 0x4 - core index']
  #allocation1 [shape = 'u32[144,128]{1,0:T(1,128)}', space=vmem, size = 0x12000, scoped, tag = 'internal scratch']
  %s0 = inlined_call_operand.vmem [shape: f32[2,8,32], index: 0, kind: input, shape index: {}]
  %s1 = inlined_call_operand.vmem [shape: f32[1,32], index: 1, kind: input, shape index: {}]
  %s2 = inlined_call_operand.vmem [shape: f32[1,32], index: 2, kind: input, shape index: {}]
  %s3 = inlined_call_operand.vmem [shape: f32[32,96], index: 3, kind: input, shape index: {}]
  %s4 = inlined_call_operand.vmem [shape: f32[1,96], index: 4, kind: input, shape index: {}]
  %s5 = inlined_call_operand.vmem [shape: f32[32,32], index: 5, kind: input, shape index: {}]
  %s6 = inlined_call_operand.vmem [shape: f32[1,32], index: 6, kind: input, shape index: {}]
  %s7 = inlined_call_operand.vmem [shape: f32[1,32], index: 7, kind: input, shape index: {}]
  %s8 = inlined_call_operand.vmem [shape: f32[1,32], index: 8, kind: input, shape index: {}]
  %s9 = inlined_call_operand.vmem [shape: f32[32,128], index: 9, kind: input, shape index: {}]
  %s10 = inlined_call_operand.vmem [shape: f32[1,128], index: 10, kind: input, shape index: {}]
  %s11 = inlined_call_operand.vmem [shape: f32[128,32], index: 11, kind: input, shape index: {}]
  %s12 = inlined_call_operand.vmem [shape: f32[1,32], index: 12, kind: input, shape index: {}]
  %s13 = inlined_call_operand.hbm [shape: f32[2,8,32], index: 13, kind: output, shape index: {}]
  %s14 = sld [smem:[#allocation0]]
  $region85: #{tpu_custom_call.1} parent=0
    _
  %s16 = ssub.s32 1, %s14
  %s17 = scalar_select 0, %s16, %s14
  $region1: #{tpu_custom_call.1} parent=0
    #allocation2 [shape = 'u8[8192]{0}', space=vmem, size = 0x2000, scoped, tag = 'output window, operand 0']
    #allocation3 [shape = 's32[2]{0}', space=sflag, size = 0x8, scoped, tag = 'scoped memory for tpu_custom_call.1']
    %18 = vsyncpa [#allocation3], 0
    %s19 = scalar_lea.sflag [#allocation3], 1
    %20 = vsyncpa %s19, 0
    loop: start=0, step=1, limit=4
    $region2: #{tpu_custom_call.1} parent=1 // loop_pre_header
      _
    $region3: #{tpu_custom_call.1} parent=1 // loop_header
      %s22 = sphi 0, %s26
      %p23 = scmp.ge.s32.totalorder %s22, 4
      %s32 = sphi 0, %s34
      %s35 = sphi 0, %s32
      %s36 = sphi 0, %s35
      %s52 = sphi 0, %s36
      %s56 = sphi 0, %s56
      %s58 = sphi 0, %s56
      %s59 = sphi 0, %s58
      %s73 = sphi 0, %s59
      %s77 = sphi 0, %s77
      %s79 = sphi 0, %s77
      %s80 = sphi 0, %s79
      %s94 = sphi 0, %s80
      %s98 = sphi 0, %s98
      %s100 = sphi 0, %s98
      %s101 = sphi 0, %s100
      %s115 = sphi 0, %s101
      %s119 = sphi 0, %s119
      %s121 = sphi 0, %s119
      %s122 = sphi 0, %s121
      %s136 = sphi 0, %s122
      %s140 = sphi 0, %s140
      %s142 = sphi 0, %s140
      %s143 = sphi 0, %s142
      %s157 = sphi 0, %s143
      %s161 = sphi 0, %s161
      %s163 = sphi 0, %s161
      %s164 = sphi 0, %s163
      %s178 = sphi 0, %s164
      %s182 = sphi 0, %s182
      %s184 = sphi 0, %s182
      %s185 = sphi 0, %s184
      %s199 = sphi 0, %s185
      %s203 = sphi 0, %s203
      %s205 = sphi 0, %s203
      %s206 = sphi 0, %s205
      %s220 = sphi 0, %s206
      %s224 = sphi 0, %s224
      %s226 = sphi 0, %s224
      %s227 = sphi 0, %s226
      %s241 = sphi 0, %s227
      %s245 = sphi 0, %s245
      %s247 = sphi 0, %s245
      %s248 = sphi 0, %s247
      %s262 = sphi 0, %s248
      %s266 = sphi 0, %s266
      %s268 = sphi 0, %s266
      %s269 = sphi 0, %s268
      %s283 = sphi 0, %s269
      %s287 = sphi 0, %s287
      %s289 = sphi 0, %s287
      %s290 = sphi 0, %s289
      %s304 = sphi 0, %s290
      %s310 = sphi 0, %s312
      %s313 = sphi 0, %s310
      %s314 = sphi 0, %s313
      %s330 = sphi 0, %s314
    $region4: #{tpu_custom_call.1} parent=1 // loop_header_branch
      %25 = sbr.rel (%p23) target = $region8
    $region5: #{tpu_custom_call.1} parent=1 // loop_body
      %s27 = ssub.s32 %s22, 1
      %s28 = ssub.s32 %s22, 2
      %s29 = sadd.s32 %s22, 1
      %s30 = ssub.s32 %s22, %s29
      %p31 = scmp.eq.s32.totalorder %s30, 0
      %s33 = sadd.s32 %s32, 1
      %s34 = scalar_select %p31, %s32, %s33
      %p37 = pneg %p31
      %p38 = scmp.eq.s32.totalorder %s22, 1
      %p39 = por %p37, %p38
      %p40 = scmp.ne.s32.totalorder %s32, %s35
      %p41 = scmp.eq.s32.totalorder %s22, 0
      %p42 = por %p40, %p41
      %p43 = scmp.ne.s32.totalorder %s32, %s35
      %p44 = scmp.eq.s32.totalorder %s27, 1
      %p45 = por %p43, %p44
      %p46 = scmp.ne.s32.totalorder %s35, %s36
      %p47 = scmp.eq.s32.totalorder %s27, 0
      %p48 = por %p46, %p47
      %p49 = scmp.ne.s32.totalorder %s35, %s36
      %p50 = scmp.eq.s32.totalorder %s28, 1
      %p51 = por %p49, %p50
      %p53 = scmp.ne.s32.totalorder %s36, %s52
      %p54 = scmp.eq.s32.totalorder %s28, 0
      %p55 = por %p53, %p54
      %s57 = sadd.s32 %s56, 1
      %p60 = scmp.eq.s32.totalorder %s22, 1
      %p61 = scmp.ne.s32.totalorder %s56, %s58
      %p62 = scmp.eq.s32.totalorder %s22, 0
      %p63 = por %p61, %p62
      %p64 = scmp.ne.s32.totalorder %s56, %s58
      %p65 = scmp.eq.s32.totalorder %s27, 1
      %p66 = por %p64, %p65
      %p67 = scmp.ne.s32.totalorder %s58, %s59
      %p68 = scmp.eq.s32.totalorder %s27, 0
      %p69 = por %p67, %p68
      %p70 = scmp.ne.s32.totalorder %s58, %s59
      %p71 = scmp.eq.s32.totalorder %s28, 1
      %p72 = por %p70, %p71
      %p74 = scmp.ne.s32.totalorder %s59, %s73
      %p75 = scmp.eq.s32.totalorder %s28, 0
      %p76 = por %p74, %p75
      %s78 = sadd.s32 %s77, 1
      %p81 = scmp.eq.s32.totalorder %s22, 1
      %p82 = scmp.ne.s32.totalorder %s77, %s79
      %p83 = scmp.eq.s32.totalorder %s22, 0
      %p84 = por %p82, %p83
      %p85 = scmp.ne.s32.totalorder %s77, %s79
      %p86 = scmp.eq.s32.totalorder %s27, 1
      %p87 = por %p85, %p86
      %p88 = scmp.ne.s32.totalorder %s79, %s80
      %p89 = scmp.eq.s32.totalorder %s27, 0
      %p90 = por %p88, %p89
      %p91 = scmp.ne.s32.totalorder %s79, %s80
      %p92 = scmp.eq.s32.totalorder %s28, 1
      %p93 = por %p91, %p92
      %p95 = scmp.ne.s32.totalorder %s80, %s94
      %p96 = scmp.eq.s32.totalorder %s28, 0
      %p97 = por %p95, %p96
      %s99 = sadd.s32 %s98, 1
      %p102 = scmp.eq.s32.totalorder %s22, 1
      %p103 = scmp.ne.s32.totalorder %s98, %s100
      %p104 = scmp.eq.s32.totalorder %s22, 0
      %p105 = por %p103, %p104
      %p106 = scmp.ne.s32.totalorder %s98, %s100
      %p107 = scmp.eq.s32.totalorder %s27, 1
      %p108 = por %p106, %p107
      %p109 = scmp.ne.s32.totalorder %s100, %s101
      %p110 = scmp.eq.s32.totalorder %s27, 0
      %p111 = por %p109, %p110
      %p112 = scmp.ne.s32.totalorder %s100, %s101
      %p113 = scmp.eq.s32.totalorder %s28, 1
      %p114 = por %p112, %p113
      %p116 = scmp.ne.s32.totalorder %s101, %s115
      %p117 = scmp.eq.s32.totalorder %s28, 0
      %p118 = por %p116, %p117
      %s120 = sadd.s32 %s119, 1
      %p123 = scmp.eq.s32.totalorder %s22, 1
      %p124 = scmp.ne.s32.totalorder %s119, %s121
      %p125 = scmp.eq.s32.totalorder %s22, 0
      %p126 = por %p124, %p125
      %p127 = scmp.ne.s32.totalorder %s119, %s121
      %p128 = scmp.eq.s32.totalorder %s27, 1
      %p129 = por %p127, %p128
      %p130 = scmp.ne.s32.totalorder %s121, %s122
      %p131 = scmp.eq.s32.totalorder %s27, 0
      %p132 = por %p130, %p131
      %p133 = scmp.ne.s32.totalorder %s121, %s122
      %p134 = scmp.eq.s32.totalorder %s28, 1
      %p135 = por %p133, %p134
      %p137 = scmp.ne.s32.totalorder %s122, %s136
      %p138 = scmp.eq.s32.totalorder %s28, 0
      %p139 = por %p137, %p138
      %s141 = sadd.s32 %s140, 1
      %p144 = scmp.eq.s32.totalorder %s22, 1
      %p145 = scmp.ne.s32.totalorder %s140, %s142
      %p146 = scmp.eq.s32.totalorder %s22, 0
      %p147 = por %p145, %p146
      %p148 = scmp.ne.s32.totalorder %s140, %s142
      %p149 = scmp.eq.s32.totalorder %s27, 1
      %p150 = por %p148, %p149
      %p151 = scmp.ne.s32.totalorder %s142, %s143
      %p152 = scmp.eq.s32.totalorder %s27, 0
      %p153 = por %p151, %p152
      %p154 = scmp.ne.s32.totalorder %s142, %s143
      %p155 = scmp.eq.s32.totalorder %s28, 1
      %p156 = por %p154, %p155
      %p158 = scmp.ne.s32.totalorder %s143, %s157
      %p159 = scmp.eq.s32.totalorder %s28, 0
      %p160 = por %p158, %p159
      %s162 = sadd.s32 %s161, 1
      %p165 = scmp.eq.s32.totalorder %s22, 1
      %p166 = scmp.ne.s32.totalorder %s161, %s163
      %p167 = scmp.eq.s32.totalorder %s22, 0
      %p168 = por %p166, %p167
      %p169 = scmp.ne.s32.totalorder %s161, %s163
      %p170 = scmp.eq.s32.totalorder %s27, 1
      %p171 = por %p169, %p170
      %p172 = scmp.ne.s32.totalorder %s163, %s164
      %p173 = scmp.eq.s32.totalorder %s27, 0
      %p174 = por %p172, %p173
      %p175 = scmp.ne.s32.totalorder %s163, %s164
      %p176 = scmp.eq.s32.totalorder %s28, 1
      %p177 = por %p175, %p176
      %p179 = scmp.ne.s32.totalorder %s164, %s178
      %p180 = scmp.eq.s32.totalorder %s28, 0
      %p181 = por %p179, %p180
      %s183 = sadd.s32 %s182, 1
      %p186 = scmp.eq.s32.totalorder %s22, 1
      %p187 = scmp.ne.s32.totalorder %s182, %s184
      %p188 = scmp.eq.s32.totalorder %s22, 0
      %p189 = por %p187, %p188
      %p190 = scmp.ne.s32.totalorder %s182, %s184
      %p191 = scmp.eq.s32.totalorder %s27, 1
      %p192 = por %p190, %p191
      %p193 = scmp.ne.s32.totalorder %s184, %s185
      %p194 = scmp.eq.s32.totalorder %s27, 0
      %p195 = por %p193, %p194
      %p196 = scmp.ne.s32.totalorder %s184, %s185
      %p197 = scmp.eq.s32.totalorder %s28, 1
      %p198 = por %p196, %p197
      %p200 = scmp.ne.s32.totalorder %s185, %s199
      %p201 = scmp.eq.s32.totalorder %s28, 0
      %p202 = por %p200, %p201
      %s204 = sadd.s32 %s203, 1
      %p207 = scmp.eq.s32.totalorder %s22, 1
      %p208 = scmp.ne.s32.totalorder %s203, %s205
      %p209 = scmp.eq.s32.totalorder %s22, 0
      %p210 = por %p208, %p209
      %p211 = scmp.ne.s32.totalorder %s203, %s205
      %p212 = scmp.eq.s32.totalorder %s27, 1
      %p213 = por %p211, %p212
      %p214 = scmp.ne.s32.totalorder %s205, %s206
      %p215 = scmp.eq.s32.totalorder %s27, 0
      %p216 = por %p214, %p215
      %p217 = scmp.ne.s32.totalorder %s205, %s206
      %p218 = scmp.eq.s32.totalorder %s28, 1
      %p219 = por %p217, %p218
      %p221 = scmp.ne.s32.totalorder %s206, %s220
      %p222 = scmp.eq.s32.totalorder %s28, 0
      %p223 = por %p221, %p222
      %s225 = sadd.s32 %s224, 1
      %p228 = scmp.eq.s32.totalorder %s22, 1
      %p229 = scmp.ne.s32.totalorder %s224, %s226
      %p230 = scmp.eq.s32.totalorder %s22, 0
      %p231 = por %p229, %p230
      %p232 = scmp.ne.s32.totalorder %s224, %s226
      %p233 = scmp.eq.s32.totalorder %s27, 1
      %p234 = por %p232, %p233
      %p235 = scmp.ne.s32.totalorder %s226, %s227
      %p236 = scmp.eq.s32.totalorder %s27, 0
      %p237 = por %p235, %p236
      %p238 = scmp.ne.s32.totalorder %s226, %s227
      %p239 = scmp.eq.s32.totalorder %s28, 1
      %p240 = por %p238, %p239
      %p242 = scmp.ne.s32.totalorder %s227, %s241
      %p243 = scmp.eq.s32.totalorder %s28, 0
      %p244 = por %p242, %p243
      %s246 = sadd.s32 %s245, 1
      %p249 = scmp.eq.s32.totalorder %s22, 1
      %p250 = scmp.ne.s32.totalorder %s245, %s247
      %p251 = scmp.eq.s32.totalorder %s22, 0
      %p252 = por %p250, %p251
      %p253 = scmp.ne.s32.totalorder %s245, %s247
      %p254 = scmp.eq.s32.totalorder %s27, 1
      %p255 = por %p253, %p254
      %p256 = scmp.ne.s32.totalorder %s247, %s248
      %p257 = scmp.eq.s32.totalorder %s27, 0
      %p258 = por %p256, %p257
      %p259 = scmp.ne.s32.totalorder %s247, %s248
      %p260 = scmp.eq.s32.totalorder %s28, 1
      %p261 = por %p259, %p260
      %p263 = scmp.ne.s32.totalorder %s248, %s262
      %p264 = scmp.eq.s32.totalorder %s28, 0
      %p265 = por %p263, %p264
      %s267 = sadd.s32 %s266, 1
      %p270 = scmp.eq.s32.totalorder %s22, 1
      %p271 = scmp.ne.s32.totalorder %s266, %s268
      %p272 = scmp.eq.s32.totalorder %s22, 0
      %p273 = por %p271, %p272
      %p274 = scmp.ne.s32.totalorder %s266, %s268
      %p275 = scmp.eq.s32.totalorder %s27, 1
      %p276 = por %p274, %p275
      %p277 = scmp.ne.s32.totalorder %s268, %s269
      %p278 = scmp.eq.s32.totalorder %s27, 0
      %p279 = por %p277, %p278
      %p280 = scmp.ne.s32.totalorder %s268, %s269
      %p281 = scmp.eq.s32.totalorder %s28, 1
      %p282 = por %p280, %p281
      %p284 = scmp.ne.s32.totalorder %s269, %s283
      %p285 = scmp.eq.s32.totalorder %s28, 0
      %p286 = por %p284, %p285
      %s288 = sadd.s32 %s287, 1
      %p291 = scmp.eq.s32.totalorder %s22, 1
      %p292 = scmp.ne.s32.totalorder %s287, %s289
      %p293 = scmp.eq.s32.totalorder %s22, 0
      %p294 = por %p292, %p293
      %p295 = scmp.ne.s32.totalorder %s287, %s289
      %p296 = scmp.eq.s32.totalorder %s27, 1
      %p297 = por %p295, %p296
      %p298 = scmp.ne.s32.totalorder %s289, %s290
      %p299 = scmp.eq.s32.totalorder %s27, 0
      %p300 = por %p298, %p299
      %p301 = scmp.ne.s32.totalorder %s289, %s290
      %p302 = scmp.eq.s32.totalorder %s28, 1
      %p303 = por %p301, %p302
      %p305 = scmp.ne.s32.totalorder %s290, %s304
      %p306 = scmp.eq.s32.totalorder %s28, 0
      %p307 = por %p305, %p306
      %s308 = ssub.s32 %s22, %s29
      %p309 = scmp.eq.s32.totalorder %s308, 0
      %s311 = sadd.s32 %s310, 1
      %s312 = scalar_select %p309, %s310, %s311
      %p315 = pneg %p309
      %p316 = scmp.eq.s32.totalorder %s22, 1
      %p317 = por %p315, %p316
      %p318 = scmp.ne.s32.totalorder %s310, %s313
      %p319 = scmp.eq.s32.totalorder %s22, 0
      %p320 = por %p318, %p319
      %p321 = scmp.ne.s32.totalorder %s310, %s313
      %p322 = scmp.eq.s32.totalorder %s27, 1
      %p323 = por %p321, %p322
      %p324 = scmp.ne.s32.totalorder %s313, %s314
      %p325 = scmp.eq.s32.totalorder %s27, 0
      %p326 = por %p324, %p325
      %p327 = scmp.ne.s32.totalorder %s313, %s314
      %p328 = scmp.eq.s32.totalorder %s28, 1
      %p329 = por %p327, %p328
      %p331 = scmp.ne.s32.totalorder %s314, %s330
      %p332 = scmp.eq.s32.totalorder %s28, 0
      %p333 = por %p331, %p332
      %p334 = scmp.le.s32.totalorder 1, %s22
      %p335 = scmp.lt.s32.totalorder %s22, 3
      %p336 = pnand %p334, %p335
      %p337 = pneg %p336
      // Predicated region
      $region9: #{tpu_custom_call.1} parent=5 // pred_check
        _
      $region10: #{tpu_custom_call.1} parent=5 // pred_check_branch
        %339 = sbr.rel (%p336) target = $region12
      $region11: #{tpu_custom_call.1} parent=5 // pred_region
        %s340 = ssub.s32 %s22, 1
        // Predicated region
        $region13: #{tpu_custom_call.1} parent=11 // pred_check
          %p341 = pneg %p69
        $region14: #{tpu_custom_call.1} parent=11 // pred_check_branch
          %343 = sbr.rel (%p341) target = $region16
        $region15: #{tpu_custom_call.1} parent=11 // pred_region
          _
        $region16: #{tpu_custom_call.1} parent=11 // pred_fallthru
          _
        // Predicated region
        $region17: #{tpu_custom_call.1} parent=11 // pred_check
          %p344 = pneg %p90
        $region18: #{tpu_custom_call.1} parent=11 // pred_check_branch
          %346 = sbr.rel (%p344) target = $region20
        $region19: #{tpu_custom_call.1} parent=11 // pred_region
          _
        $region20: #{tpu_custom_call.1} parent=11 // pred_fallthru
          _
        // Predicated region
        $region21: #{tpu_custom_call.1} parent=11 // pred_check
          %p347 = pneg %p111
        $region22: #{tpu_custom_call.1} parent=11 // pred_check_branch
          %349 = sbr.rel (%p347) target = $region24
        $region23: #{tpu_custom_call.1} parent=11 // pred_region
          _
        $region24: #{tpu_custom_call.1} parent=11 // pred_fallthru
          _
        // Predicated region
        $region25: #{tpu_custom_call.1} parent=11 // pred_check
          %p350 = pneg %p132
        $region26: #{tpu_custom_call.1} parent=11 // pred_check_branch
          %352 = sbr.rel (%p350) target = $region28
        $region27: #{tpu_custom_call.1} parent=11 // pred_region
          _
        $region28: #{tpu_custom_call.1} parent=11 // pred_fallthru
          _
        // Predicated region
        $region29: #{tpu_custom_call.1} parent=11 // pred_check
          %p353 = pneg %p153
        $region30: #{tpu_custom_call.1} parent=11 // pred_check_branch
          %355 = sbr.rel (%p353) target = $region32
        $region31: #{tpu_custom_call.1} parent=11 // pred_region
          _
        $region32: #{tpu_custom_call.1} parent=11 // pred_fallthru
          _
        // Predicated region
        $region33: #{tpu_custom_call.1} parent=11 // pred_check
          %p356 = pneg %p174
        $region34: #{tpu_custom_call.1} parent=11 // pred_check_branch
          %358 = sbr.rel (%p356) target = $region36
        $region35: #{tpu_custom_call.1} parent=11 // pred_region
          _
        $region36: #{tpu_custom_call.1} parent=11 // pred_fallthru
          _
        // Predicated region
        $region37: #{tpu_custom_call.1} parent=11 // pred_check
          %p359 = pneg %p195
        $region38: #{tpu_custom_call.1} parent=11 // pred_check_branch
          %361 = sbr.rel (%p359) target = $region40
        $region39: #{tpu_custom_call.1} parent=11 // pred_region
          _
        $region40: #{tpu_custom_call.1} parent=11 // pred_fallthru
          _
        // Predicated region
        $region41: #{tpu_custom_call.1} parent=11 // pred_check
          %p362 = pneg %p216
        $region42: #{tpu_custom_call.1} parent=11 // pred_check_branch
          %364 = sbr.rel (%p362) target = $region44
        $region43: #{tpu_custom_call.1} parent=11 // pred_region
          _
        $region44: #{tpu_custom_call.1} parent=11 // pred_fallthru
          _
        // Predicated region
        $region45: #{tpu_custom_call.1} parent=11 // pred_check
          %p365 = pneg %p237
        $region46: #{tpu_custom_call.1} parent=11 // pred_check_branch
          %367 = sbr.rel (%p365) target = $region48
        $region47: #{tpu_custom_call.1} parent=11 // pred_region
          _
        $region48: #{tpu_custom_call.1} parent=11 // pred_fallthru
          _
        // Predicated region
        $region49: #{tpu_custom_call.1} parent=11 // pred_check
          %p368 = pneg %p258
        $region50: #{tpu_custom_call.1} parent=11 // pred_check_branch
          %370 = sbr.rel (%p368) target = $region52
        $region51: #{tpu_custom_call.1} parent=11 // pred_region
          _
        $region52: #{tpu_custom_call.1} parent=11 // pred_fallthru
          _
        // Predicated region
        $region53: #{tpu_custom_call.1} parent=11 // pred_check
          %p371 = pneg %p279
        $region54: #{tpu_custom_call.1} parent=11 // pred_check_branch
          %373 = sbr.rel (%p371) target = $region56
        $region55: #{tpu_custom_call.1} parent=11 // pred_region
          _
        $region56: #{tpu_custom_call.1} parent=11 // pred_fallthru
          _
        // Predicated region
        $region57: #{tpu_custom_call.1} parent=11 // pred_check
          %p374 = pneg %p300
        $region58: #{tpu_custom_call.1} parent=11 // pred_check_branch
          %376 = sbr.rel (%p374) target = $region60
        $region59: #{tpu_custom_call.1} parent=11 // pred_region
          _
        $region60: #{tpu_custom_call.1} parent=11 // pred_fallthru
          _
      $region12: #{tpu_custom_call.1} parent=5 // pred_fallthru
        _
      %p377 = scmp.lt.s32.totalorder %s22, 2
      // Predicated region
      $region61: #{tpu_custom_call.1} parent=5 // pred_check
        %p378 = pneg %p377
      $region62: #{tpu_custom_call.1} parent=5 // pred_check_branch
        %380 = sbr.rel (%p378) target = $region64
      $region63: #{tpu_custom_call.1} parent=5 // pred_region
        // Predicated region
        $region65: #{tpu_custom_call.1} parent=63 // pred_check
          %p381 = pneg %p42
        $region66: #{tpu_custom_call.1} parent=63 // pred_check_branch
          %383 = sbr.rel (%p381) target = $region68
        $region67: #{tpu_custom_call.1} parent=63 // pred_region
          %p384 = scmp.lt.s32.totalorder %s22, 1
          %s385 = scalar_select %p384, %s22, 1
          %s386 = smul.addr %s385, 8
          %s387 = scalar_lea.vmem %s0, %s386
        $region68: #{tpu_custom_call.1} parent=63 // pred_fallthru
          _
      $region64: #{tpu_custom_call.1} parent=5 // pred_fallthru
        _
      %p388 = scmp.le.s32.totalorder 1, %s22
      %p389 = scmp.lt.s32.totalorder %s22, 3
      %p390 = pnand %p388, %p389
      %p391 = pneg %p390
      // Predicated region
      $region69: #{tpu_custom_call.1} parent=5 // pred_check
        _
      $region70: #{tpu_custom_call.1} parent=5 // pred_check_branch
        %393 = sbr.rel (%p390) target = $region72
      $region71: #{tpu_custom_call.1} parent=5 // pred_region
        %s394 = ssub.s32 %s22, 1
        %p395 = scmp.lt.s32.totalorder %s27, 1
        %s396 = scalar_select %p395, %s27, 1
        %s397 = smul.addr %s396, 8
        %s398 = scalar_lea.vmem %s0, %s397
        %p399 = pneg %p48
        %p400 = pneg %p45
        %p401 = pneg %p69
        %p402 = pneg %p66
        %p403 = pneg %p90
        %p404 = pneg %p87
        %p405 = pneg %p111
        %p406 = pneg %p108
        %p407 = pneg %p132
        %p408 = pneg %p129
        %p409 = pneg %p153
        %p410 = pneg %p150
        %p411 = pneg %p174
        %p412 = pneg %p171
        %p413 = pneg %p195
        %p414 = pneg %p192
        %p415 = pneg %p216
        %p416 = pneg %p213
        %p417 = pneg %p237
        %p418 = pneg %p234
        %p419 = pneg %p258
        %p420 = pneg %p255
        %p421 = pneg %p279
        %p422 = pneg %p276
        %p423 = pneg %p300
        %p424 = pneg %p297
        %p425 = pneg %p326
        %p426 = pneg %p323
        %s427 = sand.u32 %s313, 1
        %s428 = scalar_lea.sflag [#allocation3], %s427
        %s429 = sand.u32 %s313, 1
        %s430 = smul.addr %s429, 8
        %s431 = scalar_lea.vmem [#allocation2], %s430
        %p432 = scmp.lt.s32.totalorder %s27, 1
        %s433 = scalar_select %p432, %s27, 1
        %s434 = smul.addr %s433, 8
        %s435 = scalar_lea.vmem %s0, %s434
        %v436 = vld [vmem:[%s435] sm:$0xff]
        %v437 = vld [vmem:[%s1] sm:$0x1]
        %v438 = vld [vmem:[%s2] sm:$0x1]
        %vm439 = vcmask 261120
        %v440 = vsel %vm439, %v436, 0.0
        %441 = vadd.xlane.f32.xlu0 %v440
        %v442 = vpop.xlane.xlu0 %441
        %v443 = vrcp.pop 32.0
        %v444 = vmul.f32 %v442, %v443
        %v445 = vsub.f32 %v436, %v444
        %v446 = vmul.f32 %v445, %v445
        %v447 = vsel %vm439, %v446, 0.0
        %448 = vadd.xlane.f32.xlu0 %v447
        %v449 = vpop.xlane.xlu0 %448
        %v450 = vmul.f32 %v449, %v443
        %v451 = vadd.f32 %v450, 1e-05
        %v452 = vrsqrt.pop %v451
        %v453 = vmul.f32 %v445, %v452
        %v455 = vlaneseq
        %v456 = vshrl.u32 %v455, 7
        %v457 = vsub.s32 0, %v456
        %v458 = vrot.slane %v437, %v457
        %v460 = vmul.f32 %v453, %v458
        %v462 = vlaneseq
        %v463 = vshrl.u32 %v462, 7
        %v464 = vsub.s32 0, %v463
        %v465 = vrot.slane %v438, %v464
        %v467 = vadd.f32 %v460, %v465
        %v468 = vld [vmem:[%s3] sm:$0xff]
        %v469 = vld [vmem:[%s3 + $0x8] sm:$0xff]
        %v470 = vld [vmem:[%s3 + $0x10] sm:$0xff]
        %v471 = vld [vmem:[%s3 + $0x18] sm:$0xff]
        %v472 = vld [vmem:[%s4] sm:$0x1]
        %v474 = vlaneseq
        %v475 = vshrl.u32 %v474, 7
        %v476 = vsub.s32 0, %v475
        %v477 = vrot.slane %v472, %v476
        %v480 = vsel %vm439, %v467, 0
        %482 = vmatprep.subr.mxu0 0.0
        %v483 = vand.u32 %v468, 4294901760
        %484 = vmatpush1.msra.mxu0 %v483
        %485 = vmatprep.subr.mxu0 0.0
        %v486 = vand.u32 %v469, 4294901760
        %487 = vmatpush1.msra.mxu0 %v486
        %488 = vmatprep.subr.mxu0 0.0
        %v489 = vand.u32 %v470, 4294901760
        %490 = vmatpush1.msra.mxu0 %v489
        %491 = vmatprep.subr.mxu0 0.0
        %v492 = vand.u32 %v471, 4294901760
        %493 = vmatpush1.msra.mxu0 %v492
        %494 = vmatprep.subr.mxu0 0.0
        %495 = vmatpush1.msra.mxu0 0.0
        %496 = vmatprep.subr.mxu0 0.0
        %497 = vmatpush1.msra.mxu0 0.0
        %498 = vmatprep.subr.mxu0 0.0
        %499 = vmatpush1.msra.mxu0 0.0
        %500 = vmatprep.subr.mxu0 0.0
        %501 = vmatpush1.msra.mxu0 0.0
        %502 = vmatprep.subr.mxu0 0.0
        %503 = vmatpush1.msra.mxu0 0.0
        %504 = vmatprep.subr.mxu0 0.0
        %505 = vmatpush1.msra.mxu0 0.0
        %506 = vmatprep.subr.mxu0 0.0
        %507 = vmatpush1.msra.mxu0 0.0
        %508 = vmatprep.subr.mxu0 0.0
        %509 = vmatpush1.msra.mxu0 0.0
        %510 = vmatprep.subr.mxu0 0.0
        %511 = vmatpush1.msra.mxu0 0.0
        %512 = vmatprep.subr.mxu0 0.0
        %513 = vmatpush1.msra.mxu0 0.0
        %514 = vmatprep.subr.mxu0 0.0
        %515 = vmatpush1.msra.mxu0 0.0
        %516 = vmatprep.subr.mxu0 0.0
        %517 = vmatpush1.msra.mxu0 0.0
        %518 = vmatprep.subr.mxu0 0.0
        %519 = vmatpush1.msra.mxu0 0.0
        %520 = vmatprep.subr.mxu0 0.0
        %521 = vmatpush1.msra.mxu0 0.0
        %522 = vmatprep.subr.mxu0 0.0
        %523 = vmatpush1.msra.mxu0 0.0
        %524 = vmatprep.subr.mxu0 0.0
        %525 = vmatpush1.msra.mxu0 0.0
        %526 = vmatprep.subr.mxu0 0.0
        %527 = vmatpush1.msra.mxu0 0.0
        %528 = vmatprep.subr.mxu0 0.0
        %529 = vmatpush1.msra.mxu0 0.0
        %530 = vmatprep.subr.mxu0 0.0
        %531 = vmatpush1.msra.mxu0 0.0
        %532 = vmatprep.subr.mxu0 0.0
        %533 = vmatpush1.msra.mxu0 0.0
        %534 = vmatprep.subr.mxu0 0.0
        %535 = vmatpush1.msra.mxu0 0.0
        %536 = vmatprep.subr.mxu0 0.0
        %537 = vmatpush1.msra.mxu0 0.0
        %538 = vmatprep.subr.mxu0 0.0
        %539 = vmatpush1.msra.mxu0 0.0
        %540 = vmatprep.subr.mxu0 0.0
        %541 = vmatpush1.msra.mxu0 0.0
        %542 = vmatprep.subr.mxu0 0.0
        %543 = vmatpush1.msra.mxu0 0.0
        %544 = vmatprep.subr.mxu0 0.0
        %545 = vmatpush1.msra.mxu0 0.0
        %546 = vmatprep.subr.mxu0 0.0
        %547 = vmatpush1.msra.mxu0 0.0
        %548 = vmatprep.subr.mxu0 0.0
        %549 = vmatpush1.msra.mxu0 0.0
        %550 = vmatprep.mubr.f32.mxu0 0.0
        %v551 = vand.u32 %v480, 4294901760
        %v552 = vsub.f32 %v480, %v551
        %v553 = vand.u32 %v552, 4294901760
        %v554 = vsub.f32 %v552, %v553
        %v555 = vand.u32 %v554, 4294901760
        %556 = vmatmul.mubr.f32.gmra.mrb[0].mxu0 %v555
        %v557 = vpop.f32.mrb[0].mxu0
        %v558 = vadd.f32 %v477, %v557
        %v559 = vpop.f32.mrb[0].mxu0
        %560 = vdwg.mxu0
        %561 = vmatprep.subr.mxu0 0.0
        %v562 = vand.u32 %v468, 4294901760
        %v563 = vsub.f32 %v468, %v562
        %v564 = vand.u32 %v563, 4294901760
        %v565 = vsub.f32 %v563, %v564
        %v566 = vand.u32 %v565, 4294901760
        %567 = vmatpush1.msra.mxu0 %v566
        %568 = vmatprep.subr.mxu0 0.0
        %v569 = vand.u32 %v469, 4294901760
        %v570 = vsub.f32 %v469, %v569
        %v571 = vand.u32 %v570, 4294901760
        %v572 = vsub.f32 %v570, %v571
        %v573 = vand.u32 %v572, 4294901760
        %574 = vmatpush1.msra.mxu0 %v573
        %575 = vmatprep.subr.mxu0 0.0
        %v576 = vand.u32 %v470, 4294901760
        %v577 = vsub.f32 %v470, %v576
        %v578 = vand.u32 %v577, 4294901760
        %v579 = vsub.f32 %v577, %v578
        %v580 = vand.u32 %v579, 4294901760
        %581 = vmatpush1.msra.mxu0 %v580
        %582 = vmatprep.subr.mxu0 0.0
        %v583 = vand.u32 %v471, 4294901760
        %v584 = vsub.f32 %v471, %v583
        %v585 = vand.u32 %v584, 4294901760
        %v586 = vsub.f32 %v584, %v585
        %v587 = vand.u32 %v586, 4294901760
        %588 = vmatpush1.msra.mxu0 %v587
        %589 = vmatprep.subr.mxu0 0.0
        %590 = vmatpush1.msra.mxu0 0.0
        %591 = vmatprep.subr.mxu0 0.0
        %592 = vmatpush1.msra.mxu0 0.0
        %593 = vmatprep.subr.mxu0 0.0
        %594 = vmatpush1.msra.mxu0 0.0
        %595 = vmatprep.subr.mxu0 0.0
        %596 = vmatpush1.msra.mxu0 0.0
        %597 = vmatprep.subr.mxu0 0.0
        %598 = vmatpush1.msra.mxu0 0.0
        %599 = vmatprep.subr.mxu0 0.0
        %600 = vmatpush1.msra.mxu0 0.0
        %601 = vmatprep.subr.mxu0 0.0
        %602 = vmatpush1.msra.mxu0 0.0
        %603 = vmatprep.subr.mxu0 0.0
        %604 = vmatpush1.msra.mxu0 0.0
        %605 = vmatprep.subr.mxu0 0.0
        %606 = vmatpush1.msra.mxu0 0.0
        %607 = vmatprep.subr.mxu0 0.0
        %608 = vmatpush1.msra.mxu0 0.0
        %609 = vmatprep.subr.mxu0 0.0
        %610 = vmatpush1.msra.mxu0 0.0
        %611 = vmatprep.subr.mxu0 0.0
        %612 = vmatpush1.msra.mxu0 0.0
        %613 = vmatprep.subr.mxu0 0.0
        %614 = vmatpush1.msra.mxu0 0.0
        %615 = vmatprep.subr.mxu0 0.0
        %616 = vmatpush1.msra.mxu0 0.0
        %617 = vmatprep.subr.mxu0 0.0
        %618 = vmatpush1.msra.mxu0 0.0
        %619 = vmatprep.subr.mxu0 0.0
        %620 = vmatpush1.msra.mxu0 0.0
        %621 = vmatprep.subr.mxu0 0.0
        %622 = vmatpush1.msra.mxu0 0.0
        %623 = vmatprep.subr.mxu0 0.0
        %624 = vmatpush1.msra.mxu0 0.0
        %625 = vmatprep.subr.mxu0 0.0
        %626 = vmatpush1.msra.mxu0 0.0
        %627 = vmatprep.subr.mxu0 0.0
        %628 = vmatpush1.msra.mxu0 0.0
        %629 = vmatprep.subr.mxu0 0.0
        %630 = vmatpush1.msra.mxu0 0.0
        %631 = vmatprep.subr.mxu0 0.0
        %632 = vmatpush1.msra.mxu0 0.0
        %633 = vmatprep.subr.mxu0 0.0
        %634 = vmatpush1.msra.mxu0 0.0
        %635 = vmatprep.subr.mxu0 0.0
        %636 = vmatpush1.msra.mxu0 0.0
        %637 = vmatprep.subr.mxu0 0.0
        %638 = vmatpush1.msra.mxu0 0.0
        %639 = vmatprep.subr.mxu0 0.0
        %640 = vmatpush1.msra.mxu0 0.0
        %641 = vmatprep.subr.mxu0 0.0
        %642 = vmatpush1.msra.mxu0 0.0
        %643 = vmatprep.subr.mxu0 0.0
        %644 = vmatpush1.msra.mxu0 0.0
        %645 = vmatprep.mubr.f32.mxu0 0.0
        %v646 = vand.u32 %v480, 4294901760
        %647 = vmatmul.mubr.f32.gmra.mrb[0].mxu0 %v646
        %v648 = vpop.f32.mrb[0].mxu0
        %v649 = vadd.f32 %v558, %v648
        %v650 = vpop.f32.mrb[0].mxu0
        %651 = vdwg.mxu0
        %652 = vmatprep.subr.mxu0 0.0
        %v653 = vand.u32 %v468, 4294901760
        %v654 = vsub.f32 %v468, %v653
        %655 = vmatpush1.msra.mxu0 %v654
        %656 = vmatprep.subr.mxu0 0.0
        %v657 = vand.u32 %v469, 4294901760
        %v658 = vsub.f32 %v469, %v657
        %659 = vmatpush1.msra.mxu0 %v658
        %660 = vmatprep.subr.mxu0 0.0
        %v661 = vand.u32 %v470, 4294901760
        %v662 = vsub.f32 %v470, %v661
        %663 = vmatpush1.msra.mxu0 %v662
        %664 = vmatprep.subr.mxu0 0.0
        %v665 = vand.u32 %v471, 4294901760
        %v666 = vsub.f32 %v471, %v665
        %667 = vmatpush1.msra.mxu0 %v666
        %668 = vmatprep.subr.mxu0 0.0
        %669 = vmatpush1.msra.mxu0 0.0
        %670 = vmatprep.subr.mxu0 0.0
        %671 = vmatpush1.msra.mxu0 0.0
        %672 = vmatprep.subr.mxu0 0.0
        %673 = vmatpush1.msra.mxu0 0.0
        %674 = vmatprep.subr.mxu0 0.0
        %675 = vmatpush1.msra.mxu0 0.0
        %676 = vmatprep.subr.mxu0 0.0
        %677 = vmatpush1.msra.mxu0 0.0
        %678 = vmatprep.subr.mxu0 0.0
        %679 = vmatpush1.msra.mxu0 0.0
        %680 = vmatprep.subr.mxu0 0.0
        %681 = vmatpush1.msra.mxu0 0.0
        %682 = vmatprep.subr.mxu0 0.0
        %683 = vmatpush1.msra.mxu0 0.0
        %684 = vmatprep.subr.mxu0 0.0
        %685 = vmatpush1.msra.mxu0 0.0
        %686 = vmatprep.subr.mxu0 0.0
        %687 = vmatpush1.msra.mxu0 0.0
        %688 = vmatprep.subr.mxu0 0.0
        %689 = vmatpush1.msra.mxu0 0.0
        %690 = vmatprep.subr.mxu0 0.0
        %691 = vmatpush1.msra.mxu0 0.0
        %692 = vmatprep.subr.mxu0 0.0
        %693 = vmatpush1.msra.mxu0 0.0
        %694 = vmatprep.subr.mxu0 0.0
        %695 = vmatpush1.msra.mxu0 0.0
        %696 = vmatprep.subr.mxu0 0.0
        %697 = vmatpush1.msra.mxu0 0.0
        %698 = vmatprep.subr.mxu0 0.0
        %699 = vmatpush1.msra.mxu0 0.0
        %700 = vmatprep.subr.mxu0 0.0
        %701 = vmatpush1.msra.mxu0 0.0
        %702 = vmatprep.subr.mxu0 0.0
        %703 = vmatpush1.msra.mxu0 0.0
        %704 = vmatprep.subr.mxu0 0.0
        %705 = vmatpush1.msra.mxu0 0.0
        %706 = vmatprep.subr.mxu0 0.0
        %707 = vmatpush1.msra.mxu0 0.0
        %708 = vmatprep.subr.mxu0 0.0
        %709 = vmatpush1.msra.mxu0 0.0
        %710 = vmatprep.subr.mxu0 0.0
        %711 = vmatpush1.msra.mxu0 0.0
        %712 = vmatprep.subr.mxu0 0.0
        %713 = vmatpush1.msra.mxu0 0.0
        %714 = vmatprep.subr.mxu0 0.0
        %715 = vmatpush1.msra.mxu0 0.0
        %716 = vmatprep.subr.mxu0 0.0
        %717 = vmatpush1.msra.mxu0 0.0
        %718 = vmatprep.subr.mxu0 0.0
        %719 = vmatpush1.msra.mxu0 0.0
        %720 = vmatprep.subr.mxu0 0.0
        %721 = vmatpush1.msra.mxu0 0.0
        %722 = vmatprep.subr.mxu0 0.0
        %723 = vmatpush1.msra.mxu0 0.0
        %724 = vmatprep.mubr.f32.mxu0 0.0
        %v725 = vand.u32 %v480, 4294901760
        %v726 = vsub.f32 %v480, %v725
        %727 = vmatmul.mubr.f32.gmra.mrb[0].mxu0 %v726
        %v728 = vpop.f32.mrb[0].mxu0
        %v729 = vadd.f32 %v649, %v728
        %v730 = vpop.f32.mrb[0].mxu0
        %731 = vdwg.mxu0
        %732 = vmatprep.subr.mxu0 0.0
        %v733 = vand.u32 %v468, 4294901760
        %734 = vmatpush1.msra.mxu0 %v733
        %735 = vmatprep.subr.mxu0 0.0
        %v736 = vand.u32 %v469, 4294901760
        %737 = vmatpush1.msra.mxu0 %v736
        %738 = vmatprep.subr.mxu0 0.0
        %v739 = vand.u32 %v470, 4294901760
        %740 = vmatpush1.msra.mxu0 %v739
        %741 = vmatprep.subr.mxu0 0.0
        %v742 = vand.u32 %v471, 4294901760
        %743 = vmatpush1.msra.mxu0 %v742
        %744 = vmatprep.subr.mxu0 0.0
        %745 = vmatpush1.msra.mxu0 0.0
        %746 = vmatprep.subr.mxu0 0.0
        %747 = vmatpush1.msra.mxu0 0.0
        %748 = vmatprep.subr.mxu0 0.0
        %749 = vmatpush1.msra.mxu0 0.0
        %750 = vmatprep.subr.mxu0 0.0
        %751 = vmatpush1.msra.mxu0 0.0
        %752 = vmatprep.subr.mxu0 0.0
        %753 = vmatpush1.msra.mxu0 0.0
        %754 = vmatprep.subr.mxu0 0.0
        %755 = vmatpush1.msra.mxu0 0.0
        %756 = vmatprep.subr.mxu0 0.0
        %757 = vmatpush1.msra.mxu0 0.0
        %758 = vmatprep.subr.mxu0 0.0
        %759 = vmatpush1.msra.mxu0 0.0
        %760 = vmatprep.subr.mxu0 0.0
        %761 = vmatpush1.msra.mxu0 0.0
        %762 = vmatprep.subr.mxu0 0.0
        %763 = vmatpush1.msra.mxu0 0.0
        %764 = vmatprep.subr.mxu0 0.0
        %765 = vmatpush1.msra.mxu0 0.0
        %766 = vmatprep.subr.mxu0 0.0
        %767 = vmatpush1.msra.mxu0 0.0
        %768 = vmatprep.subr.mxu0 0.0
        %769 = vmatpush1.msra.mxu0 0.0
        %770 = vmatprep.subr.mxu0 0.0
        %771 = vmatpush1.msra.mxu0 0.0
        %772 = vmatprep.subr.mxu0 0.0
        %773 = vmatpush1.msra.mxu0 0.0
        %774 = vmatprep.subr.mxu0 0.0
        %775 = vmatpush1.msra.mxu0 0.0
        %776 = vmatprep.subr.mxu0 0.0
        %777 = vmatpush1.msra.mxu0 0.0
        %778 = vmatprep.subr.mxu0 0.0
        %779 = vmatpush1.msra.mxu0 0.0
        %780 = vmatprep.subr.mxu0 0.0
        %781 = vmatpush1.msra.mxu0 0.0
        %782 = vmatprep.subr.mxu0 0.0
        %783 = vmatpush1.msra.mxu0 0.0
        %784 = vmatprep.subr.mxu0 0.0
        %785 = vmatpush1.msra.mxu0 0.0
        %786 = vmatprep.subr.mxu0 0.0
        %787 = vmatpush1.msra.mxu0 0.0
        %788 = vmatprep.subr.mxu0 0.0
        %789 = vmatpush1.msra.mxu0 0.0
        %790 = vmatprep.subr.mxu0 0.0
        %791 = vmatpush1.msra.mxu0 0.0
        %792 = vmatprep.subr.mxu0 0.0
        %793 = vmatpush1.msra.mxu0 0.0
        %794 = vmatprep.subr.mxu0 0.0
        %795 = vmatpush1.msra.mxu0 0.0
        %796 = vmatprep.subr.mxu0 0.0
        %797 = vmatpush1.msra.mxu0 0.0
        %798 = vmatprep.subr.mxu0 0.0
        %799 = vmatpush1.msra.mxu0 0.0
        %800 = vmatprep.mubr.f32.mxu0 0.0
        %v801 = vand.u32 %v480, 4294901760
        %v802 = vsub.f32 %v480, %v801
        %v803 = vand.u32 %v802, 4294901760
        %804 = vmatmul.mubr.f32.gmra.mrb[0].mxu0 %v803
        %v805 = vpop.f32.mrb[0].mxu0
        %v806 = vadd.f32 %v729, %v805
        %v807 = vpop.f32.mrb[0].mxu0
        %808 = vdwg.mxu0
        %809 = vmatprep.subr.mxu0 0.0
        %v810 = vand.u32 %v468, 4294901760
        %v811 = vsub.f32 %v468, %v810
        %v812 = vand.u32 %v811, 4294901760
        %813 = vmatpush1.msra.mxu0 %v812
        %814 = vmatprep.subr.mxu0 0.0
        %v815 = vand.u32 %v469, 4294901760
        %v816 = vsub.f32 %v469, %v815
        %v817 = vand.u32 %v816, 4294901760
        %818 = vmatpush1.msra.mxu0 %v817
        %819 = vmatprep.subr.mxu0 0.0
        %v820 = vand.u32 %v470, 4294901760
        %v821 = vsub.f32 %v470, %v820
        %v822 = vand.u32 %v821, 4294901760
        %823 = vmatpush1.msra.mxu0 %v822
        %824 = vmatprep.subr.mxu0 0.0
        %v825 = vand.u32 %v471, 4294901760
        %v826 = vsub.f32 %v471, %v825
        %v827 = vand.u32 %v826, 4294901760
        %828 = vmatpush1.msra.mxu0 %v827
        %829 = vmatprep.subr.mxu0 0.0
        %830 = vmatpush1.msra.mxu0 0.0
        %831 = vmatprep.subr.mxu0 0.0
        %832 = vmatpush1.msra.mxu0 0.0
        %833 = vmatprep.subr.mxu0 0.0
        %834 = vmatpush1.msra.mxu0 0.0
        %835 = vmatprep.subr.mxu0 0.0
        %836 = vmatpush1.msra.mxu0 0.0
        %837 = vmatprep.subr.mxu0 0.0
        %838 = vmatpush1.msra.mxu0 0.0
        %839 = vmatprep.subr.mxu0 0.0
        %840 = vmatpush1.msra.mxu0 0.0
        %841 = vmatprep.subr.mxu0 0.0
        %842 = vmatpush1.msra.mxu0 0.0
        %843 = vmatprep.subr.mxu0 0.0
        %844 = vmatpush1.msra.mxu0 0.0
        %845 = vmatprep.subr.mxu0 0.0
        %846 = vmatpush1.msra.mxu0 0.0
        %847 = vmatprep.subr.mxu0 0.0
        %848 = vmatpush1.msra.mxu0 0.0
        %849 = vmatprep.subr.mxu0 0.0
        %850 = vmatpush1.msra.mxu0 0.0
        %851 = vmatprep.subr.mxu0 0.0
        %852 = vmatpush1.msra.mxu0 0.0
        %853 = vmatprep.subr.mxu0 0.0
        %854 = vmatpush1.msra.mxu0 0.0
        %855 = vmatprep.subr.mxu0 0.0
        %856 = vmatpush1.msra.mxu0 0.0
        %857 = vmatprep.subr.mxu0 0.0
        %858 = vmatpush1.msra.mxu0 0.0
        %859 = vmatprep.subr.mxu0 0.0
        %860 = vmatpush1.msra.mxu0 0.0
        %861 = vmatprep.subr.mxu0 0.0
        %862 = vmatpush1.msra.mxu0 0.0
        %863 = vmatprep.subr.mxu0 0.0
        %864 = vmatpush1.msra.mxu0 0.0
        %865 = vmatprep.subr.mxu0 0.0
        %866 = vmatpush1.msra.mxu0 0.0
        %867 = vmatprep.subr.mxu0 0.0
        %868 = vmatpush1.msra.mxu0 0.0
        %869 = vmatprep.subr.mxu0 0.0
        %870 = vmatpush1.msra.mxu0 0.0
        %871 = vmatprep.subr.mxu0 0.0
        %872 = vmatpush1.msra.mxu0 0.0
        %873 = vmatprep.subr.mxu0 0.0
        %874 = vmatpush1.msra.mxu0 0.0
        %875 = vmatprep.subr.mxu0 0.0
        %876 = vmatpush1.msra.mxu0 0.0
        %877 = vmatprep.subr.mxu0 0.0
        %878 = vmatpush1.msra.mxu0 0.0
        %879 = vmatprep.subr.mxu0 0.0
        %880 = vmatpush1.msra.mxu0 0.0
        %881 = vmatprep.subr.mxu0 0.0
        %882 = vmatpush1.msra.mxu0 0.0
        %883 = vmatprep.subr.mxu0 0.0
        %884 = vmatpush1.msra.mxu0 0.0
        %885 = vmatprep.mubr.f32.mxu0 0.0
        %v886 = vand.u32 %v480, 4294901760
        %887 = vmatmul.mubr.f32.gmra.mrb[0].mxu0 %v886
        %v888 = vpop.f32.mrb[0].mxu0
        %v889 = vadd.f32 %v806, %v888
        %v890 = vpop.f32.mrb[0].mxu0
        %891 = vdwg.mxu0
        %892 = vmatprep.subr.mxu0 0.0
        %v893 = vand.u32 %v468, 4294901760
        %894 = vmatpush1.msra.mxu0 %v893
        %895 = vmatprep.subr.mxu0 0.0
        %v896 = vand.u32 %v469, 4294901760
        %897 = vmatpush1.msra.mxu0 %v896
        %898 = vmatprep.subr.mxu0 0.0
        %v899 = vand.u32 %v470, 4294901760
        %900 = vmatpush1.msra.mxu0 %v899
        %901 = vmatprep.subr.mxu0 0.0
        %v902 = vand.u32 %v471, 4294901760
        %903 = vmatpush1.msra.mxu0 %v902
        %904 = vmatprep.subr.mxu0 0.0
        %905 = vmatpush1.msra.mxu0 0.0
        %906 = vmatprep.subr.mxu0 0.0
        %907 = vmatpush1.msra.mxu0 0.0
        %908 = vmatprep.subr.mxu0 0.0
        %909 = vmatpush1.msra.mxu0 0.0
        %910 = vmatprep.subr.mxu0 0.0
        %911 = vmatpush1.msra.mxu0 0.0
        %912 = vmatprep.subr.mxu0 0.0
        %913 = vmatpush1.msra.mxu0 0.0
        %914 = vmatprep.subr.mxu0 0.0
        %915 = vmatpush1.msra.mxu0 0.0
        %916 = vmatprep.subr.mxu0 0.0
        %917 = vmatpush1.msra.mxu0 0.0
        %918 = vmatprep.subr.mxu0 0.0
        %919 = vmatpush1.msra.mxu0 0.0
        %920 = vmatprep.subr.mxu0 0.0
        %921 = vmatpush1.msra.mxu0 0.0
        %922 = vmatprep.subr.mxu0 0.0
        %923 = vmatpush1.msra.mxu0 0.0
        %924 = vmatprep.subr.mxu0 0.0
        %925 = vmatpush1.msra.mxu0 0.0
        %926 = vmatprep.subr.mxu0 0.0
        %927 = vmatpush1.msra.mxu0 0.0
        %928 = vmatprep.subr.mxu0 0.0
        %929 = vmatpush1.msra.mxu0 0.0
        %930 = vmatprep.subr.mxu0 0.0
        %931 = vmatpush1.msra.mxu0 0.0
        %932 = vmatprep.subr.mxu0 0.0
        %933 = vmatpush1.msra.mxu0 0.0
        %934 = vmatprep.subr.mxu0 0.0
        %935 = vmatpush1.msra.mxu0 0.0
        %936 = vmatprep.subr.mxu0 0.0
        %937 = vmatpush1.msra.mxu0 0.0
        %938 = vmatprep.subr.mxu0 0.0
        %939 = vmatpush1.msra.mxu0 0.0
        %940 = vmatprep.subr.mxu0 0.0
        %941 = vmatpush1.msra.mxu0 0.0
        %942 = vmatprep.subr.mxu0 0.0
        %943 = vmatpush1.msra.mxu0 0.0
        %944 = vmatprep.subr.mxu0 0.0
        %945 = vmatpush1.msra.mxu0 0.0
        %946 = vmatprep.subr.mxu0 0.0
        %947 = vmatpush1.msra.mxu0 0.0
        %948 = vmatprep.subr.mxu0 0.0
        %949 = vmatpush1.msra.mxu0 0.0
        %950 = vmatprep.subr.mxu0 0.0
        %951 = vmatpush1.msra.mxu0 0.0
        %952 = vmatprep.subr.mxu0 0.0
        %953 = vmatpush1.msra.mxu0 0.0
        %954 = vmatprep.subr.mxu0 0.0
        %955 = vmatpush1.msra.mxu0 0.0
        %956 = vmatprep.subr.mxu0 0.0
        %957 = vmatpush1.msra.mxu0 0.0
        %958 = vmatprep.subr.mxu0 0.0
        %959 = vmatpush1.msra.mxu0 0.0
        %960 = vmatprep.mubr.f32.mxu0 0.0
        %v961 = vand.u32 %v480, 4294901760
        %962 = vmatmul.mubr.f32.gmra.mrb[0].mxu0 %v961
        %v963 = vpop.f32.mrb[0].mxu0
        %v964 = vadd.f32 %v889, %v963
        %v965 = vpop.f32.mrb[0].mxu0
        %966 = vdwg.mxu0
        %v967 = vmul.f32 %v964, 0.35355338
        %v968 = vlaneseq
        %v969 = vshrl.u32 %v968, 7
        %v970 = vlaneseq
        %v971 = vand.u32 %v970, 127
        %vm972 = vcmp.le.s32.totalorder %v971, %v969
        %v973 = vsel %vm972, 0.0, -1e+30
        %975 = vrot.lane.b32.xlu0 %v964, 96
        %v976 = vpop.permute.xlu0 %975
        %vm977 = vcmask 64512
        %v979 = vsel %vm977, %v967, 0
        %v981 = vsel %vm977, %v976, 0
        %983 = vmatprep.subr.mxu0 0.0
        %v984 = vand.u32 %v981, 4294901760
        %985 = vmatpush1.xpose.msra.mxu0 %v984
        %986 = vmatprep.subr.mxu0 0.0
        %987 = vmatpush1.xpose.msra.mxu0 0.0
        %988 = vmatprep.subr.mxu0 0.0
        %989 = vmatpush1.xpose.msra.mxu0 0.0
        %990 = vmatprep.subr.mxu0 0.0
        %991 = vmatpush1.xpose.msra.mxu0 0.0
        %992 = vmatprep.subr.mxu0 0.0
        %993 = vmatpush1.xpose.msra.mxu0 0.0
        %994 = vmatprep.subr.mxu0 0.0
        %995 = vmatpush1.xpose.msra.mxu0 0.0
        %996 = vmatprep.subr.mxu0 0.0
        %997 = vmatpush1.xpose.msra.mxu0 0.0
        %998 = vmatprep.subr.mxu0 0.0
        %999 = vmatpush1.xpose.msra.mxu0 0.0
        %1000 = vmatprep.subr.mxu0 0.0
        %1001 = vmatpush1.xpose.msra.mxu0 0.0
        %1002 = vmatprep.subr.mxu0 0.0
        %1003 = vmatpush1.xpose.msra.mxu0 0.0
        %1004 = vmatprep.subr.mxu0 0.0
        %1005 = vmatpush1.xpose.msra.mxu0 0.0
        %1006 = vmatprep.subr.mxu0 0.0
        %1007 = vmatpush1.xpose.msra.mxu0 0.0
        %1008 = vmatprep.subr.mxu0 0.0
        %1009 = vmatpush1.xpose.msra.mxu0 0.0
        %1010 = vmatprep.subr.mxu0 0.0
        %1011 = vmatpush1.xpose.msra.mxu0 0.0
        %1012 = vmatprep.subr.mxu0 0.0
        %1013 = vmatpush1.xpose.msra.mxu0 0.0
        %1014 = vmatprep.subr.mxu0 0.0
        %1015 = vmatpush1.xpose.msra.mxu0 0.0
        %1016 = vmatprep.subr.mxu0 0.0
        %1017 = vmatpush1.xpose.msra.mxu0 0.0
        %1018 = vmatprep.subr.mxu0 0.0
        %1019 = vmatpush1.xpose.msra.mxu0 0.0
        %1020 = vmatprep.subr.mxu0 0.0
        %1021 = vmatpush1.xpose.msra.mxu0 0.0
        %1022 = vmatprep.subr.mxu0 0.0
        %1023 = vmatpush1.xpose.msra.mxu0 0.0
        %1024 = vmatprep.subr.mxu0 0.0
        %1025 = vmatpush1.xpose.msra.mxu0 0.0
        %1026 = vmatprep.subr.mxu0 0.0
        %1027 = vmatpush1.xpose.msra.mxu0 0.0
        %1028 = vmatprep.subr.mxu0 0.0
        %1029 = vmatpush1.xpose.msra.mxu0 0.0
        %1030 = vmatprep.subr.mxu0 0.0
        %1031 = vmatpush1.xpose.msra.mxu0 0.0
        %1032 = vmatprep.subr.mxu0 0.0
        %1033 = vmatpush1.xpose.msra.mxu0 0.0
        %1034 = vmatprep.subr.mxu0 0.0
        %1035 = vmatpush1.xpose.msra.mxu0 0.0
        %1036 = vmatprep.subr.mxu0 0.0
        %1037 = vmatpush1.xpose.msra.mxu0 0.0
        %1038 = vmatprep.subr.mxu0 0.0
        %1039 = vmatpush1.xpose.msra.mxu0 0.0
        %1040 = vmatprep.subr.mxu0 0.0
        %1041 = vmatpush1.xpose.msra.mxu0 0.0
        %1042 = vmatprep.subr.mxu0 0.0
        %1043 = vmatpush1.xpose.msra.mxu0 0.0
        %1044 = vmatprep.subr.mxu0 0.0
        %1045 = vmatpush1.xpose.msra.mxu0 0.0
        %1046 = vmatprep.subr.mxu0 0.0
        %1047 = vmatpush1.xpose.msra.mxu0 0.0
        %1048 = vmatprep.mubr.f32.mxu0 0.0
        %v1049 = vand.u32 %v979, 4294901760
        %v1050 = vsub.f32 %v979, %v1049
        %v1051 = vand.u32 %v1050, 4294901760
        %v1052 = vsub.f32 %v1050, %v1051
        %v1053 = vand.u32 %v1052, 4294901760
        %1054 = vmatmul.mubr.f32.gmra.mrb[0].mxu0 %v1053
        %v1055 = vpop.f32.mrb[0].mxu0
        %v1056 = vadd.f32 %v973, %v1055
        %v1057 = vpop.f32.mrb[0].mxu0
        %1058 = vdwg.mxu0
        %1059 = vmatprep.subr.mxu0 0.0
        %v1060 = vand.u32 %v981, 4294901760
        %v1061 = vsub.f32 %v981, %v1060
        %v1062 = vand.u32 %v1061, 4294901760
        %v1063 = vsub.f32 %v1061, %v1062
        %v1064 = vand.u32 %v1063, 4294901760
        %1065 = vmatpush1.xpose.msra.mxu0 %v1064
        %1066 = vmatprep.subr.mxu0 0.0
        %1067 = vmatpush1.xpose.msra.mxu0 0.0
        %1068 = vmatprep.subr.mxu0 0.0
        %1069 = vmatpush1.xpose.msra.mxu0 0.0
        %1070 = vmatprep.subr.mxu0 0.0
        %1071 = vmatpush1.xpose.msra.mxu0 0.0
        %1072 = vmatprep.subr.mxu0 0.0
        %1073 = vmatpush1.xpose.msra.mxu0 0.0
        %1074 = vmatprep.subr.mxu0 0.0
        %1075 = vmatpush1.xpose.msra.mxu0 0.0
        %1076 = vmatprep.subr.mxu0 0.0
        %1077 = vmatpush1.xpose.msra.mxu0 0.0
        %1078 = vmatprep.subr.mxu0 0.0
        %1079 = vmatpush1.xpose.msra.mxu0 0.0
        %1080 = vmatprep.subr.mxu0 0.0
        %1081 = vmatpush1.xpose.msra.mxu0 0.0
        %1082 = vmatprep.subr.mxu0 0.0
        %1083 = vmatpush1.xpose.msra.mxu0 0.0
        %1084 = vmatprep.subr.mxu0 0.0
        %1085 = vmatpush1.xpose.msra.mxu0 0.0
        %1086 = vmatprep.subr.mxu0 0.0
        %1087 = vmatpush1.xpose.msra.mxu0 0.0
        %1088 = vmatprep.subr.mxu0 0.0
        %1089 = vmatpush1.xpose.msra.mxu0 0.0
        %1090 = vmatprep.subr.mxu0 0.0
        %1091 = vmatpush1.xpose.msra.mxu0 0.0
        %1092 = vmatprep.subr.mxu0 0.0
        %1093 = vmatpush1.xpose.msra.mxu0 0.0
        %1094 = vmatprep.subr.mxu0 0.0
        %1095 = vmatpush1.xpose.msra.mxu0 0.0
        %1096 = vmatprep.subr.mxu0 0.0
        %1097 = vmatpush1.xpose.msra.mxu0 0.0
        %1098 = vmatprep.subr.mxu0 0.0
        %1099 = vmatpush1.xpose.msra.mxu0 0.0
        %1100 = vmatprep.subr.mxu0 0.0
        %1101 = vmatpush1.xpose.msra.mxu0 0.0
        %1102 = vmatprep.subr.mxu0 0.0
        %1103 = vmatpush1.xpose.msra.mxu0 0.0
        %1104 = vmatprep.subr.mxu0 0.0
        %1105 = vmatpush1.xpose.msra.mxu0 0.0
        %1106 = vmatprep.subr.mxu0 0.0
        %1107 = vmatpush1.xpose.msra.mxu0 0.0
        %1108 = vmatprep.subr.mxu0 0.0
        %1109 = vmatpush1.xpose.msra.mxu0 0.0
        %1110 = vmatprep.subr.mxu0 0.0
        %1111 = vmatpush1.xpose.msra.mxu0 0.0
        %1112 = vmatprep.subr.mxu0 0.0
        %1113 = vmatpush1.xpose.msra.mxu0 0.0
        %1114 = vmatprep.subr.mxu0 0.0
        %1115 = vmatpush1.xpose.msra.mxu0 0.0
        %1116 = vmatprep.subr.mxu0 0.0
        %1117 = vmatpush1.xpose.msra.mxu0 0.0
        %1118 = vmatprep.subr.mxu0 0.0
        %1119 = vmatpush1.xpose.msra.mxu0 0.0
        %1120 = vmatprep.subr.mxu0 0.0
        %1121 = vmatpush1.xpose.msra.mxu0 0.0
        %1122 = vmatprep.subr.mxu0 0.0
        %1123 = vmatpush1.xpose.msra.mxu0 0.0
        %1124 = vmatprep.subr.mxu0 0.0
        %1125 = vmatpush1.xpose.msra.mxu0 0.0
        %1126 = vmatprep.subr.mxu0 0.0
        %1127 = vmatpush1.xpose.msra.mxu0 0.0
        %1128 = vmatprep.mubr.f32.mxu0 0.0
        %v1129 = vand.u32 %v979, 4294901760
        %1130 = vmatmul.mubr.f32.gmra.mrb[0].mxu0 %v1129
        %v1131 = vpop.f32.mrb[0].mxu0
        %v1132 = vadd.f32 %v1056, %v1131
        %v1133 = vpop.f32.mrb[0].mxu0
        %1134 = vdwg.mxu0
        %1135 = vmatprep.subr.mxu0 0.0
        %v1136 = vand.u32 %v981, 4294901760
        %v1137 = vsub.f32 %v981, %v1136
        %1138 = vmatpush1.xpose.msra.mxu0 %v1137
        %1139 = vmatprep.subr.mxu0 0.0
        %1140 = vmatpush1.xpose.msra.mxu0 0.0
        %1141 = vmatprep.subr.mxu0 0.0
        %1142 = vmatpush1.xpose.msra.mxu0 0.0
        %1143 = vmatprep.subr.mxu0 0.0
        %1144 = vmatpush1.xpose.msra.mxu0 0.0
        %1145 = vmatprep.subr.mxu0 0.0
        %1146 = vmatpush1.xpose.msra.mxu0 0.0
        %1147 = vmatprep.subr.mxu0 0.0
        %1148 = vmatpush1.xpose.msra.mxu0 0.0
        %1149 = vmatprep.subr.mxu0 0.0
        %1150 = vmatpush1.xpose.msra.mxu0 0.0
        %1151 = vmatprep.subr.mxu0 0.0
        %1152 = vmatpush1.xpose.msra.mxu0 0.0
        %1153 = vmatprep.subr.mxu0 0.0
        %1154 = vmatpush1.xpose.msra.mxu0 0.0
        %1155 = vmatprep.subr.mxu0 0.0
        %1156 = vmatpush1.xpose.msra.mxu0 0.0
        %1157 = vmatprep.subr.mxu0 0.0
        %1158 = vmatpush1.xpose.msra.mxu0 0.0
        %1159 = vmatprep.subr.mxu0 0.0
        %1160 = vmatpush1.xpose.msra.mxu0 0.0
        %1161 = vmatprep.subr.mxu0 0.0
        %1162 = vmatpush1.xpose.msra.mxu0 0.0
        %1163 = vmatprep.subr.mxu0 0.0
        %1164 = vmatpush1.xpose.msra.mxu0 0.0
        %1165 = vmatprep.subr.mxu0 0.0
        %1166 = vmatpush1.xpose.msra.mxu0 0.0
        %1167 = vmatprep.subr.mxu0 0.0
        %1168 = vmatpush1.xpose.msra.mxu0 0.0
        %1169 = vmatprep.subr.mxu0 0.0
        %1170 = vmatpush1.xpose.msra.mxu0 0.0
        %1171 = vmatprep.subr.mxu0 0.0
        %1172 = vmatpush1.xpose.msra.mxu0 0.0
        %1173 = vmatprep.subr.mxu0 0.0
        %1174 = vmatpush1.xpose.msra.mxu0 0.0
        %1175 = vmatprep.subr.mxu0 0.0
        %1176 = vmatpush1.xpose.msra.mxu0 0.0
        %1177 = vmatprep.subr.mxu0 0.0
        %1178 = vmatpush1.xpose.msra.mxu0 0.0
        %1179 = vmatprep.subr.mxu0 0.0
        %1180 = vmatpush1.xpose.msra.mxu0 0.0
        %1181 = vmatprep.subr.mxu0 0.0
        %1182 = vmatpush1.xpose.msra.mxu0 0.0
        %1183 = vmatprep.subr.mxu0 0.0
        %1184 = vmatpush1.xpose.msra.mxu0 0.0
        %1185 = vmatprep.subr.mxu0 0.0
        %1186 = vmatpush1.xpose.msra.mxu0 0.0
        %1187 = vmatprep.subr.mxu0 0.0
        %1188 = vmatpush1.xpose.msra.mxu0 0.0
        %1189 = vmatprep.subr.mxu0 0.0
        %1190 = vmatpush1.xpose.msra.mxu0 0.0
        %1191 = vmatprep.subr.mxu0 0.0
        %1192 = vmatpush1.xpose.msra.mxu0 0.0
        %1193 = vmatprep.subr.mxu0 0.0
        %1194 = vmatpush1.xpose.msra.mxu0 0.0
        %1195 = vmatprep.subr.mxu0 0.0
        %1196 = vmatpush1.xpose.msra.mxu0 0.0
        %1197 = vmatprep.subr.mxu0 0.0
        %1198 = vmatpush1.xpose.msra.mxu0 0.0
        %1199 = vmatprep.subr.mxu0 0.0
        %1200 = vmatpush1.xpose.msra.mxu0 0.0
        %1201 = vmatprep.mubr.f32.mxu0 0.0
        %v1202 = vand.u32 %v979, 4294901760
        %v1203 = vsub.f32 %v979, %v1202
        %1204 = vmatmul.mubr.f32.gmra.mrb[0].mxu0 %v1203
        %v1205 = vpop.f32.mrb[0].mxu0
        %v1206 = vadd.f32 %v1132, %v1205
        %v1207 = vpop.f32.mrb[0].mxu0
        %1208 = vdwg.mxu0
        %1209 = vmatprep.subr.mxu0 0.0
        %v1210 = vand.u32 %v981, 4294901760
        %1211 = vmatpush1.xpose.msra.mxu0 %v1210
        %1212 = vmatprep.subr.mxu0 0.0
        %1213 = vmatpush1.xpose.msra.mxu0 0.0
        %1214 = vmatprep.subr.mxu0 0.0
        %1215 = vmatpush1.xpose.msra.mxu0 0.0
        %1216 = vmatprep.subr.mxu0 0.0
        %1217 = vmatpush1.xpose.msra.mxu0 0.0
        %1218 = vmatprep.subr.mxu0 0.0
        %1219 = vmatpush1.xpose.msra.mxu0 0.0
        %1220 = vmatprep.subr.mxu0 0.0
        %1221 = vmatpush1.xpose.msra.mxu0 0.0
        %1222 = vmatprep.subr.mxu0 0.0
        %1223 = vmatpush1.xpose.msra.mxu0 0.0
        %1224 = vmatprep.subr.mxu0 0.0
        %1225 = vmatpush1.xpose.msra.mxu0 0.0
        %1226 = vmatprep.subr.mxu0 0.0
        %1227 = vmatpush1.xpose.msra.mxu0 0.0
        %1228 = vmatprep.subr.mxu0 0.0
        %1229 = vmatpush1.xpose.msra.mxu0 0.0
        %1230 = vmatprep.subr.mxu0 0.0
        %1231 = vmatpush1.xpose.msra.mxu0 0.0
        %1232 = vmatprep.subr.mxu0 0.0
        %1233 = vmatpush1.xpose.msra.mxu0 0.0
        %1234 = vmatprep.subr.mxu0 0.0
        %1235 = vmatpush1.xpose.msra.mxu0 0.0
        %1236 = vmatprep.subr.mxu0 0.0
        %1237 = vmatpush1.xpose.msra.mxu0 0.0
        %1238 = vmatprep.subr.mxu0 0.0
        %1239 = vmatpush1.xpose.msra.mxu0 0.0
        %1240 = vmatprep.subr.mxu0 0.0
        %1241 = vmatpush1.xpose.msra.mxu0 0.0
        %1242 = vmatprep.subr.mxu0 0.0
        %1243 = vmatpush1.xpose.msra.mxu0 0.0
        %1244 = vmatprep.subr.mxu0 0.0
        %1245 = vmatpush1.xpose.msra.mxu0 0.0
        %1246 = vmatprep.subr.mxu0 0.0
        %1247 = vmatpush1.xpose.msra.mxu0 0.0
        %1248 = vmatprep.subr.mxu0 0.0
        %1249 = vmatpush1.xpose.msra.mxu0 0.0
        %1250 = vmatprep.subr.mxu0 0.0
        %1251 = vmatpush1.xpose.msra.mxu0 0.0
        %1252 = vmatprep.subr.mxu0 0.0
        %1253 = vmatpush1.xpose.msra.mxu0 0.0
        %1254 = vmatprep.subr.mxu0 0.0
        %1255 = vmatpush1.xpose.msra.mxu0 0.0
        %1256 = vmatprep.subr.mxu0 0.0
        %1257 = vmatpush1.xpose.msra.mxu0 0.0
        %1258 = vmatprep.subr.mxu0 0.0
        %1259 = vmatpush1.xpose.msra.mxu0 0.0
        %1260 = vmatprep.subr.mxu0 0.0
        %1261 = vmatpush1.xpose.msra.mxu0 0.0
        %1262 = vmatprep.subr.mxu0 0.0
        %1263 = vmatpush1.xpose.msra.mxu0 0.0
        %1264 = vmatprep.subr.mxu0 0.0
        %1265 = vmatpush1.xpose.msra.mxu0 0.0
        %1266 = vmatprep.subr.mxu0 0.0
        %1267 = vmatpush1.xpose.msra.mxu0 0.0
        %1268 = vmatprep.subr.mxu0 0.0
        %1269 = vmatpush1.xpose.msra.mxu0 0.0
        %1270 = vmatprep.subr.mxu0 0.0
        %1271 = vmatpush1.xpose.msra.mxu0 0.0
        %1272 = vmatprep.subr.mxu0 0.0
        %1273 = vmatpush1.xpose.msra.mxu0 0.0
        %1274 = vmatprep.mubr.f32.mxu0 0.0
        %v1275 = vand.u32 %v979, 4294901760
        %v1276 = vsub.f32 %v979, %v1275
        %v1277 = vand.u32 %v1276, 4294901760
        %1278 = vmatmul.mubr.f32.gmra.mrb[0].mxu0 %v1277
        %v1279 = vpop.f32.mrb[0].mxu0
        %v1280 = vadd.f32 %v1206, %v1279
        %v1281 = vpop.f32.mrb[0].mxu0
        %1282 = vdwg.mxu0
        %1283 = vmatprep.subr.mxu0 0.0
        %v1284 = vand.u32 %v981, 4294901760
        %v1285 = vsub.f32 %v981, %v1284
        %v1286 = vand.u32 %v1285, 4294901760
        %1287 = vmatpush1.xpose.msra.mxu0 %v1286
        %1288 = vmatprep.subr.mxu0 0.0
        %1289 = vmatpush1.xpose.msra.mxu0 0.0
        %1290 = vmatprep.subr.mxu0 0.0
        %1291 = vmatpush1.xpose.msra.mxu0 0.0
        %1292 = vmatprep.subr.mxu0 0.0
        %1293 = vmatpush1.xpose.msra.mxu0 0.0
        %1294 = vmatprep.subr.mxu0 0.0
        %1295 = vmatpush1.xpose.msra.mxu0 0.0
        %1296 = vmatprep.subr.mxu0 0.0
        %1297 = vmatpush1.xpose.msra.mxu0 0.0
        %1298 = vmatprep.subr.mxu0 0.0
        %1299 = vmatpush1.xpose.msra.mxu0 0.0
        %1300 = vmatprep.subr.mxu0 0.0
        %1301 = vmatpush1.xpose.msra.mxu0 0.0
        %1302 = vmatprep.subr.mxu0 0.0
        %1303 = vmatpush1.xpose.msra.mxu0 0.0
        %1304 = vmatprep.subr.mxu0 0.0
        %1305 = vmatpush1.xpose.msra.mxu0 0.0
        %1306 = vmatprep.subr.mxu0 0.0
        %1307 = vmatpush1.xpose.msra.mxu0 0.0
        %1308 = vmatprep.subr.mxu0 0.0
        %1309 = vmatpush1.xpose.msra.mxu0 0.0
        %1310 = vmatprep.subr.mxu0 0.0
        %1311 = vmatpush1.xpose.msra.mxu0 0.0
        %1312 = vmatprep.subr.mxu0 0.0
        %1313 = vmatpush1.xpose.msra.mxu0 0.0
        %1314 = vmatprep.subr.mxu0 0.0
        %1315 = vmatpush1.xpose.msra.mxu0 0.0
        %1316 = vmatprep.subr.mxu0 0.0
        %1317 = vmatpush1.xpose.msra.mxu0 0.0
        %1318 = vmatprep.subr.mxu0 0.0
        %1319 = vmatpush1.xpose.msra.mxu0 0.0
        %1320 = vmatprep.subr.mxu0 0.0
        %1321 = vmatpush1.xpose.msra.mxu0 0.0
        %1322 = vmatprep.subr.mxu0 0.0
        %1323 = vmatpush1.xpose.msra.mxu0 0.0
        %1324 = vmatprep.subr.mxu0 0.0
        %1325 = vmatpush1.xpose.msra.mxu0 0.0
        %1326 = vmatprep.subr.mxu0 0.0
        %1327 = vmatpush1.xpose.msra.mxu0 0.0
        %1328 = vmatprep.subr.mxu0 0.0
        %1329 = vmatpush1.xpose.msra.mxu0 0.0
        %1330 = vmatprep.subr.mxu0 0.0
        %1331 = vmatpush1.xpose.msra.mxu0 0.0
        %1332 = vmatprep.subr.mxu0 0.0
        %1333 = vmatpush1.xpose.msra.mxu0 0.0
        %1334 = vmatprep.subr.mxu0 0.0
        %1335 = vmatpush1.xpose.msra.mxu0 0.0
        %1336 = vmatprep.subr.mxu0 0.0
        %1337 = vmatpush1.xpose.msra.mxu0 0.0
        %1338 = vmatprep.subr.mxu0 0.0
        %1339 = vmatpush1.xpose.msra.mxu0 0.0
        %1340 = vmatprep.subr.mxu0 0.0
        %1341 = vmatpush1.xpose.msra.mxu0 0.0
        %1342 = vmatprep.subr.mxu0 0.0
        %1343 = vmatpush1.xpose.msra.mxu0 0.0
        %1344 = vmatprep.subr.mxu0 0.0
        %1345 = vmatpush1.xpose.msra.mxu0 0.0
        %1346 = vmatprep.subr.mxu0 0.0
        %1347 = vmatpush1.xpose.msra.mxu0 0.0
        %1348 = vmatprep.subr.mxu0 0.0
        %1349 = vmatpush1.xpose.msra.mxu0 0.0
        %1350 = vmatprep.mubr.f32.mxu0 0.0
        %v1351 = vand.u32 %v979, 4294901760
        %1352 = vmatmul.mubr.f32.gmra.mrb[0].mxu0 %v1351
        %v1353 = vpop.f32.mrb[0].mxu0
        %v1354 = vadd.f32 %v1280, %v1353
        %v1355 = vpop.f32.mrb[0].mxu0
        %1356 = vdwg.mxu0
        %1357 = vmatprep.subr.mxu0 0.0
        %v1358 = vand.u32 %v981, 4294901760
        %1359 = vmatpush1.xpose.msra.mxu0 %v1358
        %1360 = vmatprep.subr.mxu0 0.0
        %1361 = vmatpush1.xpose.msra.mxu0 0.0
        %1362 = vmatprep.subr.mxu0 0.0
        %1363 = vmatpush1.xpose.msra.mxu0 0.0
        %1364 = vmatprep.subr.mxu0 0.0
        %1365 = vmatpush1.xpose.msra.mxu0 0.0
        %1366 = vmatprep.subr.mxu0 0.0
        %1367 = vmatpush1.xpose.msra.mxu0 0.0
        %1368 = vmatprep.subr.mxu0 0.0
        %1369 = vmatpush1.xpose.msra.mxu0 0.0
        %1370 = vmatprep.subr.mxu0 0.0
        %1371 = vmatpush1.xpose.msra.mxu0 0.0
        %1372 = vmatprep.subr.mxu0 0.0
        %1373 = vmatpush1.xpose.msra.mxu0 0.0
        %1374 = vmatprep.subr.mxu0 0.0
        %1375 = vmatpush1.xpose.msra.mxu0 0.0
        %1376 = vmatprep.subr.mxu0 0.0
        %1377 = vmatpush1.xpose.msra.mxu0 0.0
        %1378 = vmatprep.subr.mxu0 0.0
        %1379 = vmatpush1.xpose.msra.mxu0 0.0
        %1380 = vmatprep.subr.mxu0 0.0
        %1381 = vmatpush1.xpose.msra.mxu0 0.0
        %1382 = vmatprep.subr.mxu0 0.0
        %1383 = vmatpush1.xpose.msra.mxu0 0.0
        %1384 = vmatprep.subr.mxu0 0.0
        %1385 = vmatpush1.xpose.msra.mxu0 0.0
        %1386 = vmatprep.subr.mxu0 0.0
        %1387 = vmatpush1.xpose.msra.mxu0 0.0
        %1388 = vmatprep.subr.mxu0 0.0
        %1389 = vmatpush1.xpose.msra.mxu0 0.0
        %1390 = vmatprep.subr.mxu0 0.0
        %1391 = vmatpush1.xpose.msra.mxu0 0.0
        %1392 = vmatprep.subr.mxu0 0.0
        %1393 = vmatpush1.xpose.msra.mxu0 0.0
        %1394 = vmatprep.subr.mxu0 0.0
        %1395 = vmatpush1.xpose.msra.mxu0 0.0
        %1396 = vmatprep.subr.mxu0 0.0
        %1397 = vmatpush1.xpose.msra.mxu0 0.0
        %1398 = vmatprep.subr.mxu0 0.0
        %1399 = vmatpush1.xpose.msra.mxu0 0.0
        %1400 = vmatprep.subr.mxu0 0.0
        %1401 = vmatpush1.xpose.msra.mxu0 0.0
        %1402 = vmatprep.subr.mxu0 0.0
        %1403 = vmatpush1.xpose.msra.mxu0 0.0
        %1404 = vmatprep.subr.mxu0 0.0
        %1405 = vmatpush1.xpose.msra.mxu0 0.0
        %1406 = vmatprep.subr.mxu0 0.0
        %1407 = vmatpush1.xpose.msra.mxu0 0.0
        %1408 = vmatprep.subr.mxu0 0.0
        %1409 = vmatpush1.xpose.msra.mxu0 0.0
        %1410 = vmatprep.subr.mxu0 0.0
        %1411 = vmatpush1.xpose.msra.mxu0 0.0
        %1412 = vmatprep.subr.mxu0 0.0
        %1413 = vmatpush1.xpose.msra.mxu0 0.0
        %1414 = vmatprep.subr.mxu0 0.0
        %1415 = vmatpush1.xpose.msra.mxu0 0.0
        %1416 = vmatprep.subr.mxu0 0.0
        %1417 = vmatpush1.xpose.msra.mxu0 0.0
        %1418 = vmatprep.subr.mxu0 0.0
        %1419 = vmatpush1.xpose.msra.mxu0 0.0
        %1420 = vmatprep.subr.mxu0 0.0
        %1421 = vmatpush1.xpose.msra.mxu0 0.0
        %1422 = vmatprep.mubr.f32.mxu0 0.0
        %v1423 = vand.u32 %v979, 4294901760
        %1424 = vmatmul.mubr.f32.gmra.mrb[0].mxu0 %v1423
        %v1425 = vpop.f32.mrb[0].mxu0
        %v1426 = vadd.f32 %v1354, %v1425
        %v1427 = vpop.f32.mrb[0].mxu0
        %1428 = vdwg.mxu0
        %v1429 = vsel %vm977, %v1426, -inf
        %1430 = vmax.xlane.f32.xlu0 %v1429
        %v1431 = vpop.xlane.xlu0 %1430
        %v1432 = vsub.f32 %v1426, %v1431
        %v1433 = vmul.f32 %v1432, 1.442695
        %v1434 = vpow.pop %v1433
        %v1435 = vsel %vm977, %v1434, 0.0
        %1436 = vadd.xlane.f32.xlu0 %v1435
        %v1437 = vpop.xlane.xlu0 %1436
        %v1438 = vrcp.pop %v1437
        %v1439 = vmul.f32 1.0, %v1438
        %v1440 = vmul.f32 %v1434, %v1439
        %1441 = vrot.lane.b32.xlu0 %v964, 64
        %v1442 = vpop.permute.xlu0 %1441
        %v1445 = vsel %vm977, %v1440, 0
        %1447 = vmatprep.subr.mxu0 0.0
        %v1448 = vand.u32 %v1442, 4294901760
        %1449 = vmatpush1.msra.mxu0 %v1448
        %1450 = vmatprep.subr.mxu0 0.0
        %1451 = vmatpush1.msra.mxu0 0.0
        %1452 = vmatprep.subr.mxu0 0.0
        %1453 = vmatpush1.msra.mxu0 0.0
        %1454 = vmatprep.subr.mxu0 0.0
        %1455 = vmatpush1.msra.mxu0 0.0
        %1456 = vmatprep.subr.mxu0 0.0
        %1457 = vmatpush1.msra.mxu0 0.0
        %1458 = vmatprep.subr.mxu0 0.0
        %1459 = vmatpush1.msra.mxu0 0.0
        %1460 = vmatprep.subr.mxu0 0.0
        %1461 = vmatpush1.msra.mxu0 0.0
        %1462 = vmatprep.subr.mxu0 0.0
        %1463 = vmatpush1.msra.mxu0 0.0
        %1464 = vmatprep.subr.mxu0 0.0
        %1465 = vmatpush1.msra.mxu0 0.0
        %1466 = vmatprep.subr.mxu0 0.0
        %1467 = vmatpush1.msra.mxu0 0.0
        %1468 = vmatprep.subr.mxu0 0.0
        %1469 = vmatpush1.msra.mxu0 0.0
        %1470 = vmatprep.subr.mxu0 0.0
        %1471 = vmatpush1.msra.mxu0 0.0
        %1472 = vmatprep.subr.mxu0 0.0
        %1473 = vmatpush1.msra.mxu0 0.0
        %1474 = vmatprep.subr.mxu0 0.0
        %1475 = vmatpush1.msra.mxu0 0.0
        %1476 = vmatprep.subr.mxu0 0.0
        %1477 = vmatpush1.msra.mxu0 0.0
        %1478 = vmatprep.subr.mxu0 0.0
        %1479 = vmatpush1.msra.mxu0 0.0
        %1480 = vmatprep.subr.mxu0 0.0
        %1481 = vmatpush1.msra.mxu0 0.0
        %1482 = vmatprep.subr.mxu0 0.0
        %1483 = vmatpush1.msra.mxu0 0.0
        %1484 = vmatprep.subr.mxu0 0.0
        %1485 = vmatpush1.msra.mxu0 0.0
        %1486 = vmatprep.subr.mxu0 0.0
        %1487 = vmatpush1.msra.mxu0 0.0
        %1488 = vmatprep.subr.mxu0 0.0
        %1489 = vmatpush1.msra.mxu0 0.0
        %1490 = vmatprep.subr.mxu0 0.0
        %1491 = vmatpush1.msra.mxu0 0.0
        %1492 = vmatprep.subr.mxu0 0.0
        %1493 = vmatpush1.msra.mxu0 0.0
        %1494 = vmatprep.subr.mxu0 0.0
        %1495 = vmatpush1.msra.mxu0 0.0
        %1496 = vmatprep.subr.mxu0 0.0
        %1497 = vmatpush1.msra.mxu0 0.0
        %1498 = vmatprep.subr.mxu0 0.0
        %1499 = vmatpush1.msra.mxu0 0.0
        %1500 = vmatprep.subr.mxu0 0.0
        %1501 = vmatpush1.msra.mxu0 0.0
        %1502 = vmatprep.subr.mxu0 0.0
        %1503 = vmatpush1.msra.mxu0 0.0
        %1504 = vmatprep.subr.mxu0 0.0
        %1505 = vmatpush1.msra.mxu0 0.0
        %1506 = vmatprep.subr.mxu0 0.0
        %1507 = vmatpush1.msra.mxu0 0.0
        %1508 = vmatprep.subr.mxu0 0.0
        %1509 = vmatpush1.msra.mxu0 0.0
        %1510 = vmatprep.subr.mxu0 0.0
        %1511 = vmatpush1.msra.mxu0 0.0
        %1512 = vmatprep.mubr.f32.mxu0 0.0
        %v1513 = vand.u32 %v1445, 4294901760
        %v1514 = vsub.f32 %v1445, %v1513
        %v1515 = vand.u32 %v1514, 4294901760
        %v1516 = vsub.f32 %v1514, %v1515
        %v1517 = vand.u32 %v1516, 4294901760
        %1518 = vmatmul.mubr.f32.gmra.mrb[0].mxu0 %v1517
        %v1519 = vpop.f32.mrb[0].mxu0
        %v1520 = vadd.f32 0.0, %v1519
        %v1521 = vpop.f32.mrb[0].mxu0
        %1522 = vdwg.mxu0
        %1523 = vmatprep.subr.mxu0 0.0
        %v1524 = vand.u32 %v1442, 4294901760
        %v1525 = vsub.f32 %v1442, %v1524
        %v1526 = vand.u32 %v1525, 4294901760
        %v1527 = vsub.f32 %v1525, %v1526
        %v1528 = vand.u32 %v1527, 4294901760
        %1529 = vmatpush1.msra.mxu0 %v1528
        %1530 = vmatprep.subr.mxu0 0.0
        %1531 = vmatpush1.msra.mxu0 0.0
        %1532 = vmatprep.subr.mxu0 0.0
        %1533 = vmatpush1.msra.mxu0 0.0
        %1534 = vmatprep.subr.mxu0 0.0
        %1535 = vmatpush1.msra.mxu0 0.0
        %1536 = vmatprep.subr.mxu0 0.0
        %1537 = vmatpush1.msra.mxu0 0.0
        %1538 = vmatprep.subr.mxu0 0.0
        %1539 = vmatpush1.msra.mxu0 0.0
        %1540 = vmatprep.subr.mxu0 0.0
        %1541 = vmatpush1.msra.mxu0 0.0
        %1542 = vmatprep.subr.mxu0 0.0
        %1543 = vmatpush1.msra.mxu0 0.0
        %1544 = vmatprep.subr.mxu0 0.0
        %1545 = vmatpush1.msra.mxu0 0.0
        %1546 = vmatprep.subr.mxu0 0.0
        %1547 = vmatpush1.msra.mxu0 0.0
        %1548 = vmatprep.subr.mxu0 0.0
        %1549 = vmatpush1.msra.mxu0 0.0
        %1550 = vmatprep.subr.mxu0 0.0
        %1551 = vmatpush1.msra.mxu0 0.0
        %1552 = vmatprep.subr.mxu0 0.0
        %1553 = vmatpush1.msra.mxu0 0.0
        %1554 = vmatprep.subr.mxu0 0.0
        %1555 = vmatpush1.msra.mxu0 0.0
        %1556 = vmatprep.subr.mxu0 0.0
        %1557 = vmatpush1.msra.mxu0 0.0
        %1558 = vmatprep.subr.mxu0 0.0
        %1559 = vmatpush1.msra.mxu0 0.0
        %1560 = vmatprep.subr.mxu0 0.0
        %1561 = vmatpush1.msra.mxu0 0.0
        %1562 = vmatprep.subr.mxu0 0.0
        %1563 = vmatpush1.msra.mxu0 0.0
        %1564 = vmatprep.subr.mxu0 0.0
        %1565 = vmatpush1.msra.mxu0 0.0
        %1566 = vmatprep.subr.mxu0 0.0
        %1567 = vmatpush1.msra.mxu0 0.0
        %1568 = vmatprep.subr.mxu0 0.0
        %1569 = vmatpush1.msra.mxu0 0.0
        %1570 = vmatprep.subr.mxu0 0.0
        %1571 = vmatpush1.msra.mxu0 0.0
        %1572 = vmatprep.subr.mxu0 0.0
        %1573 = vmatpush1.msra.mxu0 0.0
        %1574 = vmatprep.subr.mxu0 0.0
        %1575 = vmatpush1.msra.mxu0 0.0
        %1576 = vmatprep.subr.mxu0 0.0
        %1577 = vmatpush1.msra.mxu0 0.0
        %1578 = vmatprep.subr.mxu0 0.0
        %1579 = vmatpush1.msra.mxu0 0.0
        %1580 = vmatprep.subr.mxu0 0.0
        %1581 = vmatpush1.msra.mxu0 0.0
        %1582 = vmatprep.subr.mxu0 0.0
        %1583 = vmatpush1.msra.mxu0 0.0
        %1584 = vmatprep.subr.mxu0 0.0
        %1585 = vmatpush1.msra.mxu0 0.0
        %1586 = vmatprep.subr.mxu0 0.0
        %1587 = vmatpush1.msra.mxu0 0.0
        %1588 = vmatprep.subr.mxu0 0.0
        %1589 = vmatpush1.msra.mxu0 0.0
        %1590 = vmatprep.subr.mxu0 0.0
        %1591 = vmatpush1.msra.mxu0 0.0
        %1592 = vmatprep.mubr.f32.mxu0 0.0
        %v1593 = vand.u32 %v1445, 4294901760
        %1594 = vmatmul.mubr.f32.gmra.mrb[0].mxu0 %v1593
        %v1595 = vpop.f32.mrb[0].mxu0
        %v1596 = vadd.f32 %v1520, %v1595
        %v1597 = vpop.f32.mrb[0].mxu0
        %1598 = vdwg.mxu0
        %1599 = vmatprep.subr.mxu0 0.0
        %v1600 = vand.u32 %v1442, 4294901760
        %v1601 = vsub.f32 %v1442, %v1600
        %1602 = vmatpush1.msra.mxu0 %v1601
        %1603 = vmatprep.subr.mxu0 0.0
        %1604 = vmatpush1.msra.mxu0 0.0
        %1605 = vmatprep.subr.mxu0 0.0
        %1606 = vmatpush1.msra.mxu0 0.0
        %1607 = vmatprep.subr.mxu0 0.0
        %1608 = vmatpush1.msra.mxu0 0.0
        %1609 = vmatprep.subr.mxu0 0.0
        %1610 = vmatpush1.msra.mxu0 0.0
        %1611 = vmatprep.subr.mxu0 0.0
        %1612 = vmatpush1.msra.mxu0 0.0
        %1613 = vmatprep.subr.mxu0 0.0
        %1614 = vmatpush1.msra.mxu0 0.0
        %1615 = vmatprep.subr.mxu0 0.0
        %1616 = vmatpush1.msra.mxu0 0.0
        %1617 = vmatprep.subr.mxu0 0.0
        %1618 = vmatpush1.msra.mxu0 0.0
        %1619 = vmatprep.subr.mxu0 0.0
        %1620 = vmatpush1.msra.mxu0 0.0
        %1621 = vmatprep.subr.mxu0 0.0
        %1622 = vmatpush1.msra.mxu0 0.0
        %1623 = vmatprep.subr.mxu0 0.0
        %1624 = vmatpush1.msra.mxu0 0.0
        %1625 = vmatprep.subr.mxu0 0.0
        %1626 = vmatpush1.msra.mxu0 0.0
        %1627 = vmatprep.subr.mxu0 0.0
        %1628 = vmatpush1.msra.mxu0 0.0
        %1629 = vmatprep.subr.mxu0 0.0
        %1630 = vmatpush1.msra.mxu0 0.0
        %1631 = vmatprep.subr.mxu0 0.0
        %1632 = vmatpush1.msra.mxu0 0.0
        %1633 = vmatprep.subr.mxu0 0.0
        %1634 = vmatpush1.msra.mxu0 0.0
        %1635 = vmatprep.subr.mxu0 0.0
        %1636 = vmatpush1.msra.mxu0 0.0
        %1637 = vmatprep.subr.mxu0 0.0
        %1638 = vmatpush1.msra.mxu0 0.0
        %1639 = vmatprep.subr.mxu0 0.0
        %1640 = vmatpush1.msra.mxu0 0.0
        %1641 = vmatprep.subr.mxu0 0.0
        %1642 = vmatpush1.msra.mxu0 0.0
        %1643 = vmatprep.subr.mxu0 0.0
        %1644 = vmatpush1.msra.mxu0 0.0
        %1645 = vmatprep.subr.mxu0 0.0
        %1646 = vmatpush1.msra.mxu0 0.0
        %1647 = vmatprep.subr.mxu0 0.0
        %1648 = vmatpush1.msra.mxu0 0.0
        %1649 = vmatprep.subr.mxu0 0.0
        %1650 = vmatpush1.msra.mxu0 0.0
        %1651 = vmatprep.subr.mxu0 0.0
        %1652 = vmatpush1.msra.mxu0 0.0
        %1653 = vmatprep.subr.mxu0 0.0
        %1654 = vmatpush1.msra.mxu0 0.0
        %1655 = vmatprep.subr.mxu0 0.0
        %1656 = vmatpush1.msra.mxu0 0.0
        %1657 = vmatprep.subr.mxu0 0.0
        %1658 = vmatpush1.msra.mxu0 0.0
        %1659 = vmatprep.subr.mxu0 0.0
        %1660 = vmatpush1.msra.mxu0 0.0
        %1661 = vmatprep.subr.mxu0 0.0
        %1662 = vmatpush1.msra.mxu0 0.0
        %1663 = vmatprep.subr.mxu0 0.0
        %1664 = vmatpush1.msra.mxu0 0.0
        %1665 = vmatprep.mubr.f32.mxu0 0.0
        %v1666 = vand.u32 %v1445, 4294901760
        %v1667 = vsub.f32 %v1445, %v1666
        %1668 = vmatmul.mubr.f32.gmra.mrb[0].mxu0 %v1667
        %v1669 = vpop.f32.mrb[0].mxu0
        %v1670 = vadd.f32 %v1596, %v1669
        %v1671 = vpop.f32.mrb[0].mxu0
        %1672 = vdwg.mxu0
        %1673 = vmatprep.subr.mxu0 0.0
        %v1674 = vand.u32 %v1442, 4294901760
        %1675 = vmatpush1.msra.mxu0 %v1674
        %1676 = vmatprep.subr.mxu0 0.0
        %1677 = vmatpush1.msra.mxu0 0.0
        %1678 = vmatprep.subr.mxu0 0.0
        %1679 = vmatpush1.msra.mxu0 0.0
        %1680 = vmatprep.subr.mxu0 0.0
        %1681 = vmatpush1.msra.mxu0 0.0
        %1682 = vmatprep.subr.mxu0 0.0
        %1683 = vmatpush1.msra.mxu0 0.0
        %1684 = vmatprep.subr.mxu0 0.0
        %1685 = vmatpush1.msra.mxu0 0.0
        %1686 = vmatprep.subr.mxu0 0.0
        %1687 = vmatpush1.msra.mxu0 0.0
        %1688 = vmatprep.subr.mxu0 0.0
        %1689 = vmatpush1.msra.mxu0 0.0
        %1690 = vmatprep.subr.mxu0 0.0
        %1691 = vmatpush1.msra.mxu0 0.0
        %1692 = vmatprep.subr.mxu0 0.0
        %1693 = vmatpush1.msra.mxu0 0.0
        %1694 = vmatprep.subr.mxu0 0.0
        %1695 = vmatpush1.msra.mxu0 0.0
        %1696 = vmatprep.subr.mxu0 0.0
        %1697 = vmatpush1.msra.mxu0 0.0
        %1698 = vmatprep.subr.mxu0 0.0
        %1699 = vmatpush1.msra.mxu0 0.0
        %1700 = vmatprep.subr.mxu0 0.0
        %1701 = vmatpush1.msra.mxu0 0.0
        %1702 = vmatprep.subr.mxu0 0.0
        %1703 = vmatpush1.msra.mxu0 0.0
        %1704 = vmatprep.subr.mxu0 0.0
        %1705 = vmatpush1.msra.mxu0 0.0
        %1706 = vmatprep.subr.mxu0 0.0
        %1707 = vmatpush1.msra.mxu0 0.0
        %1708 = vmatprep.subr.mxu0 0.0
        %1709 = vmatpush1.msra.mxu0 0.0
        %1710 = vmatprep.subr.mxu0 0.0
        %1711 = vmatpush1.msra.mxu0 0.0
        %1712 = vmatprep.subr.mxu0 0.0
        %1713 = vmatpush1.msra.mxu0 0.0
        %1714 = vmatprep.subr.mxu0 0.0
        %1715 = vmatpush1.msra.mxu0 0.0
        %1716 = vmatprep.subr.mxu0 0.0
        %1717 = vmatpush1.msra.mxu0 0.0
        %1718 = vmatprep.subr.mxu0 0.0
        %1719 = vmatpush1.msra.mxu0 0.0
        %1720 = vmatprep.subr.mxu0 0.0
        %1721 = vmatpush1.msra.mxu0 0.0
        %1722 = vmatprep.subr.mxu0 0.0
        %1723 = vmatpush1.msra.mxu0 0.0
        %1724 = vmatprep.subr.mxu0 0.0
        %1725 = vmatpush1.msra.mxu0 0.0
        %1726 = vmatprep.subr.mxu0 0.0
        %1727 = vmatpush1.msra.mxu0 0.0
        %1728 = vmatprep.subr.mxu0 0.0
        %1729 = vmatpush1.msra.mxu0 0.0
        %1730 = vmatprep.subr.mxu0 0.0
        %1731 = vmatpush1.msra.mxu0 0.0
        %1732 = vmatprep.subr.mxu0 0.0
        %1733 = vmatpush1.msra.mxu0 0.0
        %1734 = vmatprep.subr.mxu0 0.0
        %1735 = vmatpush1.msra.mxu0 0.0
        %1736 = vmatprep.subr.mxu0 0.0
        %1737 = vmatpush1.msra.mxu0 0.0
        %1738 = vmatprep.mubr.f32.mxu0 0.0
        %v1739 = vand.u32 %v1445, 4294901760
        %v1740 = vsub.f32 %v1445, %v1739
        %v1741 = vand.u32 %v1740, 4294901760
        %1742 = vmatmul.mubr.f32.gmra.mrb[0].mxu0 %v1741
        %v1743 = vpop.f32.mrb[0].mxu0
        %v1744 = vadd.f32 %v1670, %v1743
        %v1745 = vpop.f32.mrb[0].mxu0
        %1746 = vdwg.mxu0
        %1747 = vmatprep.subr.mxu0 0.0
        %v1748 = vand.u32 %v1442, 4294901760
        %v1749 = vsub.f32 %v1442, %v1748
        %v1750 = vand.u32 %v1749, 4294901760
        %1751 = vmatpush1.msra.mxu0 %v1750
        %1752 = vmatprep.subr.mxu0 0.0
        %1753 = vmatpush1.msra.mxu0 0.0
        %1754 = vmatprep.subr.mxu0 0.0
        %1755 = vmatpush1.msra.mxu0 0.0
        %1756 = vmatprep.subr.mxu0 0.0
        %1757 = vmatpush1.msra.mxu0 0.0
        %1758 = vmatprep.subr.mxu0 0.0
        %1759 = vmatpush1.msra.mxu0 0.0
        %1760 = vmatprep.subr.mxu0 0.0
        %1761 = vmatpush1.msra.mxu0 0.0
        %1762 = vmatprep.subr.mxu0 0.0
        %1763 = vmatpush1.msra.mxu0 0.0
        %1764 = vmatprep.subr.mxu0 0.0
        %1765 = vmatpush1.msra.mxu0 0.0
        %1766 = vmatprep.subr.mxu0 0.0
        %1767 = vmatpush1.msra.mxu0 0.0
        %1768 = vmatprep.subr.mxu0 0.0
        %1769 = vmatpush1.msra.mxu0 0.0
        %1770 = vmatprep.subr.mxu0 0.0
        %1771 = vmatpush1.msra.mxu0 0.0
        %1772 = vmatprep.subr.mxu0 0.0
        %1773 = vmatpush1.msra.mxu0 0.0
        %1774 = vmatprep.subr.mxu0 0.0
        %1775 = vmatpush1.msra.mxu0 0.0
        %1776 = vmatprep.subr.mxu0 0.0
        %1777 = vmatpush1.msra.mxu0 0.0
        %1778 = vmatprep.subr.mxu0 0.0
        %1779 = vmatpush1.msra.mxu0 0.0
        %1780 = vmatprep.subr.mxu0 0.0
        %1781 = vmatpush1.msra.mxu0 0.0
        %1782 = vmatprep.subr.mxu0 0.0
        %1783 = vmatpush1.msra.mxu0 0.0
        %1784 = vmatprep.subr.mxu0 0.0
        %1785 = vmatpush1.msra.mxu0 0.0
        %1786 = vmatprep.subr.mxu0 0.0
        %1787 = vmatpush1.msra.mxu0 0.0
        %1788 = vmatprep.subr.mxu0 0.0
        %1789 = vmatpush1.msra.mxu0 0.0
        %1790 = vmatprep.subr.mxu0 0.0
        %1791 = vmatpush1.msra.mxu0 0.0
        %1792 = vmatprep.subr.mxu0 0.0
        %1793 = vmatpush1.msra.mxu0 0.0
        %1794 = vmatprep.subr.mxu0 0.0
        %1795 = vmatpush1.msra.mxu0 0.0
        %1796 = vmatprep.subr.mxu0 0.0
        %1797 = vmatpush1.msra.mxu0 0.0
        %1798 = vmatprep.subr.mxu0 0.0
        %1799 = vmatpush1.msra.mxu0 0.0
        %1800 = vmatprep.subr.mxu0 0.0
        %1801 = vmatpush1.msra.mxu0 0.0
        %1802 = vmatprep.subr.mxu0 0.0
        %1803 = vmatpush1.msra.mxu0 0.0
        %1804 = vmatprep.subr.mxu0 0.0
        %1805 = vmatpush1.msra.mxu0 0.0
        %1806 = vmatprep.subr.mxu0 0.0
        %1807 = vmatpush1.msra.mxu0 0.0
        %1808 = vmatprep.subr.mxu0 0.0
        %1809 = vmatpush1.msra.mxu0 0.0
        %1810 = vmatprep.subr.mxu0 0.0
        %1811 = vmatpush1.msra.mxu0 0.0
        %1812 = vmatprep.subr.mxu0 0.0
        %1813 = vmatpush1.msra.mxu0 0.0
        %1814 = vmatprep.mubr.f32.mxu0 0.0
        %v1815 = vand.u32 %v1445, 4294901760
        %1816 = vmatmul.mubr.f32.gmra.mrb[0].mxu0 %v1815
        %v1817 = vpop.f32.mrb[0].mxu0
        %v1818 = vadd.f32 %v1744, %v1817
        %v1819 = vpop.f32.mrb[0].mxu0
        %1820 = vdwg.mxu0
        %1821 = vmatprep.subr.mxu0 0.0
        %v1822 = vand.u32 %v1442, 4294901760
        %1823 = vmatpush1.msra.mxu0 %v1822
        %1824 = vmatprep.subr.mxu0 0.0
        %1825 = vmatpush1.msra.mxu0 0.0
        %1826 = vmatprep.subr.mxu0 0.0
        %1827 = vmatpush1.msra.mxu0 0.0
        %1828 = vmatprep.subr.mxu0 0.0
        %1829 = vmatpush1.msra.mxu0 0.0
        %1830 = vmatprep.subr.mxu0 0.0
        %1831 = vmatpush1.msra.mxu0 0.0
        %1832 = vmatprep.subr.mxu0 0.0
        %1833 = vmatpush1.msra.mxu0 0.0
        %1834 = vmatprep.subr.mxu0 0.0
        %1835 = vmatpush1.msra.mxu0 0.0
        %1836 = vmatprep.subr.mxu0 0.0
        %1837 = vmatpush1.msra.mxu0 0.0
        %1838 = vmatprep.subr.mxu0 0.0
        %1839 = vmatpush1.msra.mxu0 0.0
        %1840 = vmatprep.subr.mxu0 0.0
        %1841 = vmatpush1.msra.mxu0 0.0
        %1842 = vmatprep.subr.mxu0 0.0
        %1843 = vmatpush1.msra.mxu0 0.0
        %1844 = vmatprep.subr.mxu0 0.0
        %1845 = vmatpush1.msra.mxu0 0.0
        %1846 = vmatprep.subr.mxu0 0.0
        %1847 = vmatpush1.msra.mxu0 0.0
        %1848 = vmatprep.subr.mxu0 0.0
        %1849 = vmatpush1.msra.mxu0 0.0
        %1850 = vmatprep.subr.mxu0 0.0
        %1851 = vmatpush1.msra.mxu0 0.0
        %1852 = vmatprep.subr.mxu0 0.0
        %1853 = vmatpush1.msra.mxu0 0.0
        %1854 = vmatprep.subr.mxu0 0.0
        %1855 = vmatpush1.msra.mxu0 0.0
        %1856 = vmatprep.subr.mxu0 0.0
        %1857 = vmatpush1.msra.mxu0 0.0
        %1858 = vmatprep.subr.mxu0 0.0
        %1859 = vmatpush1.msra.mxu0 0.0
        %1860 = vmatprep.subr.mxu0 0.0
        %1861 = vmatpush1.msra.mxu0 0.0
        %1862 = vmatprep.subr.mxu0 0.0
        %1863 = vmatpush1.msra.mxu0 0.0
        %1864 = vmatprep.subr.mxu0 0.0
        %1865 = vmatpush1.msra.mxu0 0.0
        %1866 = vmatprep.subr.mxu0 0.0
        %1867 = vmatpush1.msra.mxu0 0.0
        %1868 = vmatprep.subr.mxu0 0.0
        %1869 = vmatpush1.msra.mxu0 0.0
        %1870 = vmatprep.subr.mxu0 0.0
        %1871 = vmatpush1.msra.mxu0 0.0
        %1872 = vmatprep.subr.mxu0 0.0
        %1873 = vmatpush1.msra.mxu0 0.0
        %1874 = vmatprep.subr.mxu0 0.0
        %1875 = vmatpush1.msra.mxu0 0.0
        %1876 = vmatprep.subr.mxu0 0.0
        %1877 = vmatpush1.msra.mxu0 0.0
        %1878 = vmatprep.subr.mxu0 0.0
        %1879 = vmatpush1.msra.mxu0 0.0
        %1880 = vmatprep.subr.mxu0 0.0
        %1881 = vmatpush1.msra.mxu0 0.0
        %1882 = vmatprep.subr.mxu0 0.0
        %1883 = vmatpush1.msra.mxu0 0.0
        %1884 = vmatprep.subr.mxu0 0.0
        %1885 = vmatpush1.msra.mxu0 0.0
        %1886 = vmatprep.mubr.f32.mxu0 0.0
        %v1887 = vand.u32 %v1445, 4294901760
        %1888 = vmatmul.mubr.f32.gmra.mrb[0].mxu0 %v1887
        %v1889 = vpop.f32.mrb[0].mxu0
        %v1890 = vadd.f32 %v1818, %v1889
        %v1891 = vpop.f32.mrb[0].mxu0
        %1892 = vdwg.mxu0
        %1893 = vrot.lane.b32.xlu0 %v967, 120
        %v1894 = vpop.permute.xlu0 %1893
        %1895 = vrot.lane.b32.xlu0 %v964, 88
        %v1896 = vpop.permute.xlu0 %1895
        %v1897 = vsel %vm977, %v1894, 0
        %v1899 = vsel %vm977, %v1896, 0
        %1901 = vmatprep.subr.mxu0 0.0
        %v1902 = vand.u32 %v1899, 4294901760
        %1903 = vmatpush1.xpose.msra.mxu0 %v1902
        %1904 = vmatprep.subr.mxu0 0.0
        %1905 = vmatpush1.xpose.msra.mxu0 0.0
        %1906 = vmatprep.subr.mxu0 0.0
        %1907 = vmatpush1.xpose.msra.mxu0 0.0
        %1908 = vmatprep.subr.mxu0 0.0
        %1909 = vmatpush1.xpose.msra.mxu0 0.0
        %1910 = vmatprep.subr.mxu0 0.0
        %1911 = vmatpush1.xpose.msra.mxu0 0.0
        %1912 = vmatprep.subr.mxu0 0.0
        %1913 = vmatpush1.xpose.msra.mxu0 0.0
        %1914 = vmatprep.subr.mxu0 0.0
        %1915 = vmatpush1.xpose.msra.mxu0 0.0
        %1916 = vmatprep.subr.mxu0 0.0
        %1917 = vmatpush1.xpose.msra.mxu0 0.0
        %1918 = vmatprep.subr.mxu0 0.0
        %1919 = vmatpush1.xpose.msra.mxu0 0.0
        %1920 = vmatprep.subr.mxu0 0.0
        %1921 = vmatpush1.xpose.msra.mxu0 0.0
        %1922 = vmatprep.subr.mxu0 0.0
        %1923 = vmatpush1.xpose.msra.mxu0 0.0
        %1924 = vmatprep.subr.mxu0 0.0
        %1925 = vmatpush1.xpose.msra.mxu0 0.0
        %1926 = vmatprep.subr.mxu0 0.0
        %1927 = vmatpush1.xpose.msra.mxu0 0.0
        %1928 = vmatprep.subr.mxu0 0.0
        %1929 = vmatpush1.xpose.msra.mxu0 0.0
        %1930 = vmatprep.subr.mxu0 0.0
        %1931 = vmatpush1.xpose.msra.mxu0 0.0
        %1932 = vmatprep.subr.mxu0 0.0
        %1933 = vmatpush1.xpose.msra.mxu0 0.0
        %1934 = vmatprep.subr.mxu0 0.0
        %1935 = vmatpush1.xpose.msra.mxu0 0.0
        %1936 = vmatprep.subr.mxu0 0.0
        %1937 = vmatpush1.xpose.msra.mxu0 0.0
        %1938 = vmatprep.subr.mxu0 0.0
        %1939 = vmatpush1.xpose.msra.mxu0 0.0
        %1940 = vmatprep.subr.mxu0 0.0
        %1941 = vmatpush1.xpose.msra.mxu0 0.0
        %1942 = vmatprep.subr.mxu0 0.0
        %1943 = vmatpush1.xpose.msra.mxu0 0.0
        %1944 = vmatprep.subr.mxu0 0.0
        %1945 = vmatpush1.xpose.msra.mxu0 0.0
        %1946 = vmatprep.subr.mxu0 0.0
        %1947 = vmatpush1.xpose.msra.mxu0 0.0
        %1948 = vmatprep.subr.mxu0 0.0
        %1949 = vmatpush1.xpose.msra.mxu0 0.0
        %1950 = vmatprep.subr.mxu0 0.0
        %1951 = vmatpush1.xpose.msra.mxu0 0.0
        %1952 = vmatprep.subr.mxu0 0.0
        %1953 = vmatpush1.xpose.msra.mxu0 0.0
        %1954 = vmatprep.subr.mxu0 0.0
        %1955 = vmatpush1.xpose.msra.mxu0 0.0
        %1956 = vmatprep.subr.mxu0 0.0
        %1957 = vmatpush1.xpose.msra.mxu0 0.0
        %1958 = vmatprep.subr.mxu0 0.0
        %1959 = vmatpush1.xpose.msra.mxu0 0.0
        %1960 = vmatprep.subr.mxu0 0.0
        %1961 = vmatpush1.xpose.msra.mxu0 0.0
        %1962 = vmatprep.subr.mxu0 0.0
        %1963 = vmatpush1.xpose.msra.mxu0 0.0
        %1964 = vmatprep.subr.mxu0 0.0
        %1965 = vmatpush1.xpose.msra.mxu0 0.0
        %1966 = vmatprep.mubr.f32.mxu0 0.0
        %v1967 = vand.u32 %v1897, 4294901760
        %v1968 = vsub.f32 %v1897, %v1967
        %v1969 = vand.u32 %v1968, 4294901760
        %v1970 = vsub.f32 %v1968, %v1969
        %v1971 = vand.u32 %v1970, 4294901760
        %1972 = vmatmul.mubr.f32.gmra.mrb[0].mxu0 %v1971
        %v1973 = vpop.f32.mrb[0].mxu0
        %v1974 = vadd.f32 %v973, %v1973
        %v1975 = vpop.f32.mrb[0].mxu0
        %1976 = vdwg.mxu0
        %1977 = vmatprep.subr.mxu0 0.0
        %v1978 = vand.u32 %v1899, 4294901760
        %v1979 = vsub.f32 %v1899, %v1978
        %v1980 = vand.u32 %v1979, 4294901760
        %v1981 = vsub.f32 %v1979, %v1980
        %v1982 = vand.u32 %v1981, 4294901760
        %1983 = vmatpush1.xpose.msra.mxu0 %v1982
        %1984 = vmatprep.subr.mxu0 0.0
        %1985 = vmatpush1.xpose.msra.mxu0 0.0
        %1986 = vmatprep.subr.mxu0 0.0
        %1987 = vmatpush1.xpose.msra.mxu0 0.0
        %1988 = vmatprep.subr.mxu0 0.0
        %1989 = vmatpush1.xpose.msra.mxu0 0.0
        %1990 = vmatprep.subr.mxu0 0.0
        %1991 = vmatpush1.xpose.msra.mxu0 0.0
        %1992 = vmatprep.subr.mxu0 0.0
        %1993 = vmatpush1.xpose.msra.mxu0 0.0
        %1994 = vmatprep.subr.mxu0 0.0
        %1995 = vmatpush1.xpose.msra.mxu0 0.0
        %1996 = vmatprep.subr.mxu0 0.0
        %1997 = vmatpush1.xpose.msra.mxu0 0.0
        %1998 = vmatprep.subr.mxu0 0.0
        %1999 = vmatpush1.xpose.msra.mxu0 0.0
        %2000 = vmatprep.subr.mxu0 0.0
        %2001 = vmatpush1.xpose.msra.mxu0 0.0
        %2002 = vmatprep.subr.mxu0 0.0
        %2003 = vmatpush1.xpose.msra.mxu0 0.0
        %2004 = vmatprep.subr.mxu0 0.0
        %2005 = vmatpush1.xpose.msra.mxu0 0.0
        %2006 = vmatprep.subr.mxu0 0.0
        %2007 = vmatpush1.xpose.msra.mxu0 0.0
        %2008 = vmatprep.subr.mxu0 0.0
        %2009 = vmatpush1.xpose.msra.mxu0 0.0
        %2010 = vmatprep.subr.mxu0 0.0
        %2011 = vmatpush1.xpose.msra.mxu0 0.0
        %2012 = vmatprep.subr.mxu0 0.0
        %2013 = vmatpush1.xpose.msra.mxu0 0.0
        %2014 = vmatprep.subr.mxu0 0.0
        %2015 = vmatpush1.xpose.msra.mxu0 0.0
        %2016 = vmatprep.subr.mxu0 0.0
        %2017 = vmatpush1.xpose.msra.mxu0 0.0
        %2018 = vmatprep.subr.mxu0 0.0
        %2019 = vmatpush1.xpose.msra.mxu0 0.0
        %2020 = vmatprep.subr.mxu0 0.0
        %2021 = vmatpush1.xpose.msra.mxu0 0.0
        %2022 = vmatprep.subr.mxu0 0.0
        %2023 = vmatpush1.xpose.msra.mxu0 0.0
        %2024 = vmatprep.subr.mxu0 0.0
        %2025 = vmatpush1.xpose.msra.mxu0 0.0
        %2026 = vmatprep.subr.mxu0 0.0
        %2027 = vmatpush1.xpose.msra.mxu0 0.0
        %2028 = vmatprep.subr.mxu0 0.0
        %2029 = vmatpush1.xpose.msra.mxu0 0.0
        %2030 = vmatprep.subr.mxu0 0.0
        %2031 = vmatpush1.xpose.msra.mxu0 0.0
        %2032 = vmatprep.subr.mxu0 0.0
        %2033 = vmatpush1.xpose.msra.mxu0 0.0
        %2034 = vmatprep.subr.mxu0 0.0
        %2035 = vmatpush1.xpose.msra.mxu0 0.0
        %2036 = vmatprep.subr.mxu0 0.0
        %2037 = vmatpush1.xpose.msra.mxu0 0.0
        %2038 = vmatprep.subr.mxu0 0.0
        %2039 = vmatpush1.xpose.msra.mxu0 0.0
        %2040 = vmatprep.subr.mxu0 0.0
        %2041 = vmatpush1.xpose.msra.mxu0 0.0
        %2042 = vmatprep.subr.mxu0 0.0
        %2043 = vmatpush1.xpose.msra.mxu0 0.0
        %2044 = vmatprep.subr.mxu0 0.0
        %2045 = vmatpush1.xpose.msra.mxu0 0.0
        %2046 = vmatprep.mubr.f32.mxu0 0.0
        %v2047 = vand.u32 %v1897, 4294901760
        %2048 = vmatmul.mubr.f32.gmra.mrb[0].mxu0 %v2047
        %v2049 = vpop.f32.mrb[0].mxu0
        %v2050 = vadd.f32 %v1974, %v2049
        %v2051 = vpop.f32.mrb[0].mxu0
        %2052 = vdwg.mxu0
        %2053 = vmatprep.subr.mxu0 0.0
        %v2054 = vand.u32 %v1899, 4294901760
        %v2055 = vsub.f32 %v1899, %v2054
        %2056 = vmatpush1.xpose.msra.mxu0 %v2055
        %2057 = vmatprep.subr.mxu0 0.0
        %2058 = vmatpush1.xpose.msra.mxu0 0.0
        %2059 = vmatprep.subr.mxu0 0.0
        %2060 = vmatpush1.xpose.msra.mxu0 0.0
        %2061 = vmatprep.subr.mxu0 0.0
        %2062 = vmatpush1.xpose.msra.mxu0 0.0
        %2063 = vmatprep.subr.mxu0 0.0
        %2064 = vmatpush1.xpose.msra.mxu0 0.0
        %2065 = vmatprep.subr.mxu0 0.0
        %2066 = vmatpush1.xpose.msra.mxu0 0.0
        %2067 = vmatprep.subr.mxu0 0.0
        %2068 = vmatpush1.xpose.msra.mxu0 0.0
        %2069 = vmatprep.subr.mxu0 0.0
        %2070 = vmatpush1.xpose.msra.mxu0 0.0
        %2071 = vmatprep.subr.mxu0 0.0
        %2072 = vmatpush1.xpose.msra.mxu0 0.0
        %2073 = vmatprep.subr.mxu0 0.0
        %2074 = vmatpush1.xpose.msra.mxu0 0.0
        %2075 = vmatprep.subr.mxu0 0.0
        %2076 = vmatpush1.xpose.msra.mxu0 0.0
        %2077 = vmatprep.subr.mxu0 0.0
        %2078 = vmatpush1.xpose.msra.mxu0 0.0
        %2079 = vmatprep.subr.mxu0 0.0
        %2080 = vmatpush1.xpose.msra.mxu0 0.0
        %2081 = vmatprep.subr.mxu0 0.0
        %2082 = vmatpush1.xpose.msra.mxu0 0.0
        %2083 = vmatprep.subr.mxu0 0.0
        %2084 = vmatpush1.xpose.msra.mxu0 0.0
        %2085 = vmatprep.subr.mxu0 0.0
        %2086 = vmatpush1.xpose.msra.mxu0 0.0
        %2087 = vmatprep.subr.mxu0 0.0
        %2088 = vmatpush1.xpose.msra.mxu0 0.0
        %2089 = vmatprep.subr.mxu0 0.0
        %2090 = vmatpush1.xpose.msra.mxu0 0.0
        %2091 = vmatprep.subr.mxu0 0.0
        %2092 = vmatpush1.xpose.msra.mxu0 0.0
        %2093 = vmatprep.subr.mxu0 0.0
        %2094 = vmatpush1.xpose.msra.mxu0 0.0
        %2095 = vmatprep.subr.mxu0 0.0
        %2096 = vmatpush1.xpose.msra.mxu0 0.0
        %2097 = vmatprep.subr.mxu0 0.0
        %2098 = vmatpush1.xpose.msra.mxu0 0.0
        %2099 = vmatprep.subr.mxu0 0.0
        %2100 = vmatpush1.xpose.msra.mxu0 0.0
        %2101 = vmatprep.subr.mxu0 0.0
        %2102 = vmatpush1.xpose.msra.mxu0 0.0
        %2103 = vmatprep.subr.mxu0 0.0
        %2104 = vmatpush1.xpose.msra.mxu0 0.0
        %2105 = vmatprep.subr.mxu0 0.0
        %2106 = vmatpush1.xpose.msra.mxu0 0.0
        %2107 = vmatprep.subr.mxu0 0.0
        %2108 = vmatpush1.xpose.msra.mxu0 0.0
        %2109 = vmatprep.subr.mxu0 0.0
        %2110 = vmatpush1.xpose.msra.mxu0 0.0
        %2111 = vmatprep.subr.mxu0 0.0
        %2112 = vmatpush1.xpose.msra.mxu0 0.0
        %2113 = vmatprep.subr.mxu0 0.0
        %2114 = vmatpush1.xpose.msra.mxu0 0.0
        %2115 = vmatprep.subr.mxu0 0.0
        %2116 = vmatpush1.xpose.msra.mxu0 0.0
        %2117 = vmatprep.subr.mxu0 0.0
        %2118 = vmatpush1.xpose.msra.mxu0 0.0
        %2119 = vmatprep.mubr.f32.mxu0 0.0
        %v2120 = vand.u32 %v1897, 4294901760
        %v2121 = vsub.f32 %v1897, %v2120
        %2122 = vmatmul.mubr.f32.gmra.mrb[0].mxu0 %v2121
        %v2123 = vpop.f32.mrb[0].mxu0
        %v2124 = vadd.f32 %v2050, %v2123
        %v2125 = vpop.f32.mrb[0].mxu0
        %2126 = vdwg.mxu0
        %2127 = vmatprep.subr.mxu0 0.0
        %v2128 = vand.u32 %v1899, 4294901760
        %2129 = vmatpush1.xpose.msra.mxu0 %v2128
        %2130 = vmatprep.subr.mxu0 0.0
        %2131 = vmatpush1.xpose.msra.mxu0 0.0
        %2132 = vmatprep.subr.mxu0 0.0
        %2133 = vmatpush1.xpose.msra.mxu0 0.0
        %2134 = vmatprep.subr.mxu0 0.0
        %2135 = vmatpush1.xpose.msra.mxu0 0.0
        %2136 = vmatprep.subr.mxu0 0.0
        %2137 = vmatpush1.xpose.msra.mxu0 0.0
        %2138 = vmatprep.subr.mxu0 0.0
        %2139 = vmatpush1.xpose.msra.mxu0 0.0
        %2140 = vmatprep.subr.mxu0 0.0
        %2141 = vmatpush1.xpose.msra.mxu0 0.0
        %2142 = vmatprep.subr.mxu0 0.0
        %2143 = vmatpush1.xpose.msra.mxu0 0.0
        %2144 = vmatprep.subr.mxu0 0.0
        %2145 = vmatpush1.xpose.msra.mxu0 0.0
        %2146 = vmatprep.subr.mxu0 0.0
        %2147 = vmatpush1.xpose.msra.mxu0 0.0
        %2148 = vmatprep.subr.mxu0 0.0
        %2149 = vmatpush1.xpose.msra.mxu0 0.0
        %2150 = vmatprep.subr.mxu0 0.0
        %2151 = vmatpush1.xpose.msra.mxu0 0.0
        %2152 = vmatprep.subr.mxu0 0.0
        %2153 = vmatpush1.xpose.msra.mxu0 0.0
        %2154 = vmatprep.subr.mxu0 0.0
        %2155 = vmatpush1.xpose.msra.mxu0 0.0
        %2156 = vmatprep.subr.mxu0 0.0
        %2157 = vmatpush1.xpose.msra.mxu0 0.0
        %2158 = vmatprep.subr.mxu0 0.0
        %2159 = vmatpush1.xpose.msra.mxu0 0.0
        %2160 = vmatprep.subr.mxu0 0.0
        %2161 = vmatpush1.xpose.msra.mxu0 0.0
        %2162 = vmatprep.subr.mxu0 0.0
        %2163 = vmatpush1.xpose.msra.mxu0 0.0
        %2164 = vmatprep.subr.mxu0 0.0
        %2165 = vmatpush1.xpose.msra.mxu0 0.0
        %2166 = vmatprep.subr.mxu0 0.0
        %2167 = vmatpush1.xpose.msra.mxu0 0.0
        %2168 = vmatprep.subr.mxu0 0.0
        %2169 = vmatpush1.xpose.msra.mxu0 0.0
        %2170 = vmatprep.subr.mxu0 0.0
        %2171 = vmatpush1.xpose.msra.mxu0 0.0
        %2172 = vmatprep.subr.mxu0 0.0
        %2173 = vmatpush1.xpose.msra.mxu0 0.0
        %2174 = vmatprep.subr.mxu0 0.0
        %2175 = vmatpush1.xpose.msra.mxu0 0.0
        %2176 = vmatprep.subr.mxu0 0.0
        %2177 = vmatpush1.xpose.msra.mxu0 0.0
        %2178 = vmatprep.subr.mxu0 0.0
        %2179 = vmatpush1.xpose.msra.mxu0 0.0
        %2180 = vmatprep.subr.mxu0 0.0
        %2181 = vmatpush1.xpose.msra.mxu0 0.0
        %2182 = vmatprep.subr.mxu0 0.0
        %2183 = vmatpush1.xpose.msra.mxu0 0.0
        %2184 = vmatprep.subr.mxu0 0.0
        %2185 = vmatpush1.xpose.msra.mxu0 0.0
        %2186 = vmatprep.subr.mxu0 0.0
        %2187 = vmatpush1.xpose.msra.mxu0 0.0
        %2188 = vmatprep.subr.mxu0 0.0
        %2189 = vmatpush1.xpose.msra.mxu0 0.0
        %2190 = vmatprep.subr.mxu0 0.0
        %2191 = vmatpush1.xpose.msra.mxu0 0.0
        %2192 = vmatprep.mubr.f32.mxu0 0.0
        %v2193 = vand.u32 %v1897, 4294901760
        %v2194 = vsub.f32 %v1897, %v2193
        %v2195 = vand.u32 %v2194, 4294901760
        %2196 = vmatmul.mubr.f32.gmra.mrb[0].mxu0 %v2195
        %v2197 = vpop.f32.mrb[0].mxu0
        %v2198 = vadd.f32 %v2124, %v2197
        %v2199 = vpop.f32.mrb[0].mxu0
        %2200 = vdwg.mxu0
        %2201 = vmatprep.subr.mxu0 0.0
        %v2202 = vand.u32 %v1899, 4294901760
        %v2203 = vsub.f32 %v1899, %v2202
        %v2204 = vand.u32 %v2203, 4294901760
        %2205 = vmatpush1.xpose.msra.mxu0 %v2204
        %2206 = vmatprep.subr.mxu0 0.0
        %2207 = vmatpush1.xpose.msra.mxu0 0.0
        %2208 = vmatprep.subr.mxu0 0.0
        %2209 = vmatpush1.xpose.msra.mxu0 0.0
        %2210 = vmatprep.subr.mxu0 0.0
        %2211 = vmatpush1.xpose.msra.mxu0 0.0
        %2212 = vmatprep.subr.mxu0 0.0
        %2213 = vmatpush1.xpose.msra.mxu0 0.0
        %2214 = vmatprep.subr.mxu0 0.0
        %2215 = vmatpush1.xpose.msra.mxu0 0.0
        %2216 = vmatprep.subr.mxu0 0.0
        %2217 = vmatpush1.xpose.msra.mxu0 0.0
        %2218 = vmatprep.subr.mxu0 0.0
        %2219 = vmatpush1.xpose.msra.mxu0 0.0
        %2220 = vmatprep.subr.mxu0 0.0
        %2221 = vmatpush1.xpose.msra.mxu0 0.0
        %2222 = vmatprep.subr.mxu0 0.0
        %2223 = vmatpush1.xpose.msra.mxu0 0.0
        %2224 = vmatprep.subr.mxu0 0.0
        %2225 = vmatpush1.xpose.msra.mxu0 0.0
        %2226 = vmatprep.subr.mxu0 0.0
        %2227 = vmatpush1.xpose.msra.mxu0 0.0
        %2228 = vmatprep.subr.mxu0 0.0
        %2229 = vmatpush1.xpose.msra.mxu0 0.0
        %2230 = vmatprep.subr.mxu0 0.0
        %2231 = vmatpush1.xpose.msra.mxu0 0.0
        %2232 = vmatprep.subr.mxu0 0.0
        %2233 = vmatpush1.xpose.msra.mxu0 0.0
        %2234 = vmatprep.subr.mxu0 0.0
        %2235 = vmatpush1.xpose.msra.mxu0 0.0
        %2236 = vmatprep.subr.mxu0 0.0
        %2237 = vmatpush1.xpose.msra.mxu0 0.0
        %2238 = vmatprep.subr.mxu0 0.0
        %2239 = vmatpush1.xpose.msra.mxu0 0.0
        %2240 = vmatprep.subr.mxu0 0.0
        %2241 = vmatpush1.xpose.msra.mxu0 0.0
        %2242 = vmatprep.subr.mxu0 0.0
        %2243 = vmatpush1.xpose.msra.mxu0 0.0
        %2244 = vmatprep.subr.mxu0 0.0
        %2245 = vmatpush1.xpose.msra.mxu0 0.0
        %2246 = vmatprep.subr.mxu0 0.0
        %2247 = vmatpush1.xpose.msra.mxu0 0.0
        %2248 = vmatprep.subr.mxu0 0.0
        %2249 = vmatpush1.xpose.msra.mxu0 0.0
        %2250 = vmatprep.subr.mxu0 0.0
        %2251 = vmatpush1.xpose.msra.mxu0 0.0
        %2252 = vmatprep.subr.mxu0 0.0
        %2253 = vmatpush1.xpose.msra.mxu0 0.0
        %2254 = vmatprep.subr.mxu0 0.0
        %2255 = vmatpush1.xpose.msra.mxu0 0.0
        %2256 = vmatprep.subr.mxu0 0.0
        %2257 = vmatpush1.xpose.msra.mxu0 0.0
        %2258 = vmatprep.subr.mxu0 0.0
        %2259 = vmatpush1.xpose.msra.mxu0 0.0
        %2260 = vmatprep.subr.mxu0 0.0
        %2261 = vmatpush1.xpose.msra.mxu0 0.0
        %2262 = vmatprep.subr.mxu0 0.0
        %2263 = vmatpush1.xpose.msra.mxu0 0.0
        %2264 = vmatprep.subr.mxu0 0.0
        %2265 = vmatpush1.xpose.msra.mxu0 0.0
        %2266 = vmatprep.subr.mxu0 0.0
        %2267 = vmatpush1.xpose.msra.mxu0 0.0
        %2268 = vmatprep.mubr.f32.mxu0 0.0
        %v2269 = vand.u32 %v1897, 4294901760
        %2270 = vmatmul.mubr.f32.gmra.mrb[0].mxu0 %v2269
        %v2271 = vpop.f32.mrb[0].mxu0
        %v2272 = vadd.f32 %v2198, %v2271
        %v2273 = vpop.f32.mrb[0].mxu0
        %2274 = vdwg.mxu0
        %2275 = vmatprep.subr.mxu0 0.0
        %v2276 = vand.u32 %v1899, 4294901760
        %2277 = vmatpush1.xpose.msra.mxu0 %v2276
        %2278 = vmatprep.subr.mxu0 0.0
        %2279 = vmatpush1.xpose.msra.mxu0 0.0
        %2280 = vmatprep.subr.mxu0 0.0
        %2281 = vmatpush1.xpose.msra.mxu0 0.0
        %2282 = vmatprep.subr.mxu0 0.0
        %2283 = vmatpush1.xpose.msra.mxu0 0.0
        %2284 = vmatprep.subr.mxu0 0.0
        %2285 = vmatpush1.xpose.msra.mxu0 0.0
        %2286 = vmatprep.subr.mxu0 0.0
        %2287 = vmatpush1.xpose.msra.mxu0 0.0
        %2288 = vmatprep.subr.mxu0 0.0
        %2289 = vmatpush1.xpose.msra.mxu0 0.0
        %2290 = vmatprep.subr.mxu0 0.0
        %2291 = vmatpush1.xpose.msra.mxu0 0.0
        %2292 = vmatprep.subr.mxu0 0.0
        %2293 = vmatpush1.xpose.msra.mxu0 0.0
        %2294 = vmatprep.subr.mxu0 0.0
        %2295 = vmatpush1.xpose.msra.mxu0 0.0
        %2296 = vmatprep.subr.mxu0 0.0
        %2297 = vmatpush1.xpose.msra.mxu0 0.0
        %2298 = vmatprep.subr.mxu0 0.0
        %2299 = vmatpush1.xpose.msra.mxu0 0.0
        %2300 = vmatprep.subr.mxu0 0.0
        %2301 = vmatpush1.xpose.msra.mxu0 0.0
        %2302 = vmatprep.subr.mxu0 0.0
        %2303 = vmatpush1.xpose.msra.mxu0 0.0
        %2304 = vmatprep.subr.mxu0 0.0
        %2305 = vmatpush1.xpose.msra.mxu0 0.0
        %2306 = vmatprep.subr.mxu0 0.0
        %2307 = vmatpush1.xpose.msra.mxu0 0.0
        %2308 = vmatprep.subr.mxu0 0.0
        %2309 = vmatpush1.xpose.msra.mxu0 0.0
        %2310 = vmatprep.subr.mxu0 0.0
        %2311 = vmatpush1.xpose.msra.mxu0 0.0
        %2312 = vmatprep.subr.mxu0 0.0
        %2313 = vmatpush1.xpose.msra.mxu0 0.0
        %2314 = vmatprep.subr.mxu0 0.0
        %2315 = vmatpush1.xpose.msra.mxu0 0.0
        %2316 = vmatprep.subr.mxu0 0.0
        %2317 = vmatpush1.xpose.msra.mxu0 0.0
        %2318 = vmatprep.subr.mxu0 0.0
        %2319 = vmatpush1.xpose.msra.mxu0 0.0
        %2320 = vmatprep.subr.mxu0 0.0
        %2321 = vmatpush1.xpose.msra.mxu0 0.0
        %2322 = vmatprep.subr.mxu0 0.0
        %2323 = vmatpush1.xpose.msra.mxu0 0.0
        %2324 = vmatprep.subr.mxu0 0.0
        %2325 = vmatpush1.xpose.msra.mxu0 0.0
        %2326 = vmatprep.subr.mxu0 0.0
        %2327 = vmatpush1.xpose.msra.mxu0 0.0
        %2328 = vmatprep.subr.mxu0 0.0
        %2329 = vmatpush1.xpose.msra.mxu0 0.0
        %2330 = vmatprep.subr.mxu0 0.0
        %2331 = vmatpush1.xpose.msra.mxu0 0.0
        %2332 = vmatprep.subr.mxu0 0.0
        %2333 = vmatpush1.xpose.msra.mxu0 0.0
        %2334 = vmatprep.subr.mxu0 0.0
        %2335 = vmatpush1.xpose.msra.mxu0 0.0
        %2336 = vmatprep.subr.mxu0 0.0
        %2337 = vmatpush1.xpose.msra.mxu0 0.0
        %2338 = vmatprep.subr.mxu0 0.0
        %2339 = vmatpush1.xpose.msra.mxu0 0.0
        %2340 = vmatprep.mubr.f32.mxu0 0.0
        %v2341 = vand.u32 %v1897, 4294901760
        %2342 = vmatmul.mubr.f32.gmra.mrb[0].mxu0 %v2341
        %v2343 = vpop.f32.mrb[0].mxu0
        %v2344 = vadd.f32 %v2272, %v2343
        %v2345 = vpop.f32.mrb[0].mxu0
        %2346 = vdwg.mxu0
        %v2347 = vsel %vm977, %v2344, -inf
        %2348 = vmax.xlane.f32.xlu0 %v2347
        %v2349 = vpop.xlane.xlu0 %2348
        %v2350 = vsub.f32 %v2344, %v2349
        %v2351 = vmul.f32 %v2350, 1.442695
        %v2352 = vpow.pop %v2351
        %v2353 = vsel %vm977, %v2352, 0.0
        %2354 = vadd.xlane.f32.xlu0 %v2353
        %v2355 = vpop.xlane.xlu0 %2354
        %v2356 = vrcp.pop %v2355
        %v2357 = vmul.f32 1.0, %v2356
        %v2358 = vmul.f32 %v2352, %v2357
        %2359 = vrot.lane.b32.xlu0 %v964, 56
        %v2360 = vpop.permute.xlu0 %2359
        %v2363 = vsel %vm977, %v2358, 0
        %2365 = vmatprep.subr.mxu0 0.0
        %v2366 = vand.u32 %v2360, 4294901760
        %2367 = vmatpush1.msra.mxu0 %v2366
        %2368 = vmatprep.subr.mxu0 0.0
        %2369 = vmatpush1.msra.mxu0 0.0
        %2370 = vmatprep.subr.mxu0 0.0
        %2371 = vmatpush1.msra.mxu0 0.0
        %2372 = vmatprep.subr.mxu0 0.0
        %2373 = vmatpush1.msra.mxu0 0.0
        %2374 = vmatprep.subr.mxu0 0.0
        %2375 = vmatpush1.msra.mxu0 0.0
        %2376 = vmatprep.subr.mxu0 0.0
        %2377 = vmatpush1.msra.mxu0 0.0
        %2378 = vmatprep.subr.mxu0 0.0
        %2379 = vmatpush1.msra.mxu0 0.0
        %2380 = vmatprep.subr.mxu0 0.0
        %2381 = vmatpush1.msra.mxu0 0.0
        %2382 = vmatprep.subr.mxu0 0.0
        %2383 = vmatpush1.msra.mxu0 0.0
        %2384 = vmatprep.subr.mxu0 0.0
        %2385 = vmatpush1.msra.mxu0 0.0
        %2386 = vmatprep.subr.mxu0 0.0
        %2387 = vmatpush1.msra.mxu0 0.0
        %2388 = vmatprep.subr.mxu0 0.0
        %2389 = vmatpush1.msra.mxu0 0.0
        %2390 = vmatprep.subr.mxu0 0.0
        %2391 = vmatpush1.msra.mxu0 0.0
        %2392 = vmatprep.subr.mxu0 0.0
        %2393 = vmatpush1.msra.mxu0 0.0
        %2394 = vmatprep.subr.mxu0 0.0
        %2395 = vmatpush1.msra.mxu0 0.0
        %2396 = vmatprep.subr.mxu0 0.0
        %2397 = vmatpush1.msra.mxu0 0.0
        %2398 = vmatprep.subr.mxu0 0.0
        %2399 = vmatpush1.msra.mxu0 0.0
        %2400 = vmatprep.subr.mxu0 0.0
        %2401 = vmatpush1.msra.mxu0 0.0
        %2402 = vmatprep.subr.mxu0 0.0
        %2403 = vmatpush1.msra.mxu0 0.0
        %2404 = vmatprep.subr.mxu0 0.0
        %2405 = vmatpush1.msra.mxu0 0.0
        %2406 = vmatprep.subr.mxu0 0.0
        %2407 = vmatpush1.msra.mxu0 0.0
        %2408 = vmatprep.subr.mxu0 0.0
        %2409 = vmatpush1.msra.mxu0 0.0
        %2410 = vmatprep.subr.mxu0 0.0
        %2411 = vmatpush1.msra.mxu0 0.0
        %2412 = vmatprep.subr.mxu0 0.0
        %2413 = vmatpush1.msra.mxu0 0.0
        %2414 = vmatprep.subr.mxu0 0.0
        %2415 = vmatpush1.msra.mxu0 0.0
        %2416 = vmatprep.subr.mxu0 0.0
        %2417 = vmatpush1.msra.mxu0 0.0
        %2418 = vmatprep.subr.mxu0 0.0
        %2419 = vmatpush1.msra.mxu0 0.0
        %2420 = vmatprep.subr.mxu0 0.0
        %2421 = vmatpush1.msra.mxu0 0.0
        %2422 = vmatprep.subr.mxu0 0.0
        %2423 = vmatpush1.msra.mxu0 0.0
        %2424 = vmatprep.subr.mxu0 0.0
        %2425 = vmatpush1.msra.mxu0 0.0
        %2426 = vmatprep.subr.mxu0 0.0
        %2427 = vmatpush1.msra.mxu0 0.0
        %2428 = vmatprep.subr.mxu0 0.0
        %2429 = vmatpush1.msra.mxu0 0.0
        %2430 = vmatprep.mubr.f32.mxu0 0.0
        %v2431 = vand.u32 %v2363, 4294901760
        %v2432 = vsub.f32 %v2363, %v2431
        %v2433 = vand.u32 %v2432, 4294901760
        %v2434 = vsub.f32 %v2432, %v2433
        %v2435 = vand.u32 %v2434, 4294901760
        %2436 = vmatmul.mubr.f32.gmra.mrb[0].mxu0 %v2435
        %v2437 = vpop.f32.mrb[0].mxu0
        %v2438 = vadd.f32 0.0, %v2437
        %v2439 = vpop.f32.mrb[0].mxu0
        %2440 = vdwg.mxu0
        %2441 = vmatprep.subr.mxu0 0.0
        %v2442 = vand.u32 %v2360, 4294901760
        %v2443 = vsub.f32 %v2360, %v2442
        %v2444 = vand.u32 %v2443, 4294901760
        %v2445 = vsub.f32 %v2443, %v2444
        %v2446 = vand.u32 %v2445, 4294901760
        %2447 = vmatpush1.msra.mxu0 %v2446
        %2448 = vmatprep.subr.mxu0 0.0
        %2449 = vmatpush1.msra.mxu0 0.0
        %2450 = vmatprep.subr.mxu0 0.0
        %2451 = vmatpush1.msra.mxu0 0.0
        %2452 = vmatprep.subr.mxu0 0.0
        %2453 = vmatpush1.msra.mxu0 0.0
        %2454 = vmatprep.subr.mxu0 0.0
        %2455 = vmatpush1.msra.mxu0 0.0
        %2456 = vmatprep.subr.mxu0 0.0
        %2457 = vmatpush1.msra.mxu0 0.0
        %2458 = vmatprep.subr.mxu0 0.0
        %2459 = vmatpush1.msra.mxu0 0.0
        %2460 = vmatprep.subr.mxu0 0.0
        %2461 = vmatpush1.msra.mxu0 0.0
        %2462 = vmatprep.subr.mxu0 0.0
        %2463 = vmatpush1.msra.mxu0 0.0
        %2464 = vmatprep.subr.mxu0 0.0
        %2465 = vmatpush1.msra.mxu0 0.0
        %2466 = vmatprep.subr.mxu0 0.0
        %2467 = vmatpush1.msra.mxu0 0.0
        %2468 = vmatprep.subr.mxu0 0.0
        %2469 = vmatpush1.msra.mxu0 0.0
        %2470 = vmatprep.subr.mxu0 0.0
        %2471 = vmatpush1.msra.mxu0 0.0
        %2472 = vmatprep.subr.mxu0 0.0
        %2473 = vmatpush1.msra.mxu0 0.0
        %2474 = vmatprep.subr.mxu0 0.0
        %2475 = vmatpush1.msra.mxu0 0.0
        %2476 = vmatprep.subr.mxu0 0.0
        %2477 = vmatpush1.msra.mxu0 0.0
        %2478 = vmatprep.subr.mxu0 0.0
        %2479 = vmatpush1.msra.mxu0 0.0
        %2480 = vmatprep.subr.mxu0 0.0
        %2481 = vmatpush1.msra.mxu0 0.0
        %2482 = vmatprep.subr.mxu0 0.0
        %2483 = vmatpush1.msra.mxu0 0.0
        %2484 = vmatprep.subr.mxu0 0.0
        %2485 = vmatpush1.msra.mxu0 0.0
        %2486 = vmatprep.subr.mxu0 0.0
        %2487 = vmatpush1.msra.mxu0 0.0
        %2488 = vmatprep.subr.mxu0 0.0
        %2489 = vmatpush1.msra.mxu0 0.0
        %2490 = vmatprep.subr.mxu0 0.0
        %2491 = vmatpush1.msra.mxu0 0.0
        %2492 = vmatprep.subr.mxu0 0.0
        %2493 = vmatpush1.msra.mxu0 0.0
        %2494 = vmatprep.subr.mxu0 0.0
        %2495 = vmatpush1.msra.mxu0 0.0
        %2496 = vmatprep.subr.mxu0 0.0
        %2497 = vmatpush1.msra.mxu0 0.0
        %2498 = vmatprep.subr.mxu0 0.0
        %2499 = vmatpush1.msra.mxu0 0.0
        %2500 = vmatprep.subr.mxu0 0.0
        %2501 = vmatpush1.msra.mxu0 0.0
        %2502 = vmatprep.subr.mxu0 0.0
        %2503 = vmatpush1.msra.mxu0 0.0
        %2504 = vmatprep.subr.mxu0 0.0
        %2505 = vmatpush1.msra.mxu0 0.0
        %2506 = vmatprep.subr.mxu0 0.0
        %2507 = vmatpush1.msra.mxu0 0.0
        %2508 = vmatprep.subr.mxu0 0.0
        %2509 = vmatpush1.msra.mxu0 0.0
        %2510 = vmatprep.mubr.f32.mxu0 0.0
        %v2511 = vand.u32 %v2363, 4294901760
        %2512 = vmatmul.mubr.f32.gmra.mrb[0].mxu0 %v2511
        %v2513 = vpop.f32.mrb[0].mxu0
        %v2514 = vadd.f32 %v2438, %v2513
        %v2515 = vpop.f32.mrb[0].mxu0
        %2516 = vdwg.mxu0
        %2517 = vmatprep.subr.mxu0 0.0
        %v2518 = vand.u32 %v2360, 4294901760
        %v2519 = vsub.f32 %v2360, %v2518
        %2520 = vmatpush1.msra.mxu0 %v2519
        %2521 = vmatprep.subr.mxu0 0.0
        %2522 = vmatpush1.msra.mxu0 0.0
        %2523 = vmatprep.subr.mxu0 0.0
        %2524 = vmatpush1.msra.mxu0 0.0
        %2525 = vmatprep.subr.mxu0 0.0
        %2526 = vmatpush1.msra.mxu0 0.0
        %2527 = vmatprep.subr.mxu0 0.0
        %2528 = vmatpush1.msra.mxu0 0.0
        %2529 = vmatprep.subr.mxu0 0.0
        %2530 = vmatpush1.msra.mxu0 0.0
        %2531 = vmatprep.subr.mxu0 0.0
        %2532 = vmatpush1.msra.mxu0 0.0
        %2533 = vmatprep.subr.mxu0 0.0
        %2534 = vmatpush1.msra.mxu0 0.0
        %2535 = vmatprep.subr.mxu0 0.0
        %2536 = vmatpush1.msra.mxu0 0.0
        %2537 = vmatprep.subr.mxu0 0.0
        %2538 = vmatpush1.msra.mxu0 0.0
        %2539 = vmatprep.subr.mxu0 0.0
        %2540 = vmatpush1.msra.mxu0 0.0
        %2541 = vmatprep.subr.mxu0 0.0
        %2542 = vmatpush1.msra.mxu0 0.0
        %2543 = vmatprep.subr.mxu0 0.0
        %2544 = vmatpush1.msra.mxu0 0.0
        %2545 = vmatprep.subr.mxu0 0.0
        %2546 = vmatpush1.msra.mxu0 0.0
        %2547 = vmatprep.subr.mxu0 0.0
        %2548 = vmatpush1.msra.mxu0 0.0
        %2549 = vmatprep.subr.mxu0 0.0
        %2550 = vmatpush1.msra.mxu0 0.0
        %2551 = vmatprep.subr.mxu0 0.0
        %2552 = vmatpush1.msra.mxu0 0.0
        %2553 = vmatprep.subr.mxu0 0.0
        %2554 = vmatpush1.msra.mxu0 0.0
        %2555 = vmatprep.subr.mxu0 0.0
        %2556 = vmatpush1.msra.mxu0 0.0
        %2557 = vmatprep.subr.mxu0 0.0
        %2558 = vmatpush1.msra.mxu0 0.0
        %2559 = vmatprep.subr.mxu0 0.0
        %2560 = vmatpush1.msra.mxu0 0.0
        %2561 = vmatprep.subr.mxu0 0.0
        %2562 = vmatpush1.msra.mxu0 0.0
        %2563 = vmatprep.subr.mxu0 0.0
        %2564 = vmatpush1.msra.mxu0 0.0
        %2565 = vmatprep.subr.mxu0 0.0
        %2566 = vmatpush1.msra.mxu0 0.0
        %2567 = vmatprep.subr.mxu0 0.0
        %2568 = vmatpush1.msra.mxu0 0.0
        %2569 = vmatprep.subr.mxu0 0.0
        %2570 = vmatpush1.msra.mxu0 0.0
        %2571 = vmatprep.subr.mxu0 0.0
        %2572 = vmatpush1.msra.mxu0 0.0
        %2573 = vmatprep.subr.mxu0 0.0
        %2574 = vmatpush1.msra.mxu0 0.0
        %2575 = vmatprep.subr.mxu0 0.0
        %2576 = vmatpush1.msra.mxu0 0.0
        %2577 = vmatprep.subr.mxu0 0.0
        %2578 = vmatpush1.msra.mxu0 0.0
        %2579 = vmatprep.subr.mxu0 0.0
        %2580 = vmatpush1.msra.mxu0 0.0
        %2581 = vmatprep.subr.mxu0 0.0
        %2582 = vmatpush1.msra.mxu0 0.0
        %2583 = vmatprep.mubr.f32.mxu0 0.0
        %v2584 = vand.u32 %v2363, 4294901760
        %v2585 = vsub.f32 %v2363, %v2584
        %2586 = vmatmul.mubr.f32.gmra.mrb[0].mxu0 %v2585
        %v2587 = vpop.f32.mrb[0].mxu0
        %v2588 = vadd.f32 %v2514, %v2587
        %v2589 = vpop.f32.mrb[0].mxu0
        %2590 = vdwg.mxu0
        %2591 = vmatprep.subr.mxu0 0.0
        %v2592 = vand.u32 %v2360, 4294901760
        %2593 = vmatpush1.msra.mxu0 %v2592
        %2594 = vmatprep.subr.mxu0 0.0
        %2595 = vmatpush1.msra.mxu0 0.0
        %2596 = vmatprep.subr.mxu0 0.0
        %2597 = vmatpush1.msra.mxu0 0.0
        %2598 = vmatprep.subr.mxu0 0.0
        %2599 = vmatpush1.msra.mxu0 0.0
        %2600 = vmatprep.subr.mxu0 0.0
        %2601 = vmatpush1.msra.mxu0 0.0
        %2602 = vmatprep.subr.mxu0 0.0
        %2603 = vmatpush1.msra.mxu0 0.0
        %2604 = vmatprep.subr.mxu0 0.0
        %2605 = vmatpush1.msra.mxu0 0.0
        %2606 = vmatprep.subr.mxu0 0.0
        %2607 = vmatpush1.msra.mxu0 0.0
        %2608 = vmatprep.subr.mxu0 0.0
        %2609 = vmatpush1.msra.mxu0 0.0
        %2610 = vmatprep.subr.mxu0 0.0
        %2611 = vmatpush1.msra.mxu0 0.0
        %2612 = vmatprep.subr.mxu0 0.0
        %2613 = vmatpush1.msra.mxu0 0.0
        %2614 = vmatprep.subr.mxu0 0.0
        %2615 = vmatpush1.msra.mxu0 0.0
        %2616 = vmatprep.subr.mxu0 0.0
        %2617 = vmatpush1.msra.mxu0 0.0
        %2618 = vmatprep.subr.mxu0 0.0
        %2619 = vmatpush1.msra.mxu0 0.0
        %2620 = vmatprep.subr.mxu0 0.0
        %2621 = vmatpush1.msra.mxu0 0.0
        %2622 = vmatprep.subr.mxu0 0.0
        %2623 = vmatpush1.msra.mxu0 0.0
        %2624 = vmatprep.subr.mxu0 0.0
        %2625 = vmatpush1.msra.mxu0 0.0
        %2626 = vmatprep.subr.mxu0 0.0
        %2627 = vmatpush1.msra.mxu0 0.0
        %2628 = vmatprep.subr.mxu0 0.0
        %2629 = vmatpush1.msra.mxu0 0.0
        %2630 = vmatprep.subr.mxu0 0.0
        %2631 = vmatpush1.msra.mxu0 0.0
        %2632 = vmatprep.subr.mxu0 0.0
        %2633 = vmatpush1.msra.mxu0 0.0
        %2634 = vmatprep.subr.mxu0 0.0
        %2635 = vmatpush1.msra.mxu0 0.0
        %2636 = vmatprep.subr.mxu0 0.0
        %2637 = vmatpush1.msra.mxu0 0.0
        %2638 = vmatprep.subr.mxu0 0.0
        %2639 = vmatpush1.msra.mxu0 0.0
        %2640 = vmatprep.subr.mxu0 0.0
        %2641 = vmatpush1.msra.mxu0 0.0
        %2642 = vmatprep.subr.mxu0 0.0
        %2643 = vmatpush1.msra.mxu0 0.0
        %2644 = vmatprep.subr.mxu0 0.0
        %2645 = vmatpush1.msra.mxu0 0.0
        %2646 = vmatprep.subr.mxu0 0.0
        %2647 = vmatpush1.msra.mxu0 0.0
        %2648 = vmatprep.subr.mxu0 0.0
        %2649 = vmatpush1.msra.mxu0 0.0
        %2650 = vmatprep.subr.mxu0 0.0
        %2651 = vmatpush1.msra.mxu0 0.0
        %2652 = vmatprep.subr.mxu0 0.0
        %2653 = vmatpush1.msra.mxu0 0.0
        %2654 = vmatprep.subr.mxu0 0.0
        %2655 = vmatpush1.msra.mxu0 0.0
        %2656 = vmatprep.mubr.f32.mxu0 0.0
        %v2657 = vand.u32 %v2363, 4294901760
        %v2658 = vsub.f32 %v2363, %v2657
        %v2659 = vand.u32 %v2658, 4294901760
        %2660 = vmatmul.mubr.f32.gmra.mrb[0].mxu0 %v2659
        %v2661 = vpop.f32.mrb[0].mxu0
        %v2662 = vadd.f32 %v2588, %v2661
        %v2663 = vpop.f32.mrb[0].mxu0
        %2664 = vdwg.mxu0
        %2665 = vmatprep.subr.mxu0 0.0
        %v2666 = vand.u32 %v2360, 4294901760
        %v2667 = vsub.f32 %v2360, %v2666
        %v2668 = vand.u32 %v2667, 4294901760
        %2669 = vmatpush1.msra.mxu0 %v2668
        %2670 = vmatprep.subr.mxu0 0.0
        %2671 = vmatpush1.msra.mxu0 0.0
        %2672 = vmatprep.subr.mxu0 0.0
        %2673 = vmatpush1.msra.mxu0 0.0
        %2674 = vmatprep.subr.mxu0 0.0
        %2675 = vmatpush1.msra.mxu0 0.0
        %2676 = vmatprep.subr.mxu0 0.0
        %2677 = vmatpush1.msra.mxu0 0.0
        %2678 = vmatprep.subr.mxu0 0.0
        %2679 = vmatpush1.msra.mxu0 0.0
        %2680 = vmatprep.subr.mxu0 0.0
        %2681 = vmatpush1.msra.mxu0 0.0
        %2682 = vmatprep.subr.mxu0 0.0
        %2683 = vmatpush1.msra.mxu0 0.0
        %2684 = vmatprep.subr.mxu0 0.0
        %2685 = vmatpush1.msra.mxu0 0.0
        %2686 = vmatprep.subr.mxu0 0.0
        %2687 = vmatpush1.msra.mxu0 0.0
        %2688 = vmatprep.subr.mxu0 0.0
        %2689 = vmatpush1.msra.mxu0 0.0
        %2690 = vmatprep.subr.mxu0 0.0
        %2691 = vmatpush1.msra.mxu0 0.0
        %2692 = vmatprep.subr.mxu0 0.0
        %2693 = vmatpush1.msra.mxu0 0.0
        %2694 = vmatprep.subr.mxu0 0.0
        %2695 = vmatpush1.msra.mxu0 0.0
        %2696 = vmatprep.subr.mxu0 0.0
        %2697 = vmatpush1.msra.mxu0 0.0
        %2698 = vmatprep.subr.mxu0 0.0
        %2699 = vmatpush1.msra.mxu0 0.0
        %2700 = vmatprep.subr.mxu0 0.0
        %2701 = vmatpush1.msra.mxu0 0.0
        %2702 = vmatprep.subr.mxu0 0.0
        %2703 = vmatpush1.msra.mxu0 0.0
        %2704 = vmatprep.subr.mxu0 0.0
        %2705 = vmatpush1.msra.mxu0 0.0
        %2706 = vmatprep.subr.mxu0 0.0
        %2707 = vmatpush1.msra.mxu0 0.0
        %2708 = vmatprep.subr.mxu0 0.0
        %2709 = vmatpush1.msra.mxu0 0.0
        %2710 = vmatprep.subr.mxu0 0.0
        %2711 = vmatpush1.msra.mxu0 0.0
        %2712 = vmatprep.subr.mxu0 0.0
        %2713 = vmatpush1.msra.mxu0 0.0
        %2714 = vmatprep.subr.mxu0 0.0
        %2715 = vmatpush1.msra.mxu0 0.0
        %2716 = vmatprep.subr.mxu0 0.0
        %2717 = vmatpush1.msra.mxu0 0.0
        %2718 = vmatprep.subr.mxu0 0.0
        %2719 = vmatpush1.msra.mxu0 0.0
        %2720 = vmatprep.subr.mxu0 0.0
        %2721 = vmatpush1.msra.mxu0 0.0
        %2722 = vmatprep.subr.mxu0 0.0
        %2723 = vmatpush1.msra.mxu0 0.0
        %2724 = vmatprep.subr.mxu0 0.0
        %2725 = vmatpush1.msra.mxu0 0.0
        %2726 = vmatprep.subr.mxu0 0.0
        %2727 = vmatpush1.msra.mxu0 0.0
        %2728 = vmatprep.subr.mxu0 0.0
        %2729 = vmatpush1.msra.mxu0 0.0
        %2730 = vmatprep.subr.mxu0 0.0
        %2731 = vmatpush1.msra.mxu0 0.0
        %2732 = vmatprep.mubr.f32.mxu0 0.0
        %v2733 = vand.u32 %v2363, 4294901760
        %2734 = vmatmul.mubr.f32.gmra.mrb[0].mxu0 %v2733
        %v2735 = vpop.f32.mrb[0].mxu0
        %v2736 = vadd.f32 %v2662, %v2735
        %v2737 = vpop.f32.mrb[0].mxu0
        %2738 = vdwg.mxu0
        %2739 = vmatprep.subr.mxu0 0.0
        %v2740 = vand.u32 %v2360, 4294901760
        %2741 = vmatpush1.msra.mxu0 %v2740
        %2742 = vmatprep.subr.mxu0 0.0
        %2743 = vmatpush1.msra.mxu0 0.0
        %2744 = vmatprep.subr.mxu0 0.0
        %2745 = vmatpush1.msra.mxu0 0.0
        %2746 = vmatprep.subr.mxu0 0.0
        %2747 = vmatpush1.msra.mxu0 0.0
        %2748 = vmatprep.subr.mxu0 0.0
        %2749 = vmatpush1.msra.mxu0 0.0
        %2750 = vmatprep.subr.mxu0 0.0
        %2751 = vmatpush1.msra.mxu0 0.0
        %2752 = vmatprep.subr.mxu0 0.0
        %2753 = vmatpush1.msra.mxu0 0.0
        %2754 = vmatprep.subr.mxu0 0.0
        %2755 = vmatpush1.msra.mxu0 0.0
        %2756 = vmatprep.subr.mxu0 0.0
        %2757 = vmatpush1.msra.mxu0 0.0
        %2758 = vmatprep.subr.mxu0 0.0
        %2759 = vmatpush1.msra.mxu0 0.0
        %2760 = vmatprep.subr.mxu0 0.0
        %2761 = vmatpush1.msra.mxu0 0.0
        %2762 = vmatprep.subr.mxu0 0.0
        %2763 = vmatpush1.msra.mxu0 0.0
        %2764 = vmatprep.subr.mxu0 0.0
        %2765 = vmatpush1.msra.mxu0 0.0
        %2766 = vmatprep.subr.mxu0 0.0
        %2767 = vmatpush1.msra.mxu0 0.0
        %2768 = vmatprep.subr.mxu0 0.0
        %2769 = vmatpush1.msra.mxu0 0.0
        %2770 = vmatprep.subr.mxu0 0.0
        %2771 = vmatpush1.msra.mxu0 0.0
        %2772 = vmatprep.subr.mxu0 0.0
        %2773 = vmatpush1.msra.mxu0 0.0
        %2774 = vmatprep.subr.mxu0 0.0
        %2775 = vmatpush1.msra.mxu0 0.0
        %2776 = vmatprep.subr.mxu0 0.0
        %2777 = vmatpush1.msra.mxu0 0.0
        %2778 = vmatprep.subr.mxu0 0.0
        %2779 = vmatpush1.msra.mxu0 0.0
        %2780 = vmatprep.subr.mxu0 0.0
        %2781 = vmatpush1.msra.mxu0 0.0
        %2782 = vmatprep.subr.mxu0 0.0
        %2783 = vmatpush1.msra.mxu0 0.0
        %2784 = vmatprep.subr.mxu0 0.0
        %2785 = vmatpush1.msra.mxu0 0.0
        %2786 = vmatprep.subr.mxu0 0.0
        %2787 = vmatpush1.msra.mxu0 0.0
        %2788 = vmatprep.subr.mxu0 0.0
        %2789 = vmatpush1.msra.mxu0 0.0
        %2790 = vmatprep.subr.mxu0 0.0
        %2791 = vmatpush1.msra.mxu0 0.0
        %2792 = vmatprep.subr.mxu0 0.0
        %2793 = vmatpush1.msra.mxu0 0.0
        %2794 = vmatprep.subr.mxu0 0.0
        %2795 = vmatpush1.msra.mxu0 0.0
        %2796 = vmatprep.subr.mxu0 0.0
        %2797 = vmatpush1.msra.mxu0 0.0
        %2798 = vmatprep.subr.mxu0 0.0
        %2799 = vmatpush1.msra.mxu0 0.0
        %2800 = vmatprep.subr.mxu0 0.0
        %2801 = vmatpush1.msra.mxu0 0.0
        %2802 = vmatprep.subr.mxu0 0.0
        %2803 = vmatpush1.msra.mxu0 0.0
        %2804 = vmatprep.mubr.f32.mxu0 0.0
        %v2805 = vand.u32 %v2363, 4294901760
        %2806 = vmatmul.mubr.f32.gmra.mrb[0].mxu0 %v2805
        %v2807 = vpop.f32.mrb[0].mxu0
        %v2808 = vadd.f32 %v2736, %v2807
        %v2809 = vpop.f32.mrb[0].mxu0
        %2810 = vdwg.mxu0
        %2811 = vrot.lane.b32.xlu0 %v967, 112
        %v2812 = vpop.permute.xlu0 %2811
        %2813 = vrot.lane.b32.xlu0 %v964, 80
        %v2814 = vpop.permute.xlu0 %2813
        %v2815 = vsel %vm977, %v2812, 0
        %v2817 = vsel %vm977, %v2814, 0
        %2819 = vmatprep.subr.mxu0 0.0
        %v2820 = vand.u32 %v2817, 4294901760
        %2821 = vmatpush1.xpose.msra.mxu0 %v2820
        %2822 = vmatprep.subr.mxu0 0.0
        %2823 = vmatpush1.xpose.msra.mxu0 0.0
        %2824 = vmatprep.subr.mxu0 0.0
        %2825 = vmatpush1.xpose.msra.mxu0 0.0
        %2826 = vmatprep.subr.mxu0 0.0
        %2827 = vmatpush1.xpose.msra.mxu0 0.0
        %2828 = vmatprep.subr.mxu0 0.0
        %2829 = vmatpush1.xpose.msra.mxu0 0.0
        %2830 = vmatprep.subr.mxu0 0.0
        %2831 = vmatpush1.xpose.msra.mxu0 0.0
        %2832 = vmatprep.subr.mxu0 0.0
        %2833 = vmatpush1.xpose.msra.mxu0 0.0
        %2834 = vmatprep.subr.mxu0 0.0
        %2835 = vmatpush1.xpose.msra.mxu0 0.0
        %2836 = vmatprep.subr.mxu0 0.0
        %2837 = vmatpush1.xpose.msra.mxu0 0.0
        %2838 = vmatprep.subr.mxu0 0.0
        %2839 = vmatpush1.xpose.msra.mxu0 0.0
        %2840 = vmatprep.subr.mxu0 0.0
        %2841 = vmatpush1.xpose.msra.mxu0 0.0
        %2842 = vmatprep.subr.mxu0 0.0
        %2843 = vmatpush1.xpose.msra.mxu0 0.0
        %2844 = vmatprep.subr.mxu0 0.0
        %2845 = vmatpush1.xpose.msra.mxu0 0.0
        %2846 = vmatprep.subr.mxu0 0.0
        %2847 = vmatpush1.xpose.msra.mxu0 0.0
        %2848 = vmatprep.subr.mxu0 0.0
        %2849 = vmatpush1.xpose.msra.mxu0 0.0
        %2850 = vmatprep.subr.mxu0 0.0
        %2851 = vmatpush1.xpose.msra.mxu0 0.0
        %2852 = vmatprep.subr.mxu0 0.0
        %2853 = vmatpush1.xpose.msra.mxu0 0.0
        %2854 = vmatprep.subr.mxu0 0.0
        %2855 = vmatpush1.xpose.msra.mxu0 0.0
        %2856 = vmatprep.subr.mxu0 0.0
        %2857 = vmatpush1.xpose.msra.mxu0 0.0
        %2858 = vmatprep.subr.mxu0 0.0
        %2859 = vmatpush1.xpose.msra.mxu0 0.0
        %2860 = vmatprep.subr.mxu0 0.0
        %2861 = vmatpush1.xpose.msra.mxu0 0.0
        %2862 = vmatprep.subr.mxu0 0.0
        %2863 = vmatpush1.xpose.msra.mxu0 0.0
        %2864 = vmatprep.subr.mxu0 0.0
        %2865 = vmatpush1.xpose.msra.mxu0 0.0
        %2866 = vmatprep.subr.mxu0 0.0
        %2867 = vmatpush1.xpose.msra.mxu0 0.0
        %2868 = vmatprep.subr.mxu0 0.0
        %2869 = vmatpush1.xpose.msra.mxu0 0.0
        %2870 = vmatprep.subr.mxu0 0.0
        %2871 = vmatpush1.xpose.msra.mxu0 0.0
        %2872 = vmatprep.subr.mxu0 0.0
        %2873 = vmatpush1.xpose.msra.mxu0 0.0
        %2874 = vmatprep.subr.mxu0 0.0
        %2875 = vmatpush1.xpose.msra.mxu0 0.0
        %2876 = vmatprep.subr.mxu0 0.0
        %2877 = vmatpush1.xpose.msra.mxu0 0.0
        %2878 = vmatprep.subr.mxu0 0.0
        %2879 = vmatpush1.xpose.msra.mxu0 0.0
        %2880 = vmatprep.subr.mxu0 0.0
        %2881 = vmatpush1.xpose.msra.mxu0 0.0
        %2882 = vmatprep.subr.mxu0 0.0
        %2883 = vmatpush1.xpose.msra.mxu0 0.0
        %2884 = vmatprep.mubr.f32.mxu0 0.0
        %v2885 = vand.u32 %v2815, 4294901760
        %v2886 = vsub.f32 %v2815, %v2885
        %v2887 = vand.u32 %v2886, 4294901760
        %v2888 = vsub.f32 %v2886, %v2887
        %v2889 = vand.u32 %v2888, 4294901760
        %2890 = vmatmul.mubr.f32.gmra.mrb[0].mxu0 %v2889
        %v2891 = vpop.f32.mrb[0].mxu0
        %v2892 = vadd.f32 %v973, %v2891
        %v2893 = vpop.f32.mrb[0].mxu0
        %2894 = vdwg.mxu0
        %2895 = vmatprep.subr.mxu0 0.0
        %v2896 = vand.u32 %v2817, 4294901760
        %v2897 = vsub.f32 %v2817, %v2896
        %v2898 = vand.u32 %v2897, 4294901760
        %v2899 = vsub.f32 %v2897, %v2898
        %v2900 = vand.u32 %v2899, 4294901760
        %2901 = vmatpush1.xpose.msra.mxu0 %v2900
        %2902 = vmatprep.subr.mxu0 0.0
        %2903 = vmatpush1.xpose.msra.mxu0 0.0
        %2904 = vmatprep.subr.mxu0 0.0
        %2905 = vmatpush1.xpose.msra.mxu0 0.0
        %2906 = vmatprep.subr.mxu0 0.0
        %2907 = vmatpush1.xpose.msra.mxu0 0.0
        %2908 = vmatprep.subr.mxu0 0.0
        %2909 = vmatpush1.xpose.msra.mxu0 0.0
        %2910 = vmatprep.subr.mxu0 0.0
        %2911 = vmatpush1.xpose.msra.mxu0 0.0
        %2912 = vmatprep.subr.mxu0 0.0
        %2913 = vmatpush1.xpose.msra.mxu0 0.0
        %2914 = vmatprep.subr.mxu0 0.0
        %2915 = vmatpush1.xpose.msra.mxu0 0.0
        %2916 = vmatprep.subr.mxu0 0.0
        %2917 = vmatpush1.xpose.msra.mxu0 0.0
        %2918 = vmatprep.subr.mxu0 0.0
        %2919 = vmatpush1.xpose.msra.mxu0 0.0
        %2920 = vmatprep.subr.mxu0 0.0
        %2921 = vmatpush1.xpose.msra.mxu0 0.0
        %2922 = vmatprep.subr.mxu0 0.0
        %2923 = vmatpush1.xpose.msra.mxu0 0.0
        %2924 = vmatprep.subr.mxu0 0.0
        %2925 = vmatpush1.xpose.msra.mxu0 0.0
        %2926 = vmatprep.subr.mxu0 0.0
        %2927 = vmatpush1.xpose.msra.mxu0 0.0
        %2928 = vmatprep.subr.mxu0 0.0
        %2929 = vmatpush1.xpose.msra.mxu0 0.0
        %2930 = vmatprep.subr.mxu0 0.0
        %2931 = vmatpush1.xpose.msra.mxu0 0.0
        %2932 = vmatprep.subr.mxu0 0.0
        %2933 = vmatpush1.xpose.msra.mxu0 0.0
        %2934 = vmatprep.subr.mxu0 0.0
        %2935 = vmatpush1.xpose.msra.mxu0 0.0
        %2936 = vmatprep.subr.mxu0 0.0
        %2937 = vmatpush1.xpose.msra.mxu0 0.0
        %2938 = vmatprep.subr.mxu0 0.0
        %2939 = vmatpush1.xpose.msra.mxu0 0.0
        %2940 = vmatprep.subr.mxu0 0.0
        %2941 = vmatpush1.xpose.msra.mxu0 0.0
        %2942 = vmatprep.subr.mxu0 0.0
        %2943 = vmatpush1.xpose.msra.mxu0 0.0
        %2944 = vmatprep.subr.mxu0 0.0
        %2945 = vmatpush1.xpose.msra.mxu0 0.0
        %2946 = vmatprep.subr.mxu0 0.0
        %2947 = vmatpush1.xpose.msra.mxu0 0.0
        %2948 = vmatprep.subr.mxu0 0.0
        %2949 = vmatpush1.xpose.msra.mxu0 0.0
        %2950 = vmatprep.subr.mxu0 0.0
        %2951 = vmatpush1.xpose.msra.mxu0 0.0
        %2952 = vmatprep.subr.mxu0 0.0
        %2953 = vmatpush1.xpose.msra.mxu0 0.0
        %2954 = vmatprep.subr.mxu0 0.0
        %2955 = vmatpush1.xpose.msra.mxu0 0.0
        %2956 = vmatprep.subr.mxu0 0.0
        %2957 = vmatpush1.xpose.msra.mxu0 0.0
        %2958 = vmatprep.subr.mxu0 0.0
        %2959 = vmatpush1.xpose.msra.mxu0 0.0
        %2960 = vmatprep.subr.mxu0 0.0
        %2961 = vmatpush1.xpose.msra.mxu0 0.0
        %2962 = vmatprep.subr.mxu0 0.0
        %2963 = vmatpush1.xpose.msra.mxu0 0.0
        %2964 = vmatprep.mubr.f32.mxu0 0.0
        %v2965 = vand.u32 %v2815, 4294901760
        %2966 = vmatmul.mubr.f32.gmra.mrb[0].mxu0 %v2965
        %v2967 = vpop.f32.mrb[0].mxu0
        %v2968 = vadd.f32 %v2892, %v2967
        %v2969 = vpop.f32.mrb[0].mxu0
        %2970 = vdwg.mxu0
        %2971 = vmatprep.subr.mxu0 0.0
        %v2972 = vand.u32 %v2817, 4294901760
        %v2973 = vsub.f32 %v2817, %v2972
        %2974 = vmatpush1.xpose.msra.mxu0 %v2973
        %2975 = vmatprep.subr.mxu0 0.0
        %2976 = vmatpush1.xpose.msra.mxu0 0.0
        %2977 = vmatprep.subr.mxu0 0.0
        %2978 = vmatpush1.xpose.msra.mxu0 0.0
        %2979 = vmatprep.subr.mxu0 0.0
        %2980 = vmatpush1.xpose.msra.mxu0 0.0
        %2981 = vmatprep.subr.mxu0 0.0
        %2982 = vmatpush1.xpose.msra.mxu0 0.0
        %2983 = vmatprep.subr.mxu0 0.0
        %2984 = vmatpush1.xpose.msra.mxu0 0.0
        %2985 = vmatprep.subr.mxu0 0.0
        %2986 = vmatpush1.xpose.msra.mxu0 0.0
        %2987 = vmatprep.subr.mxu0 0.0
        %2988 = vmatpush1.xpose.msra.mxu0 0.0
        %2989 = vmatprep.subr.mxu0 0.0
        %2990 = vmatpush1.xpose.msra.mxu0 0.0
        %2991 = vmatprep.subr.mxu0 0.0
        %2992 = vmatpush1.xpose.msra.mxu0 0.0
        %2993 = vmatprep.subr.mxu0 0.0
        %2994 = vmatpush1.xpose.msra.mxu0 0.0
        %2995 = vmatprep.subr.mxu0 0.0
        %2996 = vmatpush1.xpose.msra.mxu0 0.0
        %2997 = vmatprep.subr.mxu0 0.0
        %2998 = vmatpush1.xpose.msra.mxu0 0.0
        %2999 = vmatprep.subr.mxu0 0.0
        %3000 = vmatpush1.xpose.msra.mxu0 0.0
        %3001 = vmatprep.subr.mxu0 0.0
        %3002 = vmatpush1.xpose.msra.mxu0 0.0
        %3003 = vmatprep.subr.mxu0 0.0
        %3004 = vmatpush1.xpose.msra.mxu0 0.0
        %3005 = vmatprep.subr.mxu0 0.0
        %3006 = vmatpush1.xpose.msra.mxu0 0.0
        %3007 = vmatprep.subr.mxu0 0.0
        %3008 = vmatpush1.xpose.msra.mxu0 0.0
        %3009 = vmatprep.subr.mxu0 0.0
        %3010 = vmatpush1.xpose.msra.mxu0 0.0
        %3011 = vmatprep.subr.mxu0 0.0
        %3012 = vmatpush1.xpose.msra.mxu0 0.0
        %3013 = vmatprep.subr.mxu0 0.0
        %3014 = vmatpush1.xpose.msra.mxu0 0.0
        %3015 = vmatprep.subr.mxu0 0.0
        %3016 = vmatpush1.xpose.msra.mxu0 0.0
        %3017 = vmatprep.subr.mxu0 0.0
        %3018 = vmatpush1.xpose.msra.mxu0 0.0
        %3019 = vmatprep.subr.mxu0 0.0
        %3020 = vmatpush1.xpose.msra.mxu0 0.0
        %3021 = vmatprep.subr.mxu0 0.0
        %3022 = vmatpush1.xpose.msra.mxu0 0.0
        %3023 = vmatprep.subr.mxu0 0.0
        %3024 = vmatpush1.xpose.msra.mxu0 0.0
        %3025 = vmatprep.subr.mxu0 0.0
        %3026 = vmatpush1.xpose.msra.mxu0 0.0
        %3027 = vmatprep.subr.mxu0 0.0
        %3028 = vmatpush1.xpose.msra.mxu0 0.0
        %3029 = vmatprep.subr.mxu0 0.0
        %3030 = vmatpush1.xpose.msra.mxu0 0.0
        %3031 = vmatprep.subr.mxu0 0.0
        %3032 = vmatpush1.xpose.msra.mxu0 0.0
        %3033 = vmatprep.subr.mxu0 0.0
        %3034 = vmatpush1.xpose.msra.mxu0 0.0
        %3035 = vmatprep.subr.mxu0 0.0
        %3036 = vmatpush1.xpose.msra.mxu0 0.0
        %3037 = vmatprep.mubr.f32.mxu0 0.0
        %v3038 = vand.u32 %v2815, 4294901760
        %v3039 = vsub.f32 %v2815, %v3038
        %3040 = vmatmul.mubr.f32.gmra.mrb[0].mxu0 %v3039
        %v3041 = vpop.f32.mrb[0].mxu0
        %v3042 = vadd.f32 %v2968, %v3041
        %v3043 = vpop.f32.mrb[0].mxu0
        %3044 = vdwg.mxu0
        %3045 = vmatprep.subr.mxu0 0.0
        %v3046 = vand.u32 %v2817, 4294901760
        %3047 = vmatpush1.xpose.msra.mxu0 %v3046
        %3048 = vmatprep.subr.mxu0 0.0
        %3049 = vmatpush1.xpose.msra.mxu0 0.0
        %3050 = vmatprep.subr.mxu0 0.0
        %3051 = vmatpush1.xpose.msra.mxu0 0.0
        %3052 = vmatprep.subr.mxu0 0.0
        %3053 = vmatpush1.xpose.msra.mxu0 0.0
        %3054 = vmatprep.subr.mxu0 0.0
        %3055 = vmatpush1.xpose.msra.mxu0 0.0
        %3056 = vmatprep.subr.mxu0 0.0
        %3057 = vmatpush1.xpose.msra.mxu0 0.0
        %3058 = vmatprep.subr.mxu0 0.0
        %3059 = vmatpush1.xpose.msra.mxu0 0.0
        %3060 = vmatprep.subr.mxu0 0.0
        %3061 = vmatpush1.xpose.msra.mxu0 0.0
        %3062 = vmatprep.subr.mxu0 0.0
        %3063 = vmatpush1.xpose.msra.mxu0 0.0
        %3064 = vmatprep.subr.mxu0 0.0
        %3065 = vmatpush1.xpose.msra.mxu0 0.0
        %3066 = vmatprep.subr.mxu0 0.0
        %3067 = vmatpush1.xpose.msra.mxu0 0.0
        %3068 = vmatprep.subr.mxu0 0.0
        %3069 = vmatpush1.xpose.msra.mxu0 0.0
        %3070 = vmatprep.subr.mxu0 0.0
        %3071 = vmatpush1.xpose.msra.mxu0 0.0
        %3072 = vmatprep.subr.mxu0 0.0
        %3073 = vmatpush1.xpose.msra.mxu0 0.0
        %3074 = vmatprep.subr.mxu0 0.0
        %3075 = vmatpush1.xpose.msra.mxu0 0.0
        %3076 = vmatprep.subr.mxu0 0.0
        %3077 = vmatpush1.xpose.msra.mxu0 0.0
        %3078 = vmatprep.subr.mxu0 0.0
        %3079 = vmatpush1.xpose.msra.mxu0 0.0
        %3080 = vmatprep.subr.mxu0 0.0
        %3081 = vmatpush1.xpose.msra.mxu0 0.0
        %3082 = vmatprep.subr.mxu0 0.0
        %3083 = vmatpush1.xpose.msra.mxu0 0.0
        %3084 = vmatprep.subr.mxu0 0.0
        %3085 = vmatpush1.xpose.msra.mxu0 0.0
        %3086 = vmatprep.subr.mxu0 0.0
        %3087 = vmatpush1.xpose.msra.mxu0 0.0
        %3088 = vmatprep.subr.mxu0 0.0
        %3089 = vmatpush1.xpose.msra.mxu0 0.0
        %3090 = vmatprep.subr.mxu0 0.0
        %3091 = vmatpush1.xpose.msra.mxu0 0.0
        %3092 = vmatprep.subr.mxu0 0.0
        %3093 = vmatpush1.xpose.msra.mxu0 0.0
        %3094 = vmatprep.subr.mxu0 0.0
        %3095 = vmatpush1.xpose.msra.mxu0 0.0
        %3096 = vmatprep.subr.mxu0 0.0
        %3097 = vmatpush1.xpose.msra.mxu0 0.0
        %3098 = vmatprep.subr.mxu0 0.0
        %3099 = vmatpush1.xpose.msra.mxu0 0.0
        %3100 = vmatprep.subr.mxu0 0.0
        %3101 = vmatpush1.xpose.msra.mxu0 0.0
        %3102 = vmatprep.subr.mxu0 0.0
        %3103 = vmatpush1.xpose.msra.mxu0 0.0
        %3104 = vmatprep.subr.mxu0 0.0
        %3105 = vmatpush1.xpose.msra.mxu0 0.0
        %3106 = vmatprep.subr.mxu0 0.0
        %3107 = vmatpush1.xpose.msra.mxu0 0.0
        %3108 = vmatprep.subr.mxu0 0.0
        %3109 = vmatpush1.xpose.msra.mxu0 0.0
        %3110 = vmatprep.mubr.f32.mxu0 0.0
        %v3111 = vand.u32 %v2815, 4294901760
        %v3112 = vsub.f32 %v2815, %v3111
        %v3113 = vand.u32 %v3112, 4294901760
        %3114 = vmatmul.mubr.f32.gmra.mrb[0].mxu0 %v3113
        %v3115 = vpop.f32.mrb[0].mxu0
        %v3116 = vadd.f32 %v3042, %v3115
        %v3117 = vpop.f32.mrb[0].mxu0
        %3118 = vdwg.mxu0
        %3119 = vmatprep.subr.mxu0 0.0
        %v3120 = vand.u32 %v2817, 4294901760
        %v3121 = vsub.f32 %v2817, %v3120
        %v3122 = vand.u32 %v3121, 4294901760
        %3123 = vmatpush1.xpose.msra.mxu0 %v3122
        %3124 = vmatprep.subr.mxu0 0.0
        %3125 = vmatpush1.xpose.msra.mxu0 0.0
        %3126 = vmatprep.subr.mxu0 0.0
        %3127 = vmatpush1.xpose.msra.mxu0 0.0
        %3128 = vmatprep.subr.mxu0 0.0
        %3129 = vmatpush1.xpose.msra.mxu0 0.0
        %3130 = vmatprep.subr.mxu0 0.0
        %3131 = vmatpush1.xpose.msra.mxu0 0.0
        %3132 = vmatprep.subr.mxu0 0.0
        %3133 = vmatpush1.xpose.msra.mxu0 0.0
        %3134 = vmatprep.subr.mxu0 0.0
        %3135 = vmatpush1.xpose.msra.mxu0 0.0
        %3136 = vmatprep.subr.mxu0 0.0
        %3137 = vmatpush1.xpose.msra.mxu0 0.0
        %3138 = vmatprep.subr.mxu0 0.0
        %3139 = vmatpush1.xpose.msra.mxu0 0.0
        %3140 = vmatprep.subr.mxu0 0.0
        %3141 = vmatpush1.xpose.msra.mxu0 0.0
        %3142 = vmatprep.subr.mxu0 0.0
        %3143 = vmatpush1.xpose.msra.mxu0 0.0
        %3144 = vmatprep.subr.mxu0 0.0
        %3145 = vmatpush1.xpose.msra.mxu0 0.0
        %3146 = vmatprep.subr.mxu0 0.0
        %3147 = vmatpush1.xpose.msra.mxu0 0.0
        %3148 = vmatprep.subr.mxu0 0.0
        %3149 = vmatpush1.xpose.msra.mxu0 0.0
        %3150 = vmatprep.subr.mxu0 0.0
        %3151 = vmatpush1.xpose.msra.mxu0 0.0
        %3152 = vmatprep.subr.mxu0 0.0
        %3153 = vmatpush1.xpose.msra.mxu0 0.0
        %3154 = vmatprep.subr.mxu0 0.0
        %3155 = vmatpush1.xpose.msra.mxu0 0.0
        %3156 = vmatprep.subr.mxu0 0.0
        %3157 = vmatpush1.xpose.msra.mxu0 0.0
        %3158 = vmatprep.subr.mxu0 0.0
        %3159 = vmatpush1.xpose.msra.mxu0 0.0
        %3160 = vmatprep.subr.mxu0 0.0
        %3161 = vmatpush1.xpose.msra.mxu0 0.0
        %3162 = vmatprep.subr.mxu0 0.0
        %3163 = vmatpush1.xpose.msra.mxu0 0.0
        %3164 = vmatprep.subr.mxu0 0.0
        %3165 = vmatpush1.xpose.msra.mxu0 0.0
        %3166 = vmatprep.subr.mxu0 0.0
        %3167 = vmatpush1.xpose.msra.mxu0 0.0
        %3168 = vmatprep.subr.mxu0 0.0
        %3169 = vmatpush1.xpose.msra.mxu0 0.0
        %3170 = vmatprep.subr.mxu0 0.0
        %3171 = vmatpush1.xpose.msra.mxu0 0.0
        %3172 = vmatprep.subr.mxu0 0.0
        %3173 = vmatpush1.xpose.msra.mxu0 0.0
        %3174 = vmatprep.subr.mxu0 0.0
        %3175 = vmatpush1.xpose.msra.mxu0 0.0
        %3176 = vmatprep.subr.mxu0 0.0
        %3177 = vmatpush1.xpose.msra.mxu0 0.0
        %3178 = vmatprep.subr.mxu0 0.0
        %3179 = vmatpush1.xpose.msra.mxu0 0.0
        %3180 = vmatprep.subr.mxu0 0.0
        %3181 = vmatpush1.xpose.msra.mxu0 0.0
        %3182 = vmatprep.subr.mxu0 0.0
        %3183 = vmatpush1.xpose.msra.mxu0 0.0
        %3184 = vmatprep.subr.mxu0 0.0
        %3185 = vmatpush1.xpose.msra.mxu0 0.0
        %3186 = vmatprep.mubr.f32.mxu0 0.0
        %v3187 = vand.u32 %v2815, 4294901760
        %3188 = vmatmul.mubr.f32.gmra.mrb[0].mxu0 %v3187
        %v3189 = vpop.f32.mrb[0].mxu0
        %v3190 = vadd.f32 %v3116, %v3189
        %v3191 = vpop.f32.mrb[0].mxu0
        %3192 = vdwg.mxu0
        %3193 = vmatprep.subr.mxu0 0.0
        %v3194 = vand.u32 %v2817, 4294901760
        %3195 = vmatpush1.xpose.msra.mxu0 %v3194
        %3196 = vmatprep.subr.mxu0 0.0
        %3197 = vmatpush1.xpose.msra.mxu0 0.0
        %3198 = vmatprep.subr.mxu0 0.0
        %3199 = vmatpush1.xpose.msra.mxu0 0.0
        %3200 = vmatprep.subr.mxu0 0.0
        %3201 = vmatpush1.xpose.msra.mxu0 0.0
        %3202 = vmatprep.subr.mxu0 0.0
        %3203 = vmatpush1.xpose.msra.mxu0 0.0
        %3204 = vmatprep.subr.mxu0 0.0
        %3205 = vmatpush1.xpose.msra.mxu0 0.0
        %3206 = vmatprep.subr.mxu0 0.0
        %3207 = vmatpush1.xpose.msra.mxu0 0.0
        %3208 = vmatprep.subr.mxu0 0.0
        %3209 = vmatpush1.xpose.msra.mxu0 0.0
        %3210 = vmatprep.subr.mxu0 0.0
        %3211 = vmatpush1.xpose.msra.mxu0 0.0
        %3212 = vmatprep.subr.mxu0 0.0
        %3213 = vmatpush1.xpose.msra.mxu0 0.0
        %3214 = vmatprep.subr.mxu0 0.0
        %3215 = vmatpush1.xpose.msra.mxu0 0.0
        %3216 = vmatprep.subr.mxu0 0.0
        %3217 = vmatpush1.xpose.msra.mxu0 0.0
        %3218 = vmatprep.subr.mxu0 0.0
        %3219 = vmatpush1.xpose.msra.mxu0 0.0
        %3220 = vmatprep.subr.mxu0 0.0
        %3221 = vmatpush1.xpose.msra.mxu0 0.0
        %3222 = vmatprep.subr.mxu0 0.0
        %3223 = vmatpush1.xpose.msra.mxu0 0.0
        %3224 = vmatprep.subr.mxu0 0.0
        %3225 = vmatpush1.xpose.msra.mxu0 0.0
        %3226 = vmatprep.subr.mxu0 0.0
        %3227 = vmatpush1.xpose.msra.mxu0 0.0
        %3228 = vmatprep.subr.mxu0 0.0
        %3229 = vmatpush1.xpose.msra.mxu0 0.0
        %3230 = vmatprep.subr.mxu0 0.0
        %3231 = vmatpush1.xpose.msra.mxu0 0.0
        %3232 = vmatprep.subr.mxu0 0.0
        %3233 = vmatpush1.xpose.msra.mxu0 0.0
        %3234 = vmatprep.subr.mxu0 0.0
        %3235 = vmatpush1.xpose.msra.mxu0 0.0
        %3236 = vmatprep.subr.mxu0 0.0
        %3237 = vmatpush1.xpose.msra.mxu0 0.0
        %3238 = vmatprep.subr.mxu0 0.0
        %3239 = vmatpush1.xpose.msra.mxu0 0.0
        %3240 = vmatprep.subr.mxu0 0.0
        %3241 = vmatpush1.xpose.msra.mxu0 0.0
        %3242 = vmatprep.subr.mxu0 0.0
        %3243 = vmatpush1.xpose.msra.mxu0 0.0
        %3244 = vmatprep.subr.mxu0 0.0
        %3245 = vmatpush1.xpose.msra.mxu0 0.0
        %3246 = vmatprep.subr.mxu0 0.0
        %3247 = vmatpush1.xpose.msra.mxu0 0.0
        %3248 = vmatprep.subr.mxu0 0.0
        %3249 = vmatpush1.xpose.msra.mxu0 0.0
        %3250 = vmatprep.subr.mxu0 0.0
        %3251 = vmatpush1.xpose.msra.mxu0 0.0
        %3252 = vmatprep.subr.mxu0 0.0
        %3253 = vmatpush1.xpose.msra.mxu0 0.0
        %3254 = vmatprep.subr.mxu0 0.0
        %3255 = vmatpush1.xpose.msra.mxu0 0.0
        %3256 = vmatprep.subr.mxu0 0.0
        %3257 = vmatpush1.xpose.msra.mxu0 0.0
        %3258 = vmatprep.mubr.f32.mxu0 0.0
        %v3259 = vand.u32 %v2815, 4294901760
        %3260 = vmatmul.mubr.f32.gmra.mrb[0].mxu0 %v3259
        %v3261 = vpop.f32.mrb[0].mxu0
        %v3262 = vadd.f32 %v3190, %v3261
        %v3263 = vpop.f32.mrb[0].mxu0
        %3264 = vdwg.mxu0
        %v3265 = vsel %vm977, %v3262, -inf
        %3266 = vmax.xlane.f32.xlu0 %v3265
        %v3267 = vpop.xlane.xlu0 %3266
        %v3268 = vsub.f32 %v3262, %v3267
        %v3269 = vmul.f32 %v3268, 1.442695
        %v3270 = vpow.pop %v3269
        %v3271 = vsel %vm977, %v3270, 0.0
        %3272 = vadd.xlane.f32.xlu0 %v3271
        %v3273 = vpop.xlane.xlu0 %3272
        %v3274 = vrcp.pop %v3273
        %v3275 = vmul.f32 1.0, %v3274
        %v3276 = vmul.f32 %v3270, %v3275
        %3277 = vrot.lane.b32.xlu0 %v964, 48
        %v3278 = vpop.permute.xlu0 %3277
        %v3281 = vsel %vm977, %v3276, 0
        %3283 = vmatprep.subr.mxu0 0.0
        %v3284 = vand.u32 %v3278, 4294901760
        %3285 = vmatpush1.msra.mxu0 %v3284
        %3286 = vmatprep.subr.mxu0 0.0
        %3287 = vmatpush1.msra.mxu0 0.0
        %3288 = vmatprep.subr.mxu0 0.0
        %3289 = vmatpush1.msra.mxu0 0.0
        %3290 = vmatprep.subr.mxu0 0.0
        %3291 = vmatpush1.msra.mxu0 0.0
        %3292 = vmatprep.subr.mxu0 0.0
        %3293 = vmatpush1.msra.mxu0 0.0
        %3294 = vmatprep.subr.mxu0 0.0
        %3295 = vmatpush1.msra.mxu0 0.0
        %3296 = vmatprep.subr.mxu0 0.0
        %3297 = vmatpush1.msra.mxu0 0.0
        %3298 = vmatprep.subr.mxu0 0.0
        %3299 = vmatpush1.msra.mxu0 0.0
        %3300 = vmatprep.subr.mxu0 0.0
        %3301 = vmatpush1.msra.mxu0 0.0
        %3302 = vmatprep.subr.mxu0 0.0
        %3303 = vmatpush1.msra.mxu0 0.0
        %3304 = vmatprep.subr.mxu0 0.0
        %3305 = vmatpush1.msra.mxu0 0.0
        %3306 = vmatprep.subr.mxu0 0.0
        %3307 = vmatpush1.msra.mxu0 0.0
        %3308 = vmatprep.subr.mxu0 0.0
        %3309 = vmatpush1.msra.mxu0 0.0
        %3310 = vmatprep.subr.mxu0 0.0
        %3311 = vmatpush1.msra.mxu0 0.0
        %3312 = vmatprep.subr.mxu0 0.0
        %3313 = vmatpush1.msra.mxu0 0.0
        %3314 = vmatprep.subr.mxu0 0.0
        %3315 = vmatpush1.msra.mxu0 0.0
        %3316 = vmatprep.subr.mxu0 0.0
        %3317 = vmatpush1.msra.mxu0 0.0
        %3318 = vmatprep.subr.mxu0 0.0
        %3319 = vmatpush1.msra.mxu0 0.0
        %3320 = vmatprep.subr.mxu0 0.0
        %3321 = vmatpush1.msra.mxu0 0.0
        %3322 = vmatprep.subr.mxu0 0.0
        %3323 = vmatpush1.msra.mxu0 0.0
        %3324 = vmatprep.subr.mxu0 0.0
        %3325 = vmatpush1.msra.mxu0 0.0
        %3326 = vmatprep.subr.mxu0 0.0
        %3327 = vmatpush1.msra.mxu0 0.0
        %3328 = vmatprep.subr.mxu0 0.0
        %3329 = vmatpush1.msra.mxu0 0.0
        %3330 = vmatprep.subr.mxu0 0.0
        %3331 = vmatpush1.msra.mxu0 0.0
        %3332 = vmatprep.subr.mxu0 0.0
        %3333 = vmatpush1.msra.mxu0 0.0
        %3334 = vmatprep.subr.mxu0 0.0
        %3335 = vmatpush1.msra.mxu0 0.0
        %3336 = vmatprep.subr.mxu0 0.0
        %3337 = vmatpush1.msra.mxu0 0.0
        %3338 = vmatprep.subr.mxu0 0.0
        %3339 = vmatpush1.msra.mxu0 0.0
        %3340 = vmatprep.subr.mxu0 0.0
        %3341 = vmatpush1.msra.mxu0 0.0
        %3342 = vmatprep.subr.mxu0 0.0
        %3343 = vmatpush1.msra.mxu0 0.0
        %3344 = vmatprep.subr.mxu0 0.0
        %3345 = vmatpush1.msra.mxu0 0.0
        %3346 = vmatprep.subr.mxu0 0.0
        %3347 = vmatpush1.msra.mxu0 0.0
        %3348 = vmatprep.mubr.f32.mxu0 0.0
        %v3349 = vand.u32 %v3281, 4294901760
        %v3350 = vsub.f32 %v3281, %v3349
        %v3351 = vand.u32 %v3350, 4294901760
        %v3352 = vsub.f32 %v3350, %v3351
        %v3353 = vand.u32 %v3352, 4294901760
        %3354 = vmatmul.mubr.f32.gmra.mrb[0].mxu0 %v3353
        %v3355 = vpop.f32.mrb[0].mxu0
        %v3356 = vadd.f32 0.0, %v3355
        %v3357 = vpop.f32.mrb[0].mxu0
        %3358 = vdwg.mxu0
        %3359 = vmatprep.subr.mxu0 0.0
        %v3360 = vand.u32 %v3278, 4294901760
        %v3361 = vsub.f32 %v3278, %v3360
        %v3362 = vand.u32 %v3361, 4294901760
        %v3363 = vsub.f32 %v3361, %v3362
        %v3364 = vand.u32 %v3363, 4294901760
        %3365 = vmatpush1.msra.mxu0 %v3364
        %3366 = vmatprep.subr.mxu0 0.0
        %3367 = vmatpush1.msra.mxu0 0.0
        %3368 = vmatprep.subr.mxu0 0.0
        %3369 = vmatpush1.msra.mxu0 0.0
        %3370 = vmatprep.subr.mxu0 0.0
        %3371 = vmatpush1.msra.mxu0 0.0
        %3372 = vmatprep.subr.mxu0 0.0
        %3373 = vmatpush1.msra.mxu0 0.0
        %3374 = vmatprep.subr.mxu0 0.0
        %3375 = vmatpush1.msra.mxu0 0.0
        %3376 = vmatprep.subr.mxu0 0.0
        %3377 = vmatpush1.msra.mxu0 0.0
        %3378 = vmatprep.subr.mxu0 0.0
        %3379 = vmatpush1.msra.mxu0 0.0
        %3380 = vmatprep.subr.mxu0 0.0
        %3381 = vmatpush1.msra.mxu0 0.0
        %3382 = vmatprep.subr.mxu0 0.0
        %3383 = vmatpush1.msra.mxu0 0.0
        %3384 = vmatprep.subr.mxu0 0.0
        %3385 = vmatpush1.msra.mxu0 0.0
        %3386 = vmatprep.subr.mxu0 0.0
        %3387 = vmatpush1.msra.mxu0 0.0
        %3388 = vmatprep.subr.mxu0 0.0
        %3389 = vmatpush1.msra.mxu0 0.0
        %3390 = vmatprep.subr.mxu0 0.0
        %3391 = vmatpush1.msra.mxu0 0.0
        %3392 = vmatprep.subr.mxu0 0.0
        %3393 = vmatpush1.msra.mxu0 0.0
        %3394 = vmatprep.subr.mxu0 0.0
        %3395 = vmatpush1.msra.mxu0 0.0
        %3396 = vmatprep.subr.mxu0 0.0
        %3397 = vmatpush1.msra.mxu0 0.0
        %3398 = vmatprep.subr.mxu0 0.0
        %3399 = vmatpush1.msra.mxu0 0.0
        %3400 = vmatprep.subr.mxu0 0.0
        %3401 = vmatpush1.msra.mxu0 0.0
        %3402 = vmatprep.subr.mxu0 0.0
        %3403 = vmatpush1.msra.mxu0 0.0
        %3404 = vmatprep.subr.mxu0 0.0
        %3405 = vmatpush1.msra.mxu0 0.0
        %3406 = vmatprep.subr.mxu0 0.0
        %3407 = vmatpush1.msra.mxu0 0.0
        %3408 = vmatprep.subr.mxu0 0.0
        %3409 = vmatpush1.msra.mxu0 0.0
        %3410 = vmatprep.subr.mxu0 0.0
        %3411 = vmatpush1.msra.mxu0 0.0
        %3412 = vmatprep.subr.mxu0 0.0
        %3413 = vmatpush1.msra.mxu0 0.0
        %3414 = vmatprep.subr.mxu0 0.0
        %3415 = vmatpush1.msra.mxu0 0.0
        %3416 = vmatprep.subr.mxu0 0.0
        %3417 = vmatpush1.msra.mxu0 0.0
        %3418 = vmatprep.subr.mxu0 0.0
        %3419 = vmatpush1.msra.mxu0 0.0
        %3420 = vmatprep.subr.mxu0 0.0
        %3421 = vmatpush1.msra.mxu0 0.0
        %3422 = vmatprep.subr.mxu0 0.0
        %3423 = vmatpush1.msra.mxu0 0.0
        %3424 = vmatprep.subr.mxu0 0.0
        %3425 = vmatpush1.msra.mxu0 0.0
        %3426 = vmatprep.subr.mxu0 0.0
        %3427 = vmatpush1.msra.mxu0 0.0
        %3428 = vmatprep.mubr.f32.mxu0 0.0
        %v3429 = vand.u32 %v3281, 4294901760
        %3430 = vmatmul.mubr.f32.gmra.mrb[0].mxu0 %v3429
        %v3431 = vpop.f32.mrb[0].mxu0
        %v3432 = vadd.f32 %v3356, %v3431
        %v3433 = vpop.f32.mrb[0].mxu0
        %3434 = vdwg.mxu0
        %3435 = vmatprep.subr.mxu0 0.0
        %v3436 = vand.u32 %v3278, 4294901760
        %v3437 = vsub.f32 %v3278, %v3436
        %3438 = vmatpush1.msra.mxu0 %v3437
        %3439 = vmatprep.subr.mxu0 0.0
        %3440 = vmatpush1.msra.mxu0 0.0
        %3441 = vmatprep.subr.mxu0 0.0
        %3442 = vmatpush1.msra.mxu0 0.0
        %3443 = vmatprep.subr.mxu0 0.0
        %3444 = vmatpush1.msra.mxu0 0.0
        %3445 = vmatprep.subr.mxu0 0.0
        %3446 = vmatpush1.msra.mxu0 0.0
        %3447 = vmatprep.subr.mxu0 0.0
        %3448 = vmatpush1.msra.mxu0 0.0
        %3449 = vmatprep.subr.mxu0 0.0
        %3450 = vmatpush1.msra.mxu0 0.0
        %3451 = vmatprep.subr.mxu0 0.0
        %3452 = vmatpush1.msra.mxu0 0.0
        %3453 = vmatprep.subr.mxu0 0.0
        %3454 = vmatpush1.msra.mxu0 0.0
        %3455 = vmatprep.subr.mxu0 0.0
        %3456 = vmatpush1.msra.mxu0 0.0
        %3457 = vmatprep.subr.mxu0 0.0
        %3458 = vmatpush1.msra.mxu0 0.0
        %3459 = vmatprep.subr.mxu0 0.0
        %3460 = vmatpush1.msra.mxu0 0.0
        %3461 = vmatprep.subr.mxu0 0.0
        %3462 = vmatpush1.msra.mxu0 0.0
        %3463 = vmatprep.subr.mxu0 0.0
        %3464 = vmatpush1.msra.mxu0 0.0
        %3465 = vmatprep.subr.mxu0 0.0
        %3466 = vmatpush1.msra.mxu0 0.0
        %3467 = vmatprep.subr.mxu0 0.0
        %3468 = vmatpush1.msra.mxu0 0.0
        %3469 = vmatprep.subr.mxu0 0.0
        %3470 = vmatpush1.msra.mxu0 0.0
        %3471 = vmatprep.subr.mxu0 0.0
        %3472 = vmatpush1.msra.mxu0 0.0
        %3473 = vmatprep.subr.mxu0 0.0
        %3474 = vmatpush1.msra.mxu0 0.0
        %3475 = vmatprep.subr.mxu0 0.0
        %3476 = vmatpush1.msra.mxu0 0.0
        %3477 = vmatprep.subr.mxu0 0.0
        %3478 = vmatpush1.msra.mxu0 0.0
        %3479 = vmatprep.subr.mxu0 0.0
        %3480 = vmatpush1.msra.mxu0 0.0
        %3481 = vmatprep.subr.mxu0 0.0
        %3482 = vmatpush1.msra.mxu0 0.0
        %3483 = vmatprep.subr.mxu0 0.0
        %3484 = vmatpush1.msra.mxu0 0.0
        %3485 = vmatprep.subr.mxu0 0.0
        %3486 = vmatpush1.msra.mxu0 0.0
        %3487 = vmatprep.subr.mxu0 0.0
        %3488 = vmatpush1.msra.mxu0 0.0
        %3489 = vmatprep.subr.mxu0 0.0
        %3490 = vmatpush1.msra.mxu0 0.0
        %3491 = vmatprep.subr.mxu0 0.0
        %3492 = vmatpush1.msra.mxu0 0.0
        %3493 = vmatprep.subr.mxu0 0.0
        %3494 = vmatpush1.msra.mxu0 0.0
        %3495 = vmatprep.subr.mxu0 0.0
        %3496 = vmatpush1.msra.mxu0 0.0
        %3497 = vmatprep.subr.mxu0 0.0
        %3498 = vmatpush1.msra.mxu0 0.0
        %3499 = vmatprep.subr.mxu0 0.0
        %3500 = vmatpush1.msra.mxu0 0.0
        %3501 = vmatprep.mubr.f32.mxu0 0.0
        %v3502 = vand.u32 %v3281, 4294901760
        %v3503 = vsub.f32 %v3281, %v3502
        %3504 = vmatmul.mubr.f32.gmra.mrb[0].mxu0 %v3503
        %v3505 = vpop.f32.mrb[0].mxu0
        %v3506 = vadd.f32 %v3432, %v3505
        %v3507 = vpop.f32.mrb[0].mxu0
        %3508 = vdwg.mxu0
        %3509 = vmatprep.subr.mxu0 0.0
        %v3510 = vand.u32 %v3278, 4294901760
        %3511 = vmatpush1.msra.mxu0 %v3510
        %3512 = vmatprep.subr.mxu0 0.0
        %3513 = vmatpush1.msra.mxu0 0.0
        %3514 = vmatprep.subr.mxu0 0.0
        %3515 = vmatpush1.msra.mxu0 0.0
        %3516 = vmatprep.subr.mxu0 0.0
        %3517 = vmatpush1.msra.mxu0 0.0
        %3518 = vmatprep.subr.mxu0 0.0
        %3519 = vmatpush1.msra.mxu0 0.0
        %3520 = vmatprep.subr.mxu0 0.0
        %3521 = vmatpush1.msra.mxu0 0.0
        %3522 = vmatprep.subr.mxu0 0.0
        %3523 = vmatpush1.msra.mxu0 0.0
        %3524 = vmatprep.subr.mxu0 0.0
        %3525 = vmatpush1.msra.mxu0 0.0
        %3526 = vmatprep.subr.mxu0 0.0
        %3527 = vmatpush1.msra.mxu0 0.0
        %3528 = vmatprep.subr.mxu0 0.0
        %3529 = vmatpush1.msra.mxu0 0.0
        %3530 = vmatprep.subr.mxu0 0.0
        %3531 = vmatpush1.msra.mxu0 0.0
        %3532 = vmatprep.subr.mxu0 0.0
        %3533 = vmatpush1.msra.mxu0 0.0
        %3534 = vmatprep.subr.mxu0 0.0
        %3535 = vmatpush1.msra.mxu0 0.0
        %3536 = vmatprep.subr.mxu0 0.0
        %3537 = vmatpush1.msra.mxu0 0.0
        %3538 = vmatprep.subr.mxu0 0.0
        %3539 = vmatpush1.msra.mxu0 0.0
        %3540 = vmatprep.subr.mxu0 0.0
        %3541 = vmatpush1.msra.mxu0 0.0
        %3542 = vmatprep.subr.mxu0 0.0
        %3543 = vmatpush1.msra.mxu0 0.0
        %3544 = vmatprep.subr.mxu0 0.0
        %3545 = vmatpush1.msra.mxu0 0.0
        %3546 = vmatprep.subr.mxu0 0.0
        %3547 = vmatpush1.msra.mxu0 0.0
        %3548 = vmatprep.subr.mxu0 0.0
        %3549 = vmatpush1.msra.mxu0 0.0
        %3550 = vmatprep.subr.mxu0 0.0
        %3551 = vmatpush1.msra.mxu0 0.0
        %3552 = vmatprep.subr.mxu0 0.0
        %3553 = vmatpush1.msra.mxu0 0.0
        %3554 = vmatprep.subr.mxu0 0.0
        %3555 = vmatpush1.msra.mxu0 0.0
        %3556 = vmatprep.subr.mxu0 0.0
        %3557 = vmatpush1.msra.mxu0 0.0
        %3558 = vmatprep.subr.mxu0 0.0
        %3559 = vmatpush1.msra.mxu0 0.0
        %3560 = vmatprep.subr.mxu0 0.0
        %3561 = vmatpush1.msra.mxu0 0.0
        %3562 = vmatprep.subr.mxu0 0.0
        %3563 = vmatpush1.msra.mxu0 0.0
        %3564 = vmatprep.subr.mxu0 0.0
        %3565 = vmatpush1.msra.mxu0 0.0
        %3566 = vmatprep.subr.mxu0 0.0
        %3567 = vmatpush1.msra.mxu0 0.0
        %3568 = vmatprep.subr.mxu0 0.0
        %3569 = vmatpush1.msra.mxu0 0.0
        %3570 = vmatprep.subr.mxu0 0.0
        %3571 = vmatpush1.msra.mxu0 0.0
        %3572 = vmatprep.subr.mxu0 0.0
        %3573 = vmatpush1.msra.mxu0 0.0
        %3574 = vmatprep.mubr.f32.mxu0 0.0
        %v3575 = vand.u32 %v3281, 4294901760
        %v3576 = vsub.f32 %v3281, %v3575
        %v3577 = vand.u32 %v3576, 4294901760
        %3578 = vmatmul.mubr.f32.gmra.mrb[0].mxu0 %v3577
        %v3579 = vpop.f32.mrb[0].mxu0
        %v3580 = vadd.f32 %v3506, %v3579
        %v3581 = vpop.f32.mrb[0].mxu0
        %3582 = vdwg.mxu0
        %3583 = vmatprep.subr.mxu0 0.0
        %v3584 = vand.u32 %v3278, 4294901760
        %v3585 = vsub.f32 %v3278, %v3584
        %v3586 = vand.u32 %v3585, 4294901760
        %3587 = vmatpush1.msra.mxu0 %v3586
        %3588 = vmatprep.subr.mxu0 0.0
        %3589 = vmatpush1.msra.mxu0 0.0
        %3590 = vmatprep.subr.mxu0 0.0
        %3591 = vmatpush1.msra.mxu0 0.0
        %3592 = vmatprep.subr.mxu0 0.0
        %3593 = vmatpush1.msra.mxu0 0.0
        %3594 = vmatprep.subr.mxu0 0.0
        %3595 = vmatpush1.msra.mxu0 0.0
        %3596 = vmatprep.subr.mxu0 0.0
        %3597 = vmatpush1.msra.mxu0 0.0
        %3598 = vmatprep.subr.mxu0 0.0
        %3599 = vmatpush1.msra.mxu0 0.0
        %3600 = vmatprep.subr.mxu0 0.0
        %3601 = vmatpush1.msra.mxu0 0.0
        %3602 = vmatprep.subr.mxu0 0.0
        %3603 = vmatpush1.msra.mxu0 0.0
        %3604 = vmatprep.subr.mxu0 0.0
        %3605 = vmatpush1.msra.mxu0 0.0
        %3606 = vmatprep.subr.mxu0 0.0
        %3607 = vmatpush1.msra.mxu0 0.0
        %3608 = vmatprep.subr.mxu0 0.0
        %3609 = vmatpush1.msra.mxu0 0.0
        %3610 = vmatprep.subr.mxu0 0.0
        %3611 = vmatpush1.msra.mxu0 0.0
        %3612 = vmatprep.subr.mxu0 0.0
        %3613 = vmatpush1.msra.mxu0 0.0
        %3614 = vmatprep.subr.mxu0 0.0
        %3615 = vmatpush1.msra.mxu0 0.0
        %3616 = vmatprep.subr.mxu0 0.0
        %3617 = vmatpush1.msra.mxu0 0.0
        %3618 = vmatprep.subr.mxu0 0.0
        %3619 = vmatpush1.msra.mxu0 0.0
        %3620 = vmatprep.subr.mxu0 0.0
        %3621 = vmatpush1.msra.mxu0 0.0
        %3622 = vmatprep.subr.mxu0 0.0
        %3623 = vmatpush1.msra.mxu0 0.0
        %3624 = vmatprep.subr.mxu0 0.0
        %3625 = vmatpush1.msra.mxu0 0.0
        %3626 = vmatprep.subr.mxu0 0.0
        %3627 = vmatpush1.msra.mxu0 0.0
        %3628 = vmatprep.subr.mxu0 0.0
        %3629 = vmatpush1.msra.mxu0 0.0
        %3630 = vmatprep.subr.mxu0 0.0
        %3631 = vmatpush1.msra.mxu0 0.0
        %3632 = vmatprep.subr.mxu0 0.0
        %3633 = vmatpush1.msra.mxu0 0.0
        %3634 = vmatprep.subr.mxu0 0.0
        %3635 = vmatpush1.msra.mxu0 0.0
        %3636 = vmatprep.subr.mxu0 0.0
        %3637 = vmatpush1.msra.mxu0 0.0
        %3638 = vmatprep.subr.mxu0 0.0
        %3639 = vmatpush1.msra.mxu0 0.0
        %3640 = vmatprep.subr.mxu0 0.0
        %3641 = vmatpush1.msra.mxu0 0.0
        %3642 = vmatprep.subr.mxu0 0.0
        %3643 = vmatpush1.msra.mxu0 0.0
        %3644 = vmatprep.subr.mxu0 0.0
        %3645 = vmatpush1.msra.mxu0 0.0
        %3646 = vmatprep.subr.mxu0 0.0
        %3647 = vmatpush1.msra.mxu0 0.0
        %3648 = vmatprep.subr.mxu0 0.0
        %3649 = vmatpush1.msra.mxu0 0.0
        %3650 = vmatprep.mubr.f32.mxu0 0.0
        %v3651 = vand.u32 %v3281, 4294901760
        %3652 = vmatmul.mubr.f32.gmra.mrb[0].mxu0 %v3651
        %v3653 = vpop.f32.mrb[0].mxu0
        %v3654 = vadd.f32 %v3580, %v3653
        %v3655 = vpop.f32.mrb[0].mxu0
        %3656 = vdwg.mxu0
        %3657 = vmatprep.subr.mxu0 0.0
        %v3658 = vand.u32 %v3278, 4294901760
        %3659 = vmatpush1.msra.mxu0 %v3658
        %3660 = vmatprep.subr.mxu0 0.0
        %3661 = vmatpush1.msra.mxu0 0.0
        %3662 = vmatprep.subr.mxu0 0.0
        %3663 = vmatpush1.msra.mxu0 0.0
        %3664 = vmatprep.subr.mxu0 0.0
        %3665 = vmatpush1.msra.mxu0 0.0
        %3666 = vmatprep.subr.mxu0 0.0
        %3667 = vmatpush1.msra.mxu0 0.0
        %3668 = vmatprep.subr.mxu0 0.0
        %3669 = vmatpush1.msra.mxu0 0.0
        %3670 = vmatprep.subr.mxu0 0.0
        %3671 = vmatpush1.msra.mxu0 0.0
        %3672 = vmatprep.subr.mxu0 0.0
        %3673 = vmatpush1.msra.mxu0 0.0
        %3674 = vmatprep.subr.mxu0 0.0
        %3675 = vmatpush1.msra.mxu0 0.0
        %3676 = vmatprep.subr.mxu0 0.0
        %3677 = vmatpush1.msra.mxu0 0.0
        %3678 = vmatprep.subr.mxu0 0.0
        %3679 = vmatpush1.msra.mxu0 0.0
        %3680 = vmatprep.subr.mxu0 0.0
        %3681 = vmatpush1.msra.mxu0 0.0
        %3682 = vmatprep.subr.mxu0 0.0
        %3683 = vmatpush1.msra.mxu0 0.0
        %3684 = vmatprep.subr.mxu0 0.0
        %3685 = vmatpush1.msra.mxu0 0.0
        %3686 = vmatprep.subr.mxu0 0.0
        %3687 = vmatpush1.msra.mxu0 0.0
        %3688 = vmatprep.subr.mxu0 0.0
        %3689 = vmatpush1.msra.mxu0 0.0
        %3690 = vmatprep.subr.mxu0 0.0
        %3691 = vmatpush1.msra.mxu0 0.0
        %3692 = vmatprep.subr.mxu0 0.0
        %3693 = vmatpush1.msra.mxu0 0.0
        %3694 = vmatprep.subr.mxu0 0.0
        %3695 = vmatpush1.msra.mxu0 0.0
        %3696 = vmatprep.subr.mxu0 0.0
        %3697 = vmatpush1.msra.mxu0 0.0
        %3698 = vmatprep.subr.mxu0 0.0
        %3699 = vmatpush1.msra.mxu0 0.0
        %3700 = vmatprep.subr.mxu0 0.0
        %3701 = vmatpush1.msra.mxu0 0.0
        %3702 = vmatprep.subr.mxu0 0.0
        %3703 = vmatpush1.msra.mxu0 0.0
        %3704 = vmatprep.subr.mxu0 0.0
        %3705 = vmatpush1.msra.mxu0 0.0
        %3706 = vmatprep.subr.mxu0 0.0
        %3707 = vmatpush1.msra.mxu0 0.0
        %3708 = vmatprep.subr.mxu0 0.0
        %3709 = vmatpush1.msra.mxu0 0.0
        %3710 = vmatprep.subr.mxu0 0.0
        %3711 = vmatpush1.msra.mxu0 0.0
        %3712 = vmatprep.subr.mxu0 0.0
        %3713 = vmatpush1.msra.mxu0 0.0
        %3714 = vmatprep.subr.mxu0 0.0
        %3715 = vmatpush1.msra.mxu0 0.0
        %3716 = vmatprep.subr.mxu0 0.0
        %3717 = vmatpush1.msra.mxu0 0.0
        %3718 = vmatprep.subr.mxu0 0.0
        %3719 = vmatpush1.msra.mxu0 0.0
        %3720 = vmatprep.subr.mxu0 0.0
        %3721 = vmatpush1.msra.mxu0 0.0
        %3722 = vmatprep.mubr.f32.mxu0 0.0
        %v3723 = vand.u32 %v3281, 4294901760
        %3724 = vmatmul.mubr.f32.gmra.mrb[0].mxu0 %v3723
        %v3725 = vpop.f32.mrb[0].mxu0
        %v3726 = vadd.f32 %v3654, %v3725
        %v3727 = vpop.f32.mrb[0].mxu0
        %3728 = vdwg.mxu0
        %3729 = vrot.lane.b32.xlu0 %v967, 104
        %v3730 = vpop.permute.xlu0 %3729
        %3731 = vrot.lane.b32.xlu0 %v964, 72
        %v3732 = vpop.permute.xlu0 %3731
        %v3733 = vsel %vm977, %v3730, 0
        %v3735 = vsel %vm977, %v3732, 0
        %3737 = vmatprep.subr.mxu0 0.0
        %v3738 = vand.u32 %v3735, 4294901760
        %3739 = vmatpush1.xpose.msra.mxu0 %v3738
        %3740 = vmatprep.subr.mxu0 0.0
        %3741 = vmatpush1.xpose.msra.mxu0 0.0
        %3742 = vmatprep.subr.mxu0 0.0
        %3743 = vmatpush1.xpose.msra.mxu0 0.0
        %3744 = vmatprep.subr.mxu0 0.0
        %3745 = vmatpush1.xpose.msra.mxu0 0.0
        %3746 = vmatprep.subr.mxu0 0.0
        %3747 = vmatpush1.xpose.msra.mxu0 0.0
        %3748 = vmatprep.subr.mxu0 0.0
        %3749 = vmatpush1.xpose.msra.mxu0 0.0
        %3750 = vmatprep.subr.mxu0 0.0
        %3751 = vmatpush1.xpose.msra.mxu0 0.0
        %3752 = vmatprep.subr.mxu0 0.0
        %3753 = vmatpush1.xpose.msra.mxu0 0.0
        %3754 = vmatprep.subr.mxu0 0.0
        %3755 = vmatpush1.xpose.msra.mxu0 0.0
        %3756 = vmatprep.subr.mxu0 0.0
        %3757 = vmatpush1.xpose.msra.mxu0 0.0
        %3758 = vmatprep.subr.mxu0 0.0
        %3759 = vmatpush1.xpose.msra.mxu0 0.0
        %3760 = vmatprep.subr.mxu0 0.0
        %3761 = vmatpush1.xpose.msra.mxu0 0.0
        %3762 = vmatprep.subr.mxu0 0.0
        %3763 = vmatpush1.xpose.msra.mxu0 0.0
        %3764 = vmatprep.subr.mxu0 0.0
        %3765 = vmatpush1.xpose.msra.mxu0 0.0
        %3766 = vmatprep.subr.mxu0 0.0
        %3767 = vmatpush1.xpose.msra.mxu0 0.0
        %3768 = vmatprep.subr.mxu0 0.0
        %3769 = vmatpush1.xpose.msra.mxu0 0.0
        %3770 = vmatprep.subr.mxu0 0.0
        %3771 = vmatpush1.xpose.msra.mxu0 0.0
        %3772 = vmatprep.subr.mxu0 0.0
        %3773 = vmatpush1.xpose.msra.mxu0 0.0
        %3774 = vmatprep.subr.mxu0 0.0
        %3775 = vmatpush1.xpose.msra.mxu0 0.0
        %3776 = vmatprep.subr.mxu0 0.0
        %3777 = vmatpush1.xpose.msra.mxu0 0.0
        %3778 = vmatprep.subr.mxu0 0.0
        %3779 = vmatpush1.xpose.msra.mxu0 0.0
        %3780 = vmatprep.subr.mxu0 0.0
        %3781 = vmatpush1.xpose.msra.mxu0 0.0
        %3782 = vmatprep.subr.mxu0 0.0
        %3783 = vmatpush1.xpose.msra.mxu0 0.0
        %3784 = vmatprep.subr.mxu0 0.0
        %3785 = vmatpush1.xpose.msra.mxu0 0.0
        %3786 = vmatprep.subr.mxu0 0.0
        %3787 = vmatpush1.xpose.msra.mxu0 0.0
        %3788 = vmatprep.subr.mxu0 0.0
        %3789 = vmatpush1.xpose.msra.mxu0 0.0
        %3790 = vmatprep.subr.mxu0 0.0
        %3791 = vmatpush1.xpose.msra.mxu0 0.0
        %3792 = vmatprep.subr.mxu0 0.0
        %3793 = vmatpush1.xpose.msra.mxu0 0.0
        %3794 = vmatprep.subr.mxu0 0.0
        %3795 = vmatpush1.xpose.msra.mxu0 0.0
        %3796 = vmatprep.subr.mxu0 0.0
        %3797 = vmatpush1.xpose.msra.mxu0 0.0
        %3798 = vmatprep.subr.mxu0 0.0
        %3799 = vmatpush1.xpose.msra.mxu0 0.0
        %3800 = vmatprep.subr.mxu0 0.0
        %3801 = vmatpush1.xpose.msra.mxu0 0.0
        %3802 = vmatprep.mubr.f32.mxu0 0.0
        %v3803 = vand.u32 %v3733, 4294901760
        %v3804 = vsub.f32 %v3733, %v3803
        %v3805 = vand.u32 %v3804, 4294901760
        %v3806 = vsub.f32 %v3804, %v3805
        %v3807 = vand.u32 %v3806, 4294901760
        %3808 = vmatmul.mubr.f32.gmra.mrb[0].mxu0 %v3807
        %v3809 = vpop.f32.mrb[0].mxu0
        %v3810 = vadd.f32 %v973, %v3809
        %v3811 = vpop.f32.mrb[0].mxu0
        %3812 = vdwg.mxu0
        %3813 = vmatprep.subr.mxu0 0.0
        %v3814 = vand.u32 %v3735, 4294901760
        %v3815 = vsub.f32 %v3735, %v3814
        %v3816 = vand.u32 %v3815, 4294901760
        %v3817 = vsub.f32 %v3815, %v3816
        %v3818 = vand.u32 %v3817, 4294901760
        %3819 = vmatpush1.xpose.msra.mxu0 %v3818
        %3820 = vmatprep.subr.mxu0 0.0
        %3821 = vmatpush1.xpose.msra.mxu0 0.0
        %3822 = vmatprep.subr.mxu0 0.0
        %3823 = vmatpush1.xpose.msra.mxu0 0.0
        %3824 = vmatprep.subr.mxu0 0.0
        %3825 = vmatpush1.xpose.msra.mxu0 0.0
        %3826 = vmatprep.subr.mxu0 0.0
        %3827 = vmatpush1.xpose.msra.mxu0 0.0
        %3828 = vmatprep.subr.mxu0 0.0
        %3829 = vmatpush1.xpose.msra.mxu0 0.0
        %3830 = vmatprep.subr.mxu0 0.0
        %3831 = vmatpush1.xpose.msra.mxu0 0.0
        %3832 = vmatprep.subr.mxu0 0.0
        %3833 = vmatpush1.xpose.msra.mxu0 0.0
        %3834 = vmatprep.subr.mxu0 0.0
        %3835 = vmatpush1.xpose.msra.mxu0 0.0
        %3836 = vmatprep.subr.mxu0 0.0
        %3837 = vmatpush1.xpose.msra.mxu0 0.0
        %3838 = vmatprep.subr.mxu0 0.0
        %3839 = vmatpush1.xpose.msra.mxu0 0.0
        %3840 = vmatprep.subr.mxu0 0.0
        %3841 = vmatpush1.xpose.msra.mxu0 0.0
        %3842 = vmatprep.subr.mxu0 0.0
        %3843 = vmatpush1.xpose.msra.mxu0 0.0
        %3844 = vmatprep.subr.mxu0 0.0
        %3845 = vmatpush1.xpose.msra.mxu0 0.0
        %3846 = vmatprep.subr.mxu0 0.0
        %3847 = vmatpush1.xpose.msra.mxu0 0.0
        %3848 = vmatprep.subr.mxu0 0.0
        %3849 = vmatpush1.xpose.msra.mxu0 0.0
        %3850 = vmatprep.subr.mxu0 0.0
        %3851 = vmatpush1.xpose.msra.mxu0 0.0
        %3852 = vmatprep.subr.mxu0 0.0
        %3853 = vmatpush1.xpose.msra.mxu0 0.0
        %3854 = vmatprep.subr.mxu0 0.0
        %3855 = vmatpush1.xpose.msra.mxu0 0.0
        %3856 = vmatprep.subr.mxu0 0.0
        %3857 = vmatpush1.xpose.msra.mxu0 0.0
        %3858 = vmatprep.subr.mxu0 0.0
        %3859 = vmatpush1.xpose.msra.mxu0 0.0
        %3860 = vmatprep.subr.mxu0 0.0
        %3861 = vmatpush1.xpose.msra.mxu0 0.0
        %3862 = vmatprep.subr.mxu0 0.0
        %3863 = vmatpush1.xpose.msra.mxu0 0.0
        %3864 = vmatprep.subr.mxu0 0.0
        %3865 = vmatpush1.xpose.msra.mxu0 0.0
        %3866 = vmatprep.subr.mxu0 0.0
        %3867 = vmatpush1.xpose.msra.mxu0 0.0
        %3868 = vmatprep.subr.mxu0 0.0
        %3869 = vmatpush1.xpose.msra.mxu0 0.0
        %3870 = vmatprep.subr.mxu0 0.0
        %3871 = vmatpush1.xpose.msra.mxu0 0.0
        %3872 = vmatprep.subr.mxu0 0.0
        %3873 = vmatpush1.xpose.msra.mxu0 0.0
        %3874 = vmatprep.subr.mxu0 0.0
        %3875 = vmatpush1.xpose.msra.mxu0 0.0
        %3876 = vmatprep.subr.mxu0 0.0
        %3877 = vmatpush1.xpose.msra.mxu0 0.0
        %3878 = vmatprep.subr.mxu0 0.0
        %3879 = vmatpush1.xpose.msra.mxu0 0.0
        %3880 = vmatprep.subr.mxu0 0.0
        %3881 = vmatpush1.xpose.msra.mxu0 0.0
        %3882 = vmatprep.mubr.f32.mxu0 0.0
        %v3883 = vand.u32 %v3733, 4294901760
        %3884 = vmatmul.mubr.f32.gmra.mrb[0].mxu0 %v3883
        %v3885 = vpop.f32.mrb[0].mxu0
        %v3886 = vadd.f32 %v3810, %v3885
        %v3887 = vpop.f32.mrb[0].mxu0
        %3888 = vdwg.mxu0
        %3889 = vmatprep.subr.mxu0 0.0
        %v3890 = vand.u32 %v3735, 4294901760
        %v3891 = vsub.f32 %v3735, %v3890
        %3892 = vmatpush1.xpose.msra.mxu0 %v3891
        %3893 = vmatprep.subr.mxu0 0.0
        %3894 = vmatpush1.xpose.msra.mxu0 0.0
        %3895 = vmatprep.subr.mxu0 0.0
        %3896 = vmatpush1.xpose.msra.mxu0 0.0
        %3897 = vmatprep.subr.mxu0 0.0
        %3898 = vmatpush1.xpose.msra.mxu0 0.0
        %3899 = vmatprep.subr.mxu0 0.0
        %3900 = vmatpush1.xpose.msra.mxu0 0.0
        %3901 = vmatprep.subr.mxu0 0.0
        %3902 = vmatpush1.xpose.msra.mxu0 0.0
        %3903 = vmatprep.subr.mxu0 0.0
        %3904 = vmatpush1.xpose.msra.mxu0 0.0
        %3905 = vmatprep.subr.mxu0 0.0
        %3906 = vmatpush1.xpose.msra.mxu0 0.0
        %3907 = vmatprep.subr.mxu0 0.0
        %3908 = vmatpush1.xpose.msra.mxu0 0.0
        %3909 = vmatprep.subr.mxu0 0.0
        %3910 = vmatpush1.xpose.msra.mxu0 0.0
        %3911 = vmatprep.subr.mxu0 0.0
        %3912 = vmatpush1.xpose.msra.mxu0 0.0
        %3913 = vmatprep.subr.mxu0 0.0
        %3914 = vmatpush1.xpose.msra.mxu0 0.0
        %3915 = vmatprep.subr.mxu0 0.0
        %3916 = vmatpush1.xpose.msra.mxu0 0.0
        %3917 = vmatprep.subr.mxu0 0.0
        %3918 = vmatpush1.xpose.msra.mxu0 0.0
        %3919 = vmatprep.subr.mxu0 0.0
        %3920 = vmatpush1.xpose.msra.mxu0 0.0
        %3921 = vmatprep.subr.mxu0 0.0
        %3922 = vmatpush1.xpose.msra.mxu0 0.0
        %3923 = vmatprep.subr.mxu0 0.0
        %3924 = vmatpush1.xpose.msra.mxu0 0.0
        %3925 = vmatprep.subr.mxu0 0.0
        %3926 = vmatpush1.xpose.msra.mxu0 0.0
        %3927 = vmatprep.subr.mxu0 0.0
        %3928 = vmatpush1.xpose.msra.mxu0 0.0
        %3929 = vmatprep.subr.mxu0 0.0
        %3930 = vmatpush1.xpose.msra.mxu0 0.0
        %3931 = vmatprep.subr.mxu0 0.0
        %3932 = vmatpush1.xpose.msra.mxu0 0.0
        %3933 = vmatprep.subr.mxu0 0.0
        %3934 = vmatpush1.xpose.msra.mxu0 0.0
        %3935 = vmatprep.subr.mxu0 0.0
        %3936 = vmatpush1.xpose.msra.mxu0 0.0
        %3937 = vmatprep.subr.mxu0 0.0
        %3938 = vmatpush1.xpose.msra.mxu0 0.0
        %3939 = vmatprep.subr.mxu0 0.0
        %3940 = vmatpush1.xpose.msra.mxu0 0.0
        %3941 = vmatprep.subr.mxu0 0.0
        %3942 = vmatpush1.xpose.msra.mxu0 0.0
        %3943 = vmatprep.subr.mxu0 0.0
        %3944 = vmatpush1.xpose.msra.mxu0 0.0
        %3945 = vmatprep.subr.mxu0 0.0
        %3946 = vmatpush1.xpose.msra.mxu0 0.0
        %3947 = vmatprep.subr.mxu0 0.0
        %3948 = vmatpush1.xpose.msra.mxu0 0.0
        %3949 = vmatprep.subr.mxu0 0.0
        %3950 = vmatpush1.xpose.msra.mxu0 0.0
        %3951 = vmatprep.subr.mxu0 0.0
        %3952 = vmatpush1.xpose.msra.mxu0 0.0
        %3953 = vmatprep.subr.mxu0 0.0
        %3954 = vmatpush1.xpose.msra.mxu0 0.0
        %3955 = vmatprep.mubr.f32.mxu0 0.0
        %v3956 = vand.u32 %v3733, 4294901760
        %v3957 = vsub.f32 %v3733, %v3956
        %3958 = vmatmul.mubr.f32.gmra.mrb[0].mxu0 %v3957
        %v3959 = vpop.f32.mrb[0].mxu0
        %v3960 = vadd.f32 %v3886, %v3959
        %v3961 = vpop.f32.mrb[0].mxu0
        %3962 = vdwg.mxu0
        %3963 = vmatprep.subr.mxu0 0.0
        %v3964 = vand.u32 %v3735, 4294901760
        %3965 = vmatpush1.xpose.msra.mxu0 %v3964
        %3966 = vmatprep.subr.mxu0 0.0
        %3967 = vmatpush1.xpose.msra.mxu0 0.0
        %3968 = vmatprep.subr.mxu0 0.0
        %3969 = vmatpush1.xpose.msra.mxu0 0.0
        %3970 = vmatprep.subr.mxu0 0.0
        %3971 = vmatpush1.xpose.msra.mxu0 0.0
        %3972 = vmatprep.subr.mxu0 0.0
        %3973 = vmatpush1.xpose.msra.mxu0 0.0
        %3974 = vmatprep.subr.mxu0 0.0
        %3975 = vmatpush1.xpose.msra.mxu0 0.0
        %3976 = vmatprep.subr.mxu0 0.0
        %3977 = vmatpush1.xpose.msra.mxu0 0.0
        %3978 = vmatprep.subr.mxu0 0.0
        %3979 = vmatpush1.xpose.msra.mxu0 0.0
        %3980 = vmatprep.subr.mxu0 0.0
        %3981 = vmatpush1.xpose.msra.mxu0 0.0
        %3982 = vmatprep.subr.mxu0 0.0
        %3983 = vmatpush1.xpose.msra.mxu0 0.0
        %3984 = vmatprep.subr.mxu0 0.0
        %3985 = vmatpush1.xpose.msra.mxu0 0.0
        %3986 = vmatprep.subr.mxu0 0.0
        %3987 = vmatpush1.xpose.msra.mxu0 0.0
        %3988 = vmatprep.subr.mxu0 0.0
        %3989 = vmatpush1.xpose.msra.mxu0 0.0
        %3990 = vmatprep.subr.mxu0 0.0
        %3991 = vmatpush1.xpose.msra.mxu0 0.0
        %3992 = vmatprep.subr.mxu0 0.0
        %3993 = vmatpush1.xpose.msra.mxu0 0.0
        %3994 = vmatprep.subr.mxu0 0.0
        %3995 = vmatpush1.xpose.msra.mxu0 0.0
        %3996 = vmatprep.subr.mxu0 0.0
        %3997 = vmatpush1.xpose.msra.mxu0 0.0
        %3998 = vmatprep.subr.mxu0 0.0
        %3999 = vmatpush1.xpose.msra.mxu0 0.0
        %4000 = vmatprep.subr.mxu0 0.0
        %4001 = vmatpush1.xpose.msra.mxu0 0.0
        %4002 = vmatprep.subr.mxu0 0.0
        %4003 = vmatpush1.xpose.msra.mxu0 0.0
        %4004 = vmatprep.subr.mxu0 0.0
        %4005 = vmatpush1.xpose.msra.mxu0 0.0
        %4006 = vmatprep.subr.mxu0 0.0
        %4007 = vmatpush1.xpose.msra.mxu0 0.0
        %4008 = vmatprep.subr.mxu0 0.0
        %4009 = vmatpush1.xpose.msra.mxu0 0.0
        %4010 = vmatprep.subr.mxu0 0.0
        %4011 = vmatpush1.xpose.msra.mxu0 0.0
        %4012 = vmatprep.subr.mxu0 0.0
        %4013 = vmatpush1.xpose.msra.mxu0 0.0
        %4014 = vmatprep.subr.mxu0 0.0
        %4015 = vmatpush1.xpose.msra.mxu0 0.0
        %4016 = vmatprep.subr.mxu0 0.0
        %4017 = vmatpush1.xpose.msra.mxu0 0.0
        %4018 = vmatprep.subr.mxu0 0.0
        %4019 = vmatpush1.xpose.msra.mxu0 0.0
        %4020 = vmatprep.subr.mxu0 0.0
        %4021 = vmatpush1.xpose.msra.mxu0 0.0
        %4022 = vmatprep.subr.mxu0 0.0
        %4023 = vmatpush1.xpose.msra.mxu0 0.0
        %4024 = vmatprep.subr.mxu0 0.0
        %4025 = vmatpush1.xpose.msra.mxu0 0.0
        %4026 = vmatprep.subr.mxu0 0.0
        %4027 = vmatpush1.xpose.msra.mxu0 0.0
        %4028 = vmatprep.mubr.f32.mxu0 0.0
        %v4029 = vand.u32 %v3733, 4294901760
        %v4030 = vsub.f32 %v3733, %v4029
        %v4031 = vand.u32 %v4030, 4294901760
        %4032 = vmatmul.mubr.f32.gmra.mrb[0].mxu0 %v4031
        %v4033 = vpop.f32.mrb[0].mxu0
        %v4034 = vadd.f32 %v3960, %v4033
        %v4035 = vpop.f32.mrb[0].mxu0
        %4036 = vdwg.mxu0
        %4037 = vmatprep.subr.mxu0 0.0
        %v4038 = vand.u32 %v3735, 4294901760
        %v4039 = vsub.f32 %v3735, %v4038
        %v4040 = vand.u32 %v4039, 4294901760
        %4041 = vmatpush1.xpose.msra.mxu0 %v4040
        %4042 = vmatprep.subr.mxu0 0.0
        %4043 = vmatpush1.xpose.msra.mxu0 0.0
        %4044 = vmatprep.subr.mxu0 0.0
        %4045 = vmatpush1.xpose.msra.mxu0 0.0
        %4046 = vmatprep.subr.mxu0 0.0
        %4047 = vmatpush1.xpose.msra.mxu0 0.0
        %4048 = vmatprep.subr.mxu0 0.0
        %4049 = vmatpush1.xpose.msra.mxu0 0.0
        %4050 = vmatprep.subr.mxu0 0.0
        %4051 = vmatpush1.xpose.msra.mxu0 0.0
        %4052 = vmatprep.subr.mxu0 0.0
        %4053 = vmatpush1.xpose.msra.mxu0 0.0
        %4054 = vmatprep.subr.mxu0 0.0
        %4055 = vmatpush1.xpose.msra.mxu0 0.0
        %4056 = vmatprep.subr.mxu0 0.0
        %4057 = vmatpush1.xpose.msra.mxu0 0.0
        %4058 = vmatprep.subr.mxu0 0.0
        %4059 = vmatpush1.xpose.msra.mxu0 0.0
        %4060 = vmatprep.subr.mxu0 0.0
        %4061 = vmatpush1.xpose.msra.mxu0 0.0
        %4062 = vmatprep.subr.mxu0 0.0
        %4063 = vmatpush1.xpose.msra.mxu0 0.0
        %4064 = vmatprep.subr.mxu0 0.0
        %4065 = vmatpush1.xpose.msra.mxu0 0.0
        %4066 = vmatprep.subr.mxu0 0.0
        %4067 = vmatpush1.xpose.msra.mxu0 0.0
        %4068 = vmatprep.subr.mxu0 0.0
        %4069 = vmatpush1.xpose.msra.mxu0 0.0
        %4070 = vmatprep.subr.mxu0 0.0
        %4071 = vmatpush1.xpose.msra.mxu0 0.0
        %4072 = vmatprep.subr.mxu0 0.0
        %4073 = vmatpush1.xpose.msra.mxu0 0.0
        %4074 = vmatprep.subr.mxu0 0.0
        %4075 = vmatpush1.xpose.msra.mxu0 0.0
        %4076 = vmatprep.subr.mxu0 0.0
        %4077 = vmatpush1.xpose.msra.mxu0 0.0
        %4078 = vmatprep.subr.mxu0 0.0
        %4079 = vmatpush1.xpose.msra.mxu0 0.0
        %4080 = vmatprep.subr.mxu0 0.0
        %4081 = vmatpush1.xpose.msra.mxu0 0.0
        %4082 = vmatprep.subr.mxu0 0.0
        %4083 = vmatpush1.xpose.msra.mxu0 0.0
        %4084 = vmatprep.subr.mxu0 0.0
        %4085 = vmatpush1.xpose.msra.mxu0 0.0
        %4086 = vmatprep.subr.mxu0 0.0
        %4087 = vmatpush1.xpose.msra.mxu0 0.0
        %4088 = vmatprep.subr.mxu0 0.0
        %4089 = vmatpush1.xpose.msra.mxu0 0.0
        %4090 = vmatprep.subr.mxu0 0.0
        %4091 = vmatpush1.xpose.msra.mxu0 0.0
        %4092 = vmatprep.subr.mxu0 0.0
        %4093 = vmatpush1.xpose.msra.mxu0 0.0
        %4094 = vmatprep.subr.mxu0 0.0
        %4095 = vmatpush1.xpose.msra.mxu0 0.0
        %4096 = vmatprep.subr.mxu0 0.0
        %4097 = vmatpush1.xpose.msra.mxu0 0.0
        %4098 = vmatprep.subr.mxu0 0.0
        %4099 = vmatpush1.xpose.msra.mxu0 0.0
        %4100 = vmatprep.subr.mxu0 0.0
        %4101 = vmatpush1.xpose.msra.mxu0 0.0
        %4102 = vmatprep.subr.mxu0 0.0
        %4103 = vmatpush1.xpose.msra.mxu0 0.0
        %4104 = vmatprep.mubr.f32.mxu0 0.0
        %v4105 = vand.u32 %v3733, 4294901760
        %4106 = vmatmul.mubr.f32.gmra.mrb[0].mxu0 %v4105
        %v4107 = vpop.f32.mrb[0].mxu0
        %v4108 = vadd.f32 %v4034, %v4107
        %v4109 = vpop.f32.mrb[0].mxu0
        %4110 = vdwg.mxu0
        %4111 = vmatprep.subr.mxu0 0.0
        %v4112 = vand.u32 %v3735, 4294901760
        %4113 = vmatpush1.xpose.msra.mxu0 %v4112
        %4114 = vmatprep.subr.mxu0 0.0
        %4115 = vmatpush1.xpose.msra.mxu0 0.0
        %4116 = vmatprep.subr.mxu0 0.0
        %4117 = vmatpush1.xpose.msra.mxu0 0.0
        %4118 = vmatprep.subr.mxu0 0.0
        %4119 = vmatpush1.xpose.msra.mxu0 0.0
        %4120 = vmatprep.subr.mxu0 0.0
        %4121 = vmatpush1.xpose.msra.mxu0 0.0
        %4122 = vmatprep.subr.mxu0 0.0
        %4123 = vmatpush1.xpose.msra.mxu0 0.0
        %4124 = vmatprep.subr.mxu0 0.0
        %4125 = vmatpush1.xpose.msra.mxu0 0.0
        %4126 = vmatprep.subr.mxu0 0.0
        %4127 = vmatpush1.xpose.msra.mxu0 0.0
        %4128 = vmatprep.subr.mxu0 0.0
        %4129 = vmatpush1.xpose.msra.mxu0 0.0
        %4130 = vmatprep.subr.mxu0 0.0
        %4131 = vmatpush1.xpose.msra.mxu0 0.0
        %4132 = vmatprep.subr.mxu0 0.0
        %4133 = vmatpush1.xpose.msra.mxu0 0.0
        %4134 = vmatprep.subr.mxu0 0.0
        %4135 = vmatpush1.xpose.msra.mxu0 0.0
        %4136 = vmatprep.subr.mxu0 0.0
        %4137 = vmatpush1.xpose.msra.mxu0 0.0
        %4138 = vmatprep.subr.mxu0 0.0
        %4139 = vmatpush1.xpose.msra.mxu0 0.0
        %4140 = vmatprep.subr.mxu0 0.0
        %4141 = vmatpush1.xpose.msra.mxu0 0.0
        %4142 = vmatprep.subr.mxu0 0.0
        %4143 = vmatpush1.xpose.msra.mxu0 0.0
        %4144 = vmatprep.subr.mxu0 0.0
        %4145 = vmatpush1.xpose.msra.mxu0 0.0
        %4146 = vmatprep.subr.mxu0 0.0
        %4147 = vmatpush1.xpose.msra.mxu0 0.0
        %4148 = vmatprep.subr.mxu0 0.0
        %4149 = vmatpush1.xpose.msra.mxu0 0.0
        %4150 = vmatprep.subr.mxu0 0.0
        %4151 = vmatpush1.xpose.msra.mxu0 0.0
        %4152 = vmatprep.subr.mxu0 0.0
        %4153 = vmatpush1.xpose.msra.mxu0 0.0
        %4154 = vmatprep.subr.mxu0 0.0
        %4155 = vmatpush1.xpose.msra.mxu0 0.0
        %4156 = vmatprep.subr.mxu0 0.0
        %4157 = vmatpush1.xpose.msra.mxu0 0.0
        %4158 = vmatprep.subr.mxu0 0.0
        %4159 = vmatpush1.xpose.msra.mxu0 0.0
        %4160 = vmatprep.subr.mxu0 0.0
        %4161 = vmatpush1.xpose.msra.mxu0 0.0
        %4162 = vmatprep.subr.mxu0 0.0
        %4163 = vmatpush1.xpose.msra.mxu0 0.0
        %4164 = vmatprep.subr.mxu0 0.0
        %4165 = vmatpush1.xpose.msra.mxu0 0.0
        %4166 = vmatprep.subr.mxu0 0.0
        %4167 = vmatpush1.xpose.msra.mxu0 0.0
        %4168 = vmatprep.subr.mxu0 0.0
        %4169 = vmatpush1.xpose.msra.mxu0 0.0
        %4170 = vmatprep.subr.mxu0 0.0
        %4171 = vmatpush1.xpose.msra.mxu0 0.0
        %4172 = vmatprep.subr.mxu0 0.0
        %4173 = vmatpush1.xpose.msra.mxu0 0.0
        %4174 = vmatprep.subr.mxu0 0.0
        %4175 = vmatpush1.xpose.msra.mxu0 0.0
        %4176 = vmatprep.mubr.f32.mxu0 0.0
        %v4177 = vand.u32 %v3733, 4294901760
        %4178 = vmatmul.mubr.f32.gmra.mrb[0].mxu0 %v4177
        %v4179 = vpop.f32.mrb[0].mxu0
        %v4180 = vadd.f32 %v4108, %v4179
        %v4181 = vpop.f32.mrb[0].mxu0
        %4182 = vdwg.mxu0
        %v4183 = vsel %vm977, %v4180, -inf
        %4184 = vmax.xlane.f32.xlu0 %v4183
        %v4185 = vpop.xlane.xlu0 %4184
        %v4186 = vsub.f32 %v4180, %v4185
        %v4187 = vmul.f32 %v4186, 1.442695
        %v4188 = vpow.pop %v4187
        %v4189 = vsel %vm977, %v4188, 0.0
        %4190 = vadd.xlane.f32.xlu0 %v4189
        %v4191 = vpop.xlane.xlu0 %4190
        %v4192 = vrcp.pop %v4191
        %v4193 = vmul.f32 1.0, %v4192
        %v4194 = vmul.f32 %v4188, %v4193
        %4195 = vrot.lane.b32.xlu0 %v964, 40
        %v4196 = vpop.permute.xlu0 %4195
        %v4199 = vsel %vm977, %v4194, 0
        %4201 = vmatprep.subr.mxu0 0.0
        %v4202 = vand.u32 %v4196, 4294901760
        %4203 = vmatpush1.msra.mxu0 %v4202
        %4204 = vmatprep.subr.mxu0 0.0
        %4205 = vmatpush1.msra.mxu0 0.0
        %4206 = vmatprep.subr.mxu0 0.0
        %4207 = vmatpush1.msra.mxu0 0.0
        %4208 = vmatprep.subr.mxu0 0.0
        %4209 = vmatpush1.msra.mxu0 0.0
        %4210 = vmatprep.subr.mxu0 0.0
        %4211 = vmatpush1.msra.mxu0 0.0
        %4212 = vmatprep.subr.mxu0 0.0
        %4213 = vmatpush1.msra.mxu0 0.0
        %4214 = vmatprep.subr.mxu0 0.0
        %4215 = vmatpush1.msra.mxu0 0.0
        %4216 = vmatprep.subr.mxu0 0.0
        %4217 = vmatpush1.msra.mxu0 0.0
        %4218 = vmatprep.subr.mxu0 0.0
        %4219 = vmatpush1.msra.mxu0 0.0
        %4220 = vmatprep.subr.mxu0 0.0
        %4221 = vmatpush1.msra.mxu0 0.0
        %4222 = vmatprep.subr.mxu0 0.0
        %4223 = vmatpush1.msra.mxu0 0.0
        %4224 = vmatprep.subr.mxu0 0.0
        %4225 = vmatpush1.msra.mxu0 0.0
        %4226 = vmatprep.subr.mxu0 0.0
        %4227 = vmatpush1.msra.mxu0 0.0
        %4228 = vmatprep.subr.mxu0 0.0
        %4229 = vmatpush1.msra.mxu0 0.0
        %4230 = vmatprep.subr.mxu0 0.0
        %4231 = vmatpush1.msra.mxu0 0.0
        %4232 = vmatprep.subr.mxu0 0.0
        %4233 = vmatpush1.msra.mxu0 0.0
        %4234 = vmatprep.subr.mxu0 0.0
        %4235 = vmatpush1.msra.mxu0 0.0
        %4236 = vmatprep.subr.mxu0 0.0
        %4237 = vmatpush1.msra.mxu0 0.0
        %4238 = vmatprep.subr.mxu0 0.0
        %4239 = vmatpush1.msra.mxu0 0.0
        %4240 = vmatprep.subr.mxu0 0.0
        %4241 = vmatpush1.msra.mxu0 0.0
        %4242 = vmatprep.subr.mxu0 0.0
        %4243 = vmatpush1.msra.mxu0 0.0
        %4244 = vmatprep.subr.mxu0 0.0
        %4245 = vmatpush1.msra.mxu0 0.0
        %4246 = vmatprep.subr.mxu0 0.0
        %4247 = vmatpush1.msra.mxu0 0.0
        %4248 = vmatprep.subr.mxu0 0.0
        %4249 = vmatpush1.msra.mxu0 0.0
        %4250 = vmatprep.subr.mxu0 0.0
        %4251 = vmatpush1.msra.mxu0 0.0
        %4252 = vmatprep.subr.mxu0 0.0
        %4253 = vmatpush1.msra.mxu0 0.0
        %4254 = vmatprep.subr.mxu0 0.0
        %4255 = vmatpush1.msra.mxu0 0.0
        %4256 = vmatprep.subr.mxu0 0.0
        %4257 = vmatpush1.msra.mxu0 0.0
        %4258 = vmatprep.subr.mxu0 0.0
        %4259 = vmatpush1.msra.mxu0 0.0
        %4260 = vmatprep.subr.mxu0 0.0
        %4261 = vmatpush1.msra.mxu0 0.0
        %4262 = vmatprep.subr.mxu0 0.0
        %4263 = vmatpush1.msra.mxu0 0.0
        %4264 = vmatprep.subr.mxu0 0.0
        %4265 = vmatpush1.msra.mxu0 0.0
        %4266 = vmatprep.mubr.f32.mxu0 0.0
        %v4267 = vand.u32 %v4199, 4294901760
        %v4268 = vsub.f32 %v4199, %v4267
        %v4269 = vand.u32 %v4268, 4294901760
        %v4270 = vsub.f32 %v4268, %v4269
        %v4271 = vand.u32 %v4270, 4294901760
        %4272 = vmatmul.mubr.f32.gmra.mrb[0].mxu0 %v4271
        %v4273 = vpop.f32.mrb[0].mxu0
        %v4274 = vadd.f32 0.0, %v4273
        %v4275 = vpop.f32.mrb[0].mxu0
        %4276 = vdwg.mxu0
        %4277 = vmatprep.subr.mxu0 0.0
        %v4278 = vand.u32 %v4196, 4294901760
        %v4279 = vsub.f32 %v4196, %v4278
        %v4280 = vand.u32 %v4279, 4294901760
        %v4281 = vsub.f32 %v4279, %v4280
        %v4282 = vand.u32 %v4281, 4294901760
        %4283 = vmatpush1.msra.mxu0 %v4282
        %4284 = vmatprep.subr.mxu0 0.0
        %4285 = vmatpush1.msra.mxu0 0.0
        %4286 = vmatprep.subr.mxu0 0.0
        %4287 = vmatpush1.msra.mxu0 0.0
        %4288 = vmatprep.subr.mxu0 0.0
        %4289 = vmatpush1.msra.mxu0 0.0
        %4290 = vmatprep.subr.mxu0 0.0
        %4291 = vmatpush1.msra.mxu0 0.0
        %4292 = vmatprep.subr.mxu0 0.0
        %4293 = vmatpush1.msra.mxu0 0.0
        %4294 = vmatprep.subr.mxu0 0.0
        %4295 = vmatpush1.msra.mxu0 0.0
        %4296 = vmatprep.subr.mxu0 0.0
        %4297 = vmatpush1.msra.mxu0 0.0
        %4298 = vmatprep.subr.mxu0 0.0
        %4299 = vmatpush1.msra.mxu0 0.0
        %4300 = vmatprep.subr.mxu0 0.0
        %4301 = vmatpush1.msra.mxu0 0.0
        %4302 = vmatprep.subr.mxu0 0.0
        %4303 = vmatpush1.msra.mxu0 0.0
        %4304 = vmatprep.subr.mxu0 0.0
        %4305 = vmatpush1.msra.mxu0 0.0
        %4306 = vmatprep.subr.mxu0 0.0
        %4307 = vmatpush1.msra.mxu0 0.0
        %4308 = vmatprep.subr.mxu0 0.0
        %4309 = vmatpush1.msra.mxu0 0.0
        %4310 = vmatprep.subr.mxu0 0.0
        %4311 = vmatpush1.msra.mxu0 0.0
        %4312 = vmatprep.subr.mxu0 0.0
        %4313 = vmatpush1.msra.mxu0 0.0
        %4314 = vmatprep.subr.mxu0 0.0
        %4315 = vmatpush1.msra.mxu0 0.0
        %4316 = vmatprep.subr.mxu0 0.0
        %4317 = vmatpush1.msra.mxu0 0.0
        %4318 = vmatprep.subr.mxu0 0.0
        %4319 = vmatpush1.msra.mxu0 0.0
        %4320 = vmatprep.subr.mxu0 0.0
        %4321 = vmatpush1.msra.mxu0 0.0
        %4322 = vmatprep.subr.mxu0 0.0
        %4323 = vmatpush1.msra.mxu0 0.0
        %4324 = vmatprep.subr.mxu0 0.0
        %4325 = vmatpush1.msra.mxu0 0.0
        %4326 = vmatprep.subr.mxu0 0.0
        %4327 = vmatpush1.msra.mxu0 0.0
        %4328 = vmatprep.subr.mxu0 0.0
        %4329 = vmatpush1.msra.mxu0 0.0
        %4330 = vmatprep.subr.mxu0 0.0
        %4331 = vmatpush1.msra.mxu0 0.0
        %4332 = vmatprep.subr.mxu0 0.0
        %4333 = vmatpush1.msra.mxu0 0.0
        %4334 = vmatprep.subr.mxu0 0.0
        %4335 = vmatpush1.msra.mxu0 0.0
        %4336 = vmatprep.subr.mxu0 0.0
        %4337 = vmatpush1.msra.mxu0 0.0
        %4338 = vmatprep.subr.mxu0 0.0
        %4339 = vmatpush1.msra.mxu0 0.0
        %4340 = vmatprep.subr.mxu0 0.0
        %4341 = vmatpush1.msra.mxu0 0.0
        %4342 = vmatprep.subr.mxu0 0.0
        %4343 = vmatpush1.msra.mxu0 0.0
        %4344 = vmatprep.subr.mxu0 0.0
        %4345 = vmatpush1.msra.mxu0 0.0
        %4346 = vmatprep.mubr.f32.mxu0 0.0
        %v4347 = vand.u32 %v4199, 4294901760
        %4348 = vmatmul.mubr.f32.gmra.mrb[0].mxu0 %v4347
        %v4349 = vpop.f32.mrb[0].mxu0
        %v4350 = vadd.f32 %v4274, %v4349
        %v4351 = vpop.f32.mrb[0].mxu0
        %4352 = vdwg.mxu0
        %4353 = vmatprep.subr.mxu0 0.0
        %v4354 = vand.u32 %v4196, 4294901760
        %v4355 = vsub.f32 %v4196, %v4354
        %4356 = vmatpush1.msra.mxu0 %v4355
        %4357 = vmatprep.subr.mxu0 0.0
        %4358 = vmatpush1.msra.mxu0 0.0
        %4359 = vmatprep.subr.mxu0 0.0
        %4360 = vmatpush1.msra.mxu0 0.0
        %4361 = vmatprep.subr.mxu0 0.0
        %4362 = vmatpush1.msra.mxu0 0.0
        %4363 = vmatprep.subr.mxu0 0.0
        %4364 = vmatpush1.msra.mxu0 0.0
        %4365 = vmatprep.subr.mxu0 0.0
        %4366 = vmatpush1.msra.mxu0 0.0
        %4367 = vmatprep.subr.mxu0 0.0
        %4368 = vmatpush1.msra.mxu0 0.0
        %4369 = vmatprep.subr.mxu0 0.0
        %4370 = vmatpush1.msra.mxu0 0.0
        %4371 = vmatprep.subr.mxu0 0.0
        %4372 = vmatpush1.msra.mxu0 0.0
        %4373 = vmatprep.subr.mxu0 0.0
        %4374 = vmatpush1.msra.mxu0 0.0
        %4375 = vmatprep.subr.mxu0 0.0
        %4376 = vmatpush1.msra.mxu0 0.0
        %4377 = vmatprep.subr.mxu0 0.0
        %4378 = vmatpush1.msra.mxu0 0.0
        %4379 = vmatprep.subr.mxu0 0.0
        %4380 = vmatpush1.msra.mxu0 0.0
        %4381 = vmatprep.subr.mxu0 0.0
        %4382 = vmatpush1.msra.mxu0 0.0
        %4383 = vmatprep.subr.mxu0 0.0
        %4384 = vmatpush1.msra.mxu0 0.0
        %4385 = vmatprep.subr.mxu0 0.0
        %4386 = vmatpush1.msra.mxu0 0.0
        %4387 = vmatprep.subr.mxu0 0.0
        %4388 = vmatpush1.msra.mxu0 0.0
        %4389 = vmatprep.subr.mxu0 0.0
        %4390 = vmatpush1.msra.mxu0 0.0
        %4391 = vmatprep.subr.mxu0 0.0
        %4392 = vmatpush1.msra.mxu0 0.0
        %4393 = vmatprep.subr.mxu0 0.0
        %4394 = vmatpush1.msra.mxu0 0.0
        %4395 = vmatprep.subr.mxu0 0.0
        %4396 = vmatpush1.msra.mxu0 0.0
        %4397 = vmatprep.subr.mxu0 0.0
        %4398 = vmatpush1.msra.mxu0 0.0
        %4399 = vmatprep.subr.mxu0 0.0
        %4400 = vmatpush1.msra.mxu0 0.0
        %4401 = vmatprep.subr.mxu0 0.0
        %4402 = vmatpush1.msra.mxu0 0.0
        %4403 = vmatprep.subr.mxu0 0.0
        %4404 = vmatpush1.msra.mxu0 0.0
        %4405 = vmatprep.subr.mxu0 0.0
        %4406 = vmatpush1.msra.mxu0 0.0
        %4407 = vmatprep.subr.mxu0 0.0
        %4408 = vmatpush1.msra.mxu0 0.0
        %4409 = vmatprep.subr.mxu0 0.0
        %4410 = vmatpush1.msra.mxu0 0.0
        %4411 = vmatprep.subr.mxu0 0.0
        %4412 = vmatpush1.msra.mxu0 0.0
        %4413 = vmatprep.subr.mxu0 0.0
        %4414 = vmatpush1.msra.mxu0 0.0
        %4415 = vmatprep.subr.mxu0 0.0
        %4416 = vmatpush1.msra.mxu0 0.0
        %4417 = vmatprep.subr.mxu0 0.0
        %4418 = vmatpush1.msra.mxu0 0.0
        %4419 = vmatprep.mubr.f32.mxu0 0.0
        %v4420 = vand.u32 %v4199, 4294901760
        %v4421 = vsub.f32 %v4199, %v4420
        %4422 = vmatmul.mubr.f32.gmra.mrb[0].mxu0 %v4421
        %v4423 = vpop.f32.mrb[0].mxu0
        %v4424 = vadd.f32 %v4350, %v4423
        %v4425 = vpop.f32.mrb[0].mxu0
        %4426 = vdwg.mxu0
        %4427 = vmatprep.subr.mxu0 0.0
        %v4428 = vand.u32 %v4196, 4294901760
        %4429 = vmatpush1.msra.mxu0 %v4428
        %4430 = vmatprep.subr.mxu0 0.0
        %4431 = vmatpush1.msra.mxu0 0.0
        %4432 = vmatprep.subr.mxu0 0.0
        %4433 = vmatpush1.msra.mxu0 0.0
        %4434 = vmatprep.subr.mxu0 0.0
        %4435 = vmatpush1.msra.mxu0 0.0
        %4436 = vmatprep.subr.mxu0 0.0
        %4437 = vmatpush1.msra.mxu0 0.0
        %4438 = vmatprep.subr.mxu0 0.0
        %4439 = vmatpush1.msra.mxu0 0.0
        %4440 = vmatprep.subr.mxu0 0.0
        %4441 = vmatpush1.msra.mxu0 0.0
        %4442 = vmatprep.subr.mxu0 0.0
        %4443 = vmatpush1.msra.mxu0 0.0
        %4444 = vmatprep.subr.mxu0 0.0
        %4445 = vmatpush1.msra.mxu0 0.0
        %4446 = vmatprep.subr.mxu0 0.0
        %4447 = vmatpush1.msra.mxu0 0.0
        %4448 = vmatprep.subr.mxu0 0.0
        %4449 = vmatpush1.msra.mxu0 0.0
        %4450 = vmatprep.subr.mxu0 0.0
        %4451 = vmatpush1.msra.mxu0 0.0
        %4452 = vmatprep.subr.mxu0 0.0
        %4453 = vmatpush1.msra.mxu0 0.0
        %4454 = vmatprep.subr.mxu0 0.0
        %4455 = vmatpush1.msra.mxu0 0.0
        %4456 = vmatprep.subr.mxu0 0.0
        %4457 = vmatpush1.msra.mxu0 0.0
        %4458 = vmatprep.subr.mxu0 0.0
        %4459 = vmatpush1.msra.mxu0 0.0
        %4460 = vmatprep.subr.mxu0 0.0
        %4461 = vmatpush1.msra.mxu0 0.0
        %4462 = vmatprep.subr.mxu0 0.0
        %4463 = vmatpush1.msra.mxu0 0.0
        %4464 = vmatprep.subr.mxu0 0.0
        %4465 = vmatpush1.msra.mxu0 0.0
        %4466 = vmatprep.subr.mxu0 0.0
        %4467 = vmatpush1.msra.mxu0 0.0
        %4468 = vmatprep.subr.mxu0 0.0
        %4469 = vmatpush1.msra.mxu0 0.0
        %4470 = vmatprep.subr.mxu0 0.0
        %4471 = vmatpush1.msra.mxu0 0.0
        %4472 = vmatprep.subr.mxu0 0.0
        %4473 = vmatpush1.msra.mxu0 0.0
        %4474 = vmatprep.subr.mxu0 0.0
        %4475 = vmatpush1.msra.mxu0 0.0
        %4476 = vmatprep.subr.mxu0 0.0
        %4477 = vmatpush1.msra.mxu0 0.0
        %4478 = vmatprep.subr.mxu0 0.0
        %4479 = vmatpush1.msra.mxu0 0.0
        %4480 = vmatprep.subr.mxu0 0.0
        %4481 = vmatpush1.msra.mxu0 0.0
        %4482 = vmatprep.subr.mxu0 0.0
        %4483 = vmatpush1.msra.mxu0 0.0
        %4484 = vmatprep.subr.mxu0 0.0
        %4485 = vmatpush1.msra.mxu0 0.0
        %4486 = vmatprep.subr.mxu0 0.0
        %4487 = vmatpush1.msra.mxu0 0.0
        %4488 = vmatprep.subr.mxu0 0.0
        %4489 = vmatpush1.msra.mxu0 0.0
        %4490 = vmatprep.subr.mxu0 0.0
        %4491 = vmatpush1.msra.mxu0 0.0
        %4492 = vmatprep.mubr.f32.mxu0 0.0
        %v4493 = vand.u32 %v4199, 4294901760
        %v4494 = vsub.f32 %v4199, %v4493
        %v4495 = vand.u32 %v4494, 4294901760
        %4496 = vmatmul.mubr.f32.gmra.mrb[0].mxu0 %v4495
        %v4497 = vpop.f32.mrb[0].mxu0
        %v4498 = vadd.f32 %v4424, %v4497
        %v4499 = vpop.f32.mrb[0].mxu0
        %4500 = vdwg.mxu0
        %4501 = vmatprep.subr.mxu0 0.0
        %v4502 = vand.u32 %v4196, 4294901760
        %v4503 = vsub.f32 %v4196, %v4502
        %v4504 = vand.u32 %v4503, 4294901760
        %4505 = vmatpush1.msra.mxu0 %v4504
        %4506 = vmatprep.subr.mxu0 0.0
        %4507 = vmatpush1.msra.mxu0 0.0
        %4508 = vmatprep.subr.mxu0 0.0
        %4509 = vmatpush1.msra.mxu0 0.0
        %4510 = vmatprep.subr.mxu0 0.0
        %4511 = vmatpush1.msra.mxu0 0.0
        %4512 = vmatprep.subr.mxu0 0.0
        %4513 = vmatpush1.msra.mxu0 0.0
        %4514 = vmatprep.subr.mxu0 0.0
        %4515 = vmatpush1.msra.mxu0 0.0
        %4516 = vmatprep.subr.mxu0 0.0
        %4517 = vmatpush1.msra.mxu0 0.0
        %4518 = vmatprep.subr.mxu0 0.0
        %4519 = vmatpush1.msra.mxu0 0.0
        %4520 = vmatprep.subr.mxu0 0.0
        %4521 = vmatpush1.msra.mxu0 0.0
        %4522 = vmatprep.subr.mxu0 0.0
        %4523 = vmatpush1.msra.mxu0 0.0
        %4524 = vmatprep.subr.mxu0 0.0
        %4525 = vmatpush1.msra.mxu0 0.0
        %4526 = vmatprep.subr.mxu0 0.0
        %4527 = vmatpush1.msra.mxu0 0.0
        %4528 = vmatprep.subr.mxu0 0.0
        %4529 = vmatpush1.msra.mxu0 0.0
        %4530 = vmatprep.subr.mxu0 0.0
        %4531 = vmatpush1.msra.mxu0 0.0
        %4532 = vmatprep.subr.mxu0 0.0
        %4533 = vmatpush1.msra.mxu0 0.0
        %4534 = vmatprep.subr.mxu0 0.0
        %4535 = vmatpush1.msra.mxu0 0.0
        %4536 = vmatprep.subr.mxu0 0.0
        %4537 = vmatpush1.msra.mxu0 0.0
        %4538 = vmatprep.subr.mxu0 0.0
        %4539 = vmatpush1.msra.mxu0 0.0
        %4540 = vmatprep.subr.mxu0 0.0
        %4541 = vmatpush1.msra.mxu0 0.0
        %4542 = vmatprep.subr.mxu0 0.0
        %4543 = vmatpush1.msra.mxu0 0.0
        %4544 = vmatprep.subr.mxu0 0.0
        %4545 = vmatpush1.msra.mxu0 0.0
        %4546 = vmatprep.subr.mxu0 0.0
        %4547 = vmatpush1.msra.mxu0 0.0
        %4548 = vmatprep.subr.mxu0 0.0
        %4549 = vmatpush1.msra.mxu0 0.0
        %4550 = vmatprep.subr.mxu0 0.0
        %4551 = vmatpush1.msra.mxu0 0.0
        %4552 = vmatprep.subr.mxu0 0.0
        %4553 = vmatpush1.msra.mxu0 0.0
        %4554 = vmatprep.subr.mxu0 0.0
        %4555 = vmatpush1.msra.mxu0 0.0
        %4556 = vmatprep.subr.mxu0 0.0
        %4557 = vmatpush1.msra.mxu0 0.0
        %4558 = vmatprep.subr.mxu0 0.0
        %4559 = vmatpush1.msra.mxu0 0.0
        %4560 = vmatprep.subr.mxu0 0.0
        %4561 = vmatpush1.msra.mxu0 0.0
        %4562 = vmatprep.subr.mxu0 0.0
        %4563 = vmatpush1.msra.mxu0 0.0
        %4564 = vmatprep.subr.mxu0 0.0
        %4565 = vmatpush1.msra.mxu0 0.0
        %4566 = vmatprep.subr.mxu0 0.0
        %4567 = vmatpush1.msra.mxu0 0.0
        %4568 = vmatprep.mubr.f32.mxu0 0.0
        %v4569 = vand.u32 %v4199, 4294901760
        %4570 = vmatmul.mubr.f32.gmra.mrb[0].mxu0 %v4569
        %v4571 = vpop.f32.mrb[0].mxu0
        %v4572 = vadd.f32 %v4498, %v4571
        %v4573 = vpop.f32.mrb[0].mxu0
        %4574 = vdwg.mxu0
        %4575 = vmatprep.subr.mxu0 0.0
        %v4576 = vand.u32 %v4196, 4294901760
        %4577 = vmatpush1.msra.mxu0 %v4576
        %4578 = vmatprep.subr.mxu0 0.0
        %4579 = vmatpush1.msra.mxu0 0.0
        %4580 = vmatprep.subr.mxu0 0.0
        %4581 = vmatpush1.msra.mxu0 0.0
        %4582 = vmatprep.subr.mxu0 0.0
        %4583 = vmatpush1.msra.mxu0 0.0
        %4584 = vmatprep.subr.mxu0 0.0
        %4585 = vmatpush1.msra.mxu0 0.0
        %4586 = vmatprep.subr.mxu0 0.0
        %4587 = vmatpush1.msra.mxu0 0.0
        %4588 = vmatprep.subr.mxu0 0.0
        %4589 = vmatpush1.msra.mxu0 0.0
        %4590 = vmatprep.subr.mxu0 0.0
        %4591 = vmatpush1.msra.mxu0 0.0
        %4592 = vmatprep.subr.mxu0 0.0
        %4593 = vmatpush1.msra.mxu0 0.0
        %4594 = vmatprep.subr.mxu0 0.0
        %4595 = vmatpush1.msra.mxu0 0.0
        %4596 = vmatprep.subr.mxu0 0.0
        %4597 = vmatpush1.msra.mxu0 0.0
        %4598 = vmatprep.subr.mxu0 0.0
        %4599 = vmatpush1.msra.mxu0 0.0
        %4600 = vmatprep.subr.mxu0 0.0
        %4601 = vmatpush1.msra.mxu0 0.0
        %4602 = vmatprep.subr.mxu0 0.0
        %4603 = vmatpush1.msra.mxu0 0.0
        %4604 = vmatprep.subr.mxu0 0.0
        %4605 = vmatpush1.msra.mxu0 0.0
        %4606 = vmatprep.subr.mxu0 0.0
        %4607 = vmatpush1.msra.mxu0 0.0
        %4608 = vmatprep.subr.mxu0 0.0
        %4609 = vmatpush1.msra.mxu0 0.0
        %4610 = vmatprep.subr.mxu0 0.0
        %4611 = vmatpush1.msra.mxu0 0.0
        %4612 = vmatprep.subr.mxu0 0.0
        %4613 = vmatpush1.msra.mxu0 0.0
        %4614 = vmatprep.subr.mxu0 0.0
        %4615 = vmatpush1.msra.mxu0 0.0
        %4616 = vmatprep.subr.mxu0 0.0
        %4617 = vmatpush1.msra.mxu0 0.0
        %4618 = vmatprep.subr.mxu0 0.0
        %4619 = vmatpush1.msra.mxu0 0.0
        %4620 = vmatprep.subr.mxu0 0.0
        %4621 = vmatpush1.msra.mxu0 0.0
        %4622 = vmatprep.subr.mxu0 0.0
        %4623 = vmatpush1.msra.mxu0 0.0
        %4624 = vmatprep.subr.mxu0 0.0
        %4625 = vmatpush1.msra.mxu0 0.0
        %4626 = vmatprep.subr.mxu0 0.0
        %4627 = vmatpush1.msra.mxu0 0.0
        %4628 = vmatprep.subr.mxu0 0.0
        %4629 = vmatpush1.msra.mxu0 0.0
        %4630 = vmatprep.subr.mxu0 0.0
        %4631 = vmatpush1.msra.mxu0 0.0
        %4632 = vmatprep.subr.mxu0 0.0
        %4633 = vmatpush1.msra.mxu0 0.0
        %4634 = vmatprep.subr.mxu0 0.0
        %4635 = vmatpush1.msra.mxu0 0.0
        %4636 = vmatprep.subr.mxu0 0.0
        %4637 = vmatpush1.msra.mxu0 0.0
        %4638 = vmatprep.subr.mxu0 0.0
        %4639 = vmatpush1.msra.mxu0 0.0
        %4640 = vmatprep.mubr.f32.mxu0 0.0
        %v4641 = vand.u32 %v4199, 4294901760
        %4642 = vmatmul.mubr.f32.gmra.mrb[0].mxu0 %v4641
        %v4643 = vpop.f32.mrb[0].mxu0
        %v4644 = vadd.f32 %v4572, %v4643
        %v4645 = vpop.f32.mrb[0].mxu0
        %4646 = vdwg.mxu0
        %4648 = vrot.lane.b32.xlu0 %v2808, 8
        %v4649 = vpop.permute.xlu0 %4648
        %4652 = vrot.lane.b32.xlu0 %v3726, 16
        %v4653 = vpop.permute.xlu0 %4652
        %4656 = vrot.lane.b32.xlu0 %v4644, 24
        %v4657 = vpop.permute.xlu0 %4656
        %v4659 = vsel %vm977, %v1890, %v4649
        %vm4660 = vcmask 130048
        %v4661 = vsel %vm4660, %v4659, %v4653
        %vm4662 = vcmask 195584
        %v4663 = vsel %vm4662, %v4661, %v4657
        %v4664 = vld [vmem:[%s5] sm:$0xff]
        %v4665 = vld [vmem:[%s5 + $0x8] sm:$0xff]
        %v4666 = vld [vmem:[%s5 + $0x10] sm:$0xff]
        %v4667 = vld [vmem:[%s5 + $0x18] sm:$0xff]
        %v4668 = vld [vmem:[%s6] sm:$0x1]
        %v4670 = vlaneseq
        %v4671 = vshrl.u32 %v4670, 7
        %v4672 = vsub.s32 0, %v4671
        %v4673 = vrot.slane %v4668, %v4672
        %v4676 = vsel %vm439, %v4663, 0
        %4678 = vmatprep.subr.mxu0 0.0
        %v4679 = vand.u32 %v4664, 4294901760
        %4680 = vmatpush1.msra.mxu0 %v4679
        %4681 = vmatprep.subr.mxu0 0.0
        %v4682 = vand.u32 %v4665, 4294901760
        %4683 = vmatpush1.msra.mxu0 %v4682
        %4684 = vmatprep.subr.mxu0 0.0
        %v4685 = vand.u32 %v4666, 4294901760
        %4686 = vmatpush1.msra.mxu0 %v4685
        %4687 = vmatprep.subr.mxu0 0.0
        %v4688 = vand.u32 %v4667, 4294901760
        %4689 = vmatpush1.msra.mxu0 %v4688
        %4690 = vmatprep.subr.mxu0 0.0
        %4691 = vmatpush1.msra.mxu0 0.0
        %4692 = vmatprep.subr.mxu0 0.0
        %4693 = vmatpush1.msra.mxu0 0.0
        %4694 = vmatprep.subr.mxu0 0.0
        %4695 = vmatpush1.msra.mxu0 0.0
        %4696 = vmatprep.subr.mxu0 0.0
        %4697 = vmatpush1.msra.mxu0 0.0
        %4698 = vmatprep.subr.mxu0 0.0
        %4699 = vmatpush1.msra.mxu0 0.0
        %4700 = vmatprep.subr.mxu0 0.0
        %4701 = vmatpush1.msra.mxu0 0.0
        %4702 = vmatprep.subr.mxu0 0.0
        %4703 = vmatpush1.msra.mxu0 0.0
        %4704 = vmatprep.subr.mxu0 0.0
        %4705 = vmatpush1.msra.mxu0 0.0
        %4706 = vmatprep.subr.mxu0 0.0
        %4707 = vmatpush1.msra.mxu0 0.0
        %4708 = vmatprep.subr.mxu0 0.0
        %4709 = vmatpush1.msra.mxu0 0.0
        %4710 = vmatprep.subr.mxu0 0.0
        %4711 = vmatpush1.msra.mxu0 0.0
        %4712 = vmatprep.subr.mxu0 0.0
        %4713 = vmatpush1.msra.mxu0 0.0
        %4714 = vmatprep.subr.mxu0 0.0
        %4715 = vmatpush1.msra.mxu0 0.0
        %4716 = vmatprep.subr.mxu0 0.0
        %4717 = vmatpush1.msra.mxu0 0.0
        %4718 = vmatprep.subr.mxu0 0.0
        %4719 = vmatpush1.msra.mxu0 0.0
        %4720 = vmatprep.subr.mxu0 0.0
        %4721 = vmatpush1.msra.mxu0 0.0
        %4722 = vmatprep.subr.mxu0 0.0
        %4723 = vmatpush1.msra.mxu0 0.0
        %4724 = vmatprep.subr.mxu0 0.0
        %4725 = vmatpush1.msra.mxu0 0.0
        %4726 = vmatprep.subr.mxu0 0.0
        %4727 = vmatpush1.msra.mxu0 0.0
        %4728 = vmatprep.subr.mxu0 0.0
        %4729 = vmatpush1.msra.mxu0 0.0
        %4730 = vmatprep.subr.mxu0 0.0
        %4731 = vmatpush1.msra.mxu0 0.0
        %4732 = vmatprep.subr.mxu0 0.0
        %4733 = vmatpush1.msra.mxu0 0.0
        %4734 = vmatprep.subr.mxu0 0.0
        %4735 = vmatpush1.msra.mxu0 0.0
        %4736 = vmatprep.subr.mxu0 0.0
        %4737 = vmatpush1.msra.mxu0 0.0
        %4738 = vmatprep.subr.mxu0 0.0
        %4739 = vmatpush1.msra.mxu0 0.0
        %4740 = vmatprep.subr.mxu0 0.0
        %4741 = vmatpush1.msra.mxu0 0.0
        %4742 = vmatprep.subr.mxu0 0.0
        %4743 = vmatpush1.msra.mxu0 0.0
        %4744 = vmatprep.subr.mxu0 0.0
        %4745 = vmatpush1.msra.mxu0 0.0
        %4746 = vmatprep.mubr.f32.mxu0 0.0
        %v4747 = vand.u32 %v4676, 4294901760
        %v4748 = vsub.f32 %v4676, %v4747
        %v4749 = vand.u32 %v4748, 4294901760
        %v4750 = vsub.f32 %v4748, %v4749
        %v4751 = vand.u32 %v4750, 4294901760
        %4752 = vmatmul.mubr.f32.gmra.mrb[0].mxu0 %v4751
        %v4753 = vpop.f32.mrb[0].mxu0
        %v4754 = vadd.f32 %v4673, %v4753
        %v4755 = vpop.f32.mrb[0].mxu0
        %4756 = vdwg.mxu0
        %4757 = vmatprep.subr.mxu0 0.0
        %v4758 = vand.u32 %v4664, 4294901760
        %v4759 = vsub.f32 %v4664, %v4758
        %v4760 = vand.u32 %v4759, 4294901760
        %v4761 = vsub.f32 %v4759, %v4760
        %v4762 = vand.u32 %v4761, 4294901760
        %4763 = vmatpush1.msra.mxu0 %v4762
        %4764 = vmatprep.subr.mxu0 0.0
        %v4765 = vand.u32 %v4665, 4294901760
        %v4766 = vsub.f32 %v4665, %v4765
        %v4767 = vand.u32 %v4766, 4294901760
        %v4768 = vsub.f32 %v4766, %v4767
        %v4769 = vand.u32 %v4768, 4294901760
        %4770 = vmatpush1.msra.mxu0 %v4769
        %4771 = vmatprep.subr.mxu0 0.0
        %v4772 = vand.u32 %v4666, 4294901760
        %v4773 = vsub.f32 %v4666, %v4772
        %v4774 = vand.u32 %v4773, 4294901760
        %v4775 = vsub.f32 %v4773, %v4774
        %v4776 = vand.u32 %v4775, 4294901760
        %4777 = vmatpush1.msra.mxu0 %v4776
        %4778 = vmatprep.subr.mxu0 0.0
        %v4779 = vand.u32 %v4667, 4294901760
        %v4780 = vsub.f32 %v4667, %v4779
        %v4781 = vand.u32 %v4780, 4294901760
        %v4782 = vsub.f32 %v4780, %v4781
        %v4783 = vand.u32 %v4782, 4294901760
        %4784 = vmatpush1.msra.mxu0 %v4783
        %4785 = vmatprep.subr.mxu0 0.0
        %4786 = vmatpush1.msra.mxu0 0.0
        %4787 = vmatprep.subr.mxu0 0.0
        %4788 = vmatpush1.msra.mxu0 0.0
        %4789 = vmatprep.subr.mxu0 0.0
        %4790 = vmatpush1.msra.mxu0 0.0
        %4791 = vmatprep.subr.mxu0 0.0
        %4792 = vmatpush1.msra.mxu0 0.0
        %4793 = vmatprep.subr.mxu0 0.0
        %4794 = vmatpush1.msra.mxu0 0.0
        %4795 = vmatprep.subr.mxu0 0.0
        %4796 = vmatpush1.msra.mxu0 0.0
        %4797 = vmatprep.subr.mxu0 0.0
        %4798 = vmatpush1.msra.mxu0 0.0
        %4799 = vmatprep.subr.mxu0 0.0
        %4800 = vmatpush1.msra.mxu0 0.0
        %4801 = vmatprep.subr.mxu0 0.0
        %4802 = vmatpush1.msra.mxu0 0.0
        %4803 = vmatprep.subr.mxu0 0.0
        %4804 = vmatpush1.msra.mxu0 0.0
        %4805 = vmatprep.subr.mxu0 0.0
        %4806 = vmatpush1.msra.mxu0 0.0
        %4807 = vmatprep.subr.mxu0 0.0
        %4808 = vmatpush1.msra.mxu0 0.0
        %4809 = vmatprep.subr.mxu0 0.0
        %4810 = vmatpush1.msra.mxu0 0.0
        %4811 = vmatprep.subr.mxu0 0.0
        %4812 = vmatpush1.msra.mxu0 0.0
        %4813 = vmatprep.subr.mxu0 0.0
        %4814 = vmatpush1.msra.mxu0 0.0
        %4815 = vmatprep.subr.mxu0 0.0
        %4816 = vmatpush1.msra.mxu0 0.0
        %4817 = vmatprep.subr.mxu0 0.0
        %4818 = vmatpush1.msra.mxu0 0.0
        %4819 = vmatprep.subr.mxu0 0.0
        %4820 = vmatpush1.msra.mxu0 0.0
        %4821 = vmatprep.subr.mxu0 0.0
        %4822 = vmatpush1.msra.mxu0 0.0
        %4823 = vmatprep.subr.mxu0 0.0
        %4824 = vmatpush1.msra.mxu0 0.0
        %4825 = vmatprep.subr.mxu0 0.0
        %4826 = vmatpush1.msra.mxu0 0.0
        %4827 = vmatprep.subr.mxu0 0.0
        %4828 = vmatpush1.msra.mxu0 0.0
        %4829 = vmatprep.subr.mxu0 0.0
        %4830 = vmatpush1.msra.mxu0 0.0
        %4831 = vmatprep.subr.mxu0 0.0
        %4832 = vmatpush1.msra.mxu0 0.0
        %4833 = vmatprep.subr.mxu0 0.0
        %4834 = vmatpush1.msra.mxu0 0.0
        %4835 = vmatprep.subr.mxu0 0.0
        %4836 = vmatpush1.msra.mxu0 0.0
        %4837 = vmatprep.subr.mxu0 0.0
        %4838 = vmatpush1.msra.mxu0 0.0
        %4839 = vmatprep.subr.mxu0 0.0
        %4840 = vmatpush1.msra.mxu0 0.0
        %4841 = vmatprep.mubr.f32.mxu0 0.0
        %v4842 = vand.u32 %v4676, 4294901760
        %4843 = vmatmul.mubr.f32.gmra.mrb[0].mxu0 %v4842
        %v4844 = vpop.f32.mrb[0].mxu0
        %v4845 = vadd.f32 %v4754, %v4844
        %v4846 = vpop.f32.mrb[0].mxu0
        %4847 = vdwg.mxu0
        %4848 = vmatprep.subr.mxu0 0.0
        %v4849 = vand.u32 %v4664, 4294901760
        %v4850 = vsub.f32 %v4664, %v4849
        %4851 = vmatpush1.msra.mxu0 %v4850
        %4852 = vmatprep.subr.mxu0 0.0
        %v4853 = vand.u32 %v4665, 4294901760
        %v4854 = vsub.f32 %v4665, %v4853
        %4855 = vmatpush1.msra.mxu0 %v4854
        %4856 = vmatprep.subr.mxu0 0.0
        %v4857 = vand.u32 %v4666, 4294901760
        %v4858 = vsub.f32 %v4666, %v4857
        %4859 = vmatpush1.msra.mxu0 %v4858
        %4860 = vmatprep.subr.mxu0 0.0
        %v4861 = vand.u32 %v4667, 4294901760
        %v4862 = vsub.f32 %v4667, %v4861
        %4863 = vmatpush1.msra.mxu0 %v4862
        %4864 = vmatprep.subr.mxu0 0.0
        %4865 = vmatpush1.msra.mxu0 0.0
        %4866 = vmatprep.subr.mxu0 0.0
        %4867 = vmatpush1.msra.mxu0 0.0
        %4868 = vmatprep.subr.mxu0 0.0
        %4869 = vmatpush1.msra.mxu0 0.0
        %4870 = vmatprep.subr.mxu0 0.0
        %4871 = vmatpush1.msra.mxu0 0.0
        %4872 = vmatprep.subr.mxu0 0.0
        %4873 = vmatpush1.msra.mxu0 0.0
        %4874 = vmatprep.subr.mxu0 0.0
        %4875 = vmatpush1.msra.mxu0 0.0
        %4876 = vmatprep.subr.mxu0 0.0
        %4877 = vmatpush1.msra.mxu0 0.0
        %4878 = vmatprep.subr.mxu0 0.0
        %4879 = vmatpush1.msra.mxu0 0.0
        %4880 = vmatprep.subr.mxu0 0.0
        %4881 = vmatpush1.msra.mxu0 0.0
        %4882 = vmatprep.subr.mxu0 0.0
        %4883 = vmatpush1.msra.mxu0 0.0
        %4884 = vmatprep.subr.mxu0 0.0
        %4885 = vmatpush1.msra.mxu0 0.0
        %4886 = vmatprep.subr.mxu0 0.0
        %4887 = vmatpush1.msra.mxu0 0.0
        %4888 = vmatprep.subr.mxu0 0.0
        %4889 = vmatpush1.msra.mxu0 0.0
        %4890 = vmatprep.subr.mxu0 0.0
        %4891 = vmatpush1.msra.mxu0 0.0
        %4892 = vmatprep.subr.mxu0 0.0
        %4893 = vmatpush1.msra.mxu0 0.0
        %4894 = vmatprep.subr.mxu0 0.0
        %4895 = vmatpush1.msra.mxu0 0.0
        %4896 = vmatprep.subr.mxu0 0.0
        %4897 = vmatpush1.msra.mxu0 0.0
        %4898 = vmatprep.subr.mxu0 0.0
        %4899 = vmatpush1.msra.mxu0 0.0
        %4900 = vmatprep.subr.mxu0 0.0
        %4901 = vmatpush1.msra.mxu0 0.0
        %4902 = vmatprep.subr.mxu0 0.0
        %4903 = vmatpush1.msra.mxu0 0.0
        %4904 = vmatprep.subr.mxu0 0.0
        %4905 = vmatpush1.msra.mxu0 0.0
        %4906 = vmatprep.subr.mxu0 0.0
        %4907 = vmatpush1.msra.mxu0 0.0
        %4908 = vmatprep.subr.mxu0 0.0
        %4909 = vmatpush1.msra.mxu0 0.0
        %4910 = vmatprep.subr.mxu0 0.0
        %4911 = vmatpush1.msra.mxu0 0.0
        %4912 = vmatprep.subr.mxu0 0.0
        %4913 = vmatpush1.msra.mxu0 0.0
        %4914 = vmatprep.subr.mxu0 0.0
        %4915 = vmatpush1.msra.mxu0 0.0
        %4916 = vmatprep.subr.mxu0 0.0
        %4917 = vmatpush1.msra.mxu0 0.0
        %4918 = vmatprep.subr.mxu0 0.0
        %4919 = vmatpush1.msra.mxu0 0.0
        %4920 = vmatprep.mubr.f32.mxu0 0.0
        %v4921 = vand.u32 %v4676, 4294901760
        %v4922 = vsub.f32 %v4676, %v4921
        %4923 = vmatmul.mubr.f32.gmra.mrb[0].mxu0 %v4922
        %v4924 = vpop.f32.mrb[0].mxu0
        %v4925 = vadd.f32 %v4845, %v4924
        %v4926 = vpop.f32.mrb[0].mxu0
        %4927 = vdwg.mxu0
        %4928 = vmatprep.subr.mxu0 0.0
        %v4929 = vand.u32 %v4664, 4294901760
        %4930 = vmatpush1.msra.mxu0 %v4929
        %4931 = vmatprep.subr.mxu0 0.0
        %v4932 = vand.u32 %v4665, 4294901760
        %4933 = vmatpush1.msra.mxu0 %v4932
        %4934 = vmatprep.subr.mxu0 0.0
        %v4935 = vand.u32 %v4666, 4294901760
        %4936 = vmatpush1.msra.mxu0 %v4935
        %4937 = vmatprep.subr.mxu0 0.0
        %v4938 = vand.u32 %v4667, 4294901760
        %4939 = vmatpush1.msra.mxu0 %v4938
        %4940 = vmatprep.subr.mxu0 0.0
        %4941 = vmatpush1.msra.mxu0 0.0
        %4942 = vmatprep.subr.mxu0 0.0
        %4943 = vmatpush1.msra.mxu0 0.0
        %4944 = vmatprep.subr.mxu0 0.0
        %4945 = vmatpush1.msra.mxu0 0.0
        %4946 = vmatprep.subr.mxu0 0.0
        %4947 = vmatpush1.msra.mxu0 0.0
        %4948 = vmatprep.subr.mxu0 0.0
        %4949 = vmatpush1.msra.mxu0 0.0
        %4950 = vmatprep.subr.mxu0 0.0
        %4951 = vmatpush1.msra.mxu0 0.0
        %4952 = vmatprep.subr.mxu0 0.0
        %4953 = vmatpush1.msra.mxu0 0.0
        %4954 = vmatprep.subr.mxu0 0.0
        %4955 = vmatpush1.msra.mxu0 0.0
        %4956 = vmatprep.subr.mxu0 0.0
        %4957 = vmatpush1.msra.mxu0 0.0
        %4958 = vmatprep.subr.mxu0 0.0
        %4959 = vmatpush1.msra.mxu0 0.0
        %4960 = vmatprep.subr.mxu0 0.0
        %4961 = vmatpush1.msra.mxu0 0.0
        %4962 = vmatprep.subr.mxu0 0.0
        %4963 = vmatpush1.msra.mxu0 0.0
        %4964 = vmatprep.subr.mxu0 0.0
        %4965 = vmatpush1.msra.mxu0 0.0
        %4966 = vmatprep.subr.mxu0 0.0
        %4967 = vmatpush1.msra.mxu0 0.0
        %4968 = vmatprep.subr.mxu0 0.0
        %4969 = vmatpush1.msra.mxu0 0.0
        %4970 = vmatprep.subr.mxu0 0.0
        %4971 = vmatpush1.msra.mxu0 0.0
        %4972 = vmatprep.subr.mxu0 0.0
        %4973 = vmatpush1.msra.mxu0 0.0
        %4974 = vmatprep.subr.mxu0 0.0
        %4975 = vmatpush1.msra.mxu0 0.0
        %4976 = vmatprep.subr.mxu0 0.0
        %4977 = vmatpush1.msra.mxu0 0.0
        %4978 = vmatprep.subr.mxu0 0.0
        %4979 = vmatpush1.msra.mxu0 0.0
        %4980 = vmatprep.subr.mxu0 0.0
        %4981 = vmatpush1.msra.mxu0 0.0
        %4982 = vmatprep.subr.mxu0 0.0
        %4983 = vmatpush1.msra.mxu0 0.0
        %4984 = vmatprep.subr.mxu0 0.0
        %4985 = vmatpush1.msra.mxu0 0.0
        %4986 = vmatprep.subr.mxu0 0.0
        %4987 = vmatpush1.msra.mxu0 0.0
        %4988 = vmatprep.subr.mxu0 0.0
        %4989 = vmatpush1.msra.mxu0 0.0
        %4990 = vmatprep.subr.mxu0 0.0
        %4991 = vmatpush1.msra.mxu0 0.0
        %4992 = vmatprep.subr.mxu0 0.0
        %4993 = vmatpush1.msra.mxu0 0.0
        %4994 = vmatprep.subr.mxu0 0.0
        %4995 = vmatpush1.msra.mxu0 0.0
        %4996 = vmatprep.mubr.f32.mxu0 0.0
        %v4997 = vand.u32 %v4676, 4294901760
        %v4998 = vsub.f32 %v4676, %v4997
        %v4999 = vand.u32 %v4998, 4294901760
        %5000 = vmatmul.mubr.f32.gmra.mrb[0].mxu0 %v4999
        %v5001 = vpop.f32.mrb[0].mxu0
        %v5002 = vadd.f32 %v4925, %v5001
        %v5003 = vpop.f32.mrb[0].mxu0
        %5004 = vdwg.mxu0
        %5005 = vmatprep.subr.mxu0 0.0
        %v5006 = vand.u32 %v4664, 4294901760
        %v5007 = vsub.f32 %v4664, %v5006
        %v5008 = vand.u32 %v5007, 4294901760
        %5009 = vmatpush1.msra.mxu0 %v5008
        %5010 = vmatprep.subr.mxu0 0.0
        %v5011 = vand.u32 %v4665, 4294901760
        %v5012 = vsub.f32 %v4665, %v5011
        %v5013 = vand.u32 %v5012, 4294901760
        %5014 = vmatpush1.msra.mxu0 %v5013
        %5015 = vmatprep.subr.mxu0 0.0
        %v5016 = vand.u32 %v4666, 4294901760
        %v5017 = vsub.f32 %v4666, %v5016
        %v5018 = vand.u32 %v5017, 4294901760
        %5019 = vmatpush1.msra.mxu0 %v5018
        %5020 = vmatprep.subr.mxu0 0.0
        %v5021 = vand.u32 %v4667, 4294901760
        %v5022 = vsub.f32 %v4667, %v5021
        %v5023 = vand.u32 %v5022, 4294901760
        %5024 = vmatpush1.msra.mxu0 %v5023
        %5025 = vmatprep.subr.mxu0 0.0
        %5026 = vmatpush1.msra.mxu0 0.0
        %5027 = vmatprep.subr.mxu0 0.0
        %5028 = vmatpush1.msra.mxu0 0.0
        %5029 = vmatprep.subr.mxu0 0.0
        %5030 = vmatpush1.msra.mxu0 0.0
        %5031 = vmatprep.subr.mxu0 0.0
        %5032 = vmatpush1.msra.mxu0 0.0
        %5033 = vmatprep.subr.mxu0 0.0
        %5034 = vmatpush1.msra.mxu0 0.0
        %5035 = vmatprep.subr.mxu0 0.0
        %5036 = vmatpush1.msra.mxu0 0.0
        %5037 = vmatprep.subr.mxu0 0.0
        %5038 = vmatpush1.msra.mxu0 0.0
        %5039 = vmatprep.subr.mxu0 0.0
        %5040 = vmatpush1.msra.mxu0 0.0
        %5041 = vmatprep.subr.mxu0 0.0
        %5042 = vmatpush1.msra.mxu0 0.0
        %5043 = vmatprep.subr.mxu0 0.0
        %5044 = vmatpush1.msra.mxu0 0.0
        %5045 = vmatprep.subr.mxu0 0.0
        %5046 = vmatpush1.msra.mxu0 0.0
        %5047 = vmatprep.subr.mxu0 0.0
        %5048 = vmatpush1.msra.mxu0 0.0
        %5049 = vmatprep.subr.mxu0 0.0
        %5050 = vmatpush1.msra.mxu0 0.0
        %5051 = vmatprep.subr.mxu0 0.0
        %5052 = vmatpush1.msra.mxu0 0.0
        %5053 = vmatprep.subr.mxu0 0.0
        %5054 = vmatpush1.msra.mxu0 0.0
        %5055 = vmatprep.subr.mxu0 0.0
        %5056 = vmatpush1.msra.mxu0 0.0
        %5057 = vmatprep.subr.mxu0 0.0
        %5058 = vmatpush1.msra.mxu0 0.0
        %5059 = vmatprep.subr.mxu0 0.0
        %5060 = vmatpush1.msra.mxu0 0.0
        %5061 = vmatprep.subr.mxu0 0.0
        %5062 = vmatpush1.msra.mxu0 0.0
        %5063 = vmatprep.subr.mxu0 0.0
        %5064 = vmatpush1.msra.mxu0 0.0
        %5065 = vmatprep.subr.mxu0 0.0
        %5066 = vmatpush1.msra.mxu0 0.0
        %5067 = vmatprep.subr.mxu0 0.0
        %5068 = vmatpush1.msra.mxu0 0.0
        %5069 = vmatprep.subr.mxu0 0.0
        %5070 = vmatpush1.msra.mxu0 0.0
        %5071 = vmatprep.subr.mxu0 0.0
        %5072 = vmatpush1.msra.mxu0 0.0
        %5073 = vmatprep.subr.mxu0 0.0
        %5074 = vmatpush1.msra.mxu0 0.0
        %5075 = vmatprep.subr.mxu0 0.0
        %5076 = vmatpush1.msra.mxu0 0.0
        %5077 = vmatprep.subr.mxu0 0.0
        %5078 = vmatpush1.msra.mxu0 0.0
        %5079 = vmatprep.subr.mxu0 0.0
        %5080 = vmatpush1.msra.mxu0 0.0
        %5081 = vmatprep.mubr.f32.mxu0 0.0
        %v5082 = vand.u32 %v4676, 4294901760
        %5083 = vmatmul.mubr.f32.gmra.mrb[0].mxu0 %v5082
        %v5084 = vpop.f32.mrb[0].mxu0
        %v5085 = vadd.f32 %v5002, %v5084
        %v5086 = vpop.f32.mrb[0].mxu0
        %5087 = vdwg.mxu0
        %5088 = vmatprep.subr.mxu0 0.0
        %v5089 = vand.u32 %v4664, 4294901760
        %5090 = vmatpush1.msra.mxu0 %v5089
        %5091 = vmatprep.subr.mxu0 0.0
        %v5092 = vand.u32 %v4665, 4294901760
        %5093 = vmatpush1.msra.mxu0 %v5092
        %5094 = vmatprep.subr.mxu0 0.0
        %v5095 = vand.u32 %v4666, 4294901760
        %5096 = vmatpush1.msra.mxu0 %v5095
        %5097 = vmatprep.subr.mxu0 0.0
        %v5098 = vand.u32 %v4667, 4294901760
        %5099 = vmatpush1.msra.mxu0 %v5098
        %5100 = vmatprep.subr.mxu0 0.0
        %5101 = vmatpush1.msra.mxu0 0.0
        %5102 = vmatprep.subr.mxu0 0.0
        %5103 = vmatpush1.msra.mxu0 0.0
        %5104 = vmatprep.subr.mxu0 0.0
        %5105 = vmatpush1.msra.mxu0 0.0
        %5106 = vmatprep.subr.mxu0 0.0
        %5107 = vmatpush1.msra.mxu0 0.0
        %5108 = vmatprep.subr.mxu0 0.0
        %5109 = vmatpush1.msra.mxu0 0.0
        %5110 = vmatprep.subr.mxu0 0.0
        %5111 = vmatpush1.msra.mxu0 0.0
        %5112 = vmatprep.subr.mxu0 0.0
        %5113 = vmatpush1.msra.mxu0 0.0
        %5114 = vmatprep.subr.mxu0 0.0
        %5115 = vmatpush1.msra.mxu0 0.0
        %5116 = vmatprep.subr.mxu0 0.0
        %5117 = vmatpush1.msra.mxu0 0.0
        %5118 = vmatprep.subr.mxu0 0.0
        %5119 = vmatpush1.msra.mxu0 0.0
        %5120 = vmatprep.subr.mxu0 0.0
        %5121 = vmatpush1.msra.mxu0 0.0
        %5122 = vmatprep.subr.mxu0 0.0
        %5123 = vmatpush1.msra.mxu0 0.0
        %5124 = vmatprep.subr.mxu0 0.0
        %5125 = vmatpush1.msra.mxu0 0.0
        %5126 = vmatprep.subr.mxu0 0.0
        %5127 = vmatpush1.msra.mxu0 0.0
        %5128 = vmatprep.subr.mxu0 0.0
        %5129 = vmatpush1.msra.mxu0 0.0
        %5130 = vmatprep.subr.mxu0 0.0
        %5131 = vmatpush1.msra.mxu0 0.0
        %5132 = vmatprep.subr.mxu0 0.0
        %5133 = vmatpush1.msra.mxu0 0.0
        %5134 = vmatprep.subr.mxu0 0.0
        %5135 = vmatpush1.msra.mxu0 0.0
        %5136 = vmatprep.subr.mxu0 0.0
        %5137 = vmatpush1.msra.mxu0 0.0
        %5138 = vmatprep.subr.mxu0 0.0
        %5139 = vmatpush1.msra.mxu0 0.0
        %5140 = vmatprep.subr.mxu0 0.0
        %5141 = vmatpush1.msra.mxu0 0.0
        %5142 = vmatprep.subr.mxu0 0.0
        %5143 = vmatpush1.msra.mxu0 0.0
        %5144 = vmatprep.subr.mxu0 0.0
        %5145 = vmatpush1.msra.mxu0 0.0
        %5146 = vmatprep.subr.mxu0 0.0
        %5147 = vmatpush1.msra.mxu0 0.0
        %5148 = vmatprep.subr.mxu0 0.0
        %5149 = vmatpush1.msra.mxu0 0.0
        %5150 = vmatprep.subr.mxu0 0.0
        %5151 = vmatpush1.msra.mxu0 0.0
        %5152 = vmatprep.subr.mxu0 0.0
        %5153 = vmatpush1.msra.mxu0 0.0
        %5154 = vmatprep.subr.mxu0 0.0
        %5155 = vmatpush1.msra.mxu0 0.0
        %5156 = vmatprep.mubr.f32.mxu0 0.0
        %v5157 = vand.u32 %v4676, 4294901760
        %5158 = vmatmul.mubr.f32.gmra.mrb[0].mxu0 %v5157
        %v5159 = vpop.f32.mrb[0].mxu0
        %v5160 = vadd.f32 %v5085, %v5159
        %v5161 = vpop.f32.mrb[0].mxu0
        %5162 = vdwg.mxu0
        %v5163 = vadd.f32 %v436, %v5160
        %v5164 = vld [vmem:[%s7] sm:$0x1]
        %v5165 = vld [vmem:[%s8] sm:$0x1]
        %v5166 = vsel %vm439, %v5163, 0.0
        %5167 = vadd.xlane.f32.xlu0 %v5166
        %v5168 = vpop.xlane.xlu0 %5167
        %v5169 = vmul.f32 %v5168, %v443
        %v5170 = vsub.f32 %v5163, %v5169
        %v5171 = vmul.f32 %v5170, %v5170
        %v5172 = vsel %vm439, %v5171, 0.0
        %5173 = vadd.xlane.f32.xlu0 %v5172
        %v5174 = vpop.xlane.xlu0 %5173
        %v5175 = vmul.f32 %v5174, %v443
        %v5176 = vadd.f32 %v5175, 1e-05
        %v5177 = vrsqrt.pop %v5176
        %v5178 = vmul.f32 %v5170, %v5177
        %v5180 = vlaneseq
        %v5181 = vshrl.u32 %v5180, 7
        %v5182 = vsub.s32 0, %v5181
        %v5183 = vrot.slane %v5164, %v5182
        %v5185 = vmul.f32 %v5178, %v5183
        %v5187 = vlaneseq
        %v5188 = vshrl.u32 %v5187, 7
        %v5189 = vsub.s32 0, %v5188
        %v5190 = vrot.slane %v5165, %v5189
        %v5192 = vadd.f32 %v5185, %v5190
        %v5193 = vld [vmem:[%s9] sm:$0xff]
        %v5194 = vld [vmem:[%s9 + $0x8] sm:$0xff]
        %v5195 = vld [vmem:[%s9 + $0x10] sm:$0xff]
        %v5196 = vld [vmem:[%s9 + $0x18] sm:$0xff]
        %v5197 = vld [vmem:[%s10] sm:$0x1]
        %v5199 = vlaneseq
        %v5200 = vshrl.u32 %v5199, 7
        %v5201 = vsub.s32 0, %v5200
        %v5202 = vrot.slane %v5197, %v5201
        %v5205 = vsel %vm439, %v5192, 0
        %5207 = vmatprep.subr.mxu0 0.0
        %v5208 = vand.u32 %v5193, 4294901760
        %5209 = vmatpush1.msra.mxu0 %v5208
        %5210 = vmatprep.subr.mxu0 0.0
        %v5211 = vand.u32 %v5194, 4294901760
        %5212 = vmatpush1.msra.mxu0 %v5211
        %5213 = vmatprep.subr.mxu0 0.0
        %v5214 = vand.u32 %v5195, 4294901760
        %5215 = vmatpush1.msra.mxu0 %v5214
        %5216 = vmatprep.subr.mxu0 0.0
        %v5217 = vand.u32 %v5196, 4294901760
        %5218 = vmatpush1.msra.mxu0 %v5217
        %5219 = vmatprep.subr.mxu0 0.0
        %5220 = vmatpush1.msra.mxu0 0.0
        %5221 = vmatprep.subr.mxu0 0.0
        %5222 = vmatpush1.msra.mxu0 0.0
        %5223 = vmatprep.subr.mxu0 0.0
        %5224 = vmatpush1.msra.mxu0 0.0
        %5225 = vmatprep.subr.mxu0 0.0
        %5226 = vmatpush1.msra.mxu0 0.0
        %5227 = vmatprep.subr.mxu0 0.0
        %5228 = vmatpush1.msra.mxu0 0.0
        %5229 = vmatprep.subr.mxu0 0.0
        %5230 = vmatpush1.msra.mxu0 0.0
        %5231 = vmatprep.subr.mxu0 0.0
        %5232 = vmatpush1.msra.mxu0 0.0
        %5233 = vmatprep.subr.mxu0 0.0
        %5234 = vmatpush1.msra.mxu0 0.0
        %5235 = vmatprep.subr.mxu0 0.0
        %5236 = vmatpush1.msra.mxu0 0.0
        %5237 = vmatprep.subr.mxu0 0.0
        %5238 = vmatpush1.msra.mxu0 0.0
        %5239 = vmatprep.subr.mxu0 0.0
        %5240 = vmatpush1.msra.mxu0 0.0
        %5241 = vmatprep.subr.mxu0 0.0
        %5242 = vmatpush1.msra.mxu0 0.0
        %5243 = vmatprep.subr.mxu0 0.0
        %5244 = vmatpush1.msra.mxu0 0.0
        %5245 = vmatprep.subr.mxu0 0.0
        %5246 = vmatpush1.msra.mxu0 0.0
        %5247 = vmatprep.subr.mxu0 0.0
        %5248 = vmatpush1.msra.mxu0 0.0
        %5249 = vmatprep.subr.mxu0 0.0
        %5250 = vmatpush1.msra.mxu0 0.0
        %5251 = vmatprep.subr.mxu0 0.0
        %5252 = vmatpush1.msra.mxu0 0.0
        %5253 = vmatprep.subr.mxu0 0.0
        %5254 = vmatpush1.msra.mxu0 0.0
        %5255 = vmatprep.subr.mxu0 0.0
        %5256 = vmatpush1.msra.mxu0 0.0
        %5257 = vmatprep.subr.mxu0 0.0
        %5258 = vmatpush1.msra.mxu0 0.0
        %5259 = vmatprep.subr.mxu0 0.0
        %5260 = vmatpush1.msra.mxu0 0.0
        %5261 = vmatprep.subr.mxu0 0.0
        %5262 = vmatpush1.msra.mxu0 0.0
        %5263 = vmatprep.subr.mxu0 0.0
        %5264 = vmatpush1.msra.mxu0 0.0
        %5265 = vmatprep.subr.mxu0 0.0
        %5266 = vmatpush1.msra.mxu0 0.0
        %5267 = vmatprep.subr.mxu0 0.0
        %5268 = vmatpush1.msra.mxu0 0.0
        %5269 = vmatprep.subr.mxu0 0.0
        %5270 = vmatpush1.msra.mxu0 0.0
        %5271 = vmatprep.subr.mxu0 0.0
        %5272 = vmatpush1.msra.mxu0 0.0
        %5273 = vmatprep.subr.mxu0 0.0
        %5274 = vmatpush1.msra.mxu0 0.0
        %5275 = vmatprep.mubr.f32.mxu0 0.0
        %v5276 = vand.u32 %v5205, 4294901760
        %v5277 = vsub.f32 %v5205, %v5276
        %v5278 = vand.u32 %v5277, 4294901760
        %v5279 = vsub.f32 %v5277, %v5278
        %v5280 = vand.u32 %v5279, 4294901760
        %5281 = vmatmul.mubr.f32.gmra.mrb[0].mxu0 %v5280
        %v5282 = vpop.f32.mrb[0].mxu0
        %v5283 = vadd.f32 %v5202, %v5282
        %v5284 = vpop.f32.mrb[0].mxu0
        %5285 = vdwg.mxu0
        %5286 = vmatprep.subr.mxu0 0.0
        %v5287 = vand.u32 %v5193, 4294901760
        %v5288 = vsub.f32 %v5193, %v5287
        %v5289 = vand.u32 %v5288, 4294901760
        %v5290 = vsub.f32 %v5288, %v5289
        %v5291 = vand.u32 %v5290, 4294901760
        %5292 = vmatpush1.msra.mxu0 %v5291
        %5293 = vmatprep.subr.mxu0 0.0
        %v5294 = vand.u32 %v5194, 4294901760
        %v5295 = vsub.f32 %v5194, %v5294
        %v5296 = vand.u32 %v5295, 4294901760
        %v5297 = vsub.f32 %v5295, %v5296
        %v5298 = vand.u32 %v5297, 4294901760
        %5299 = vmatpush1.msra.mxu0 %v5298
        %5300 = vmatprep.subr.mxu0 0.0
        %v5301 = vand.u32 %v5195, 4294901760
        %v5302 = vsub.f32 %v5195, %v5301
        %v5303 = vand.u32 %v5302, 4294901760
        %v5304 = vsub.f32 %v5302, %v5303
        %v5305 = vand.u32 %v5304, 4294901760
        %5306 = vmatpush1.msra.mxu0 %v5305
        %5307 = vmatprep.subr.mxu0 0.0
        %v5308 = vand.u32 %v5196, 4294901760
        %v5309 = vsub.f32 %v5196, %v5308
        %v5310 = vand.u32 %v5309, 4294901760
        %v5311 = vsub.f32 %v5309, %v5310
        %v5312 = vand.u32 %v5311, 4294901760
        %5313 = vmatpush1.msra.mxu0 %v5312
        %5314 = vmatprep.subr.mxu0 0.0
        %5315 = vmatpush1.msra.mxu0 0.0
        %5316 = vmatprep.subr.mxu0 0.0
        %5317 = vmatpush1.msra.mxu0 0.0
        %5318 = vmatprep.subr.mxu0 0.0
        %5319 = vmatpush1.msra.mxu0 0.0
        %5320 = vmatprep.subr.mxu0 0.0
        %5321 = vmatpush1.msra.mxu0 0.0
        %5322 = vmatprep.subr.mxu0 0.0
        %5323 = vmatpush1.msra.mxu0 0.0
        %5324 = vmatprep.subr.mxu0 0.0
        %5325 = vmatpush1.msra.mxu0 0.0
        %5326 = vmatprep.subr.mxu0 0.0
        %5327 = vmatpush1.msra.mxu0 0.0
        %5328 = vmatprep.subr.mxu0 0.0
        %5329 = vmatpush1.msra.mxu0 0.0
        %5330 = vmatprep.subr.mxu0 0.0
        %5331 = vmatpush1.msra.mxu0 0.0
        %5332 = vmatprep.subr.mxu0 0.0
        %5333 = vmatpush1.msra.mxu0 0.0
        %5334 = vmatprep.subr.mxu0 0.0
        %5335 = vmatpush1.msra.mxu0 0.0
        %5336 = vmatprep.subr.mxu0 0.0
        %5337 = vmatpush1.msra.mxu0 0.0
        %5338 = vmatprep.subr.mxu0 0.0
        %5339 = vmatpush1.msra.mxu0 0.0
        %5340 = vmatprep.subr.mxu0 0.0
        %5341 = vmatpush1.msra.mxu0 0.0
        %5342 = vmatprep.subr.mxu0 0.0
        %5343 = vmatpush1.msra.mxu0 0.0
        %5344 = vmatprep.subr.mxu0 0.0
        %5345 = vmatpush1.msra.mxu0 0.0
        %5346 = vmatprep.subr.mxu0 0.0
        %5347 = vmatpush1.msra.mxu0 0.0
        %5348 = vmatprep.subr.mxu0 0.0
        %5349 = vmatpush1.msra.mxu0 0.0
        %5350 = vmatprep.subr.mxu0 0.0
        %5351 = vmatpush1.msra.mxu0 0.0
        %5352 = vmatprep.subr.mxu0 0.0
        %5353 = vmatpush1.msra.mxu0 0.0
        %5354 = vmatprep.subr.mxu0 0.0
        %5355 = vmatpush1.msra.mxu0 0.0
        %5356 = vmatprep.subr.mxu0 0.0
        %5357 = vmatpush1.msra.mxu0 0.0
        %5358 = vmatprep.subr.mxu0 0.0
        %5359 = vmatpush1.msra.mxu0 0.0
        %5360 = vmatprep.subr.mxu0 0.0
        %5361 = vmatpush1.msra.mxu0 0.0
        %5362 = vmatprep.subr.mxu0 0.0
        %5363 = vmatpush1.msra.mxu0 0.0
        %5364 = vmatprep.subr.mxu0 0.0
        %5365 = vmatpush1.msra.mxu0 0.0
        %5366 = vmatprep.subr.mxu0 0.0
        %5367 = vmatpush1.msra.mxu0 0.0
        %5368 = vmatprep.subr.mxu0 0.0
        %5369 = vmatpush1.msra.mxu0 0.0
        %5370 = vmatprep.mubr.f32.mxu0 0.0
        %v5371 = vand.u32 %v5205, 4294901760
        %5372 = vmatmul.mubr.f32.gmra.mrb[0].mxu0 %v5371
        %v5373 = vpop.f32.mrb[0].mxu0
        %v5374 = vadd.f32 %v5283, %v5373
        %v5375 = vpop.f32.mrb[0].mxu0
        %5376 = vdwg.mxu0
        %5377 = vmatprep.subr.mxu0 0.0
        %v5378 = vand.u32 %v5193, 4294901760
        %v5379 = vsub.f32 %v5193, %v5378
        %5380 = vmatpush1.msra.mxu0 %v5379
        %5381 = vmatprep.subr.mxu0 0.0
        %v5382 = vand.u32 %v5194, 4294901760
        %v5383 = vsub.f32 %v5194, %v5382
        %5384 = vmatpush1.msra.mxu0 %v5383
        %5385 = vmatprep.subr.mxu0 0.0
        %v5386 = vand.u32 %v5195, 4294901760
        %v5387 = vsub.f32 %v5195, %v5386
        %5388 = vmatpush1.msra.mxu0 %v5387
        %5389 = vmatprep.subr.mxu0 0.0
        %v5390 = vand.u32 %v5196, 4294901760
        %v5391 = vsub.f32 %v5196, %v5390
        %5392 = vmatpush1.msra.mxu0 %v5391
        %5393 = vmatprep.subr.mxu0 0.0
        %5394 = vmatpush1.msra.mxu0 0.0
        %5395 = vmatprep.subr.mxu0 0.0
        %5396 = vmatpush1.msra.mxu0 0.0
        %5397 = vmatprep.subr.mxu0 0.0
        %5398 = vmatpush1.msra.mxu0 0.0
        %5399 = vmatprep.subr.mxu0 0.0
        %5400 = vmatpush1.msra.mxu0 0.0
        %5401 = vmatprep.subr.mxu0 0.0
        %5402 = vmatpush1.msra.mxu0 0.0
        %5403 = vmatprep.subr.mxu0 0.0
        %5404 = vmatpush1.msra.mxu0 0.0
        %5405 = vmatprep.subr.mxu0 0.0
        %5406 = vmatpush1.msra.mxu0 0.0
        %5407 = vmatprep.subr.mxu0 0.0
        %5408 = vmatpush1.msra.mxu0 0.0
        %5409 = vmatprep.subr.mxu0 0.0
        %5410 = vmatpush1.msra.mxu0 0.0
        %5411 = vmatprep.subr.mxu0 0.0
        %5412 = vmatpush1.msra.mxu0 0.0
        %5413 = vmatprep.subr.mxu0 0.0
        %5414 = vmatpush1.msra.mxu0 0.0
        %5415 = vmatprep.subr.mxu0 0.0
        %5416 = vmatpush1.msra.mxu0 0.0
        %5417 = vmatprep.subr.mxu0 0.0
        %5418 = vmatpush1.msra.mxu0 0.0
        %5419 = vmatprep.subr.mxu0 0.0
        %5420 = vmatpush1.msra.mxu0 0.0
        %5421 = vmatprep.subr.mxu0 0.0
        %5422 = vmatpush1.msra.mxu0 0.0
        %5423 = vmatprep.subr.mxu0 0.0
        %5424 = vmatpush1.msra.mxu0 0.0
        %5425 = vmatprep.subr.mxu0 0.0
        %5426 = vmatpush1.msra.mxu0 0.0
        %5427 = vmatprep.subr.mxu0 0.0
        %5428 = vmatpush1.msra.mxu0 0.0
        %5429 = vmatprep.subr.mxu0 0.0
        %5430 = vmatpush1.msra.mxu0 0.0
        %5431 = vmatprep.subr.mxu0 0.0
        %5432 = vmatpush1.msra.mxu0 0.0
        %5433 = vmatprep.subr.mxu0 0.0
        %5434 = vmatpush1.msra.mxu0 0.0
        %5435 = vmatprep.subr.mxu0 0.0
        %5436 = vmatpush1.msra.mxu0 0.0
        %5437 = vmatprep.subr.mxu0 0.0
        %5438 = vmatpush1.msra.mxu0 0.0
        %5439 = vmatprep.subr.mxu0 0.0
        %5440 = vmatpush1.msra.mxu0 0.0
        %5441 = vmatprep.subr.mxu0 0.0
        %5442 = vmatpush1.msra.mxu0 0.0
        %5443 = vmatprep.subr.mxu0 0.0
        %5444 = vmatpush1.msra.mxu0 0.0
        %5445 = vmatprep.subr.mxu0 0.0
        %5446 = vmatpush1.msra.mxu0 0.0
        %5447 = vmatprep.subr.mxu0 0.0
        %5448 = vmatpush1.msra.mxu0 0.0
        %5449 = vmatprep.mubr.f32.mxu0 0.0
        %v5450 = vand.u32 %v5205, 4294901760
        %v5451 = vsub.f32 %v5205, %v5450
        %5452 = vmatmul.mubr.f32.gmra.mrb[0].mxu0 %v5451
        %v5453 = vpop.f32.mrb[0].mxu0
        %v5454 = vadd.f32 %v5374, %v5453
        %v5455 = vpop.f32.mrb[0].mxu0
        %5456 = vdwg.mxu0
        %5457 = vmatprep.subr.mxu0 0.0
        %v5458 = vand.u32 %v5193, 4294901760
        %5459 = vmatpush1.msra.mxu0 %v5458
        %5460 = vmatprep.subr.mxu0 0.0
        %v5461 = vand.u32 %v5194, 4294901760
        %5462 = vmatpush1.msra.mxu0 %v5461
        %5463 = vmatprep.subr.mxu0 0.0
        %v5464 = vand.u32 %v5195, 4294901760
        %5465 = vmatpush1.msra.mxu0 %v5464
        %5466 = vmatprep.subr.mxu0 0.0
        %v5467 = vand.u32 %v5196, 4294901760
        %5468 = vmatpush1.msra.mxu0 %v5467
        %5469 = vmatprep.subr.mxu0 0.0
        %5470 = vmatpush1.msra.mxu0 0.0
        %5471 = vmatprep.subr.mxu0 0.0
        %5472 = vmatpush1.msra.mxu0 0.0
        %5473 = vmatprep.subr.mxu0 0.0
        %5474 = vmatpush1.msra.mxu0 0.0
        %5475 = vmatprep.subr.mxu0 0.0
        %5476 = vmatpush1.msra.mxu0 0.0
        %5477 = vmatprep.subr.mxu0 0.0
        %5478 = vmatpush1.msra.mxu0 0.0
        %5479 = vmatprep.subr.mxu0 0.0
        %5480 = vmatpush1.msra.mxu0 0.0
        %5481 = vmatprep.subr.mxu0 0.0
        %5482 = vmatpush1.msra.mxu0 0.0
        %5483 = vmatprep.subr.mxu0 0.0
        %5484 = vmatpush1.msra.mxu0 0.0
        %5485 = vmatprep.subr.mxu0 0.0
        %5486 = vmatpush1.msra.mxu0 0.0
        %5487 = vmatprep.subr.mxu0 0.0
        %5488 = vmatpush1.msra.mxu0 0.0
        %5489 = vmatprep.subr.mxu0 0.0
        %5490 = vmatpush1.msra.mxu0 0.0
        %5491 = vmatprep.subr.mxu0 0.0
        %5492 = vmatpush1.msra.mxu0 0.0
        %5493 = vmatprep.subr.mxu0 0.0
        %5494 = vmatpush1.msra.mxu0 0.0
        %5495 = vmatprep.subr.mxu0 0.0
        %5496 = vmatpush1.msra.mxu0 0.0
        %5497 = vmatprep.subr.mxu0 0.0
        %5498 = vmatpush1.msra.mxu0 0.0
        %5499 = vmatprep.subr.mxu0 0.0
        %5500 = vmatpush1.msra.mxu0 0.0
        %5501 = vmatprep.subr.mxu0 0.0
        %5502 = vmatpush1.msra.mxu0 0.0
        %5503 = vmatprep.subr.mxu0 0.0
        %5504 = vmatpush1.msra.mxu0 0.0
        %5505 = vmatprep.subr.mxu0 0.0
        %5506 = vmatpush1.msra.mxu0 0.0
        %5507 = vmatprep.subr.mxu0 0.0
        %5508 = vmatpush1.msra.mxu0 0.0
        %5509 = vmatprep.subr.mxu0 0.0
        %5510 = vmatpush1.msra.mxu0 0.0
        %5511 = vmatprep.subr.mxu0 0.0
        %5512 = vmatpush1.msra.mxu0 0.0
        %5513 = vmatprep.subr.mxu0 0.0
        %5514 = vmatpush1.msra.mxu0 0.0
        %5515 = vmatprep.subr.mxu0 0.0
        %5516 = vmatpush1.msra.mxu0 0.0
        %5517 = vmatprep.subr.mxu0 0.0
        %5518 = vmatpush1.msra.mxu0 0.0
        %5519 = vmatprep.subr.mxu0 0.0
        %5520 = vmatpush1.msra.mxu0 0.0
        %5521 = vmatprep.subr.mxu0 0.0
        %5522 = vmatpush1.msra.mxu0 0.0
        %5523 = vmatprep.subr.mxu0 0.0
        %5524 = vmatpush1.msra.mxu0 0.0
        %5525 = vmatprep.mubr.f32.mxu0 0.0
        %v5526 = vand.u32 %v5205, 4294901760
        %v5527 = vsub.f32 %v5205, %v5526
        %v5528 = vand.u32 %v5527, 4294901760
        %5529 = vmatmul.mubr.f32.gmra.mrb[0].mxu0 %v5528
        %v5530 = vpop.f32.mrb[0].mxu0
        %v5531 = vadd.f32 %v5454, %v5530
        %v5532 = vpop.f32.mrb[0].mxu0
        %5533 = vdwg.mxu0
        %5534 = vmatprep.subr.mxu0 0.0
        %v5535 = vand.u32 %v5193, 4294901760
        %v5536 = vsub.f32 %v5193, %v5535
        %v5537 = vand.u32 %v5536, 4294901760
        %5538 = vmatpush1.msra.mxu0 %v5537
        %5539 = vmatprep.subr.mxu0 0.0
        %v5540 = vand.u32 %v5194, 4294901760
        %v5541 = vsub.f32 %v5194, %v5540
        %v5542 = vand.u32 %v5541, 4294901760
        %5543 = vmatpush1.msra.mxu0 %v5542
        %5544 = vmatprep.subr.mxu0 0.0
        %v5545 = vand.u32 %v5195, 4294901760
        %v5546 = vsub.f32 %v5195, %v5545
        %v5547 = vand.u32 %v5546, 4294901760
        %5548 = vmatpush1.msra.mxu0 %v5547
        %5549 = vmatprep.subr.mxu0 0.0
        %v5550 = vand.u32 %v5196, 4294901760
        %v5551 = vsub.f32 %v5196, %v5550
        %v5552 = vand.u32 %v5551, 4294901760
        %5553 = vmatpush1.msra.mxu0 %v5552
        %5554 = vmatprep.subr.mxu0 0.0
        %5555 = vmatpush1.msra.mxu0 0.0
        %5556 = vmatprep.subr.mxu0 0.0
        %5557 = vmatpush1.msra.mxu0 0.0
        %5558 = vmatprep.subr.mxu0 0.0
        %5559 = vmatpush1.msra.mxu0 0.0
        %5560 = vmatprep.subr.mxu0 0.0
        %5561 = vmatpush1.msra.mxu0 0.0
        %5562 = vmatprep.subr.mxu0 0.0
        %5563 = vmatpush1.msra.mxu0 0.0
        %5564 = vmatprep.subr.mxu0 0.0
        %5565 = vmatpush1.msra.mxu0 0.0
        %5566 = vmatprep.subr.mxu0 0.0
        %5567 = vmatpush1.msra.mxu0 0.0
        %5568 = vmatprep.subr.mxu0 0.0
        %5569 = vmatpush1.msra.mxu0 0.0
        %5570 = vmatprep.subr.mxu0 0.0
        %5571 = vmatpush1.msra.mxu0 0.0
        %5572 = vmatprep.subr.mxu0 0.0
        %5573 = vmatpush1.msra.mxu0 0.0
        %5574 = vmatprep.subr.mxu0 0.0
        %5575 = vmatpush1.msra.mxu0 0.0
        %5576 = vmatprep.subr.mxu0 0.0
        %5577 = vmatpush1.msra.mxu0 0.0
        %5578 = vmatprep.subr.mxu0 0.0
        %5579 = vmatpush1.msra.mxu0 0.0
        %5580 = vmatprep.subr.mxu0 0.0
        %5581 = vmatpush1.msra.mxu0 0.0
        %5582 = vmatprep.subr.mxu0 0.0
        %5583 = vmatpush1.msra.mxu0 0.0
        %5584 = vmatprep.subr.mxu0 0.0
        %5585 = vmatpush1.msra.mxu0 0.0
        %5586 = vmatprep.subr.mxu0 0.0
        %5587 = vmatpush1.msra.mxu0 0.0
        %5588 = vmatprep.subr.mxu0 0.0
        %5589 = vmatpush1.msra.mxu0 0.0
        %5590 = vmatprep.subr.mxu0 0.0
        %5591 = vmatpush1.msra.mxu0 0.0
        %5592 = vmatprep.subr.mxu0 0.0
        %5593 = vmatpush1.msra.mxu0 0.0
        %5594 = vmatprep.subr.mxu0 0.0
        %5595 = vmatpush1.msra.mxu0 0.0
        %5596 = vmatprep.subr.mxu0 0.0
        %5597 = vmatpush1.msra.mxu0 0.0
        %5598 = vmatprep.subr.mxu0 0.0
        %5599 = vmatpush1.msra.mxu0 0.0
        %5600 = vmatprep.subr.mxu0 0.0
        %5601 = vmatpush1.msra.mxu0 0.0
        %5602 = vmatprep.subr.mxu0 0.0
        %5603 = vmatpush1.msra.mxu0 0.0
        %5604 = vmatprep.subr.mxu0 0.0
        %5605 = vmatpush1.msra.mxu0 0.0
        %5606 = vmatprep.subr.mxu0 0.0
        %5607 = vmatpush1.msra.mxu0 0.0
        %5608 = vmatprep.subr.mxu0 0.0
        %5609 = vmatpush1.msra.mxu0 0.0
        %5610 = vmatprep.mubr.f32.mxu0 0.0
        %v5611 = vand.u32 %v5205, 4294901760
        %5612 = vmatmul.mubr.f32.gmra.mrb[0].mxu0 %v5611
        %v5613 = vpop.f32.mrb[0].mxu0
        %v5614 = vadd.f32 %v5531, %v5613
        %v5615 = vpop.f32.mrb[0].mxu0
        %5616 = vdwg.mxu0
        %5617 = vmatprep.subr.mxu0 0.0
        %v5618 = vand.u32 %v5193, 4294901760
        %5619 = vmatpush1.msra.mxu0 %v5618
        %5620 = vmatprep.subr.mxu0 0.0
        %v5621 = vand.u32 %v5194, 4294901760
        %5622 = vmatpush1.msra.mxu0 %v5621
        %5623 = vmatprep.subr.mxu0 0.0
        %v5624 = vand.u32 %v5195, 4294901760
        %5625 = vmatpush1.msra.mxu0 %v5624
        %5626 = vmatprep.subr.mxu0 0.0
        %v5627 = vand.u32 %v5196, 4294901760
        %5628 = vmatpush1.msra.mxu0 %v5627
        %5629 = vmatprep.subr.mxu0 0.0
        %5630 = vmatpush1.msra.mxu0 0.0
        %5631 = vmatprep.subr.mxu0 0.0
        %5632 = vmatpush1.msra.mxu0 0.0
        %5633 = vmatprep.subr.mxu0 0.0
        %5634 = vmatpush1.msra.mxu0 0.0
        %5635 = vmatprep.subr.mxu0 0.0
        %5636 = vmatpush1.msra.mxu0 0.0
        %5637 = vmatprep.subr.mxu0 0.0
        %5638 = vmatpush1.msra.mxu0 0.0
        %5639 = vmatprep.subr.mxu0 0.0
        %5640 = vmatpush1.msra.mxu0 0.0
        %5641 = vmatprep.subr.mxu0 0.0
        %5642 = vmatpush1.msra.mxu0 0.0
        %5643 = vmatprep.subr.mxu0 0.0
        %5644 = vmatpush1.msra.mxu0 0.0
        %5645 = vmatprep.subr.mxu0 0.0
        %5646 = vmatpush1.msra.mxu0 0.0
        %5647 = vmatprep.subr.mxu0 0.0
        %5648 = vmatpush1.msra.mxu0 0.0
        %5649 = vmatprep.subr.mxu0 0.0
        %5650 = vmatpush1.msra.mxu0 0.0
        %5651 = vmatprep.subr.mxu0 0.0
        %5652 = vmatpush1.msra.mxu0 0.0
        %5653 = vmatprep.subr.mxu0 0.0
        %5654 = vmatpush1.msra.mxu0 0.0
        %5655 = vmatprep.subr.mxu0 0.0
        %5656 = vmatpush1.msra.mxu0 0.0
        %5657 = vmatprep.subr.mxu0 0.0
        %5658 = vmatpush1.msra.mxu0 0.0
        %5659 = vmatprep.subr.mxu0 0.0
        %5660 = vmatpush1.msra.mxu0 0.0
        %5661 = vmatprep.subr.mxu0 0.0
        %5662 = vmatpush1.msra.mxu0 0.0
        %5663 = vmatprep.subr.mxu0 0.0
        %5664 = vmatpush1.msra.mxu0 0.0
        %5665 = vmatprep.subr.mxu0 0.0
        %5666 = vmatpush1.msra.mxu0 0.0
        %5667 = vmatprep.subr.mxu0 0.0
        %5668 = vmatpush1.msra.mxu0 0.0
        %5669 = vmatprep.subr.mxu0 0.0
        %5670 = vmatpush1.msra.mxu0 0.0
        %5671 = vmatprep.subr.mxu0 0.0
        %5672 = vmatpush1.msra.mxu0 0.0
        %5673 = vmatprep.subr.mxu0 0.0
        %5674 = vmatpush1.msra.mxu0 0.0
        %5675 = vmatprep.subr.mxu0 0.0
        %5676 = vmatpush1.msra.mxu0 0.0
        %5677 = vmatprep.subr.mxu0 0.0
        %5678 = vmatpush1.msra.mxu0 0.0
        %5679 = vmatprep.subr.mxu0 0.0
        %5680 = vmatpush1.msra.mxu0 0.0
        %5681 = vmatprep.subr.mxu0 0.0
        %5682 = vmatpush1.msra.mxu0 0.0
        %5683 = vmatprep.subr.mxu0 0.0
        %5684 = vmatpush1.msra.mxu0 0.0
        %5685 = vmatprep.mubr.f32.mxu0 0.0
        %v5686 = vand.u32 %v5205, 4294901760
        %5687 = vmatmul.mubr.f32.gmra.mrb[0].mxu0 %v5686
        %v5688 = vpop.f32.mrb[0].mxu0
        %v5689 = vadd.f32 %v5614, %v5688
        %v5690 = vpop.f32.mrb[0].mxu0
        %5691 = vdwg.mxu0
        %v5692 = vmul.f32 %v5689, %v5689
        %v5693 = vmul.f32 %v5689, %v5692
        %v5694 = vmul.f32 %v5693, 0.044715
        %v5695 = vadd.f32 %v5689, %v5694
        %v5696 = vmul.f32 %v5695, 0.7978846
        %v5697 = vtanh.pop %v5696
        %v5698 = vadd.f32 %v5697, 1.0
        %v5699 = vmul.f32 %v5698, 0.5
        %v5700 = vmul.f32 %v5689, %v5699
        %v5701 = vld [vmem:[%s11] sm:$0xff]
        %v5702 = vld [vmem:[%s11 + $0x8] sm:$0xff]
        %v5703 = vld [vmem:[%s11 + $0x10] sm:$0xff]
        %v5704 = vld [vmem:[%s11 + $0x18] sm:$0xff]
        %v5705 = vld [vmem:[%s11 + $0x20] sm:$0xff]
        %v5706 = vld [vmem:[%s11 + $0x28] sm:$0xff]
        %v5707 = vld [vmem:[%s11 + $0x30] sm:$0xff]
        %v5708 = vld [vmem:[%s11 + $0x38] sm:$0xff]
        %v5709 = vld [vmem:[%s11 + $0x40] sm:$0xff]
        %v5710 = vld [vmem:[%s11 + $0x48] sm:$0xff]
        %v5711 = vld [vmem:[%s11 + $0x50] sm:$0xff]
        %v5712 = vld [vmem:[%s11 + $0x58] sm:$0xff]
        %v5713 = vld [vmem:[%s11 + $0x60] sm:$0xff]
        %v5714 = vld [vmem:[%s11 + $0x68] sm:$0xff]
        %v5715 = vld [vmem:[%s11 + $0x70] sm:$0xff]
        %v5716 = vld [vmem:[%s11 + $0x78] sm:$0xff]
        %v5717 = vld [vmem:[%s12] sm:$0x1]
        %v5719 = vlaneseq
        %v5720 = vshrl.u32 %v5719, 7
        %v5721 = vsub.s32 0, %v5720
        %v5722 = vrot.slane %v5717, %v5721
        %5724 = vmatprep.subr.mxu0 0.0
        %v5725 = vand.u32 %v5701, 4294901760
        %5726 = vmatpush1.msra.mxu0 %v5725
        %5727 = vmatprep.subr.mxu0 0.0
        %v5728 = vand.u32 %v5702, 4294901760
        %5729 = vmatpush1.msra.mxu0 %v5728
        %5730 = vmatprep.subr.mxu0 0.0
        %v5731 = vand.u32 %v5703, 4294901760
        %5732 = vmatpush1.msra.mxu0 %v5731
        %5733 = vmatprep.subr.mxu0 0.0
        %v5734 = vand.u32 %v5704, 4294901760
        %5735 = vmatpush1.msra.mxu0 %v5734
        %5736 = vmatprep.subr.mxu0 0.0
        %v5737 = vand.u32 %v5705, 4294901760
        %5738 = vmatpush1.msra.mxu0 %v5737
        %5739 = vmatprep.subr.mxu0 0.0
        %v5740 = vand.u32 %v5706, 4294901760
        %5741 = vmatpush1.msra.mxu0 %v5740
        %5742 = vmatprep.subr.mxu0 0.0
        %v5743 = vand.u32 %v5707, 4294901760
        %5744 = vmatpush1.msra.mxu0 %v5743
        %5745 = vmatprep.subr.mxu0 0.0
        %v5746 = vand.u32 %v5708, 4294901760
        %5747 = vmatpush1.msra.mxu0 %v5746
        %5748 = vmatprep.subr.mxu0 0.0
        %v5749 = vand.u32 %v5709, 4294901760
        %5750 = vmatpush1.msra.mxu0 %v5749
        %5751 = vmatprep.subr.mxu0 0.0
        %v5752 = vand.u32 %v5710, 4294901760
        %5753 = vmatpush1.msra.mxu0 %v5752
        %5754 = vmatprep.subr.mxu0 0.0
        %v5755 = vand.u32 %v5711, 4294901760
        %5756 = vmatpush1.msra.mxu0 %v5755
        %5757 = vmatprep.subr.mxu0 0.0
        %v5758 = vand.u32 %v5712, 4294901760
        %5759 = vmatpush1.msra.mxu0 %v5758
        %5760 = vmatprep.subr.mxu0 0.0
        %v5761 = vand.u32 %v5713, 4294901760
        %5762 = vmatpush1.msra.mxu0 %v5761
        %5763 = vmatprep.subr.mxu0 0.0
        %v5764 = vand.u32 %v5714, 4294901760
        %5765 = vmatpush1.msra.mxu0 %v5764
        %5766 = vmatprep.subr.mxu0 0.0
        %v5767 = vand.u32 %v5715, 4294901760
        %5768 = vmatpush1.msra.mxu0 %v5767
        %5769 = vmatprep.subr.mxu0 0.0
        %v5770 = vand.u32 %v5716, 4294901760
        %5771 = vmatpush1.msra.mxu0 %v5770
        %5772 = vmatprep.subr.mxu0 0.0
        %5773 = vmatpush1.msra.mxu0 0.0
        %5774 = vmatprep.subr.mxu0 0.0
        %5775 = vmatpush1.msra.mxu0 0.0
        %5776 = vmatprep.subr.mxu0 0.0
        %5777 = vmatpush1.msra.mxu0 0.0
        %5778 = vmatprep.subr.mxu0 0.0
        %5779 = vmatpush1.msra.mxu0 0.0
        %5780 = vmatprep.subr.mxu0 0.0
        %5781 = vmatpush1.msra.mxu0 0.0
        %5782 = vmatprep.subr.mxu0 0.0
        %5783 = vmatpush1.msra.mxu0 0.0
        %5784 = vmatprep.subr.mxu0 0.0
        %5785 = vmatpush1.msra.mxu0 0.0
        %5786 = vmatprep.subr.mxu0 0.0
        %5787 = vmatpush1.msra.mxu0 0.0
        %5788 = vmatprep.subr.mxu0 0.0
        %5789 = vmatpush1.msra.mxu0 0.0
        %5790 = vmatprep.subr.mxu0 0.0
        %5791 = vmatpush1.msra.mxu0 0.0
        %5792 = vmatprep.subr.mxu0 0.0
        %5793 = vmatpush1.msra.mxu0 0.0
        %5794 = vmatprep.subr.mxu0 0.0
        %5795 = vmatpush1.msra.mxu0 0.0
        %5796 = vmatprep.subr.mxu0 0.0
        %5797 = vmatpush1.msra.mxu0 0.0
        %5798 = vmatprep.subr.mxu0 0.0
        %5799 = vmatpush1.msra.mxu0 0.0
        %5800 = vmatprep.subr.mxu0 0.0
        %5801 = vmatpush1.msra.mxu0 0.0
        %5802 = vmatprep.subr.mxu0 0.0
        %5803 = vmatpush1.msra.mxu0 0.0
        %5804 = vmatprep.mubr.f32.mxu0 0.0
        %v5805 = vand.u32 %v5700, 4294901760
        %v5806 = vsub.f32 %v5700, %v5805
        %v5807 = vand.u32 %v5806, 4294901760
        %v5808 = vsub.f32 %v5806, %v5807
        %v5809 = vand.u32 %v5808, 4294901760
        %5810 = vmatmul.mubr.f32.gmra.mrb[0].mxu0 %v5809
        %v5811 = vpop.f32.mrb[0].mxu0
        %v5812 = vadd.f32 %v5722, %v5811
        %v5813 = vpop.f32.mrb[0].mxu0
        %5814 = vdwg.mxu0
        %5815 = vmatprep.subr.mxu0 0.0
        %v5816 = vand.u32 %v5701, 4294901760
        %v5817 = vsub.f32 %v5701, %v5816
        %v5818 = vand.u32 %v5817, 4294901760
        %v5819 = vsub.f32 %v5817, %v5818
        %v5820 = vand.u32 %v5819, 4294901760
        %5821 = vmatpush1.msra.mxu0 %v5820
        %5822 = vmatprep.subr.mxu0 0.0
        %v5823 = vand.u32 %v5702, 4294901760
        %v5824 = vsub.f32 %v5702, %v5823
        %v5825 = vand.u32 %v5824, 4294901760
        %v5826 = vsub.f32 %v5824, %v5825
        %v5827 = vand.u32 %v5826, 4294901760
        %5828 = vmatpush1.msra.mxu0 %v5827
        %5829 = vmatprep.subr.mxu0 0.0
        %v5830 = vand.u32 %v5703, 4294901760
        %v5831 = vsub.f32 %v5703, %v5830
        %v5832 = vand.u32 %v5831, 4294901760
        %v5833 = vsub.f32 %v5831, %v5832
        %v5834 = vand.u32 %v5833, 4294901760
        %5835 = vmatpush1.msra.mxu0 %v5834
        %5836 = vmatprep.subr.mxu0 0.0
        %v5837 = vand.u32 %v5704, 4294901760
        %v5838 = vsub.f32 %v5704, %v5837
        %v5839 = vand.u32 %v5838, 4294901760
        %v5840 = vsub.f32 %v5838, %v5839
        %v5841 = vand.u32 %v5840, 4294901760
        %5842 = vmatpush1.msra.mxu0 %v5841
        %5843 = vmatprep.subr.mxu0 0.0
        %v5844 = vand.u32 %v5705, 4294901760
        %v5845 = vsub.f32 %v5705, %v5844
        %v5846 = vand.u32 %v5845, 4294901760
        %v5847 = vsub.f32 %v5845, %v5846
        %v5848 = vand.u32 %v5847, 4294901760
        %5849 = vmatpush1.msra.mxu0 %v5848
        %5850 = vmatprep.subr.mxu0 0.0
        %v5851 = vand.u32 %v5706, 4294901760
        %v5852 = vsub.f32 %v5706, %v5851
        %v5853 = vand.u32 %v5852, 4294901760
        %v5854 = vsub.f32 %v5852, %v5853
        %v5855 = vand.u32 %v5854, 4294901760
        %5856 = vmatpush1.msra.mxu0 %v5855
        %5857 = vmatprep.subr.mxu0 0.0
        %v5858 = vand.u32 %v5707, 4294901760
        %v5859 = vsub.f32 %v5707, %v5858
        %v5860 = vand.u32 %v5859, 4294901760
        %v5861 = vsub.f32 %v5859, %v5860
        %v5862 = vand.u32 %v5861, 4294901760
        %5863 = vmatpush1.msra.mxu0 %v5862
        %5864 = vmatprep.subr.mxu0 0.0
        %v5865 = vand.u32 %v5708, 4294901760
        %v5866 = vsub.f32 %v5708, %v5865
        %v5867 = vand.u32 %v5866, 4294901760
        %v5868 = vsub.f32 %v5866, %v5867
        %v5869 = vand.u32 %v5868, 4294901760
        %5870 = vmatpush1.msra.mxu0 %v5869
        %5871 = vmatprep.subr.mxu0 0.0
        %v5872 = vand.u32 %v5709, 4294901760
        %v5873 = vsub.f32 %v5709, %v5872
        %v5874 = vand.u32 %v5873, 4294901760
        %v5875 = vsub.f32 %v5873, %v5874
        %v5876 = vand.u32 %v5875, 4294901760
        %5877 = vmatpush1.msra.mxu0 %v5876
        %5878 = vmatprep.subr.mxu0 0.0
        %v5879 = vand.u32 %v5710, 4294901760
        %v5880 = vsub.f32 %v5710, %v5879
        %v5881 = vand.u32 %v5880, 4294901760
        %v5882 = vsub.f32 %v5880, %v5881
        %v5883 = vand.u32 %v5882, 4294901760
        %5884 = vmatpush1.msra.mxu0 %v5883
        %5885 = vmatprep.subr.mxu0 0.0
        %v5886 = vand.u32 %v5711, 4294901760
        %v5887 = vsub.f32 %v5711, %v5886
        %v5888 = vand.u32 %v5887, 4294901760
        %v5889 = vsub.f32 %v5887, %v5888
        %v5890 = vand.u32 %v5889, 4294901760
        %5891 = vmatpush1.msra.mxu0 %v5890
        %5892 = vmatprep.subr.mxu0 0.0
        %v5893 = vand.u32 %v5712, 4294901760
        %v5894 = vsub.f32 %v5712, %v5893
        %v5895 = vand.u32 %v5894, 4294901760
        %v5896 = vsub.f32 %v5894, %v5895
        %v5897 = vand.u32 %v5896, 4294901760
        %5898 = vmatpush1.msra.mxu0 %v5897
        %5899 = vmatprep.subr.mxu0 0.0
        %v5900 = vand.u32 %v5713, 4294901760
        %v5901 = vsub.f32 %v5713, %v5900
        %v5902 = vand.u32 %v5901, 4294901760
        %v5903 = vsub.f32 %v5901, %v5902
        %v5904 = vand.u32 %v5903, 4294901760
        %5905 = vmatpush1.msra.mxu0 %v5904
        %5906 = vmatprep.subr.mxu0 0.0
        %v5907 = vand.u32 %v5714, 4294901760
        %v5908 = vsub.f32 %v5714, %v5907
        %v5909 = vand.u32 %v5908, 4294901760
        %v5910 = vsub.f32 %v5908, %v5909
        %v5911 = vand.u32 %v5910, 4294901760
        %5912 = vmatpush1.msra.mxu0 %v5911
        %5913 = vmatprep.subr.mxu0 0.0
        %v5914 = vand.u32 %v5715, 4294901760
        %v5915 = vsub.f32 %v5715, %v5914
        %v5916 = vand.u32 %v5915, 4294901760
        %v5917 = vsub.f32 %v5915, %v5916
        %v5918 = vand.u32 %v5917, 4294901760
        %5919 = vmatpush1.msra.mxu0 %v5918
        %5920 = vmatprep.subr.mxu0 0.0
        %v5921 = vand.u32 %v5716, 4294901760
        %v5922 = vsub.f32 %v5716, %v5921
        %v5923 = vand.u32 %v5922, 4294901760
        %v5924 = vsub.f32 %v5922, %v5923
        %v5925 = vand.u32 %v5924, 4294901760
        %5926 = vmatpush1.msra.mxu0 %v5925
        %5927 = vmatprep.subr.mxu0 0.0
        %5928 = vmatpush1.msra.mxu0 0.0
        %5929 = vmatprep.subr.mxu0 0.0
        %5930 = vmatpush1.msra.mxu0 0.0
        %5931 = vmatprep.subr.mxu0 0.0
        %5932 = vmatpush1.msra.mxu0 0.0
        %5933 = vmatprep.subr.mxu0 0.0
        %5934 = vmatpush1.msra.mxu0 0.0
        %5935 = vmatprep.subr.mxu0 0.0
        %5936 = vmatpush1.msra.mxu0 0.0
        %5937 = vmatprep.subr.mxu0 0.0
        %5938 = vmatpush1.msra.mxu0 0.0
        %5939 = vmatprep.subr.mxu0 0.0
        %5940 = vmatpush1.msra.mxu0 0.0
        %5941 = vmatprep.subr.mxu0 0.0
        %5942 = vmatpush1.msra.mxu0 0.0
        %5943 = vmatprep.subr.mxu0 0.0
        %5944 = vmatpush1.msra.mxu0 0.0
        %5945 = vmatprep.subr.mxu0 0.0
        %5946 = vmatpush1.msra.mxu0 0.0
        %5947 = vmatprep.subr.mxu0 0.0
        %5948 = vmatpush1.msra.mxu0 0.0
        %5949 = vmatprep.subr.mxu0 0.0
        %5950 = vmatpush1.msra.mxu0 0.0
        %5951 = vmatprep.subr.mxu0 0.0
        %5952 = vmatpush1.msra.mxu0 0.0
        %5953 = vmatprep.subr.mxu0 0.0
        %5954 = vmatpush1.msra.mxu0 0.0
        %5955 = vmatprep.subr.mxu0 0.0
        %5956 = vmatpush1.msra.mxu0 0.0
        %5957 = vmatprep.subr.mxu0 0.0
        %5958 = vmatpush1.msra.mxu0 0.0
        %5959 = vmatprep.mubr.f32.mxu0 0.0
        %v5960 = vand.u32 %v5700, 4294901760
        %5961 = vmatmul.mubr.f32.gmra.mrb[0].mxu0 %v5960
        %v5962 = vpop.f32.mrb[0].mxu0
        %v5963 = vadd.f32 %v5812, %v5962
        %v5964 = vpop.f32.mrb[0].mxu0
        %5965 = vdwg.mxu0
        %5966 = vmatprep.subr.mxu0 0.0
        %v5967 = vand.u32 %v5701, 4294901760
        %v5968 = vsub.f32 %v5701, %v5967
        %5969 = vmatpush1.msra.mxu0 %v5968
        %5970 = vmatprep.subr.mxu0 0.0
        %v5971 = vand.u32 %v5702, 4294901760
        %v5972 = vsub.f32 %v5702, %v5971
        %5973 = vmatpush1.msra.mxu0 %v5972
        %5974 = vmatprep.subr.mxu0 0.0
        %v5975 = vand.u32 %v5703, 4294901760
        %v5976 = vsub.f32 %v5703, %v5975
        %5977 = vmatpush1.msra.mxu0 %v5976
        %5978 = vmatprep.subr.mxu0 0.0
        %v5979 = vand.u32 %v5704, 4294901760
        %v5980 = vsub.f32 %v5704, %v5979
        %5981 = vmatpush1.msra.mxu0 %v5980
        %5982 = vmatprep.subr.mxu0 0.0
        %v5983 = vand.u32 %v5705, 4294901760
        %v5984 = vsub.f32 %v5705, %v5983
        %5985 = vmatpush1.msra.mxu0 %v5984
        %5986 = vmatprep.subr.mxu0 0.0
        %v5987 = vand.u32 %v5706, 4294901760
        %v5988 = vsub.f32 %v5706, %v5987
        %5989 = vmatpush1.msra.mxu0 %v5988
        %5990 = vmatprep.subr.mxu0 0.0
        %v5991 = vand.u32 %v5707, 4294901760
        %v5992 = vsub.f32 %v5707, %v5991
        %5993 = vmatpush1.msra.mxu0 %v5992
        %5994 = vmatprep.subr.mxu0 0.0
        %v5995 = vand.u32 %v5708, 4294901760
        %v5996 = vsub.f32 %v5708, %v5995
        %5997 = vmatpush1.msra.mxu0 %v5996
        %5998 = vmatprep.subr.mxu0 0.0
        %v5999 = vand.u32 %v5709, 4294901760
        %v6000 = vsub.f32 %v5709, %v5999
        %6001 = vmatpush1.msra.mxu0 %v6000
        %6002 = vmatprep.subr.mxu0 0.0
        %v6003 = vand.u32 %v5710, 4294901760
        %v6004 = vsub.f32 %v5710, %v6003
        %6005 = vmatpush1.msra.mxu0 %v6004
        %6006 = vmatprep.subr.mxu0 0.0
        %v6007 = vand.u32 %v5711, 4294901760
        %v6008 = vsub.f32 %v5711, %v6007
        %6009 = vmatpush1.msra.mxu0 %v6008
        %6010 = vmatprep.subr.mxu0 0.0
        %v6011 = vand.u32 %v5712, 4294901760
        %v6012 = vsub.f32 %v5712, %v6011
        %6013 = vmatpush1.msra.mxu0 %v6012
        %6014 = vmatprep.subr.mxu0 0.0
        %v6015 = vand.u32 %v5713, 4294901760
        %v6016 = vsub.f32 %v5713, %v6015
        %6017 = vmatpush1.msra.mxu0 %v6016
        %6018 = vmatprep.subr.mxu0 0.0
        %v6019 = vand.u32 %v5714, 4294901760
        %v6020 = vsub.f32 %v5714, %v6019
        %6021 = vmatpush1.msra.mxu0 %v6020
        %6022 = vmatprep.subr.mxu0 0.0
        %v6023 = vand.u32 %v5715, 4294901760
        %v6024 = vsub.f32 %v5715, %v6023
        %6025 = vmatpush1.msra.mxu0 %v6024
        %6026 = vmatprep.subr.mxu0 0.0
        %v6027 = vand.u32 %v5716, 4294901760
        %v6028 = vsub.f32 %v5716, %v6027
        %6029 = vmatpush1.msra.mxu0 %v6028
        %6030 = vmatprep.subr.mxu0 0.0
        %6031 = vmatpush1.msra.mxu0 0.0
        %6032 = vmatprep.subr.mxu0 0.0
        %6033 = vmatpush1.msra.mxu0 0.0
        %6034 = vmatprep.subr.mxu0 0.0
        %6035 = vmatpush1.msra.mxu0 0.0
        %6036 = vmatprep.subr.mxu0 0.0
        %6037 = vmatpush1.msra.mxu0 0.0
        %6038 = vmatprep.subr.mxu0 0.0
        %6039 = vmatpush1.msra.mxu0 0.0
        %6040 = vmatprep.subr.mxu0 0.0
        %6041 = vmatpush1.msra.mxu0 0.0
        %6042 = vmatprep.subr.mxu0 0.0
        %6043 = vmatpush1.msra.mxu0 0.0
        %6044 = vmatprep.subr.mxu0 0.0
        %6045 = vmatpush1.msra.mxu0 0.0
        %6046 = vmatprep.subr.mxu0 0.0
        %6047 = vmatpush1.msra.mxu0 0.0
        %6048 = vmatprep.subr.mxu0 0.0
        %6049 = vmatpush1.msra.mxu0 0.0
        %6050 = vmatprep.subr.mxu0 0.0
        %6051 = vmatpush1.msra.mxu0 0.0
        %6052 = vmatprep.subr.mxu0 0.0
        %6053 = vmatpush1.msra.mxu0 0.0
        %6054 = vmatprep.subr.mxu0 0.0
        %6055 = vmatpush1.msra.mxu0 0.0
        %6056 = vmatprep.subr.mxu0 0.0
        %6057 = vmatpush1.msra.mxu0 0.0
        %6058 = vmatprep.subr.mxu0 0.0
        %6059 = vmatpush1.msra.mxu0 0.0
        %6060 = vmatprep.subr.mxu0 0.0
        %6061 = vmatpush1.msra.mxu0 0.0
        %6062 = vmatprep.mubr.f32.mxu0 0.0
        %v6063 = vand.u32 %v5700, 4294901760
        %v6064 = vsub.f32 %v5700, %v6063
        %6065 = vmatmul.mubr.f32.gmra.mrb[0].mxu0 %v6064
        %v6066 = vpop.f32.mrb[0].mxu0
        %v6067 = vadd.f32 %v5963, %v6066
        %v6068 = vpop.f32.mrb[0].mxu0
        %6069 = vdwg.mxu0
        %6070 = vmatprep.subr.mxu0 0.0
        %v6071 = vand.u32 %v5701, 4294901760
        %6072 = vmatpush1.msra.mxu0 %v6071
        %6073 = vmatprep.subr.mxu0 0.0
        %v6074 = vand.u32 %v5702, 4294901760
        %6075 = vmatpush1.msra.mxu0 %v6074
        %6076 = vmatprep.subr.mxu0 0.0
        %v6077 = vand.u32 %v5703, 4294901760
        %6078 = vmatpush1.msra.mxu0 %v6077
        %6079 = vmatprep.subr.mxu0 0.0
        %v6080 = vand.u32 %v5704, 4294901760
        %6081 = vmatpush1.msra.mxu0 %v6080
        %6082 = vmatprep.subr.mxu0 0.0
        %v6083 = vand.u32 %v5705, 4294901760
        %6084 = vmatpush1.msra.mxu0 %v6083
        %6085 = vmatprep.subr.mxu0 0.0
        %v6086 = vand.u32 %v5706, 4294901760
        %6087 = vmatpush1.msra.mxu0 %v6086
        %6088 = vmatprep.subr.mxu0 0.0
        %v6089 = vand.u32 %v5707, 4294901760
        %6090 = vmatpush1.msra.mxu0 %v6089
        %6091 = vmatprep.subr.mxu0 0.0
        %v6092 = vand.u32 %v5708, 4294901760
        %6093 = vmatpush1.msra.mxu0 %v6092
        %6094 = vmatprep.subr.mxu0 0.0
        %v6095 = vand.u32 %v5709, 4294901760
        %6096 = vmatpush1.msra.mxu0 %v6095
        %6097 = vmatprep.subr.mxu0 0.0
        %v6098 = vand.u32 %v5710, 4294901760
        %6099 = vmatpush1.msra.mxu0 %v6098
        %6100 = vmatprep.subr.mxu0 0.0
        %v6101 = vand.u32 %v5711, 4294901760
        %6102 = vmatpush1.msra.mxu0 %v6101
        %6103 = vmatprep.subr.mxu0 0.0
        %v6104 = vand.u32 %v5712, 4294901760
        %6105 = vmatpush1.msra.mxu0 %v6104
        %6106 = vmatprep.subr.mxu0 0.0
        %v6107 = vand.u32 %v5713, 4294901760
        %6108 = vmatpush1.msra.mxu0 %v6107
        %6109 = vmatprep.subr.mxu0 0.0
        %v6110 = vand.u32 %v5714, 4294901760
        %6111 = vmatpush1.msra.mxu0 %v6110
        %6112 = vmatprep.subr.mxu0 0.0
        %v6113 = vand.u32 %v5715, 4294901760
        %6114 = vmatpush1.msra.mxu0 %v6113
        %6115 = vmatprep.subr.mxu0 0.0
        %v6116 = vand.u32 %v5716, 4294901760
        %6117 = vmatpush1.msra.mxu0 %v6116
        %6118 = vmatprep.subr.mxu0 0.0
        %6119 = vmatpush1.msra.mxu0 0.0
        %6120 = vmatprep.subr.mxu0 0.0
        %6121 = vmatpush1.msra.mxu0 0.0
        %6122 = vmatprep.subr.mxu0 0.0
        %6123 = vmatpush1.msra.mxu0 0.0
        %6124 = vmatprep.subr.mxu0 0.0
        %6125 = vmatpush1.msra.mxu0 0.0
        %6126 = vmatprep.subr.mxu0 0.0
        %6127 = vmatpush1.msra.mxu0 0.0
        %6128 = vmatprep.subr.mxu0 0.0
        %6129 = vmatpush1.msra.mxu0 0.0
        %6130 = vmatprep.subr.mxu0 0.0
        %6131 = vmatpush1.msra.mxu0 0.0
        %6132 = vmatprep.subr.mxu0 0.0
        %6133 = vmatpush1.msra.mxu0 0.0
        %6134 = vmatprep.subr.mxu0 0.0
        %6135 = vmatpush1.msra.mxu0 0.0
        %6136 = vmatprep.subr.mxu0 0.0
        %6137 = vmatpush1.msra.mxu0 0.0
        %6138 = vmatprep.subr.mxu0 0.0
        %6139 = vmatpush1.msra.mxu0 0.0
        %6140 = vmatprep.subr.mxu0 0.0
        %6141 = vmatpush1.msra.mxu0 0.0
        %6142 = vmatprep.subr.mxu0 0.0
        %6143 = vmatpush1.msra.mxu0 0.0
        %6144 = vmatprep.subr.mxu0 0.0
        %6145 = vmatpush1.msra.mxu0 0.0
        %6146 = vmatprep.subr.mxu0 0.0
        %6147 = vmatpush1.msra.mxu0 0.0
        %6148 = vmatprep.subr.mxu0 0.0
        %6149 = vmatpush1.msra.mxu0 0.0
        %6150 = vmatprep.mubr.f32.mxu0 0.0
        %v6151 = vand.u32 %v5700, 4294901760
        %v6152 = vsub.f32 %v5700, %v6151
        %v6153 = vand.u32 %v6152, 4294901760
        %6154 = vmatmul.mubr.f32.gmra.mrb[0].mxu0 %v6153
        %v6155 = vpop.f32.mrb[0].mxu0
        %v6156 = vadd.f32 %v6067, %v6155
        %v6157 = vpop.f32.mrb[0].mxu0
        %6158 = vdwg.mxu0
        %6159 = vmatprep.subr.mxu0 0.0
        %v6160 = vand.u32 %v5701, 4294901760
        %v6161 = vsub.f32 %v5701, %v6160
        %v6162 = vand.u32 %v6161, 4294901760
        %6163 = vmatpush1.msra.mxu0 %v6162
        %6164 = vmatprep.subr.mxu0 0.0
        %v6165 = vand.u32 %v5702, 4294901760
        %v6166 = vsub.f32 %v5702, %v6165
        %v6167 = vand.u32 %v6166, 4294901760
        %6168 = vmatpush1.msra.mxu0 %v6167
        %6169 = vmatprep.subr.mxu0 0.0
        %v6170 = vand.u32 %v5703, 4294901760
        %v6171 = vsub.f32 %v5703, %v6170
        %v6172 = vand.u32 %v6171, 4294901760
        %6173 = vmatpush1.msra.mxu0 %v6172
        %6174 = vmatprep.subr.mxu0 0.0
        %v6175 = vand.u32 %v5704, 4294901760
        %v6176 = vsub.f32 %v5704, %v6175
        %v6177 = vand.u32 %v6176, 4294901760
        %6178 = vmatpush1.msra.mxu0 %v6177
        %6179 = vmatprep.subr.mxu0 0.0
        %v6180 = vand.u32 %v5705, 4294901760
        %v6181 = vsub.f32 %v5705, %v6180
        %v6182 = vand.u32 %v6181, 4294901760
        %6183 = vmatpush1.msra.mxu0 %v6182
        %6184 = vmatprep.subr.mxu0 0.0
        %v6185 = vand.u32 %v5706, 4294901760
        %v6186 = vsub.f32 %v5706, %v6185
        %v6187 = vand.u32 %v6186, 4294901760
        %6188 = vmatpush1.msra.mxu0 %v6187
        %6189 = vmatprep.subr.mxu0 0.0
        %v6190 = vand.u32 %v5707, 4294901760
        %v6191 = vsub.f32 %v5707, %v6190
        %v6192 = vand.u32 %v6191, 4294901760
        %6193 = vmatpush1.msra.mxu0 %v6192
        %6194 = vmatprep.subr.mxu0 0.0
        %v6195 = vand.u32 %v5708, 4294901760
        %v6196 = vsub.f32 %v5708, %v6195
        %v6197 = vand.u32 %v6196, 4294901760
        %6198 = vmatpush1.msra.mxu0 %v6197
        %6199 = vmatprep.subr.mxu0 0.0
        %v6200 = vand.u32 %v5709, 4294901760
        %v6201 = vsub.f32 %v5709, %v6200
        %v6202 = vand.u32 %v6201, 4294901760
        %6203 = vmatpush1.msra.mxu0 %v6202
        %6204 = vmatprep.subr.mxu0 0.0
        %v6205 = vand.u32 %v5710, 4294901760
        %v6206 = vsub.f32 %v5710, %v6205
        %v6207 = vand.u32 %v6206, 4294901760
        %6208 = vmatpush1.msra.mxu0 %v6207
        %6209 = vmatprep.subr.mxu0 0.0
        %v6210 = vand.u32 %v5711, 4294901760
        %v6211 = vsub.f32 %v5711, %v6210
        %v6212 = vand.u32 %v6211, 4294901760
        %6213 = vmatpush1.msra.mxu0 %v6212
        %6214 = vmatprep.subr.mxu0 0.0
        %v6215 = vand.u32 %v5712, 4294901760
        %v6216 = vsub.f32 %v5712, %v6215
        %v6217 = vand.u32 %v6216, 4294901760
        %6218 = vmatpush1.msra.mxu0 %v6217
        %6219 = vmatprep.subr.mxu0 0.0
        %v6220 = vand.u32 %v5713, 4294901760
        %v6221 = vsub.f32 %v5713, %v6220
        %v6222 = vand.u32 %v6221, 4294901760
        %6223 = vmatpush1.msra.mxu0 %v6222
        %6224 = vmatprep.subr.mxu0 0.0
        %v6225 = vand.u32 %v5714, 4294901760
        %v6226 = vsub.f32 %v5714, %v6225
        %v6227 = vand.u32 %v6226, 4294901760
        %6228 = vmatpush1.msra.mxu0 %v6227
        %6229 = vmatprep.subr.mxu0 0.0
        %v6230 = vand.u32 %v5715, 4294901760
        %v6231 = vsub.f32 %v5715, %v6230
        %v6232 = vand.u32 %v6231, 4294901760
        %6233 = vmatpush1.msra.mxu0 %v6232
        %6234 = vmatprep.subr.mxu0 0.0
        %v6235 = vand.u32 %v5716, 4294901760
        %v6236 = vsub.f32 %v5716, %v6235
        %v6237 = vand.u32 %v6236, 4294901760
        %6238 = vmatpush1.msra.mxu0 %v6237
        %6239 = vmatprep.subr.mxu0 0.0
        %6240 = vmatpush1.msra.mxu0 0.0
        %6241 = vmatprep.subr.mxu0 0.0
        %6242 = vmatpush1.msra.mxu0 0.0
        %6243 = vmatprep.subr.mxu0 0.0
        %6244 = vmatpush1.msra.mxu0 0.0
        %6245 = vmatprep.subr.mxu0 0.0
        %6246 = vmatpush1.msra.mxu0 0.0
        %6247 = vmatprep.subr.mxu0 0.0
        %6248 = vmatpush1.msra.mxu0 0.0
        %6249 = vmatprep.subr.mxu0 0.0
        %6250 = vmatpush1.msra.mxu0 0.0
        %6251 = vmatprep.subr.mxu0 0.0
        %6252 = vmatpush1.msra.mxu0 0.0
        %6253 = vmatprep.subr.mxu0 0.0
        %6254 = vmatpush1.msra.mxu0 0.0
        %6255 = vmatprep.subr.mxu0 0.0
        %6256 = vmatpush1.msra.mxu0 0.0
        %6257 = vmatprep.subr.mxu0 0.0
        %6258 = vmatpush1.msra.mxu0 0.0
        %6259 = vmatprep.subr.mxu0 0.0
        %6260 = vmatpush1.msra.mxu0 0.0
        %6261 = vmatprep.subr.mxu0 0.0
        %6262 = vmatpush1.msra.mxu0 0.0
        %6263 = vmatprep.subr.mxu0 0.0
        %6264 = vmatpush1.msra.mxu0 0.0
        %6265 = vmatprep.subr.mxu0 0.0
        %6266 = vmatpush1.msra.mxu0 0.0
        %6267 = vmatprep.subr.mxu0 0.0
        %6268 = vmatpush1.msra.mxu0 0.0
        %6269 = vmatprep.subr.mxu0 0.0
        %6270 = vmatpush1.msra.mxu0 0.0
        %6271 = vmatprep.mubr.f32.mxu0 0.0
        %v6272 = vand.u32 %v5700, 4294901760
        %6273 = vmatmul.mubr.f32.gmra.mrb[0].mxu0 %v6272
        %v6274 = vpop.f32.mrb[0].mxu0
        %v6275 = vadd.f32 %v6156, %v6274
        %v6276 = vpop.f32.mrb[0].mxu0
        %6277 = vdwg.mxu0
        %6278 = vmatprep.subr.mxu0 0.0
        %v6279 = vand.u32 %v5701, 4294901760
        %6280 = vmatpush1.msra.mxu0 %v6279
        %6281 = vmatprep.subr.mxu0 0.0
        %v6282 = vand.u32 %v5702, 4294901760
        %6283 = vmatpush1.msra.mxu0 %v6282
        %6284 = vmatprep.subr.mxu0 0.0
        %v6285 = vand.u32 %v5703, 4294901760
        %6286 = vmatpush1.msra.mxu0 %v6285
        %6287 = vmatprep.subr.mxu0 0.0
        %v6288 = vand.u32 %v5704, 4294901760
        %6289 = vmatpush1.msra.mxu0 %v6288
        %6290 = vmatprep.subr.mxu0 0.0
        %v6291 = vand.u32 %v5705, 4294901760
        %6292 = vmatpush1.msra.mxu0 %v6291
        %6293 = vmatprep.subr.mxu0 0.0
        %v6294 = vand.u32 %v5706, 4294901760
        %6295 = vmatpush1.msra.mxu0 %v6294
        %6296 = vmatprep.subr.mxu0 0.0
        %v6297 = vand.u32 %v5707, 4294901760
        %6298 = vmatpush1.msra.mxu0 %v6297
        %6299 = vmatprep.subr.mxu0 0.0
        %v6300 = vand.u32 %v5708, 4294901760
        %6301 = vmatpush1.msra.mxu0 %v6300
        %6302 = vmatprep.subr.mxu0 0.0
        %v6303 = vand.u32 %v5709, 4294901760
        %6304 = vmatpush1.msra.mxu0 %v6303
        %6305 = vmatprep.subr.mxu0 0.0
        %v6306 = vand.u32 %v5710, 4294901760
        %6307 = vmatpush1.msra.mxu0 %v6306
        %6308 = vmatprep.subr.mxu0 0.0
        %v6309 = vand.u32 %v5711, 4294901760
        %6310 = vmatpush1.msra.mxu0 %v6309
        %6311 = vmatprep.subr.mxu0 0.0
        %v6312 = vand.u32 %v5712, 4294901760
        %6313 = vmatpush1.msra.mxu0 %v6312
        %6314 = vmatprep.subr.mxu0 0.0
        %v6315 = vand.u32 %v5713, 4294901760
        %6316 = vmatpush1.msra.mxu0 %v6315
        %6317 = vmatprep.subr.mxu0 0.0
        %v6318 = vand.u32 %v5714, 4294901760
        %6319 = vmatpush1.msra.mxu0 %v6318
        %6320 = vmatprep.subr.mxu0 0.0
        %v6321 = vand.u32 %v5715, 4294901760
        %6322 = vmatpush1.msra.mxu0 %v6321
        %6323 = vmatprep.subr.mxu0 0.0
        %v6324 = vand.u32 %v5716, 4294901760
        %6325 = vmatpush1.msra.mxu0 %v6324
        %6326 = vmatprep.subr.mxu0 0.0
        %6327 = vmatpush1.msra.mxu0 0.0
        %6328 = vmatprep.subr.mxu0 0.0
        %6329 = vmatpush1.msra.mxu0 0.0
        %6330 = vmatprep.subr.mxu0 0.0
        %6331 = vmatpush1.msra.mxu0 0.0
        %6332 = vmatprep.subr.mxu0 0.0
        %6333 = vmatpush1.msra.mxu0 0.0
        %6334 = vmatprep.subr.mxu0 0.0
        %6335 = vmatpush1.msra.mxu0 0.0
        %6336 = vmatprep.subr.mxu0 0.0
        %6337 = vmatpush1.msra.mxu0 0.0
        %6338 = vmatprep.subr.mxu0 0.0
        %6339 = vmatpush1.msra.mxu0 0.0
        %6340 = vmatprep.subr.mxu0 0.0
        %6341 = vmatpush1.msra.mxu0 0.0
        %6342 = vmatprep.subr.mxu0 0.0
        %6343 = vmatpush1.msra.mxu0 0.0
        %6344 = vmatprep.subr.mxu0 0.0
        %6345 = vmatpush1.msra.mxu0 0.0
        %6346 = vmatprep.subr.mxu0 0.0
        %6347 = vmatpush1.msra.mxu0 0.0
        %6348 = vmatprep.subr.mxu0 0.0
        %6349 = vmatpush1.msra.mxu0 0.0
        %6350 = vmatprep.subr.mxu0 0.0
        %6351 = vmatpush1.msra.mxu0 0.0
        %6352 = vmatprep.subr.mxu0 0.0
        %6353 = vmatpush1.msra.mxu0 0.0
        %6354 = vmatprep.subr.mxu0 0.0
        %6355 = vmatpush1.msra.mxu0 0.0
        %6356 = vmatprep.subr.mxu0 0.0
        %6357 = vmatpush1.msra.mxu0 0.0
        %6358 = vmatprep.mubr.f32.mxu0 0.0
        %v6359 = vand.u32 %v5700, 4294901760
        %6360 = vmatmul.mubr.f32.gmra.mrb[0].mxu0 %v6359
        %v6361 = vpop.f32.mrb[0].mxu0
        %v6362 = vadd.f32 %v6275, %v6361
        %v6363 = vpop.f32.mrb[0].mxu0
        %6364 = vdwg.mxu0
        %v6365 = vadd.f32 %v5163, %v6362
        %6366 = vst.msk [vmem:[%s431] sm:$0xff] %vm439, %v6365
        %s6367 = sand.u32 %s313, 1
        %s6368 = scalar_lea.sflag [#allocation3], %s6367
        %s6369 = sand.u32 %s313, 1
        %s6370 = smul.addr %s6369, 8
        %s6371 = scalar_lea.vmem [#allocation2], %s6370
        // Predicated region
        $region73: #{tpu_custom_call.1} parent=71 // pred_check
          %p6372 = pneg %p323
        $region74: #{tpu_custom_call.1} parent=71 // pred_check_branch
          %6374 = sbr.rel (%p6372) target = $region76
        $region75: #{tpu_custom_call.1} parent=71 // pred_region
          %s6376 = ssub.s32 128, 128
          %6377 = vsyncadd %s6368, %s6376
          %s6378 = smul.addr %s27, 128
          %s6379 = scalar_lea.hbm %s13, %s6378
          %s6381 = sshll.u32 %s6371, 4
          %s6382 = int_to_ptr.vmem [resolvable:$true] %s6381
          %6384 = dma.vmem_to_hbm [thread:$0]  %s6382, 128, %s6379, %s6368
        $region76: #{tpu_custom_call.1} parent=71 // pred_fallthru
          _
      $region72: #{tpu_custom_call.1} parent=5 // pred_fallthru
        _
      %p6385 = scmp.le.s32.totalorder 2, %s22
      // Predicated region
      $region77: #{tpu_custom_call.1} parent=5 // pred_check
        %p6386 = pneg %p6385
      $region78: #{tpu_custom_call.1} parent=5 // pred_check_branch
        %6388 = sbr.rel (%p6386) target = $region80
      $region79: #{tpu_custom_call.1} parent=5 // pred_region
        %s6389 = ssub.s32 %s22, 2
        // Predicated region
        $region81: #{tpu_custom_call.1} parent=79 // pred_check
          %p6390 = pneg %p329
        $region82: #{tpu_custom_call.1} parent=79 // pred_check_branch
          %6392 = sbr.rel (%p6390) target = $region84
        $region83: #{tpu_custom_call.1} parent=79 // pred_region
          %s6393 = sand.u32 %s314, 1
          %s6394 = scalar_lea.sflag [#allocation3], %s6393
          %s6395 = sand.u32 %s314, 1
          %s6396 = smul.addr %s6395, 8
          %s6397 = scalar_lea.vmem [#allocation2], %s6396
          %6398 = dma.done %s6394, 128
        $region84: #{tpu_custom_call.1} parent=79 // pred_fallthru
          _
      $region80: #{tpu_custom_call.1} parent=5 // pred_fallthru
        _
    $region6: #{tpu_custom_call.1} parent=1 // loop_footer
      %s26 = sadd.s32 1, %s22
    $region7: #{tpu_custom_call.1} parent=1 // loop_footer_branch
      %21 = sbr.rel target = $region3
    $region8: #{tpu_custom_call.1} parent=1 // loop_exit
      _
    %6399 = vsyncpa [#allocation3], 1
    %s6400 = scalar_lea.sflag [#allocation3], 1
    %6401 = vsyncpa %s6400, 1

</llo_original>
